<compile_context>
chip_gen: v5e
topology: v5e:2x2
jax: 0.10.0
libtpu: 0.0.40
codegen_flags: <defaults>
</compile_context>

<pallas_src>
import functools
from typing import NamedTuple

import numpy as np
import jax
import jax.numpy as jnp
from jax import lax
from jax.experimental import pallas as pl
from jax.experimental.pallas import tpu as pltpu

LRELU_SLOPE = 0.2
BN_EPS = 1e-5
KSIZE = 4          # kernel_size = 4
PAD = 2            # ceil((4 - 1) / 2)
LANE = 128         # TPU lane width
SUB = 8            # sublane count

VMEM_TILE_BUDGET = 26 * 1024 * 1024    # conservative: safe on v7x's 64 MiB VMEM
MAX_RESIDENT_W_BYTES = 6 * 1024 * 1024  # per-buffer resident weight slab cap


def _round_up(x, m):
    return ((x + m - 1) // m) * m


def _pick_tiles(m, k, cout_pad):
    """Choose (tile_m, tile_n, mt, nt) from a per-generation-safe VMEM budget."""
    # Lane-dense N tile; 256 fills the v6e/v7x MXU when cout allows, 128 matches
    # the v5e MXU exactly.
    tile_n = 256 if (cout_pad >= 256 and cout_pad % 256 == 0) else LANE
    assert cout_pad % tile_n == 0
    nt = cout_pad // tile_n

    # Resident weights: whole (K, tile_n) bf16 slab stays in VMEM, fetched once
    # per cout tile (constant index_map over the inner M axis).
    assert k % LANE == 0
    w_bytes = k * tile_n * 2
    assert w_bytes <= MAX_RESIDENT_W_BYTES, (
        "TODO(synk): K-tiled streaming path needed for very large K*C")

    # Budget: 2x (double-buffered) x-block + 2x out-block + 2x weight slab +
    # stats/bias blocks.
    fixed = 2 * w_bytes + 4 * SUB * tile_n * 4 + 2 * tile_n * 4
    per_row = 2 * (k * 2) + 2 * (tile_n * 2)
    tile_m = (VMEM_TILE_BUDGET - fixed) // per_row
    tile_m = min(tile_m, 2048, _round_up(m, 16))
    tile_m = max(16, (tile_m // 16) * 16)
    # Megacore: guarantee >= 2 M tiles when there is enough work (v7x: 2 TCs).
    if tile_m >= m and m >= 64:
        tile_m = _round_up(pl.cdiv(m, 2), 16)
    mt = pl.cdiv(m, tile_m)
    return tile_m, tile_n, mt, nt


# --------------------------- Pallas kernel -----------------------------------

def _conv_gemm_kernel(x_ref, w_ref, b_ref, o_ref, *stat_refs,
                      n_valid, slope, need_stats):
    # x: (tile_m, K) bf16 patches   w: (K, tile_n) bf16 (VMEM resident)
    # b: (1, tile_n) f32            o: (tile_m, tile_n) bf16
    # optional stats: (1, 8, tile_n) f32 per-sublane-group partial sums.
    i = pl.program_id(1)                      # M-tile index (grid = (nt, mt))
    tile_m, tile_n = o_ref.shape

    y = jnp.dot(x_ref[...], w_ref[...], preferred_element_type=jnp.float32)
    y = y + b_ref[...]
    if slope is not None:                     # fused LeakyReLU (conv+act layers)
        y = jnp.where(y >= 0.0, y, slope * y)
    o_ref[...] = y.astype(o_ref.dtype)

    if need_stats:
        ssum_ref, ssq_ref = stat_refs
        # Row-masked partial BN stats (exclude zero-padded / ragged rows).
        row = lax.broadcasted_iota(jnp.int32, y.shape, 0) + i * tile_m
        ym = jnp.where(row < n_valid, y, 0.0)
        # Per-sublane-group partials: plain vreg adds, no cross-sublane XLU
        # reduction and no 8x-replicated store; host finishes the /8 reduce.
        g = ym.reshape(tile_m // SUB, SUB, tile_n)
        ssum_ref[...] = jnp.sum(g, axis=0, keepdims=True)
        ssq_ref[...] = jnp.sum(g * g, axis=0, keepdims=True)


def conv_gemm(patches, w_mat, bias, *, slope, need_stats):
    """bf16 (M,K) @ (K,Cpad) + bias [+ LeakyReLU]; optional per-tile BN stats."""
    m, k = patches.shape
    kdim, cpad = w_mat.shape
    assert kdim == k
    tile_m, tile_n, mt, nt = _pick_tiles(m, k, cpad)

    # Pad M so every block is fully in-bounds (no reliance on OOB-block reads).
    m_pad = mt * tile_m
    if m_pad != m:
        patches = jnp.pad(patches, ((0, m_pad - m), (0, 0)))

    kern = functools.partial(_conv_gemm_kernel, n_valid=m, slope=slope,
                             need_stats=need_stats)

    out_shape = [jax.ShapeDtypeStruct((m_pad, cpad), jnp.bfloat16)]
    out_specs = [pl.BlockSpec((tile_m, tile_n), lambda jn, i: (i, jn))]
    if need_stats:
        stat_shape = jax.ShapeDtypeStruct((mt, SUB, cpad), jnp.float32)
        stat_spec = pl.BlockSpec((1, SUB, tile_n), lambda jn, i: (i, 0, jn))
        out_shape += [stat_shape, stat_shape]
        out_specs += [stat_spec, stat_spec]

    # VMEM limit computed from the actual double-buffered footprint (not a
    # hard-coded fraction of physical VMEM) and capped well below v7x's 64 MiB.
    footprint = (2 * tile_m * k * 2 + 2 * k * tile_n * 2
                 + 2 * tile_m * tile_n * 2 + 4 * SUB * tile_n * 4
                 + 2 * tile_n * 4)
    vmem_limit = int(min(max(footprint + 8 * 2**20, 16 * 2**20), 40 * 2**20))

    res = pl.pallas_call(
        kern,
        out_shape=out_shape,
        grid=(nt, mt),
        in_specs=[pl.BlockSpec((tile_m, k), lambda jn, i: (i, 0)),
                  pl.BlockSpec((k, tile_n), lambda jn, i: (0, jn)),  # resident W
                  pl.BlockSpec((1, tile_n), lambda jn, i: (0, jn))],
        out_specs=out_specs,
        compiler_params=pltpu.CompilerParams(
            dimension_semantics=("parallel", "parallel"),
            vmem_limit_bytes=vmem_limit),
    )(patches, w_mat, bias)

    out = res[0][:m]
    if need_stats:
        return out, res[1], res[2]
    return out, None, None


# ------------------------------ Glue (JAX) ------------------------------------

def _im2col(a, stride):
    # a: (N, H, W, C) bf16 activated input.  Zero padding applies to the
    # *activated* tensor (matches PyTorch Conv2d padding semantics).
    # TODO(synk): replace with in-kernel (kh,kw) tap accumulation from a
    #             VMEM-resident input slab to remove the patch-slab HBM traffic.
    n, h, w, c = a.shape
    ho = (h + 2 * PAD - KSIZE) // stride + 1
    wo = (w + 2 * PAD - KSIZE) // stride + 1
    ap = jnp.pad(a, ((0, 0), (PAD, PAD), (PAD, PAD), (0, 0)))
    cols = []
    for kh in range(KSIZE):
        for kw in range(KSIZE):
            cols.append(ap[:, kh:kh + stride * (ho - 1) + 1:stride,
                            kw:kw + stride * (wo - 1) + 1:stride, :])
    patches = jnp.concatenate(cols, axis=-1)            # (N, Ho, Wo, 16*C)
    return patches.reshape(n * ho * wo, KSIZE * KSIZE * c), ho, wo


def _to_channels(a, c_tgt):
    c = a.shape[-1]
    if c == c_tgt:
        return a
    if c > c_tgt:
        return a[..., :c_tgt]
    pad = [(0, 0)] * (a.ndim - 1) + [(0, c_tgt - c)]
    return jnp.pad(a, pad)


def avgpool_3x3_s2(x):
    # nn.AvgPool2d(3, stride=2, padding=1, count_include_pad=False), NHWC.
    pads = ((0, 0), (1, 1), (1, 1), (0, 0))
    sums = lax.reduce_window(x, 0.0, lax.add, (1, 3, 3, 1), (1, 2, 2, 1), pads)
    cnt = lax.reduce_window(jnp.ones_like(x[..., :1]), 0.0, lax.add,
                            (1, 3, 3, 1), (1, 2, 2, 1), pads)
    return sums / cnt


# ------------------------- Model parameters / packing -------------------------

def make_nlayer_params(key, input_nc, ndf, n_layers):
    # spec: (cin, cout, stride, use_bn, use_act) -- mirrors NLayerDiscriminator
    specs = [(input_nc, ndf, 2, False, True)]
    nf = ndf
    for _ in range(1, n_layers):
        nf_prev, nf = nf, min(nf * 2, 512)
        specs.append((nf_prev, nf, 2, True, True))
    nf_prev, nf = nf, min(nf * 2, 512)
    specs.append((nf_prev, nf, 1, True, True))
    specs.append((nf, 1, 1, False, False))

    layers = []
    for cin, cout, stride, use_bn, use_act in specs:
        key, k_w, k_g = jax.random.split(key, 3)
        layer = {
            "w": 0.02 * jax.random.normal(k_w, (KSIZE, KSIZE, cin, cout),
                                          jnp.float32),
            "b": jnp.zeros((cout,), jnp.float32),
            "stride": stride,
            "act": use_act,
            "bn": None,
        }
        if use_bn:
            layer["bn"] = (
                1.0 + 0.02 * jax.random.normal(k_g, (cout,), jnp.float32),
                jnp.zeros((cout,), jnp.float32),
            )
        layers.append(layer)
    return layers


class LayerCfg(NamedTuple):
    stride: int
    cin_k: int      # channels used in the patch gather (>= real cin, mult of 8)
    cout: int       # real output channels
    cout_pad: int   # lane-padded output channels stored by the kernel
    has_bn: bool
    fused_act: bool  # LeakyReLU fused into the GEMM epilogue (conv+act, no BN)


def pack_nlayer_params(layers):
    cfgs, arrs = [], []
    for layer in layers:
        kh, kw, cin, cout = layer["w"].shape
        cin_k = _round_up(cin, SUB)
        cout_pad = _round_up(cout, LANE)
        w_full = jnp.zeros((kh, kw, cin_k, cout_pad), jnp.float32)
        w_full = w_full.at[:, :, :cin, :cout].set(layer["w"])
        arr = {
            "w": w_full.reshape(kh * kw * cin_k, cout_pad).astype(jnp.bfloat16),
            "b": jnp.zeros((1, cout_pad), jnp.float32).at[0, :cout].set(
                layer["b"]),
        }
        if layer["bn"] is not None:
            arr["gamma"], arr["beta"] = layer["bn"]
        cfgs.append(LayerCfg(layer["stride"], cin_k, cout, cout_pad,
                             layer["bn"] is not None,
                             layer["act"] and layer["bn"] is None))
        arrs.append(arr)
    return tuple(cfgs), arrs


# ------------------------------ Forward (Pallas) ------------------------------

def nlayer_forward_pallas(cfgs, arrs, x_nhwc):
    n = x_nhwc.shape[0]
    a = _to_channels(x_nhwc, cfgs[0].cin_k).astype(jnp.bfloat16)
    out = None
    for li, (cfg, arr) in enumerate(zip(cfgs, arrs)):
        patches, ho, wo = _im2col(a, cfg.stride)
        m = n * ho * wo
        slope = LRELU_SLOPE if cfg.fused_act else None
        y2d, ssum, ssq = conv_gemm(patches, arr["w"], arr["b"], slope=slope,
                                   need_stats=cfg.has_bn)
        y = y2d.reshape(n, ho, wo, cfg.cout_pad)
        if cfg.has_bn:
            # Finalize training-mode BN batch stats (biased var) from the
            # kernel's per-sublane-group partial sums — no extra pass over y.
            # TODO(synk): Welford-style merge for better conditioning.
            s1 = jnp.sum(ssum, axis=(0, 1))[:cfg.cout]
            s2 = jnp.sum(ssq, axis=(0, 1))[:cfg.cout]
            mean = s1 / m
            var = jnp.maximum(s2 / m - mean * mean, 0.0)
            scale = arr["gamma"] * lax.rsqrt(var + BN_EPS)
            shift = arr["beta"] - mean * scale
            # Per-channel affine + LeakyReLU; XLA fuses this elementwise work
            # into the next layer's patch gather (before that conv's zero pad).
            z = y[..., :cfg.cout].astype(jnp.float32) * scale + shift
            z = jnp.where(z >= 0.0, z, LRELU_SLOPE * z)
            a = z.astype(jnp.bfloat16)
        elif li + 1 < len(cfgs):
            # First layer: LeakyReLU already fused in the GEMM epilogue; the
            # padded output channels are exact zeros, so slicing is safe.
            a = y
        else:
            out = y[..., :cfg.cout].astype(jnp.float32)  # final 1-channel head
        if li + 1 < len(cfgs):
            a = _to_channels(a, cfgs[li + 1].cin_k)
    return out


def multiscale_forward_pallas(cfgs_all, arrs_all, x_nchw):
    x = jnp.transpose(x_nchw, (0, 2, 3, 1)).astype(jnp.float32)  # NCHW -> NHWC
    num_d = len(cfgs_all)
    result = []
    xd = x
    for i in range(num_d):
        d = num_d - 1 - i
        y = nlayer_forward_pallas(cfgs_all[d], arrs_all[d], xd)
        result.append([jnp.transpose(y, (0, 3, 1, 2))])          # back to NCHW
        if i != num_d - 1:
            xd = avgpool_3x3_s2(xd)
    return result


# ---------------------- Pure-JAX reference (for checking) ---------------------

def nlayer_forward_ref(layers, x):
    y = x
    for layer in layers:
        y = lax.conv_general_dilated(
            y, layer["w"], (layer["stride"],) * 2, ((PAD, PAD), (PAD, PAD)),
            dimension_numbers=("NHWC", "HWIO", "NHWC"),
            precision=lax.Precision.HIGHEST) + layer["b"]
        if layer["bn"] is not None:
            gamma, beta = layer["bn"]
            mean = jnp.mean(y, axis=(0, 1, 2))
            var = jnp.var(y, axis=(0, 1, 2))
            y = (y - mean) * lax.rsqrt(var + BN_EPS) * gamma + beta
            y = jnp.where(y >= 0.0, y, LRELU_SLOPE * y)
        elif layer["act"]:
            y = jnp.where(y >= 0.0, y, LRELU_SLOPE * y)
    return y


def multiscale_forward_ref(all_params, x_nchw):
    x = jnp.transpose(x_nchw, (0, 2, 3, 1))
    num_d = len(all_params)
    result = []
    xd = x
    for i in range(num_d):
        y = nlayer_forward_ref(all_params[num_d - 1 - i], xd)
        result.append([jnp.transpose(y, (0, 3, 1, 2))])
        if i != num_d - 1:
            xd = avgpool_3x3_s2(xd)
    return result


# ---------------------------------- main --------------------------------------

if __name__ == "__main__":
    key = jax.random.PRNGKey(0)
    kx, kp = jax.random.split(key)

    input_nc, ndf, n_layers, num_D = 3, 8, 3, 3
    d_keys = jax.random.split(kp, num_D)
    ref_params = [make_nlayer_params(d_keys[i], input_nc, ndf, n_layers)
                  for i in range(num_D)]
    packed = [pack_nlayer_params(layers) for layers in ref_params]
    cfgs_all = tuple(p[0] for p in packed)
    arrs_all = [p[1] for p in packed]

    x = jax.random.normal(kx, (2, input_nc, 32, 32), jnp.float32)

    fwd = jax.jit(functools.partial(multiscale_forward_pallas, cfgs_all))
    out = fwd(arrs_all, x)
    out = jax.block_until_ready(out)

    ref = multiscale_forward_ref(ref_params, x)
    for o, r in zip(jax.tree_util.tree_leaves(out),
                    jax.tree_util.tree_leaves(ref)):
        np.testing.assert_allclose(np.asarray(o), np.asarray(r),
                                   rtol=5e-2, atol=5e-2)

    print("KERNEL_OK")
</pallas_src>

<mosaic_0001>
module attributes {stable_mosaic.version = 11 : i64} {
  func.func @_conv_gemm_kernel(%arg0: i32, %arg1: i32, %arg2: memref<64x128xbf16, #tpu.memory_space<vmem>>, %arg3: memref<128x128xbf16, #tpu.memory_space<vmem>>, %arg4: memref<1x128xf32, #tpu.memory_space<vmem>>, %arg5: memref<64x128xbf16, #tpu.memory_space<vmem>>) attributes {dimension_semantics = [#tpu.dimension_semantics<parallel>, #tpu.dimension_semantics<parallel>], iteration_bounds = array<i64: 1, 1>, scalar_prefetch = 0 : i64, scratch_operands = 0 : i64, tpu.core_type = #tpu.core_type<tc>, window_params = [{transform_indices = @transform_0, window_bounds = array<i64: 64, 128>}, {transform_indices = @transform_1, window_bounds = array<i64: 128, 128>}, {transform_indices = @transform_2, window_bounds = array<i64: 1, 128>}, {transform_indices = @transform_3, window_bounds = array<i64: 64, 128>}]} {
    %c0 = arith.constant 0 : index
    %c0_0 = arith.constant 0 : index
    %0 = vector.load %arg2[%c0, %c0_0] : memref<64x128xbf16, #tpu.memory_space<vmem>>, vector<64x128xbf16>
    %c0_1 = arith.constant 0 : index
    %c0_2 = arith.constant 0 : index
    %1 = vector.load %arg3[%c0_1, %c0_2] : memref<128x128xbf16, #tpu.memory_space<vmem>>, vector<128x128xbf16>
    %cst = arith.constant dense<0.000000e+00> : vector<64x128xf32>
    %2 = tpu.matmul %0, %1, %cst {dimension_numbers = #tpu.dot_dimension_numbers<[1], [0], [0], [1], [0, 0, 1, 1], [], []>} : vector<64x128xbf16>, vector<128x128xbf16>, vector<64x128xf32> -> vector<64x128xf32>
    %c0_3 = arith.constant 0 : index
    %c0_4 = arith.constant 0 : index
    %3 = vector.load %arg4[%c0_3, %c0_4] : memref<1x128xf32, #tpu.memory_space<vmem>>, vector<1x128xf32>
    %4 = vector.broadcast %3 : vector<1x128xf32> to vector<64x128xf32>
    %5 = arith.addf %2, %4 : vector<64x128xf32>
    %cst_5 = arith.constant 0.000000e+00 : f32
    %6 = vector.broadcast %cst_5 : f32 to vector<64x128xf32>
    %7 = arith.cmpf oge, %5, %6 : vector<64x128xf32>
    %cst_6 = arith.constant 2.000000e-01 : f32
    %8 = vector.broadcast %cst_6 : f32 to vector<64x128xf32>
    %9 = arith.mulf %8, %5 : vector<64x128xf32>
    %10 = arith.select %7, %5, %9 : vector<64x128xi1>, vector<64x128xf32>
    %11 = arith.truncf %10 : vector<64x128xf32> to vector<64x128xbf16>
    %c0_7 = arith.constant 0 : index
    %c0_8 = arith.constant 0 : index
    %12 = vector.load %arg5[%c0_7, %c0_8] : memref<64x128xbf16, #tpu.memory_space<vmem>>, vector<64x128xbf16>
    tpu.vector_store %arg5[%c0_7, %c0_8], %11 {strides = array<i32>} : memref<64x128xbf16, #tpu.memory_space<vmem>>, vector<64x128xbf16>,
    return
  }
  func.func @transform_0(%arg0: i32, %arg1: i32) -> (i32, i32) {
    %c0_i32 = arith.constant 0 : i32
    %c0_i32_0 = arith.constant 0 : i32
    return %arg1, %c0_i32 : i32, i32
  }
  func.func @transform_1(%arg0: i32, %arg1: i32) -> (i32, i32) {
    %c0_i32 = arith.constant 0 : i32
    %c0_i32_0 = arith.constant 0 : i32
    return %c0_i32, %arg0 : i32, i32
  }
  func.func @transform_2(%arg0: i32, %arg1: i32) -> (i32, i32) {
    %c0_i32 = arith.constant 0 : i32
    %c0_i32_0 = arith.constant 0 : i32
    return %c0_i32, %arg0 : i32, i32
  }
  func.func @transform_3(%arg0: i32, %arg1: i32) -> (i32, i32) {
    %c0_i32 = arith.constant 0 : i32
    return %arg1, %arg0 : i32, i32
  }
}

module attributes {stable_mosaic.version = 11 : i64} {
  func.func @_conv_gemm_kernel(%arg0: i32, %arg1: i32, %arg2: memref<32x128xbf16, #tpu.memory_space<vmem>>, %arg3: memref<128x128xbf16, #tpu.memory_space<vmem>>, %arg4: memref<1x128xf32, #tpu.memory_space<vmem>>, %arg5: memref<32x128xbf16, #tpu.memory_space<vmem>>, %arg6: memref<1x8x128xf32, #tpu.memory_space<vmem>>, %arg7: memref<1x8x128xf32, #tpu.memory_space<vmem>>) attributes {dimension_semantics = [#tpu.dimension_semantics<parallel>, #tpu.dimension_semantics<parallel>], iteration_bounds = array<i64: 1, 1>, scalar_prefetch = 0 : i64, scratch_operands = 0 : i64, tpu.core_type = #tpu.core_type<tc>, window_params = [{transform_indices = @transform_0, window_bounds = array<i64: 32, 128>}, {transform_indices = @transform_1, window_bounds = array<i64: 128, 128>}, {transform_indices = @transform_2, window_bounds = array<i64: 1, 128>}, {transform_indices = @transform_3, window_bounds = array<i64: 32, 128>}, {transform_indices = @transform_4, window_bounds = array<i64: 1, 8, 128>}, {transform_indices = @transform_5, window_bounds = array<i64: 1, 8, 128>}]} {
    %c0 = arith.constant 0 : index
    %c0_0 = arith.constant 0 : index
    %0 = vector.load %arg2[%c0, %c0_0] : memref<32x128xbf16, #tpu.memory_space<vmem>>, vector<32x128xbf16>
    %c0_1 = arith.constant 0 : index
    %c0_2 = arith.constant 0 : index
    %1 = vector.load %arg3[%c0_1, %c0_2] : memref<128x128xbf16, #tpu.memory_space<vmem>>, vector<128x128xbf16>
    %cst = arith.constant dense<0.000000e+00> : vector<32x128xf32>
    %2 = tpu.matmul %0, %1, %cst {dimension_numbers = #tpu.dot_dimension_numbers<[1], [0], [0], [1], [0, 0, 1, 1], [], []>} : vector<32x128xbf16>, vector<128x128xbf16>, vector<32x128xf32> -> vector<32x128xf32>
    %c0_3 = arith.constant 0 : index
    %c0_4 = arith.constant 0 : index
    %3 = vector.load %arg4[%c0_3, %c0_4] : memref<1x128xf32, #tpu.memory_space<vmem>>, vector<1x128xf32>
    %4 = vector.broadcast %3 : vector<1x128xf32> to vector<32x128xf32>
    %5 = arith.addf %2, %4 : vector<32x128xf32>
    %6 = arith.truncf %5 : vector<32x128xf32> to vector<32x128xbf16>
    %c0_5 = arith.constant 0 : index
    %c0_6 = arith.constant 0 : index
    %7 = vector.load %arg5[%c0_5, %c0_6] : memref<32x128xbf16, #tpu.memory_space<vmem>>, vector<32x128xbf16>
    tpu.vector_store %arg5[%c0_5, %c0_6], %6 {strides = array<i32>} : memref<32x128xbf16, #tpu.memory_space<vmem>>, vector<32x128xbf16>,
    %8 = tpu.iota {dimensions = array<i32: 0>} : vector<32x128xi32>
    %c32_i32 = arith.constant 32 : i32
    %9 = arith.muli %arg1, %c32_i32 : i32
    %10 = vector.broadcast %9 : i32 to vector<32x128xi32>
    %11 = arith.addi %8, %10 : vector<32x128xi32>
    %c18_i32 = arith.constant 18 : i32
    %12 = vector.broadcast %c18_i32 : i32 to vector<32x128xi32>
    %13 = arith.cmpi slt, %11, %12 : vector<32x128xi32>
    %cst_7 = arith.constant 0.000000e+00 : f32
    %14 = vector.broadcast %cst_7 : f32 to vector<32x128xf32>
    %15 = arith.select %13, %5, %14 : vector<32x128xi1>, vector<32x128xf32>
    %16 = vector.shape_cast %15 : vector<32x128xf32> to vector<4x8x128xf32>
    %cst_8 = arith.constant dense<0.000000e+00> : vector<8x128xf32>
    %17 = vector.multi_reduction <add>, %16, %cst_8 [0] : vector<4x8x128xf32> to vector<8x128xf32>
    %18 = vector.shape_cast %17 : vector<8x128xf32> to vector<1x8x128xf32>
    %c0_9 = arith.constant 0 : index
    %c0_10 = arith.constant 0 : index
    %c0_11 = arith.constant 0 : index
    %19 = vector.load %arg6[%c0_9, %c0_10, %c0_11] : memref<1x8x128xf32, #tpu.memory_space<vmem>>, vector<1x8x128xf32>
    tpu.vector_store %arg6[%c0_9, %c0_10, %c0_11], %18 {strides = array<i32>} : memref<1x8x128xf32, #tpu.memory_space<vmem>>, vector<1x8x128xf32>,
    %20 = arith.mulf %16, %16 : vector<4x8x128xf32>
    %cst_12 = arith.constant dense<0.000000e+00> : vector<8x128xf32>
    %21 = vector.multi_reduction <add>, %20, %cst_12 [0] : vector<4x8x128xf32> to vector<8x128xf32>
    %22 = vector.shape_cast %21 : vector<8x128xf32> to vector<1x8x128xf32>
    %c0_13 = arith.constant 0 : index
    %c0_14 = arith.constant 0 : index
    %c0_15 = arith.constant 0 : index
    %23 = vector.load %arg7[%c0_13, %c0_14, %c0_15] : memref<1x8x128xf32, #tpu.memory_space<vmem>>, vector<1x8x128xf32>
    tpu.vector_store %arg7[%c0_13, %c0_14, %c0_15], %22 {strides = array<i32>} : memref<1x8x128xf32, #tpu.memory_space<vmem>>, vector<1x8x128xf32>,
    return
  }
  func.func @transform_0(%arg0: i32, %arg1: i32) -> (i32, i32) {
    %c0_i32 = arith.constant 0 : i32
    %c0_i32_0 = arith.constant 0 : i32
    return %arg1, %c0_i32 : i32, i32
  }
  func.func @transform_1(%arg0: i32, %arg1: i32) -> (i32, i32) {
    %c0_i32 = arith.constant 0 : i32
    %c0_i32_0 = arith.constant 0 : i32
    return %c0_i32, %arg0 : i32, i32
  }
  func.func @transform_2(%arg0: i32, %arg1: i32) -> (i32, i32) {
    %c0_i32 = arith.constant 0 : i32
    %c0_i32_0 = arith.constant 0 : i32
    return %c0_i32, %arg0 : i32, i32
  }
  func.func @transform_3(%arg0: i32, %arg1: i32) -> (i32, i32) {
    %c0_i32 = arith.constant 0 : i32
    return %arg1, %arg0 : i32, i32
  }
  func.func @transform_4(%arg0: i32, %arg1: i32) -> (i32, i32, i32) {
    %c0_i32 = arith.constant 0 : i32
    %c0_i32_0 = arith.constant 0 : i32
    return %arg1, %c0_i32, %arg0 : i32, i32, i32
  }
  func.func @transform_5(%arg0: i32, %arg1: i32) -> (i32, i32, i32) {
    %c0_i32 = arith.constant 0 : i32
    %c0_i32_0 = arith.constant 0 : i32
    return %arg1, %c0_i32, %arg0 : i32, i32, i32
  }
}

module attributes {stable_mosaic.version = 11 : i64} {
  func.func @_conv_gemm_kernel(%arg0: i32, %arg1: i32, %arg2: memref<16x256xbf16, #tpu.memory_space<vmem>>, %arg3: memref<256x128xbf16, #tpu.memory_space<vmem>>, %arg4: memref<1x128xf32, #tpu.memory_space<vmem>>, %arg5: memref<16x128xbf16, #tpu.memory_space<vmem>>, %arg6: memref<1x8x128xf32, #tpu.memory_space<vmem>>, %arg7: memref<1x8x128xf32, #tpu.memory_space<vmem>>) attributes {dimension_semantics = [#tpu.dimension_semantics<parallel>, #tpu.dimension_semantics<parallel>], iteration_bounds = array<i64: 1, 1>, scalar_prefetch = 0 : i64, scratch_operands = 0 : i64, tpu.core_type = #tpu.core_type<tc>, window_params = [{transform_indices = @transform_0, window_bounds = array<i64: 16, 256>}, {transform_indices = @transform_1, window_bounds = array<i64: 256, 128>}, {transform_indices = @transform_2, window_bounds = array<i64: 1, 128>}, {transform_indices = @transform_3, window_bounds = array<i64: 16, 128>}, {transform_indices = @transform_4, window_bounds = array<i64: 1, 8, 128>}, {transform_indices = @transform_5, window_bounds = array<i64: 1, 8, 128>}]} {
    %c0 = arith.constant 0 : index
    %c0_0 = arith.constant 0 : index
    %0 = vector.load %arg2[%c0, %c0_0] : memref<16x256xbf16, #tpu.memory_space<vmem>>, vector<16x256xbf16>
    %c0_1 = arith.constant 0 : index
    %c0_2 = arith.constant 0 : index
    %1 = vector.load %arg3[%c0_1, %c0_2] : memref<256x128xbf16, #tpu.memory_space<vmem>>, vector<256x128xbf16>
    %cst = arith.constant dense<0.000000e+00> : vector<16x128xf32>
    %2 = tpu.matmul %0, %1, %cst {dimension_numbers = #tpu.dot_dimension_numbers<[1], [0], [0], [1], [0, 0, 1, 1], [], []>} : vector<16x256xbf16>, vector<256x128xbf16>, vector<16x128xf32> -> vector<16x128xf32>
    %c0_3 = arith.constant 0 : index
    %c0_4 = arith.constant 0 : index
    %3 = vector.load %arg4[%c0_3, %c0_4] : memref<1x128xf32, #tpu.memory_space<vmem>>, vector<1x128xf32>
    %4 = vector.broadcast %3 : vector<1x128xf32> to vector<16x128xf32>
    %5 = arith.addf %2, %4 : vector<16x128xf32>
    %6 = arith.truncf %5 : vector<16x128xf32> to vector<16x128xbf16>
    %c0_5 = arith.constant 0 : index
    %c0_6 = arith.constant 0 : index
    %7 = vector.load %arg5[%c0_5, %c0_6] : memref<16x128xbf16, #tpu.memory_space<vmem>>, vector<16x128xbf16>
    tpu.vector_store %arg5[%c0_5, %c0_6], %6 {strides = array<i32>} : memref<16x128xbf16, #tpu.memory_space<vmem>>, vector<16x128xbf16>,
    %8 = tpu.iota {dimensions = array<i32: 0>} : vector<16x128xi32>
    %c16_i32 = arith.constant 16 : i32
    %9 = arith.muli %arg1, %c16_i32 : i32
    %10 = vector.broadcast %9 : i32 to vector<16x128xi32>
    %11 = arith.addi %8, %10 : vector<16x128xi32>
    %c8_i32 = arith.constant 8 : i32
    %12 = vector.broadcast %c8_i32 : i32 to vector<16x128xi32>
    %13 = arith.cmpi slt, %11, %12 : vector<16x128xi32>
    %cst_7 = arith.constant 0.000000e+00 : f32
    %14 = vector.broadcast %cst_7 : f32 to vector<16x128xf32>
    %15 = arith.select %13, %5, %14 : vector<16x128xi1>, vector<16x128xf32>
    %16 = vector.shape_cast %15 : vector<16x128xf32> to vector<2x8x128xf32>
    %cst_8 = arith.constant dense<0.000000e+00> : vector<8x128xf32>
    %17 = vector.multi_reduction <add>, %16, %cst_8 [0] : vector<2x8x128xf32> to vector<8x128xf32>
    %18 = vector.shape_cast %17 : vector<8x128xf32> to vector<1x8x128xf32>
    %c0_9 = arith.constant 0 : index
    %c0_10 = arith.constant 0 : index
    %c0_11 = arith.constant 0 : index
    %19 = vector.load %arg6[%c0_9, %c0_10, %c0_11] : memref<1x8x128xf32, #tpu.memory_space<vmem>>, vector<1x8x128xf32>
    tpu.vector_store %arg6[%c0_9, %c0_10, %c0_11], %18 {strides = array<i32>} : memref<1x8x128xf32, #tpu.memory_space<vmem>>, vector<1x8x128xf32>,
    %20 = arith.mulf %16, %16 : vector<2x8x128xf32>
    %cst_12 = arith.constant dense<0.000000e+00> : vector<8x128xf32>
    %21 = vector.multi_reduction <add>, %20, %cst_12 [0] : vector<2x8x128xf32> to vector<8x128xf32>
    %22 = vector.shape_cast %21 : vector<8x128xf32> to vector<1x8x128xf32>
    %c0_13 = arith.constant 0 : index
    %c0_14 = arith.constant 0 : index
    %c0_15 = arith.constant 0 : index
    %23 = vector.load %arg7[%c0_13, %c0_14, %c0_15] : memref<1x8x128xf32, #tpu.memory_space<vmem>>, vector<1x8x128xf32>
    tpu.vector_store %arg7[%c0_13, %c0_14, %c0_15], %22 {strides = array<i32>} : memref<1x8x128xf32, #tpu.memory_space<vmem>>, vector<1x8x128xf32>,
    return
  }
  func.func @transform_0(%arg0: i32, %arg1: i32) -> (i32, i32) {
    %c0_i32 = arith.constant 0 : i32
    %c0_i32_0 = arith.constant 0 : i32
    return %arg1, %c0_i32 : i32, i32
  }
  func.func @transform_1(%arg0: i32, %arg1: i32) -> (i32, i32) {
    %c0_i32 = arith.constant 0 : i32
    %c0_i32_0 = arith.constant 0 : i32
    return %c0_i32, %arg0 : i32, i32
  }
  func.func @transform_2(%arg0: i32, %arg1: i32) -> (i32, i32) {
    %c0_i32 = arith.constant 0 : i32
    %c0_i32_0 = arith.constant 0 : i32
    return %c0_i32, %arg0 : i32, i32
  }
  func.func @transform_3(%arg0: i32, %arg1: i32) -> (i32, i32) {
    %c0_i32 = arith.constant 0 : i32
    return %arg1, %arg0 : i32, i32
  }
  func.func @transform_4(%arg0: i32, %arg1: i32) -> (i32, i32, i32) {
    %c0_i32 = arith.constant 0 : i32
    %c0_i32_0 = arith.constant 0 : i32
    return %arg1, %c0_i32, %arg0 : i32, i32, i32
  }
  func.func @transform_5(%arg0: i32, %arg1: i32) -> (i32, i32, i32) {
    %c0_i32 = arith.constant 0 : i32
    %c0_i32_0 = arith.constant 0 : i32
    return %arg1, %c0_i32, %arg0 : i32, i32, i32
  }
}

module attributes {stable_mosaic.version = 11 : i64} {
  func.func @_conv_gemm_kernel(%arg0: i32, %arg1: i32, %arg2: memref<32x512xbf16, #tpu.memory_space<vmem>>, %arg3: memref<512x128xbf16, #tpu.memory_space<vmem>>, %arg4: memref<1x128xf32, #tpu.memory_space<vmem>>, %arg5: memref<32x128xbf16, #tpu.memory_space<vmem>>, %arg6: memref<1x8x128xf32, #tpu.memory_space<vmem>>, %arg7: memref<1x8x128xf32, #tpu.memory_space<vmem>>) attributes {dimension_semantics = [#tpu.dimension_semantics<parallel>, #tpu.dimension_semantics<parallel>], iteration_bounds = array<i64: 1, 1>, scalar_prefetch = 0 : i64, scratch_operands = 0 : i64, tpu.core_type = #tpu.core_type<tc>, window_params = [{transform_indices = @transform_0, window_bounds = array<i64: 32, 512>}, {transform_indices = @transform_1, window_bounds = array<i64: 512, 128>}, {transform_indices = @transform_2, window_bounds = array<i64: 1, 128>}, {transform_indices = @transform_3, window_bounds = array<i64: 32, 128>}, {transform_indices = @transform_4, window_bounds = array<i64: 1, 8, 128>}, {transform_indices = @transform_5, window_bounds = array<i64: 1, 8, 128>}]} {
    %c0 = arith.constant 0 : index
    %c0_0 = arith.constant 0 : index
    %0 = vector.load %arg2[%c0, %c0_0] : memref<32x512xbf16, #tpu.memory_space<vmem>>, vector<32x512xbf16>
    %c0_1 = arith.constant 0 : index
    %c0_2 = arith.constant 0 : index
    %1 = vector.load %arg3[%c0_1, %c0_2] : memref<512x128xbf16, #tpu.memory_space<vmem>>, vector<512x128xbf16>
    %cst = arith.constant dense<0.000000e+00> : vector<32x128xf32>
    %2 = tpu.matmul %0, %1, %cst {dimension_numbers = #tpu.dot_dimension_numbers<[1], [0], [0], [1], [0, 0, 1, 1], [], []>} : vector<32x512xbf16>, vector<512x128xbf16>, vector<32x128xf32> -> vector<32x128xf32>
    %c0_3 = arith.constant 0 : index
    %c0_4 = arith.constant 0 : index
    %3 = vector.load %arg4[%c0_3, %c0_4] : memref<1x128xf32, #tpu.memory_space<vmem>>, vector<1x128xf32>
    %4 = vector.broadcast %3 : vector<1x128xf32> to vector<32x128xf32>
    %5 = arith.addf %2, %4 : vector<32x128xf32>
    %6 = arith.truncf %5 : vector<32x128xf32> to vector<32x128xbf16>
    %c0_5 = arith.constant 0 : index
    %c0_6 = arith.constant 0 : index
    %7 = vector.load %arg5[%c0_5, %c0_6] : memref<32x128xbf16, #tpu.memory_space<vmem>>, vector<32x128xbf16>
    tpu.vector_store %arg5[%c0_5, %c0_6], %6 {strides = array<i32>} : memref<32x128xbf16, #tpu.memory_space<vmem>>, vector<32x128xbf16>,
    %8 = tpu.iota {dimensions = array<i32: 0>} : vector<32x128xi32>
    %c32_i32 = arith.constant 32 : i32
    %9 = arith.muli %arg1, %c32_i32 : i32
    %10 = vector.broadcast %9 : i32 to vector<32x128xi32>
    %11 = arith.addi %8, %10 : vector<32x128xi32>
    %c18_i32 = arith.constant 18 : i32
    %12 = vector.broadcast %c18_i32 : i32 to vector<32x128xi32>
    %13 = arith.cmpi slt, %11, %12 : vector<32x128xi32>
    %cst_7 = arith.constant 0.000000e+00 : f32
    %14 = vector.broadcast %cst_7 : f32 to vector<32x128xf32>
    %15 = arith.select %13, %5, %14 : vector<32x128xi1>, vector<32x128xf32>
    %16 = vector.shape_cast %15 : vector<32x128xf32> to vector<4x8x128xf32>
    %cst_8 = arith.constant dense<0.000000e+00> : vector<8x128xf32>
    %17 = vector.multi_reduction <add>, %16, %cst_8 [0] : vector<4x8x128xf32> to vector<8x128xf32>
    %18 = vector.shape_cast %17 : vector<8x128xf32> to vector<1x8x128xf32>
    %c0_9 = arith.constant 0 : index
    %c0_10 = arith.constant 0 : index
    %c0_11 = arith.constant 0 : index
    %19 = vector.load %arg6[%c0_9, %c0_10, %c0_11] : memref<1x8x128xf32, #tpu.memory_space<vmem>>, vector<1x8x128xf32>
    tpu.vector_store %arg6[%c0_9, %c0_10, %c0_11], %18 {strides = array<i32>} : memref<1x8x128xf32, #tpu.memory_space<vmem>>, vector<1x8x128xf32>,
    %20 = arith.mulf %16, %16 : vector<4x8x128xf32>
    %cst_12 = arith.constant dense<0.000000e+00> : vector<8x128xf32>
    %21 = vector.multi_reduction <add>, %20, %cst_12 [0] : vector<4x8x128xf32> to vector<8x128xf32>
    %22 = vector.shape_cast %21 : vector<8x128xf32> to vector<1x8x128xf32>
    %c0_13 = arith.constant 0 : index
    %c0_14 = arith.constant 0 : index
    %c0_15 = arith.constant 0 : index
    %23 = vector.load %arg7[%c0_13, %c0_14, %c0_15] : memref<1x8x128xf32, #tpu.memory_space<vmem>>, vector<1x8x128xf32>
    tpu.vector_store %arg7[%c0_13, %c0_14, %c0_15], %22 {strides = array<i32>} : memref<1x8x128xf32, #tpu.memory_space<vmem>>, vector<1x8x128xf32>,
    return
  }
  func.func @transform_0(%arg0: i32, %arg1: i32) -> (i32, i32) {
    %c0_i32 = arith.constant 0 : i32
    %c0_i32_0 = arith.constant 0 : i32
    return %arg1, %c0_i32 : i32, i32
  }
  func.func @transform_1(%arg0: i32, %arg1: i32) -> (i32, i32) {
    %c0_i32 = arith.constant 0 : i32
    %c0_i32_0 = arith.constant 0 : i32
    return %c0_i32, %arg0 : i32, i32
  }
  func.func @transform_2(%arg0: i32, %arg1: i32) -> (i32, i32) {
    %c0_i32 = arith.constant 0 : i32
    %c0_i32_0 = arith.constant 0 : i32
    return %c0_i32, %arg0 : i32, i32
  }
  func.func @transform_3(%arg0: i32, %arg1: i32) -> (i32, i32) {
    %c0_i32 = arith.constant 0 : i32
    return %arg1, %arg0 : i32, i32
  }
  func.func @transform_4(%arg0: i32, %arg1: i32) -> (i32, i32, i32) {
    %c0_i32 = arith.constant 0 : i32
    %c0_i32_0 = arith.constant 0 : i32
    return %arg1, %c0_i32, %arg0 : i32, i32, i32
  }
  func.func @transform_5(%arg0: i32, %arg1: i32) -> (i32, i32, i32) {
    %c0_i32 = arith.constant 0 : i32
    %c0_i32_0 = arith.constant 0 : i32
    return %arg1, %c0_i32, %arg0 : i32, i32, i32
  }
}

module attributes {stable_mosaic.version = 11 : i64} {
  func.func @_conv_gemm_kernel(%arg0: i32, %arg1: i32, %arg2: memref<32x1024xbf16, #tpu.memory_space<vmem>>, %arg3: memref<1024x128xbf16, #tpu.memory_space<vmem>>, %arg4: memref<1x128xf32, #tpu.memory_space<vmem>>, %arg5: memref<32x128xbf16, #tpu.memory_space<vmem>>) attributes {dimension_semantics = [#tpu.dimension_semantics<parallel>, #tpu.dimension_semantics<parallel>], iteration_bounds = array<i64: 1, 1>, scalar_prefetch = 0 : i64, scratch_operands = 0 : i64, tpu.core_type = #tpu.core_type<tc>, window_params = [{transform_indices = @transform_0, window_bounds = array<i64: 32, 1024>}, {transform_indices = @transform_1, window_bounds = array<i64: 1024, 128>}, {transform_indices = @transform_2, window_bounds = array<i64: 1, 128>}, {transform_indices = @transform_3, window_bounds = array<i64: 32, 128>}]} {
    %c0 = arith.constant 0 : index
    %c0_0 = arith.constant 0 : index
    %0 = vector.load %arg2[%c0, %c0_0] : memref<32x1024xbf16, #tpu.memory_space<vmem>>, vector<32x1024xbf16>
    %c0_1 = arith.constant 0 : index
    %c0_2 = arith.constant 0 : index
    %1 = vector.load %arg3[%c0_1, %c0_2] : memref<1024x128xbf16, #tpu.memory_space<vmem>>, vector<1024x128xbf16>
    %cst = arith.constant dense<0.000000e+00> : vector<32x128xf32>
    %2 = tpu.matmul %0, %1, %cst {dimension_numbers = #tpu.dot_dimension_numbers<[1], [0], [0], [1], [0, 0, 1, 1], [], []>} : vector<32x1024xbf16>, vector<1024x128xbf16>, vector<32x128xf32> -> vector<32x128xf32>
    %c0_3 = arith.constant 0 : index
    %c0_4 = arith.constant 0 : index
    %3 = vector.load %arg4[%c0_3, %c0_4] : memref<1x128xf32, #tpu.memory_space<vmem>>, vector<1x128xf32>
    %4 = vector.broadcast %3 : vector<1x128xf32> to vector<32x128xf32>
    %5 = arith.addf %2, %4 : vector<32x128xf32>
    %6 = arith.truncf %5 : vector<32x128xf32> to vector<32x128xbf16>
    %c0_5 = arith.constant 0 : index
    %c0_6 = arith.constant 0 : index
    %7 = vector.load %arg5[%c0_5, %c0_6] : memref<32x128xbf16, #tpu.memory_space<vmem>>, vector<32x128xbf16>
    tpu.vector_store %arg5[%c0_5, %c0_6], %6 {strides = array<i32>} : memref<32x128xbf16, #tpu.memory_space<vmem>>, vector<32x128xbf16>,
    return
  }
  func.func @transform_0(%arg0: i32, %arg1: i32) -> (i32, i32) {
    %c0_i32 = arith.constant 0 : i32
    %c0_i32_0 = arith.constant 0 : i32
    return %arg1, %c0_i32 : i32, i32
  }
  func.func @transform_1(%arg0: i32, %arg1: i32) -> (i32, i32) {
    %c0_i32 = arith.constant 0 : i32
    %c0_i32_0 = arith.constant 0 : i32
    return %c0_i32, %arg0 : i32, i32
  }
  func.func @transform_2(%arg0: i32, %arg1: i32) -> (i32, i32) {
    %c0_i32 = arith.constant 0 : i32
    %c0_i32_0 = arith.constant 0 : i32
    return %c0_i32, %arg0 : i32, i32
  }
  func.func @transform_3(%arg0: i32, %arg1: i32) -> (i32, i32) {
    %c0_i32 = arith.constant 0 : i32
    return %arg1, %arg0 : i32, i32
  }
}

module attributes {stable_mosaic.version = 11 : i64} {
  func.func @_conv_gemm_kernel(%arg0: i32, %arg1: i32, %arg2: memref<96x128xbf16, #tpu.memory_space<vmem>>, %arg3: memref<128x128xbf16, #tpu.memory_space<vmem>>, %arg4: memref<1x128xf32, #tpu.memory_space<vmem>>, %arg5: memref<96x128xbf16, #tpu.memory_space<vmem>>) attributes {dimension_semantics = [#tpu.dimension_semantics<parallel>, #tpu.dimension_semantics<parallel>], iteration_bounds = array<i64: 1, 2>, scalar_prefetch = 0 : i64, scratch_operands = 0 : i64, tpu.core_type = #tpu.core_type<tc>, window_params = [{transform_indices = @transform_0, window_bounds = array<i64: 96, 128>}, {transform_indices = @transform_1, window_bounds = array<i64: 128, 128>}, {transform_indices = @transform_2, window_bounds = array<i64: 1, 128>}, {transform_indices = @transform_3, window_bounds = array<i64: 96, 128>}]} {
    %c0 = arith.constant 0 : index
    %c0_0 = arith.constant 0 : index
    %0 = vector.load %arg2[%c0, %c0_0] : memref<96x128xbf16, #tpu.memory_space<vmem>>, vector<96x128xbf16>
    %c0_1 = arith.constant 0 : index
    %c0_2 = arith.constant 0 : index
    %1 = vector.load %arg3[%c0_1, %c0_2] : memref<128x128xbf16, #tpu.memory_space<vmem>>, vector<128x128xbf16>
    %cst = arith.constant dense<0.000000e+00> : vector<96x128xf32>
    %2 = tpu.matmul %0, %1, %cst {dimension_numbers = #tpu.dot_dimension_numbers<[1], [0], [0], [1], [0, 0, 1, 1], [], []>} : vector<96x128xbf16>, vector<128x128xbf16>, vector<96x128xf32> -> vector<96x128xf32>
    %c0_3 = arith.constant 0 : index
    %c0_4 = arith.constant 0 : index
    %3 = vector.load %arg4[%c0_3, %c0_4] : memref<1x128xf32, #tpu.memory_space<vmem>>, vector<1x128xf32>
    %4 = vector.broadcast %3 : vector<1x128xf32> to vector<96x128xf32>
    %5 = arith.addf %2, %4 : vector<96x128xf32>
    %cst_5 = arith.constant 0.000000e+00 : f32
    %6 = vector.broadcast %cst_5 : f32 to vector<96x128xf32>
    %7 = arith.cmpf oge, %5, %6 : vector<96x128xf32>
    %cst_6 = arith.constant 2.000000e-01 : f32
    %8 = vector.broadcast %cst_6 : f32 to vector<96x128xf32>
    %9 = arith.mulf %8, %5 : vector<96x128xf32>
    %10 = arith.select %7, %5, %9 : vector<96x128xi1>, vector<96x128xf32>
    %11 = arith.truncf %10 : vector<96x128xf32> to vector<96x128xbf16>
    %c0_7 = arith.constant 0 : index
    %c0_8 = arith.constant 0 : index
    %12 = vector.load %arg5[%c0_7, %c0_8] : memref<96x128xbf16, #tpu.memory_space<vmem>>, vector<96x128xbf16>
    tpu.vector_store %arg5[%c0_7, %c0_8], %11 {strides = array<i32>} : memref<96x128xbf16, #tpu.memory_space<vmem>>, vector<96x128xbf16>,
    return
  }
  func.func @transform_0(%arg0: i32, %arg1: i32) -> (i32, i32) {
    %c0_i32 = arith.constant 0 : i32
    %c0_i32_0 = arith.constant 0 : i32
    return %arg1, %c0_i32 : i32, i32
  }
  func.func @transform_1(%arg0: i32, %arg1: i32) -> (i32, i32) {
    %c0_i32 = arith.constant 0 : i32
    %c0_i32_0 = arith.constant 0 : i32
    return %c0_i32, %arg0 : i32, i32
  }
  func.func @transform_2(%arg0: i32, %arg1: i32) -> (i32, i32) {
    %c0_i32 = arith.constant 0 : i32
    %c0_i32_0 = arith.constant 0 : i32
    return %c0_i32, %arg0 : i32, i32
  }
  func.func @transform_3(%arg0: i32, %arg1: i32) -> (i32, i32) {
    %c0_i32 = arith.constant 0 : i32
    return %arg1, %arg0 : i32, i32
  }
}

module attributes {stable_mosaic.version = 11 : i64} {
  func.func @_conv_gemm_kernel(%arg0: i32, %arg1: i32, %arg2: memref<64x128xbf16, #tpu.memory_space<vmem>>, %arg3: memref<128x128xbf16, #tpu.memory_space<vmem>>, %arg4: memref<1x128xf32, #tpu.memory_space<vmem>>, %arg5: memref<64x128xbf16, #tpu.memory_space<vmem>>, %arg6: memref<1x8x128xf32, #tpu.memory_space<vmem>>, %arg7: memref<1x8x128xf32, #tpu.memory_space<vmem>>) attributes {dimension_semantics = [#tpu.dimension_semantics<parallel>, #tpu.dimension_semantics<parallel>], iteration_bounds = array<i64: 1, 1>, scalar_prefetch = 0 : i64, scratch_operands = 0 : i64, tpu.core_type = #tpu.core_type<tc>, window_params = [{transform_indices = @transform_0, window_bounds = array<i64: 64, 128>}, {transform_indices = @transform_1, window_bounds = array<i64: 128, 128>}, {transform_indices = @transform_2, window_bounds = array<i64: 1, 128>}, {transform_indices = @transform_3, window_bounds = array<i64: 64, 128>}, {transform_indices = @transform_4, window_bounds = array<i64: 1, 8, 128>}, {transform_indices = @transform_5, window_bounds = array<i64: 1, 8, 128>}]} {
    %c0 = arith.constant 0 : index
    %c0_0 = arith.constant 0 : index
    %0 = vector.load %arg2[%c0, %c0_0] : memref<64x128xbf16, #tpu.memory_space<vmem>>, vector<64x128xbf16>
    %c0_1 = arith.constant 0 : index
    %c0_2 = arith.constant 0 : index
    %1 = vector.load %arg3[%c0_1, %c0_2] : memref<128x128xbf16, #tpu.memory_space<vmem>>, vector<128x128xbf16>
    %cst = arith.constant dense<0.000000e+00> : vector<64x128xf32>
    %2 = tpu.matmul %0, %1, %cst {dimension_numbers = #tpu.dot_dimension_numbers<[1], [0], [0], [1], [0, 0, 1, 1], [], []>} : vector<64x128xbf16>, vector<128x128xbf16>, vector<64x128xf32> -> vector<64x128xf32>
    %c0_3 = arith.constant 0 : index
    %c0_4 = arith.constant 0 : index
    %3 = vector.load %arg4[%c0_3, %c0_4] : memref<1x128xf32, #tpu.memory_space<vmem>>, vector<1x128xf32>
    %4 = vector.broadcast %3 : vector<1x128xf32> to vector<64x128xf32>
    %5 = arith.addf %2, %4 : vector<64x128xf32>
    %6 = arith.truncf %5 : vector<64x128xf32> to vector<64x128xbf16>
    %c0_5 = arith.constant 0 : index
    %c0_6 = arith.constant 0 : index
    %7 = vector.load %arg5[%c0_5, %c0_6] : memref<64x128xbf16, #tpu.memory_space<vmem>>, vector<64x128xbf16>
    tpu.vector_store %arg5[%c0_5, %c0_6], %6 {strides = array<i32>} : memref<64x128xbf16, #tpu.memory_space<vmem>>, vector<64x128xbf16>,
    %8 = tpu.iota {dimensions = array<i32: 0>} : vector<64x128xi32>
    %c64_i32 = arith.constant 64 : i32
    %9 = arith.muli %arg1, %c64_i32 : i32
    %10 = vector.broadcast %9 : i32 to vector<64x128xi32>
    %11 = arith.addi %8, %10 : vector<64x128xi32>
    %c50_i32 = arith.constant 50 : i32
    %12 = vector.broadcast %c50_i32 : i32 to vector<64x128xi32>
    %13 = arith.cmpi slt, %11, %12 : vector<64x128xi32>
    %cst_7 = arith.constant 0.000000e+00 : f32
    %14 = vector.broadcast %cst_7 : f32 to vector<64x128xf32>
    %15 = arith.select %13, %5, %14 : vector<64x128xi1>, vector<64x128xf32>
    %16 = vector.shape_cast %15 : vector<64x128xf32> to vector<8x8x128xf32>
    %cst_8 = arith.constant dense<0.000000e+00> : vector<8x128xf32>
    %17 = vector.multi_reduction <add>, %16, %cst_8 [0] : vector<8x8x128xf32> to vector<8x128xf32>
    %18 = vector.shape_cast %17 : vector<8x128xf32> to vector<1x8x128xf32>
    %c0_9 = arith.constant 0 : index
    %c0_10 = arith.constant 0 : index
    %c0_11 = arith.constant 0 : index
    %19 = vector.load %arg6[%c0_9, %c0_10, %c0_11] : memref<1x8x128xf32, #tpu.memory_space<vmem>>, vector<1x8x128xf32>
    tpu.vector_store %arg6[%c0_9, %c0_10, %c0_11], %18 {strides = array<i32>} : memref<1x8x128xf32, #tpu.memory_space<vmem>>, vector<1x8x128xf32>,
    %20 = arith.mulf %16, %16 : vector<8x8x128xf32>
    %cst_12 = arith.constant dense<0.000000e+00> : vector<8x128xf32>
    %21 = vector.multi_reduction <add>, %20, %cst_12 [0] : vector<8x8x128xf32> to vector<8x128xf32>
    %22 = vector.shape_cast %21 : vector<8x128xf32> to vector<1x8x128xf32>
    %c0_13 = arith.constant 0 : index
    %c0_14 = arith.constant 0 : index
    %c0_15 = arith.constant 0 : index
    %23 = vector.load %arg7[%c0_13, %c0_14, %c0_15] : memref<1x8x128xf32, #tpu.memory_space<vmem>>, vector<1x8x128xf32>
    tpu.vector_store %arg7[%c0_13, %c0_14, %c0_15], %22 {strides = array<i32>} : memref<1x8x128xf32, #tpu.memory_space<vmem>>, vector<1x8x128xf32>,
    return
  }
  func.func @transform_0(%arg0: i32, %arg1: i32) -> (i32, i32) {
    %c0_i32 = arith.constant 0 : i32
    %c0_i32_0 = arith.constant 0 : i32
    return %arg1, %c0_i32 : i32, i32
  }
  func.func @transform_1(%arg0: i32, %arg1: i32) -> (i32, i32) {
    %c0_i32 = arith.constant 0 : i32
    %c0_i32_0 = arith.constant 0 : i32
    return %c0_i32, %arg0 : i32, i32
  }
  func.func @transform_2(%arg0: i32, %arg1: i32) -> (i32, i32) {
    %c0_i32 = arith.constant 0 : i32
    %c0_i32_0 = arith.constant 0 : i32
    return %c0_i32, %arg0 : i32, i32
  }
  func.func @transform_3(%arg0: i32, %arg1: i32) -> (i32, i32) {
    %c0_i32 = arith.constant 0 : i32
    return %arg1, %arg0 : i32, i32
  }
  func.func @transform_4(%arg0: i32, %arg1: i32) -> (i32, i32, i32) {
    %c0_i32 = arith.constant 0 : i32
    %c0_i32_0 = arith.constant 0 : i32
    return %arg1, %c0_i32, %arg0 : i32, i32, i32
  }
  func.func @transform_5(%arg0: i32, %arg1: i32) -> (i32, i32, i32) {
    %c0_i32 = arith.constant 0 : i32
    %c0_i32_0 = arith.constant 0 : i32
    return %arg1, %c0_i32, %arg0 : i32, i32, i32
  }
}

module attributes {stable_mosaic.version = 11 : i64} {
  func.func @_conv_gemm_kernel(%arg0: i32, %arg1: i32, %arg2: memref<32x256xbf16, #tpu.memory_space<vmem>>, %arg3: memref<256x128xbf16, #tpu.memory_space<vmem>>, %arg4: memref<1x128xf32, #tpu.memory_space<vmem>>, %arg5: memref<32x128xbf16, #tpu.memory_space<vmem>>, %arg6: memref<1x8x128xf32, #tpu.memory_space<vmem>>, %arg7: memref<1x8x128xf32, #tpu.memory_space<vmem>>) attributes {dimension_semantics = [#tpu.dimension_semantics<parallel>, #tpu.dimension_semantics<parallel>], iteration_bounds = array<i64: 1, 1>, scalar_prefetch = 0 : i64, scratch_operands = 0 : i64, tpu.core_type = #tpu.core_type<tc>, window_params = [{transform_indices = @transform_0, window_bounds = array<i64: 32, 256>}, {transform_indices = @transform_1, window_bounds = array<i64: 256, 128>}, {transform_indices = @transform_2, window_bounds = array<i64: 1, 128>}, {transform_indices = @transform_3, window_bounds = array<i64: 32, 128>}, {transform_indices = @transform_4, window_bounds = array<i64: 1, 8, 128>}, {transform_indices = @transform_5, window_bounds = array<i64: 1, 8, 128>}]} {
    %c0 = arith.constant 0 : index
    %c0_0 = arith.constant 0 : index
    %0 = vector.load %arg2[%c0, %c0_0] : memref<32x256xbf16, #tpu.memory_space<vmem>>, vector<32x256xbf16>
    %c0_1 = arith.constant 0 : index
    %c0_2 = arith.constant 0 : index
    %1 = vector.load %arg3[%c0_1, %c0_2] : memref<256x128xbf16, #tpu.memory_space<vmem>>, vector<256x128xbf16>
    %cst = arith.constant dense<0.000000e+00> : vector<32x128xf32>
    %2 = tpu.matmul %0, %1, %cst {dimension_numbers = #tpu.dot_dimension_numbers<[1], [0], [0], [1], [0, 0, 1, 1], [], []>} : vector<32x256xbf16>, vector<256x128xbf16>, vector<32x128xf32> -> vector<32x128xf32>
    %c0_3 = arith.constant 0 : index
    %c0_4 = arith.constant 0 : index
    %3 = vector.load %arg4[%c0_3, %c0_4] : memref<1x128xf32, #tpu.memory_space<vmem>>, vector<1x128xf32>
    %4 = vector.broadcast %3 : vector<1x128xf32> to vector<32x128xf32>
    %5 = arith.addf %2, %4 : vector<32x128xf32>
    %6 = arith.truncf %5 : vector<32x128xf32> to vector<32x128xbf16>
    %c0_5 = arith.constant 0 : index
    %c0_6 = arith.constant 0 : index
    %7 = vector.load %arg5[%c0_5, %c0_6] : memref<32x128xbf16, #tpu.memory_space<vmem>>, vector<32x128xbf16>
    tpu.vector_store %arg5[%c0_5, %c0_6], %6 {strides = array<i32>} : memref<32x128xbf16, #tpu.memory_space<vmem>>, vector<32x128xbf16>,
    %8 = tpu.iota {dimensions = array<i32: 0>} : vector<32x128xi32>
    %c32_i32 = arith.constant 32 : i32
    %9 = arith.muli %arg1, %c32_i32 : i32
    %10 = vector.broadcast %9 : i32 to vector<32x128xi32>
    %11 = arith.addi %8, %10 : vector<32x128xi32>
    %c18_i32 = arith.constant 18 : i32
    %12 = vector.broadcast %c18_i32 : i32 to vector<32x128xi32>
    %13 = arith.cmpi slt, %11, %12 : vector<32x128xi32>
    %cst_7 = arith.constant 0.000000e+00 : f32
    %14 = vector.broadcast %cst_7 : f32 to vector<32x128xf32>
    %15 = arith.select %13, %5, %14 : vector<32x128xi1>, vector<32x128xf32>
    %16 = vector.shape_cast %15 : vector<32x128xf32> to vector<4x8x128xf32>
    %cst_8 = arith.constant dense<0.000000e+00> : vector<8x128xf32>
    %17 = vector.multi_reduction <add>, %16, %cst_8 [0] : vector<4x8x128xf32> to vector<8x128xf32>
    %18 = vector.shape_cast %17 : vector<8x128xf32> to vector<1x8x128xf32>
    %c0_9 = arith.constant 0 : index
    %c0_10 = arith.constant 0 : index
    %c0_11 = arith.constant 0 : index
    %19 = vector.load %arg6[%c0_9, %c0_10, %c0_11] : memref<1x8x128xf32, #tpu.memory_space<vmem>>, vector<1x8x128xf32>
    tpu.vector_store %arg6[%c0_9, %c0_10, %c0_11], %18 {strides = array<i32>} : memref<1x8x128xf32, #tpu.memory_space<vmem>>, vector<1x8x128xf32>,
    %20 = arith.mulf %16, %16 : vector<4x8x128xf32>
    %cst_12 = arith.constant dense<0.000000e+00> : vector<8x128xf32>
    %21 = vector.multi_reduction <add>, %20, %cst_12 [0] : vector<4x8x128xf32> to vector<8x128xf32>
    %22 = vector.shape_cast %21 : vector<8x128xf32> to vector<1x8x128xf32>
    %c0_13 = arith.constant 0 : index
    %c0_14 = arith.constant 0 : index
    %c0_15 = arith.constant 0 : index
    %23 = vector.load %arg7[%c0_13, %c0_14, %c0_15] : memref<1x8x128xf32, #tpu.memory_space<vmem>>, vector<1x8x128xf32>
    tpu.vector_store %arg7[%c0_13, %c0_14, %c0_15], %22 {strides = array<i32>} : memref<1x8x128xf32, #tpu.memory_space<vmem>>, vector<1x8x128xf32>,
    return
  }
  func.func @transform_0(%arg0: i32, %arg1: i32) -> (i32, i32) {
    %c0_i32 = arith.constant 0 : i32
    %c0_i32_0 = arith.constant 0 : i32
    return %arg1, %c0_i32 : i32, i32
  }
  func.func @transform_1(%arg0: i32, %arg1: i32) -> (i32, i32) {
    %c0_i32 = arith.constant 0 : i32
    %c0_i32_0 = arith.constant 0 : i32
    return %c0_i32, %arg0 : i32, i32
  }
  func.func @transform_2(%arg0: i32, %arg1: i32) -> (i32, i32) {
    %c0_i32 = arith.constant 0 : i32
    %c0_i32_0 = arith.constant 0 : i32
    return %c0_i32, %arg0 : i32, i32
  }
  func.func @transform_3(%arg0: i32, %arg1: i32) -> (i32, i32) {
    %c0_i32 = arith.constant 0 : i32
    return %arg1, %arg0 : i32, i32
  }
  func.func @transform_4(%arg0: i32, %arg1: i32) -> (i32, i32, i32) {
    %c0_i32 = arith.constant 0 : i32
    %c0_i32_0 = arith.constant 0 : i32
    return %arg1, %c0_i32, %arg0 : i32, i32, i32
  }
  func.func @transform_5(%arg0: i32, %arg1: i32) -> (i32, i32, i32) {
    %c0_i32 = arith.constant 0 : i32
    %c0_i32_0 = arith.constant 0 : i32
    return %arg1, %c0_i32, %arg0 : i32, i32, i32
  }
}

module attributes {stable_mosaic.version = 11 : i64} {
  func.func @_conv_gemm_kernel(%arg0: i32, %arg1: i32, %arg2: memref<32x512xbf16, #tpu.memory_space<vmem>>, %arg3: memref<512x128xbf16, #tpu.memory_space<vmem>>, %arg4: memref<1x128xf32, #tpu.memory_space<vmem>>, %arg5: memref<32x128xbf16, #tpu.memory_space<vmem>>, %arg6: memref<1x8x128xf32, #tpu.memory_space<vmem>>, %arg7: memref<1x8x128xf32, #tpu.memory_space<vmem>>) attributes {dimension_semantics = [#tpu.dimension_semantics<parallel>, #tpu.dimension_semantics<parallel>], iteration_bounds = array<i64: 1, 1>, scalar_prefetch = 0 : i64, scratch_operands = 0 : i64, tpu.core_type = #tpu.core_type<tc>, window_params = [{transform_indices = @transform_0, window_bounds = array<i64: 32, 512>}, {transform_indices = @transform_1, window_bounds = array<i64: 512, 128>}, {transform_indices = @transform_2, window_bounds = array<i64: 1, 128>}, {transform_indices = @transform_3, window_bounds = array<i64: 32, 128>}, {transform_indices = @transform_4, window_bounds = array<i64: 1, 8, 128>}, {transform_indices = @transform_5, window_bounds = array<i64: 1, 8, 128>}]} {
    %c0 = arith.constant 0 : index
    %c0_0 = arith.constant 0 : index
    %0 = vector.load %arg2[%c0, %c0_0] : memref<32x512xbf16, #tpu.memory_space<vmem>>, vector<32x512xbf16>
    %c0_1 = arith.constant 0 : index
    %c0_2 = arith.constant 0 : index
    %1 = vector.load %arg3[%c0_1, %c0_2] : memref<512x128xbf16, #tpu.memory_space<vmem>>, vector<512x128xbf16>
    %cst = arith.constant dense<0.000000e+00> : vector<32x128xf32>
    %2 = tpu.matmul %0, %1, %cst {dimension_numbers = #tpu.dot_dimension_numbers<[1], [0], [0], [1], [0, 0, 1, 1], [], []>} : vector<32x512xbf16>, vector<512x128xbf16>, vector<32x128xf32> -> vector<32x128xf32>
    %c0_3 = arith.constant 0 : index
    %c0_4 = arith.constant 0 : index
    %3 = vector.load %arg4[%c0_3, %c0_4] : memref<1x128xf32, #tpu.memory_space<vmem>>, vector<1x128xf32>
    %4 = vector.broadcast %3 : vector<1x128xf32> to vector<32x128xf32>
    %5 = arith.addf %2, %4 : vector<32x128xf32>
    %6 = arith.truncf %5 : vector<32x128xf32> to vector<32x128xbf16>
    %c0_5 = arith.constant 0 : index
    %c0_6 = arith.constant 0 : index
    %7 = vector.load %arg5[%c0_5, %c0_6] : memref<32x128xbf16, #tpu.memory_space<vmem>>, vector<32x128xbf16>
    tpu.vector_store %arg5[%c0_5, %c0_6], %6 {strides = array<i32>} : memref<32x128xbf16, #tpu.memory_space<vmem>>, vector<32x128xbf16>,
    %8 = tpu.iota {dimensions = array<i32: 0>} : vector<32x128xi32>
    %c32_i32 = arith.constant 32 : i32
    %9 = arith.muli %arg1, %c32_i32 : i32
    %10 = vector.broadcast %9 : i32 to vector<32x128xi32>
    %11 = arith.addi %8, %10 : vector<32x128xi32>
    %c32_i32_7 = arith.constant 32 : i32
    %12 = vector.broadcast %c32_i32_7 : i32 to vector<32x128xi32>
    %13 = arith.cmpi slt, %11, %12 : vector<32x128xi32>
    %cst_8 = arith.constant 0.000000e+00 : f32
    %14 = vector.broadcast %cst_8 : f32 to vector<32x128xf32>
    %15 = arith.select %13, %5, %14 : vector<32x128xi1>, vector<32x128xf32>
    %16 = vector.shape_cast %15 : vector<32x128xf32> to vector<4x8x128xf32>
    %cst_9 = arith.constant dense<0.000000e+00> : vector<8x128xf32>
    %17 = vector.multi_reduction <add>, %16, %cst_9 [0] : vector<4x8x128xf32> to vector<8x128xf32>
    %18 = vector.shape_cast %17 : vector<8x128xf32> to vector<1x8x128xf32>
    %c0_10 = arith.constant 0 : index
    %c0_11 = arith.constant 0 : index
    %c0_12 = arith.constant 0 : index
    %19 = vector.load %arg6[%c0_10, %c0_11, %c0_12] : memref<1x8x128xf32, #tpu.memory_space<vmem>>, vector<1x8x128xf32>
    tpu.vector_store %arg6[%c0_10, %c0_11, %c0_12], %18 {strides = array<i32>} : memref<1x8x128xf32, #tpu.memory_space<vmem>>, vector<1x8x128xf32>,
    %20 = arith.mulf %16, %16 : vector<4x8x128xf32>
    %cst_13 = arith.constant dense<0.000000e+00> : vector<8x128xf32>
    %21 = vector.multi_reduction <add>, %20, %cst_13 [0] : vector<4x8x128xf32> to vector<8x128xf32>
    %22 = vector.shape_cast %21 : vector<8x128xf32> to vector<1x8x128xf32>
    %c0_14 = arith.constant 0 : index
    %c0_15 = arith.constant 0 : index
    %c0_16 = arith.constant 0 : index
    %23 = vector.load %arg7[%c0_14, %c0_15, %c0_16] : memref<1x8x128xf32, #tpu.memory_space<vmem>>, vector<1x8x128xf32>
    tpu.vector_store %arg7[%c0_14, %c0_15, %c0_16], %22 {strides = array<i32>} : memref<1x8x128xf32, #tpu.memory_space<vmem>>, vector<1x8x128xf32>,
    return
  }
  func.func @transform_0(%arg0: i32, %arg1: i32) -> (i32, i32) {
    %c0_i32 = arith.constant 0 : i32
    %c0_i32_0 = arith.constant 0 : i32
    return %arg1, %c0_i32 : i32, i32
  }
  func.func @transform_1(%arg0: i32, %arg1: i32) -> (i32, i32) {
    %c0_i32 = arith.constant 0 : i32
    %c0_i32_0 = arith.constant 0 : i32
    return %c0_i32, %arg0 : i32, i32
  }
  func.func @transform_2(%arg0: i32, %arg1: i32) -> (i32, i32) {
    %c0_i32 = arith.constant 0 : i32
    %c0_i32_0 = arith.constant 0 : i32
    return %c0_i32, %arg0 : i32, i32
  }
  func.func @transform_3(%arg0: i32, %arg1: i32) -> (i32, i32) {
    %c0_i32 = arith.constant 0 : i32
    return %arg1, %arg0 : i32, i32
  }
  func.func @transform_4(%arg0: i32, %arg1: i32) -> (i32, i32, i32) {
    %c0_i32 = arith.constant 0 : i32
    %c0_i32_0 = arith.constant 0 : i32
    return %arg1, %c0_i32, %arg0 : i32, i32, i32
  }
  func.func @transform_5(%arg0: i32, %arg1: i32) -> (i32, i32, i32) {
    %c0_i32 = arith.constant 0 : i32
    %c0_i32_0 = arith.constant 0 : i32
    return %arg1, %c0_i32, %arg0 : i32, i32, i32
  }
}

module attributes {stable_mosaic.version = 11 : i64} {
  func.func @_conv_gemm_kernel(%arg0: i32, %arg1: i32, %arg2: memref<64x1024xbf16, #tpu.memory_space<vmem>>, %arg3: memref<1024x128xbf16, #tpu.memory_space<vmem>>, %arg4: memref<1x128xf32, #tpu.memory_space<vmem>>, %arg5: memref<64x128xbf16, #tpu.memory_space<vmem>>) attributes {dimension_semantics = [#tpu.dimension_semantics<parallel>, #tpu.dimension_semantics<parallel>], iteration_bounds = array<i64: 1, 1>, scalar_prefetch = 0 : i64, scratch_operands = 0 : i64, tpu.core_type = #tpu.core_type<tc>, window_params = [{transform_indices = @transform_0, window_bounds = array<i64: 64, 1024>}, {transform_indices = @transform_1, window_bounds = array<i64: 1024, 128>}, {transform_indices = @transform_2, window_bounds = array<i64: 1, 128>}, {transform_indices = @transform_3, window_bounds = array<i64: 64, 128>}]} {
    %c0 = arith.constant 0 : index
    %c0_0 = arith.constant 0 : index
    %0 = vector.load %arg2[%c0, %c0_0] : memref<64x1024xbf16, #tpu.memory_space<vmem>>, vector<64x1024xbf16>
    %c0_1 = arith.constant 0 : index
    %c0_2 = arith.constant 0 : index
    %1 = vector.load %arg3[%c0_1, %c0_2] : memref<1024x128xbf16, #tpu.memory_space<vmem>>, vector<1024x128xbf16>
    %cst = arith.constant dense<0.000000e+00> : vector<64x128xf32>
    %2 = tpu.matmul %0, %1, %cst {dimension_numbers = #tpu.dot_dimension_numbers<[1], [0], [0], [1], [0, 0, 1, 1], [], []>} : vector<64x1024xbf16>, vector<1024x128xbf16>, vector<64x128xf32> -> vector<64x128xf32>
    %c0_3 = arith.constant 0 : index
    %c0_4 = arith.constant 0 : index
    %3 = vector.load %arg4[%c0_3, %c0_4] : memref<1x128xf32, #tpu.memory_space<vmem>>, vector<1x128xf32>
    %4 = vector.broadcast %3 : vector<1x128xf32> to vector<64x128xf32>
    %5 = arith.addf %2, %4 : vector<64x128xf32>
    %6 = arith.truncf %5 : vector<64x128xf32> to vector<64x128xbf16>
    %c0_5 = arith.constant 0 : index
    %c0_6 = arith.constant 0 : index
    %7 = vector.load %arg5[%c0_5, %c0_6] : memref<64x128xbf16, #tpu.memory_space<vmem>>, vector<64x128xbf16>
    tpu.vector_store %arg5[%c0_5, %c0_6], %6 {strides = array<i32>} : memref<64x128xbf16, #tpu.memory_space<vmem>>, vector<64x128xbf16>,
    return
  }
  func.func @transform_0(%arg0: i32, %arg1: i32) -> (i32, i32) {
    %c0_i32 = arith.constant 0 : i32
    %c0_i32_0 = arith.constant 0 : i32
    return %arg1, %c0_i32 : i32, i32
  }
  func.func @transform_1(%arg0: i32, %arg1: i32) -> (i32, i32) {
    %c0_i32 = arith.constant 0 : i32
    %c0_i32_0 = arith.constant 0 : i32
    return %c0_i32, %arg0 : i32, i32
  }
  func.func @transform_2(%arg0: i32, %arg1: i32) -> (i32, i32) {
    %c0_i32 = arith.constant 0 : i32
    %c0_i32_0 = arith.constant 0 : i32
    return %c0_i32, %arg0 : i32, i32
  }
  func.func @transform_3(%arg0: i32, %arg1: i32) -> (i32, i32) {
    %c0_i32 = arith.constant 0 : i32
    return %arg1, %arg0 : i32, i32
  }
}

module attributes {stable_mosaic.version = 11 : i64} {
  func.func @_conv_gemm_kernel(%arg0: i32, %arg1: i32, %arg2: memref<304x128xbf16, #tpu.memory_space<vmem>>, %arg3: memref<128x128xbf16, #tpu.memory_space<vmem>>, %arg4: memref<1x128xf32, #tpu.memory_space<vmem>>, %arg5: memref<304x128xbf16, #tpu.memory_space<vmem>>) attributes {dimension_semantics = [#tpu.dimension_semantics<parallel>, #tpu.dimension_semantics<parallel>], iteration_bounds = array<i64: 1, 2>, scalar_prefetch = 0 : i64, scratch_operands = 0 : i64, tpu.core_type = #tpu.core_type<tc>, window_params = [{transform_indices = @transform_0, window_bounds = array<i64: 304, 128>}, {transform_indices = @transform_1, window_bounds = array<i64: 128, 128>}, {transform_indices = @transform_2, window_bounds = array<i64: 1, 128>}, {transform_indices = @transform_3, window_bounds = array<i64: 304, 128>}]} {
    %c0 = arith.constant 0 : index
    %c0_0 = arith.constant 0 : index
    %0 = vector.load %arg2[%c0, %c0_0] : memref<304x128xbf16, #tpu.memory_space<vmem>>, vector<304x128xbf16>
    %c0_1 = arith.constant 0 : index
    %c0_2 = arith.constant 0 : index
    %1 = vector.load %arg3[%c0_1, %c0_2] : memref<128x128xbf16, #tpu.memory_space<vmem>>, vector<128x128xbf16>
    %cst = arith.constant dense<0.000000e+00> : vector<304x128xf32>
    %2 = tpu.matmul %0, %1, %cst {dimension_numbers = #tpu.dot_dimension_numbers<[1], [0], [0], [1], [0, 0, 1, 1], [], []>} : vector<304x128xbf16>, vector<128x128xbf16>, vector<304x128xf32> -> vector<304x128xf32>
    %c0_3 = arith.constant 0 : index
    %c0_4 = arith.constant 0 : index
    %3 = vector.load %arg4[%c0_3, %c0_4] : memref<1x128xf32, #tpu.memory_space<vmem>>, vector<1x128xf32>
    %4 = vector.broadcast %3 : vector<1x128xf32> to vector<304x128xf32>
    %5 = arith.addf %2, %4 : vector<304x128xf32>
    %cst_5 = arith.constant 0.000000e+00 : f32
    %6 = vector.broadcast %cst_5 : f32 to vector<304x128xf32>
    %7 = arith.cmpf oge, %5, %6 : vector<304x128xf32>
    %cst_6 = arith.constant 2.000000e-01 : f32
    %8 = vector.broadcast %cst_6 : f32 to vector<304x128xf32>
    %9 = arith.mulf %8, %5 : vector<304x128xf32>
    %10 = arith.select %7, %5, %9 : vector<304x128xi1>, vector<304x128xf32>
    %11 = arith.truncf %10 : vector<304x128xf32> to vector<304x128xbf16>
    %c0_7 = arith.constant 0 : index
    %c0_8 = arith.constant 0 : index
    %12 = vector.load %arg5[%c0_7, %c0_8] : memref<304x128xbf16, #tpu.memory_space<vmem>>, vector<304x128xbf16>
    tpu.vector_store %arg5[%c0_7, %c0_8], %11 {strides = array<i32>} : memref<304x128xbf16, #tpu.memory_space<vmem>>, vector<304x128xbf16>,
    return
  }
  func.func @transform_0(%arg0: i32, %arg1: i32) -> (i32, i32) {
    %c0_i32 = arith.constant 0 : i32
    %c0_i32_0 = arith.constant 0 : i32
    return %arg1, %c0_i32 : i32, i32
  }
  func.func @transform_1(%arg0: i32, %arg1: i32) -> (i32, i32) {
    %c0_i32 = arith.constant 0 : i32
    %c0_i32_0 = arith.constant 0 : i32
    return %c0_i32, %arg0 : i32, i32
  }
  func.func @transform_2(%arg0: i32, %arg1: i32) -> (i32, i32) {
    %c0_i32 = arith.constant 0 : i32
    %c0_i32_0 = arith.constant 0 : i32
    return %c0_i32, %arg0 : i32, i32
  }
  func.func @transform_3(%arg0: i32, %arg1: i32) -> (i32, i32) {
    %c0_i32 = arith.constant 0 : i32
    return %arg1, %arg0 : i32, i32
  }
}

module attributes {stable_mosaic.version = 11 : i64} {
  func.func @_conv_gemm_kernel(%arg0: i32, %arg1: i32, %arg2: memref<96x128xbf16, #tpu.memory_space<vmem>>, %arg3: memref<128x128xbf16, #tpu.memory_space<vmem>>, %arg4: memref<1x128xf32, #tpu.memory_space<vmem>>, %arg5: memref<96x128xbf16, #tpu.memory_space<vmem>>, %arg6: memref<1x8x128xf32, #tpu.memory_space<vmem>>, %arg7: memref<1x8x128xf32, #tpu.memory_space<vmem>>) attributes {dimension_semantics = [#tpu.dimension_semantics<parallel>, #tpu.dimension_semantics<parallel>], iteration_bounds = array<i64: 1, 2>, scalar_prefetch = 0 : i64, scratch_operands = 0 : i64, tpu.core_type = #tpu.core_type<tc>, window_params = [{transform_indices = @transform_0, window_bounds = array<i64: 96, 128>}, {transform_indices = @transform_1, window_bounds = array<i64: 128, 128>}, {transform_indices = @transform_2, window_bounds = array<i64: 1, 128>}, {transform_indices = @transform_3, window_bounds = array<i64: 96, 128>}, {transform_indices = @transform_4, window_bounds = array<i64: 1, 8, 128>}, {transform_indices = @transform_5, window_bounds = array<i64: 1, 8, 128>}]} {
    %c0 = arith.constant 0 : index
    %c0_0 = arith.constant 0 : index
    %0 = vector.load %arg2[%c0, %c0_0] : memref<96x128xbf16, #tpu.memory_space<vmem>>, vector<96x128xbf16>
    %c0_1 = arith.constant 0 : index
    %c0_2 = arith.constant 0 : index
    %1 = vector.load %arg3[%c0_1, %c0_2] : memref<128x128xbf16, #tpu.memory_space<vmem>>, vector<128x128xbf16>
    %cst = arith.constant dense<0.000000e+00> : vector<96x128xf32>
    %2 = tpu.matmul %0, %1, %cst {dimension_numbers = #tpu.dot_dimension_numbers<[1], [0], [0], [1], [0, 0, 1, 1], [], []>} : vector<96x128xbf16>, vector<128x128xbf16>, vector<96x128xf32> -> vector<96x128xf32>
    %c0_3 = arith.constant 0 : index
    %c0_4 = arith.constant 0 : index
    %3 = vector.load %arg4[%c0_3, %c0_4] : memref<1x128xf32, #tpu.memory_space<vmem>>, vector<1x128xf32>
    %4 = vector.broadcast %3 : vector<1x128xf32> to vector<96x128xf32>
    %5 = arith.addf %2, %4 : vector<96x128xf32>
    %6 = arith.truncf %5 : vector<96x128xf32> to vector<96x128xbf16>
    %c0_5 = arith.constant 0 : index
    %c0_6 = arith.constant 0 : index
    %7 = vector.load %arg5[%c0_5, %c0_6] : memref<96x128xbf16, #tpu.memory_space<vmem>>, vector<96x128xbf16>
    tpu.vector_store %arg5[%c0_5, %c0_6], %6 {strides = array<i32>} : memref<96x128xbf16, #tpu.memory_space<vmem>>, vector<96x128xbf16>,
    %8 = tpu.iota {dimensions = array<i32: 0>} : vector<96x128xi32>
    %c96_i32 = arith.constant 96 : i32
    %9 = arith.muli %arg1, %c96_i32 : i32
    %10 = vector.broadcast %9 : i32 to vector<96x128xi32>
    %11 = arith.addi %8, %10 : vector<96x128xi32>
    %c162_i32 = arith.constant 162 : i32
    %12 = vector.broadcast %c162_i32 : i32 to vector<96x128xi32>
    %13 = arith.cmpi slt, %11, %12 : vector<96x128xi32>
    %cst_7 = arith.constant 0.000000e+00 : f32
    %14 = vector.broadcast %cst_7 : f32 to vector<96x128xf32>
    %15 = arith.select %13, %5, %14 : vector<96x128xi1>, vector<96x128xf32>
    %16 = vector.shape_cast %15 : vector<96x128xf32> to vector<12x8x128xf32>
    %cst_8 = arith.constant dense<0.000000e+00> : vector<8x128xf32>
    %17 = vector.multi_reduction <add>, %16, %cst_8 [0] : vector<12x8x128xf32> to vector<8x128xf32>
    %18 = vector.shape_cast %17 : vector<8x128xf32> to vector<1x8x128xf32>
    %c0_9 = arith.constant 0 : index
    %c0_10 = arith.constant 0 : index
    %c0_11 = arith.constant 0 : index
    %19 = vector.load %arg6[%c0_9, %c0_10, %c0_11] : memref<1x8x128xf32, #tpu.memory_space<vmem>>, vector<1x8x128xf32>
    tpu.vector_store %arg6[%c0_9, %c0_10, %c0_11], %18 {strides = array<i32>} : memref<1x8x128xf32, #tpu.memory_space<vmem>>, vector<1x8x128xf32>,
    %20 = arith.mulf %16, %16 : vector<12x8x128xf32>
    %cst_12 = arith.constant dense<0.000000e+00> : vector<8x128xf32>
    %21 = vector.multi_reduction <add>, %20, %cst_12 [0] : vector<12x8x128xf32> to vector<8x128xf32>
    %22 = vector.shape_cast %21 : vector<8x128xf32> to vector<1x8x128xf32>
    %c0_13 = arith.constant 0 : index
    %c0_14 = arith.constant 0 : index
    %c0_15 = arith.constant 0 : index
    %23 = vector.load %arg7[%c0_13, %c0_14, %c0_15] : memref<1x8x128xf32, #tpu.memory_space<vmem>>, vector<1x8x128xf32>
    tpu.vector_store %arg7[%c0_13, %c0_14, %c0_15], %22 {strides = array<i32>} : memref<1x8x128xf32, #tpu.memory_space<vmem>>, vector<1x8x128xf32>,
    return
  }
  func.func @transform_0(%arg0: i32, %arg1: i32) -> (i32, i32) {
    %c0_i32 = arith.constant 0 : i32
    %c0_i32_0 = arith.constant 0 : i32
    return %arg1, %c0_i32 : i32, i32
  }
  func.func @transform_1(%arg0: i32, %arg1: i32) -> (i32, i32) {
    %c0_i32 = arith.constant 0 : i32
    %c0_i32_0 = arith.constant 0 : i32
    return %c0_i32, %arg0 : i32, i32
  }
  func.func @transform_2(%arg0: i32, %arg1: i32) -> (i32, i32) {
    %c0_i32 = arith.constant 0 : i32
    %c0_i32_0 = arith.constant 0 : i32
    return %c0_i32, %arg0 : i32, i32
  }
  func.func @transform_3(%arg0: i32, %arg1: i32) -> (i32, i32) {
    %c0_i32 = arith.constant 0 : i32
    return %arg1, %arg0 : i32, i32
  }
  func.func @transform_4(%arg0: i32, %arg1: i32) -> (i32, i32, i32) {
    %c0_i32 = arith.constant 0 : i32
    %c0_i32_0 = arith.constant 0 : i32
    return %arg1, %c0_i32, %arg0 : i32, i32, i32
  }
  func.func @transform_5(%arg0: i32, %arg1: i32) -> (i32, i32, i32) {
    %c0_i32 = arith.constant 0 : i32
    %c0_i32_0 = arith.constant 0 : i32
    return %arg1, %c0_i32, %arg0 : i32, i32, i32
  }
}

module attributes {stable_mosaic.version = 11 : i64} {
  func.func @_conv_gemm_kernel(%arg0: i32, %arg1: i32, %arg2: memref<64x256xbf16, #tpu.memory_space<vmem>>, %arg3: memref<256x128xbf16, #tpu.memory_space<vmem>>, %arg4: memref<1x128xf32, #tpu.memory_space<vmem>>, %arg5: memref<64x128xbf16, #tpu.memory_space<vmem>>, %arg6: memref<1x8x128xf32, #tpu.memory_space<vmem>>, %arg7: memref<1x8x128xf32, #tpu.memory_space<vmem>>) attributes {dimension_semantics = [#tpu.dimension_semantics<parallel>, #tpu.dimension_semantics<parallel>], iteration_bounds = array<i64: 1, 1>, scalar_prefetch = 0 : i64, scratch_operands = 0 : i64, tpu.core_type = #tpu.core_type<tc>, window_params = [{transform_indices = @transform_0, window_bounds = array<i64: 64, 256>}, {transform_indices = @transform_1, window_bounds = array<i64: 256, 128>}, {transform_indices = @transform_2, window_bounds = array<i64: 1, 128>}, {transform_indices = @transform_3, window_bounds = array<i64: 64, 128>}, {transform_indices = @transform_4, window_bounds = array<i64: 1, 8, 128>}, {transform_indices = @transform_5, window_bounds = array<i64: 1, 8, 128>}]} {
    %c0 = arith.constant 0 : index
    %c0_0 = arith.constant 0 : index
    %0 = vector.load %arg2[%c0, %c0_0] : memref<64x256xbf16, #tpu.memory_space<vmem>>, vector<64x256xbf16>
    %c0_1 = arith.constant 0 : index
    %c0_2 = arith.constant 0 : index
    %1 = vector.load %arg3[%c0_1, %c0_2] : memref<256x128xbf16, #tpu.memory_space<vmem>>, vector<256x128xbf16>
    %cst = arith.constant dense<0.000000e+00> : vector<64x128xf32>
    %2 = tpu.matmul %0, %1, %cst {dimension_numbers = #tpu.dot_dimension_numbers<[1], [0], [0], [1], [0, 0, 1, 1], [], []>} : vector<64x256xbf16>, vector<256x128xbf16>, vector<64x128xf32> -> vector<64x128xf32>
    %c0_3 = arith.constant 0 : index
    %c0_4 = arith.constant 0 : index
    %3 = vector.load %arg4[%c0_3, %c0_4] : memref<1x128xf32, #tpu.memory_space<vmem>>, vector<1x128xf32>
    %4 = vector.broadcast %3 : vector<1x128xf32> to vector<64x128xf32>
    %5 = arith.addf %2, %4 : vector<64x128xf32>
    %6 = arith.truncf %5 : vector<64x128xf32> to vector<64x128xbf16>
    %c0_5 = arith.constant 0 : index
    %c0_6 = arith.constant 0 : index
    %7 = vector.load %arg5[%c0_5, %c0_6] : memref<64x128xbf16, #tpu.memory_space<vmem>>, vector<64x128xbf16>
    tpu.vector_store %arg5[%c0_5, %c0_6], %6 {strides = array<i32>} : memref<64x128xbf16, #tpu.memory_space<vmem>>, vector<64x128xbf16>,
    %8 = tpu.iota {dimensions = array<i32: 0>} : vector<64x128xi32>
    %c64_i32 = arith.constant 64 : i32
    %9 = arith.muli %arg1, %c64_i32 : i32
    %10 = vector.broadcast %9 : i32 to vector<64x128xi32>
    %11 = arith.addi %8, %10 : vector<64x128xi32>
    %c50_i32 = arith.constant 50 : i32
    %12 = vector.broadcast %c50_i32 : i32 to vector<64x128xi32>
    %13 = arith.cmpi slt, %11, %12 : vector<64x128xi32>
    %cst_7 = arith.constant 0.000000e+00 : f32
    %14 = vector.broadcast %cst_7 : f32 to vector<64x128xf32>
    %15 = arith.select %13, %5, %14 : vector<64x128xi1>, vector<64x128xf32>
    %16 = vector.shape_cast %15 : vector<64x128xf32> to vector<8x8x128xf32>
    %cst_8 = arith.constant dense<0.000000e+00> : vector<8x128xf32>
    %17 = vector.multi_reduction <add>, %16, %cst_8 [0] : vector<8x8x128xf32> to vector<8x128xf32>
    %18 = vector.shape_cast %17 : vector<8x128xf32> to vector<1x8x128xf32>
    %c0_9 = arith.constant 0 : index
    %c0_10 = arith.constant 0 : index
    %c0_11 = arith.constant 0 : index
    %19 = vector.load %arg6[%c0_9, %c0_10, %c0_11] : memref<1x8x128xf32, #tpu.memory_space<vmem>>, vector<1x8x128xf32>
    tpu.vector_store %arg6[%c0_9, %c0_10, %c0_11], %18 {strides = array<i32>} : memref<1x8x128xf32, #tpu.memory_space<vmem>>, vector<1x8x128xf32>,
    %20 = arith.mulf %16, %16 : vector<8x8x128xf32>
    %cst_12 = arith.constant dense<0.000000e+00> : vector<8x128xf32>
    %21 = vector.multi_reduction <add>, %20, %cst_12 [0] : vector<8x8x128xf32> to vector<8x128xf32>
    %22 = vector.shape_cast %21 : vector<8x128xf32> to vector<1x8x128xf32>
    %c0_13 = arith.constant 0 : index
    %c0_14 = arith.constant 0 : index
    %c0_15 = arith.constant 0 : index
    %23 = vector.load %arg7[%c0_13, %c0_14, %c0_15] : memref<1x8x128xf32, #tpu.memory_space<vmem>>, vector<1x8x128xf32>
    tpu.vector_store %arg7[%c0_13, %c0_14, %c0_15], %22 {strides = array<i32>} : memref<1x8x128xf32, #tpu.memory_space<vmem>>, vector<1x8x128xf32>,
    return
  }
  func.func @transform_0(%arg0: i32, %arg1: i32) -> (i32, i32) {
    %c0_i32 = arith.constant 0 : i32
    %c0_i32_0 = arith.constant 0 : i32
    return %arg1, %c0_i32 : i32, i32
  }
  func.func @transform_1(%arg0: i32, %arg1: i32) -> (i32, i32) {
    %c0_i32 = arith.constant 0 : i32
    %c0_i32_0 = arith.constant 0 : i32
    return %c0_i32, %arg0 : i32, i32
  }
  func.func @transform_2(%arg0: i32, %arg1: i32) -> (i32, i32) {
    %c0_i32 = arith.constant 0 : i32
    %c0_i32_0 = arith.constant 0 : i32
    return %c0_i32, %arg0 : i32, i32
  }
  func.func @transform_3(%arg0: i32, %arg1: i32) -> (i32, i32) {
    %c0_i32 = arith.constant 0 : i32
    return %arg1, %arg0 : i32, i32
  }
  func.func @transform_4(%arg0: i32, %arg1: i32) -> (i32, i32, i32) {
    %c0_i32 = arith.constant 0 : i32
    %c0_i32_0 = arith.constant 0 : i32
    return %arg1, %c0_i32, %arg0 : i32, i32, i32
  }
  func.func @transform_5(%arg0: i32, %arg1: i32) -> (i32, i32, i32) {
    %c0_i32 = arith.constant 0 : i32
    %c0_i32_0 = arith.constant 0 : i32
    return %arg1, %c0_i32, %arg0 : i32, i32, i32
  }
}

module attributes {stable_mosaic.version = 11 : i64} {
  func.func @_conv_gemm_kernel(%arg0: i32, %arg1: i32, %arg2: memref<48x512xbf16, #tpu.memory_space<vmem>>, %arg3: memref<512x128xbf16, #tpu.memory_space<vmem>>, %arg4: memref<1x128xf32, #tpu.memory_space<vmem>>, %arg5: memref<48x128xbf16, #tpu.memory_space<vmem>>, %arg6: memref<1x8x128xf32, #tpu.memory_space<vmem>>, %arg7: memref<1x8x128xf32, #tpu.memory_space<vmem>>) attributes {dimension_semantics = [#tpu.dimension_semantics<parallel>, #tpu.dimension_semantics<parallel>], iteration_bounds = array<i64: 1, 2>, scalar_prefetch = 0 : i64, scratch_operands = 0 : i64, tpu.core_type = #tpu.core_type<tc>, window_params = [{transform_indices = @transform_0, window_bounds = array<i64: 48, 512>}, {transform_indices = @transform_1, window_bounds = array<i64: 512, 128>}, {transform_indices = @transform_2, window_bounds = array<i64: 1, 128>}, {transform_indices = @transform_3, window_bounds = array<i64: 48, 128>}, {transform_indices = @transform_4, window_bounds = array<i64: 1, 8, 128>}, {transform_indices = @transform_5, window_bounds = array<i64: 1, 8, 128>}]} {
    %c0 = arith.constant 0 : index
    %c0_0 = arith.constant 0 : index
    %0 = vector.load %arg2[%c0, %c0_0] : memref<48x512xbf16, #tpu.memory_space<vmem>>, vector<48x512xbf16>
    %c0_1 = arith.constant 0 : index
    %c0_2 = arith.constant 0 : index
    %1 = vector.load %arg3[%c0_1, %c0_2] : memref<512x128xbf16, #tpu.memory_space<vmem>>, vector<512x128xbf16>
    %cst = arith.constant dense<0.000000e+00> : vector<48x128xf32>
    %2 = tpu.matmul %0, %1, %cst {dimension_numbers = #tpu.dot_dimension_numbers<[1], [0], [0], [1], [0, 0, 1, 1], [], []>} : vector<48x512xbf16>, vector<512x128xbf16>, vector<48x128xf32> -> vector<48x128xf32>
    %c0_3 = arith.constant 0 : index
    %c0_4 = arith.constant 0 : index
    %3 = vector.load %arg4[%c0_3, %c0_4] : memref<1x128xf32, #tpu.memory_space<vmem>>, vector<1x128xf32>
    %4 = vector.broadcast %3 : vector<1x128xf32> to vector<48x128xf32>
    %5 = arith.addf %2, %4 : vector<48x128xf32>
    %6 = arith.truncf %5 : vector<48x128xf32> to vector<48x128xbf16>
    %c0_5 = arith.constant 0 : index
    %c0_6 = arith.constant 0 : index
    %7 = vector.load %arg5[%c0_5, %c0_6] : memref<48x128xbf16, #tpu.memory_space<vmem>>, vector<48x128xbf16>
    tpu.vector_store %arg5[%c0_5, %c0_6], %6 {strides = array<i32>} : memref<48x128xbf16, #tpu.memory_space<vmem>>, vector<48x128xbf16>,
    %8 = tpu.iota {dimensions = array<i32: 0>} : vector<48x128xi32>
    %c48_i32 = arith.constant 48 : i32
    %9 = arith.muli %arg1, %c48_i32 : i32
    %10 = vector.broadcast %9 : i32 to vector<48x128xi32>
    %11 = arith.addi %8, %10 : vector<48x128xi32>
    %c72_i32 = arith.constant 72 : i32
    %12 = vector.broadcast %c72_i32 : i32 to vector<48x128xi32>
    %13 = arith.cmpi slt, %11, %12 : vector<48x128xi32>
    %cst_7 = arith.constant 0.000000e+00 : f32
    %14 = vector.broadcast %cst_7 : f32 to vector<48x128xf32>
    %15 = arith.select %13, %5, %14 : vector<48x128xi1>, vector<48x128xf32>
    %16 = vector.shape_cast %15 : vector<48x128xf32> to vector<6x8x128xf32>
    %cst_8 = arith.constant dense<0.000000e+00> : vector<8x128xf32>
    %17 = vector.multi_reduction <add>, %16, %cst_8 [0] : vector<6x8x128xf32> to vector<8x128xf32>
    %18 = vector.shape_cast %17 : vector<8x128xf32> to vector<1x8x128xf32>
    %c0_9 = arith.constant 0 : index
    %c0_10 = arith.constant 0 : index
    %c0_11 = arith.constant 0 : index
    %19 = vector.load %arg6[%c0_9, %c0_10, %c0_11] : memref<1x8x128xf32, #tpu.memory_space<vmem>>, vector<1x8x128xf32>
    tpu.vector_store %arg6[%c0_9, %c0_10, %c0_11], %18 {strides = array<i32>} : memref<1x8x128xf32, #tpu.memory_space<vmem>>, vector<1x8x128xf32>,
    %20 = arith.mulf %16, %16 : vector<6x8x128xf32>
    %cst_12 = arith.constant dense<0.000000e+00> : vector<8x128xf32>
    %21 = vector.multi_reduction <add>, %20, %cst_12 [0] : vector<6x8x128xf32> to vector<8x128xf32>
    %22 = vector.shape_cast %21 : vector<8x128xf32> to vector<1x8x128xf32>
    %c0_13 = arith.constant 0 : index
    %c0_14 = arith.constant 0 : index
    %c0_15 = arith.constant 0 : index
    %23 = vector.load %arg7[%c0_13, %c0_14, %c0_15] : memref<1x8x128xf32, #tpu.memory_space<vmem>>, vector<1x8x128xf32>
    tpu.vector_store %arg7[%c0_13, %c0_14, %c0_15], %22 {strides = array<i32>} : memref<1x8x128xf32, #tpu.memory_space<vmem>>, vector<1x8x128xf32>,
    return
  }
  func.func @transform_0(%arg0: i32, %arg1: i32) -> (i32, i32) {
    %c0_i32 = arith.constant 0 : i32
    %c0_i32_0 = arith.constant 0 : i32
    return %arg1, %c0_i32 : i32, i32
  }
  func.func @transform_1(%arg0: i32, %arg1: i32) -> (i32, i32) {
    %c0_i32 = arith.constant 0 : i32
    %c0_i32_0 = arith.constant 0 : i32
    return %c0_i32, %arg0 : i32, i32
  }
  func.func @transform_2(%arg0: i32, %arg1: i32) -> (i32, i32) {
    %c0_i32 = arith.constant 0 : i32
    %c0_i32_0 = arith.constant 0 : i32
    return %c0_i32, %arg0 : i32, i32
  }
  func.func @transform_3(%arg0: i32, %arg1: i32) -> (i32, i32) {
    %c0_i32 = arith.constant 0 : i32
    return %arg1, %arg0 : i32, i32
  }
  func.func @transform_4(%arg0: i32, %arg1: i32) -> (i32, i32, i32) {
    %c0_i32 = arith.constant 0 : i32
    %c0_i32_0 = arith.constant 0 : i32
    return %arg1, %c0_i32, %arg0 : i32, i32, i32
  }
  func.func @transform_5(%arg0: i32, %arg1: i32) -> (i32, i32, i32) {
    %c0_i32 = arith.constant 0 : i32
    %c0_i32_0 = arith.constant 0 : i32
    return %arg1, %c0_i32, %arg0 : i32, i32, i32
  }
}

module attributes {stable_mosaic.version = 11 : i64} {
  func.func @_conv_gemm_kernel(%arg0: i32, %arg1: i32, %arg2: memref<64x1024xbf16, #tpu.memory_space<vmem>>, %arg3: memref<1024x128xbf16, #tpu.memory_space<vmem>>, %arg4: memref<1x128xf32, #tpu.memory_space<vmem>>, %arg5: memref<64x128xbf16, #tpu.memory_space<vmem>>) attributes {dimension_semantics = [#tpu.dimension_semantics<parallel>, #tpu.dimension_semantics<parallel>], iteration_bounds = array<i64: 1, 2>, scalar_prefetch = 0 : i64, scratch_operands = 0 : i64, tpu.core_type = #tpu.core_type<tc>, window_params = [{transform_indices = @transform_0, window_bounds = array<i64: 64, 1024>}, {transform_indices = @transform_1, window_bounds = array<i64: 1024, 128>}, {transform_indices = @transform_2, window_bounds = array<i64: 1, 128>}, {transform_indices = @transform_3, window_bounds = array<i64: 64, 128>}]} {
    %c0 = arith.constant 0 : index
    %c0_0 = arith.constant 0 : index
    %0 = vector.load %arg2[%c0, %c0_0] : memref<64x1024xbf16, #tpu.memory_space<vmem>>, vector<64x1024xbf16>
    %c0_1 = arith.constant 0 : index
    %c0_2 = arith.constant 0 : index
    %1 = vector.load %arg3[%c0_1, %c0_2] : memref<1024x128xbf16, #tpu.memory_space<vmem>>, vector<1024x128xbf16>
    %cst = arith.constant dense<0.000000e+00> : vector<64x128xf32>
    %2 = tpu.matmul %0, %1, %cst {dimension_numbers = #tpu.dot_dimension_numbers<[1], [0], [0], [1], [0, 0, 1, 1], [], []>} : vector<64x1024xbf16>, vector<1024x128xbf16>, vector<64x128xf32> -> vector<64x128xf32>
    %c0_3 = arith.constant 0 : index
    %c0_4 = arith.constant 0 : index
    %3 = vector.load %arg4[%c0_3, %c0_4] : memref<1x128xf32, #tpu.memory_space<vmem>>, vector<1x128xf32>
    %4 = vector.broadcast %3 : vector<1x128xf32> to vector<64x128xf32>
    %5 = arith.addf %2, %4 : vector<64x128xf32>
    %6 = arith.truncf %5 : vector<64x128xf32> to vector<64x128xbf16>
    %c0_5 = arith.constant 0 : index
    %c0_6 = arith.constant 0 : index
    %7 = vector.load %arg5[%c0_5, %c0_6] : memref<64x128xbf16, #tpu.memory_space<vmem>>, vector<64x128xbf16>
    tpu.vector_store %arg5[%c0_5, %c0_6], %6 {strides = array<i32>} : memref<64x128xbf16, #tpu.memory_space<vmem>>, vector<64x128xbf16>,
    return
  }
  func.func @transform_0(%arg0: i32, %arg1: i32) -> (i32, i32) {
    %c0_i32 = arith.constant 0 : i32
    %c0_i32_0 = arith.constant 0 : i32
    return %arg1, %c0_i32 : i32, i32
  }
  func.func @transform_1(%arg0: i32, %arg1: i32) -> (i32, i32) {
    %c0_i32 = arith.constant 0 : i32
    %c0_i32_0 = arith.constant 0 : i32
    return %c0_i32, %arg0 : i32, i32
  }
  func.func @transform_2(%arg0: i32, %arg1: i32) -> (i32, i32) {
    %c0_i32 = arith.constant 0 : i32
    %c0_i32_0 = arith.constant 0 : i32
    return %c0_i32, %arg0 : i32, i32
  }
  func.func @transform_3(%arg0: i32, %arg1: i32) -> (i32, i32) {
    %c0_i32 = arith.constant 0 : i32
    return %arg1, %arg0 : i32, i32
  }
}

</mosaic_0001>

<llo_original>
// kernel: multiscale_forward_pallas.25
$region0: #{multiscale_forward_pallas.25}
  #allocation0 [shape = 'u32[]', space=smem, size = 0x4, offset = 0x4, fixed_abs, tag = 'smem constant byte address 0x4 - core index']
  #allocation1 [shape = 'u32[72,128]{1,0:T(1,128)}', space=vmem, size = 0x9000, scoped, tag = 'internal scratch']
  %s0 = inlined_call_operand.vmem [shape: bf16[64,128], index: 0, kind: input, shape index: {}]
  %s1 = inlined_call_operand.vmem [shape: bf16[128,128], index: 1, kind: input, shape index: {}]
  %s2 = inlined_call_operand.vmem [shape: f32[1,128], index: 2, kind: input, shape index: {}]
  %s3 = inlined_call_operand.vmem [shape: bf16[64,128], index: 3, kind: output, shape index: {}]
  %s4 = sld [smem:[#allocation0]]
  $region22: #{multiscale_forward_pallas.25} parent=0
    _
  %s6 = ssub.s32 1, %s4
  %s7 = scalar_select 0, %s6, %s4
  // Predicated region
  $region2: #{multiscale_forward_pallas.25} parent=0 // pred_check
    _
  $region3: #{multiscale_forward_pallas.25} parent=0 // pred_check_branch
    %9 = sbr.rel (0) target = $region5
  $region4: #{multiscale_forward_pallas.25} parent=0 // pred_region
    _
  $region5: #{multiscale_forward_pallas.25} parent=0 // pred_fallthru
    _
  // Predicated region
  $region6: #{multiscale_forward_pallas.25} parent=0 // pred_check
    _
  $region7: #{multiscale_forward_pallas.25} parent=0 // pred_check_branch
    %11 = sbr.rel (0) target = $region9
  $region8: #{multiscale_forward_pallas.25} parent=0 // pred_region
    _
  $region9: #{multiscale_forward_pallas.25} parent=0 // pred_fallthru
    _
  // Predicated region
  $region10: #{multiscale_forward_pallas.25} parent=0 // pred_check
    _
  $region11: #{multiscale_forward_pallas.25} parent=0 // pred_check_branch
    %13 = sbr.rel (0) target = $region13
  $region12: #{multiscale_forward_pallas.25} parent=0 // pred_region
    _
  $region13: #{multiscale_forward_pallas.25} parent=0 // pred_fallthru
    _
  %v14 = vld [vmem:[%s0] sm:$0xf]
  %v15 = vld [vmem:[%s0 + $0x4] sm:$0xf]
  %v16 = vld [vmem:[%s0 + $0x8] sm:$0xf]
  %v17 = vld [vmem:[%s0 + $0xc] sm:$0xf]
  %v18 = vld [vmem:[%s0 + $0x10] sm:$0xf]
  %v19 = vld [vmem:[%s0 + $0x14] sm:$0xf]
  %v20 = vld [vmem:[%s0 + $0x18] sm:$0xf]
  %v21 = vld [vmem:[%s0 + $0x1c] sm:$0xf]
  %v22 = vld [vmem:[%s1] sm:$0xf]
  %v23 = vld [vmem:[%s1 + $0x4] sm:$0xf]
  %v24 = vld [vmem:[%s1 + $0x8] sm:$0xf]
  %v25 = vld [vmem:[%s1 + $0xc] sm:$0xf]
  %v26 = vld [vmem:[%s1 + $0x10] sm:$0xf]
  %v27 = vld [vmem:[%s1 + $0x14] sm:$0xf]
  %v28 = vld [vmem:[%s1 + $0x18] sm:$0xf]
  %v29 = vld [vmem:[%s1 + $0x1c] sm:$0xf]
  %v30 = vld [vmem:[%s1 + $0x20] sm:$0xf]
  %v31 = vld [vmem:[%s1 + $0x24] sm:$0xf]
  %v32 = vld [vmem:[%s1 + $0x28] sm:$0xf]
  %v33 = vld [vmem:[%s1 + $0x2c] sm:$0xf]
  %v34 = vld [vmem:[%s1 + $0x30] sm:$0xf]
  %v35 = vld [vmem:[%s1 + $0x34] sm:$0xf]
  %v36 = vld [vmem:[%s1 + $0x38] sm:$0xf]
  %v37 = vld [vmem:[%s1 + $0x3c] sm:$0xf]
  %v38 = vld [vmem:[%s2] sm:$0x1]
  %v40 = vperm.slane %v38, 0
  %v50 = vunpack.c.l.b16 %v14
  %v51 = vunpack.c.l.b16 %v15
  %v52 = vunpack.c.l.b16 %v16
  %v53 = vunpack.c.l.b16 %v17
  %v54 = vunpack.c.l.b16 %v18
  %v55 = vunpack.c.l.b16 %v19
  %v56 = vunpack.c.l.b16 %v20
  %v57 = vunpack.c.l.b16 %v21
  %v58 = vpack.c.b16 %v51, %v50
  %v59 = vpack.c.b16 %v53, %v52
  %v60 = vpack.c.b16 %v55, %v54
  %v61 = vpack.c.b16 %v57, %v56
  %v82 = vunpack.c.l.b16 %v22
  %v83 = vunpack.c.l.b16 %v23
  %v84 = vunpack.c.l.b16 %v24
  %v85 = vunpack.c.l.b16 %v25
  %v86 = vunpack.c.l.b16 %v26
  %v87 = vunpack.c.l.b16 %v27
  %v88 = vunpack.c.l.b16 %v28
  %v89 = vunpack.c.l.b16 %v29
  %v90 = vunpack.c.l.b16 %v30
  %v91 = vunpack.c.l.b16 %v31
  %v92 = vunpack.c.l.b16 %v32
  %v93 = vunpack.c.l.b16 %v33
  %v94 = vunpack.c.l.b16 %v34
  %v95 = vunpack.c.l.b16 %v35
  %v96 = vunpack.c.l.b16 %v36
  %v97 = vunpack.c.l.b16 %v37
  %v98 = vpack.c.b16 %v83, %v82
  %v99 = vpack.c.b16 %v85, %v84
  %v100 = vpack.c.b16 %v87, %v86
  %v101 = vpack.c.b16 %v89, %v88
  %v102 = vpack.c.b16 %v91, %v90
  %v103 = vpack.c.b16 %v93, %v92
  %v104 = vpack.c.b16 %v95, %v94
  %v105 = vpack.c.b16 %v97, %v96
  %114 = vmatpush.bf16.msra.mxu0 %v105
  %115 = vmatpush.bf16.msra.mxu0 %v104
  %116 = vmatpush.bf16.msra.mxu0 %v103
  %117 = vmatpush.bf16.msra.mxu0 %v102
  %118 = vmatpush.bf16.msra.mxu0 %v101
  %119 = vmatpush.bf16.msra.mxu0 %v100
  %120 = vmatpush.bf16.msra.mxu0 %v99
  %121 = vmatpush.bf16.msra.mxu0 %v98
  %122 = vmatmul.bf16.gmra.mxu0 %v58
  %v123 = vpop.f32.mrf.mxu0
  %v124 = vadd.f32 %v40, %v123
  %v125 = vpop.f32.mrf.mxu0
  %v126 = vadd.f32 %v40, %v125
  %127 = vmatmul.bf16.gmra.mxu0 %v59
  %v128 = vpop.f32.mrf.mxu0
  %v129 = vadd.f32 %v40, %v128
  %v130 = vpop.f32.mrf.mxu0
  %v131 = vadd.f32 %v40, %v130
  %132 = vmatmul.bf16.gmra.mxu0 %v60
  %v133 = vpop.f32.mrf.mxu0
  %v134 = vadd.f32 %v40, %v133
  %v135 = vpop.f32.mrf.mxu0
  %v136 = vadd.f32 %v40, %v135
  %137 = vmatmul.bf16.gmra.mxu0 %v61
  %v138 = vpop.f32.mrf.mxu0
  %v139 = vadd.f32 %v40, %v138
  %v140 = vpop.f32.mrf.mxu0
  %v141 = vadd.f32 %v40, %v140
  %142 = vdwg.mxu0
  %vm143 = vcmp.ge.f32.partialorder %v124, 0.0
  %vm144 = vcmp.ge.f32.partialorder %v126, 0.0
  %vm145 = vcmp.ge.f32.partialorder %v129, 0.0
  %vm146 = vcmp.ge.f32.partialorder %v131, 0.0
  %vm147 = vcmp.ge.f32.partialorder %v134, 0.0
  %vm148 = vcmp.ge.f32.partialorder %v136, 0.0
  %vm149 = vcmp.ge.f32.partialorder %v139, 0.0
  %vm150 = vcmp.ge.f32.partialorder %v141, 0.0
  %v151 = vmul.f32 %v124, 0.2
  %v152 = vmul.f32 %v126, 0.2
  %v153 = vmul.f32 %v129, 0.2
  %v154 = vmul.f32 %v131, 0.2
  %v155 = vmul.f32 %v134, 0.2
  %v156 = vmul.f32 %v136, 0.2
  %v157 = vmul.f32 %v139, 0.2
  %v158 = vmul.f32 %v141, 0.2
  %v159 = vsel %vm143, %v124, %v151
  %v160 = vsel %vm144, %v126, %v152
  %v161 = vsel %vm145, %v129, %v153
  %v162 = vsel %vm146, %v131, %v154
  %v163 = vsel %vm147, %v134, %v155
  %v164 = vsel %vm148, %v136, %v156
  %v165 = vsel %vm149, %v139, %v157
  %v166 = vsel %vm150, %v141, %v158
  %v167 = vpack.c.bf16 %v159, %v159
  %v168 = vpack.c.bf16 %v160, %v160
  %v169 = vpack.c.bf16 %v161, %v161
  %v170 = vpack.c.bf16 %v162, %v162
  %v171 = vpack.c.bf16 %v163, %v163
  %v172 = vpack.c.bf16 %v164, %v164
  %v173 = vpack.c.bf16 %v165, %v165
  %v174 = vpack.c.bf16 %v166, %v166
  %175 = vst [vmem:[%s3] sm:$0xf] %v167
  %176 = vst [vmem:[%s3 + $0x4] sm:$0xf] %v168
  %177 = vst [vmem:[%s3 + $0x8] sm:$0xf] %v169
  %178 = vst [vmem:[%s3 + $0xc] sm:$0xf] %v170
  %179 = vst [vmem:[%s3 + $0x10] sm:$0xf] %v171
  %180 = vst [vmem:[%s3 + $0x14] sm:$0xf] %v172
  %181 = vst [vmem:[%s3 + $0x18] sm:$0xf] %v173
  %182 = vst [vmem:[%s3 + $0x1c] sm:$0xf] %v174
  // Predicated region
  $region14: #{multiscale_forward_pallas.25} parent=0 // pred_check
    _
  $region15: #{multiscale_forward_pallas.25} parent=0 // pred_check_branch
    %184 = sbr.rel (0) target = $region17
  $region16: #{multiscale_forward_pallas.25} parent=0 // pred_region
    _
  $region17: #{multiscale_forward_pallas.25} parent=0 // pred_fallthru
    _
  // Predicated region
  $region18: #{multiscale_forward_pallas.25} parent=0 // pred_check
    _
  $region19: #{multiscale_forward_pallas.25} parent=0 // pred_check_branch
    %186 = sbr.rel (0) target = $region21
  $region20: #{multiscale_forward_pallas.25} parent=0 // pred_region
    _
  $region21: #{multiscale_forward_pallas.25} parent=0 // pred_fallthru
    _

// kernel: multiscale_forward_pallas.26
$region0: #{multiscale_forward_pallas.26}
  #allocation0 [shape = 'u32[]', space=smem, size = 0x4, offset = 0x4, fixed_abs, tag = 'smem constant byte address 0x4 - core index']
  #allocation1 [shape = 'u32[72,128]{1,0:T(1,128)}', space=vmem, size = 0x9000, scoped, tag = 'internal scratch']
  %s0 = inlined_call_operand.vmem [shape: bf16[32,128], index: 0, kind: input, shape index: {}]
  %s1 = inlined_call_operand.vmem [shape: bf16[128,128], index: 1, kind: input, shape index: {}]
  %s2 = inlined_call_operand.vmem [shape: f32[1,128], index: 2, kind: input, shape index: {}]
  %s3 = inlined_call_operand.vmem [shape: bf16[32,128], index: 3, kind: output, shape index: {0}]
  %s4 = inlined_call_operand.vmem [shape: f32[1,8,128], index: 4, kind: output, shape index: {1}]
  %s5 = inlined_call_operand.vmem [shape: f32[1,8,128], index: 5, kind: output, shape index: {2}]
  %6 = xla_tuple %s3, %s4, %s5
  %s7 = sld [smem:[#allocation0]]
  $region38: #{multiscale_forward_pallas.26} parent=0
    _
  %s9 = ssub.s32 1, %s7
  %s10 = scalar_select 0, %s9, %s7
  // Predicated region
  $region2: #{multiscale_forward_pallas.26} parent=0 // pred_check
    _
  $region3: #{multiscale_forward_pallas.26} parent=0 // pred_check_branch
    %12 = sbr.rel (0) target = $region5
  $region4: #{multiscale_forward_pallas.26} parent=0 // pred_region
    _
  $region5: #{multiscale_forward_pallas.26} parent=0 // pred_fallthru
    _
  // Predicated region
  $region6: #{multiscale_forward_pallas.26} parent=0 // pred_check
    _
  $region7: #{multiscale_forward_pallas.26} parent=0 // pred_check_branch
    %14 = sbr.rel (0) target = $region9
  $region8: #{multiscale_forward_pallas.26} parent=0 // pred_region
    _
  $region9: #{multiscale_forward_pallas.26} parent=0 // pred_fallthru
    _
  // Predicated region
  $region10: #{multiscale_forward_pallas.26} parent=0 // pred_check
    _
  $region11: #{multiscale_forward_pallas.26} parent=0 // pred_check_branch
    %16 = sbr.rel (0) target = $region13
  $region12: #{multiscale_forward_pallas.26} parent=0 // pred_region
    _
  $region13: #{multiscale_forward_pallas.26} parent=0 // pred_fallthru
    _
  %v17 = vld [vmem:[%s0] sm:$0xf]
  %v18 = vld [vmem:[%s0 + $0x4] sm:$0xf]
  %v19 = vld [vmem:[%s0 + $0x8] sm:$0xf]
  %v20 = vld [vmem:[%s0 + $0xc] sm:$0xf]
  %v21 = vld [vmem:[%s1] sm:$0xf]
  %v22 = vld [vmem:[%s1 + $0x4] sm:$0xf]
  %v23 = vld [vmem:[%s1 + $0x8] sm:$0xf]
  %v24 = vld [vmem:[%s1 + $0xc] sm:$0xf]
  %v25 = vld [vmem:[%s1 + $0x10] sm:$0xf]
  %v26 = vld [vmem:[%s1 + $0x14] sm:$0xf]
  %v27 = vld [vmem:[%s1 + $0x18] sm:$0xf]
  %v28 = vld [vmem:[%s1 + $0x1c] sm:$0xf]
  %v29 = vld [vmem:[%s1 + $0x20] sm:$0xf]
  %v30 = vld [vmem:[%s1 + $0x24] sm:$0xf]
  %v31 = vld [vmem:[%s1 + $0x28] sm:$0xf]
  %v32 = vld [vmem:[%s1 + $0x2c] sm:$0xf]
  %v33 = vld [vmem:[%s1 + $0x30] sm:$0xf]
  %v34 = vld [vmem:[%s1 + $0x34] sm:$0xf]
  %v35 = vld [vmem:[%s1 + $0x38] sm:$0xf]
  %v36 = vld [vmem:[%s1 + $0x3c] sm:$0xf]
  %v37 = vld [vmem:[%s2] sm:$0x1]
  %v39 = vperm.slane %v37, 0
  %v45 = vunpack.c.l.b16 %v17
  %v46 = vunpack.c.l.b16 %v18
  %v47 = vunpack.c.l.b16 %v19
  %v48 = vunpack.c.l.b16 %v20
  %v49 = vpack.c.b16 %v46, %v45
  %v50 = vpack.c.b16 %v48, %v47
  %v69 = vunpack.c.l.b16 %v21
  %v70 = vunpack.c.l.b16 %v22
  %v71 = vunpack.c.l.b16 %v23
  %v72 = vunpack.c.l.b16 %v24
  %v73 = vunpack.c.l.b16 %v25
  %v74 = vunpack.c.l.b16 %v26
  %v75 = vunpack.c.l.b16 %v27
  %v76 = vunpack.c.l.b16 %v28
  %v77 = vunpack.c.l.b16 %v29
  %v78 = vunpack.c.l.b16 %v30
  %v79 = vunpack.c.l.b16 %v31
  %v80 = vunpack.c.l.b16 %v32
  %v81 = vunpack.c.l.b16 %v33
  %v82 = vunpack.c.l.b16 %v34
  %v83 = vunpack.c.l.b16 %v35
  %v84 = vunpack.c.l.b16 %v36
  %v85 = vpack.c.b16 %v70, %v69
  %v86 = vpack.c.b16 %v72, %v71
  %v87 = vpack.c.b16 %v74, %v73
  %v88 = vpack.c.b16 %v76, %v75
  %v89 = vpack.c.b16 %v78, %v77
  %v90 = vpack.c.b16 %v80, %v79
  %v91 = vpack.c.b16 %v82, %v81
  %v92 = vpack.c.b16 %v84, %v83
  %101 = vmatpush.bf16.msra.mxu0 %v92
  %102 = vmatpush.bf16.msra.mxu0 %v91
  %103 = vmatpush.bf16.msra.mxu0 %v90
  %104 = vmatpush.bf16.msra.mxu0 %v89
  %105 = vmatpush.bf16.msra.mxu0 %v88
  %106 = vmatpush.bf16.msra.mxu0 %v87
  %107 = vmatpush.bf16.msra.mxu0 %v86
  %108 = vmatpush.bf16.msra.mxu0 %v85
  %109 = vmatmul.bf16.gmra.mxu0 %v49
  %v110 = vpop.f32.mrf.mxu0
  %v111 = vadd.f32 %v39, %v110
  %v112 = vpop.f32.mrf.mxu0
  %v113 = vadd.f32 %v39, %v112
  %114 = vmatmul.bf16.gmra.mxu0 %v50
  %v115 = vpop.f32.mrf.mxu0
  %v116 = vadd.f32 %v39, %v115
  %v117 = vpop.f32.mrf.mxu0
  %v118 = vadd.f32 %v39, %v117
  %119 = vdwg.mxu0
  %v120 = vpack.c.bf16 %v111, %v111
  %v121 = vpack.c.bf16 %v113, %v113
  %v122 = vpack.c.bf16 %v116, %v116
  %v123 = vpack.c.bf16 %v118, %v118
  %124 = vst [vmem:[%s3] sm:$0xf] %v120
  %125 = vst [vmem:[%s3 + $0x4] sm:$0xf] %v121
  %126 = vst [vmem:[%s3 + $0x8] sm:$0xf] %v122
  %127 = vst [vmem:[%s3 + $0xc] sm:$0xf] %v123
  %v128 = vlaneseq
  %v129 = vshrl.u32 %v128, 7
  %v130 = vadd.s32 %v129, 8
  %v131 = vadd.s32 %v129, 16
  %v132 = vadd.s32 %v129, 24
  %s133 = smul.u32 0, 32
  %v134 = vstv %s133
  %v135 = vadd.s32 %v129, %v134
  %v136 = vadd.s32 %v130, %v134
  %v137 = vadd.s32 %v131, %v134
  %v138 = vadd.s32 %v132, %v134
  %vm139 = vcmp.lt.s32.totalorder %v135, 18
  %vm140 = vcmp.lt.s32.totalorder %v136, 18
  %vm141 = vcmp.lt.s32.totalorder %v137, 18
  %vm142 = vcmp.lt.s32.totalorder %v138, 18
  %v143 = vsel %vm139, %v111, 0.0
  %v144 = vsel %vm140, %v113, 0.0
  %v145 = vsel %vm141, %v116, 0.0
  %v146 = vsel %vm142, %v118, 0.0
  %v147 = vadd.f32 %v143, %v144
  %v148 = vadd.f32 %v147, %v145
  %v149 = vadd.f32 %v148, %v146
  %150 = vst [vmem:[%s4] sm:$0xff] %v149
  %v151 = vmul.f32 %v143, %v143
  %v152 = vmul.f32 %v144, %v144
  %v153 = vmul.f32 %v145, %v145
  %v154 = vmul.f32 %v146, %v146
  %v155 = vadd.f32 %v151, %v152
  %v156 = vadd.f32 %v155, %v153
  %v157 = vadd.f32 %v156, %v154
  %158 = vst [vmem:[%s5] sm:$0xff] %v157
  // Predicated region
  $region14: #{multiscale_forward_pallas.26} parent=0 // pred_check
    _
  $region15: #{multiscale_forward_pallas.26} parent=0 // pred_check_branch
    %160 = sbr.rel (0) target = $region17
  $region16: #{multiscale_forward_pallas.26} parent=0 // pred_region
    _
  $region17: #{multiscale_forward_pallas.26} parent=0 // pred_fallthru
    _
  // Predicated region
  $region18: #{multiscale_forward_pallas.26} parent=0 // pred_check
    _
  $region19: #{multiscale_forward_pallas.26} parent=0 // pred_check_branch
    %162 = sbr.rel (0) target = $region21
  $region20: #{multiscale_forward_pallas.26} parent=0 // pred_region
    _
  $region21: #{multiscale_forward_pallas.26} parent=0 // pred_fallthru
    _
  // Predicated region
  $region22: #{multiscale_forward_pallas.26} parent=0 // pred_check
    _
  $region23: #{multiscale_forward_pallas.26} parent=0 // pred_check_branch
    %164 = sbr.rel (0) target = $region25
  $region24: #{multiscale_forward_pallas.26} parent=0 // pred_region
    _
  $region25: #{multiscale_forward_pallas.26} parent=0 // pred_fallthru
    _
  // Predicated region
  $region26: #{multiscale_forward_pallas.26} parent=0 // pred_check
    _
  $region27: #{multiscale_forward_pallas.26} parent=0 // pred_check_branch
    %166 = sbr.rel (0) target = $region29
  $region28: #{multiscale_forward_pallas.26} parent=0 // pred_region
    _
  $region29: #{multiscale_forward_pallas.26} parent=0 // pred_fallthru
    _
  // Predicated region
  $region30: #{multiscale_forward_pallas.26} parent=0 // pred_check
    _
  $region31: #{multiscale_forward_pallas.26} parent=0 // pred_check_branch
    %168 = sbr.rel (0) target = $region33
  $region32: #{multiscale_forward_pallas.26} parent=0 // pred_region
    _
  $region33: #{multiscale_forward_pallas.26} parent=0 // pred_fallthru
    _
  // Predicated region
  $region34: #{multiscale_forward_pallas.26} parent=0 // pred_check
    _
  $region35: #{multiscale_forward_pallas.26} parent=0 // pred_check_branch
    %170 = sbr.rel (0) target = $region37
  $region36: #{multiscale_forward_pallas.26} parent=0 // pred_region
    _
  $region37: #{multiscale_forward_pallas.26} parent=0 // pred_fallthru
    _

// kernel: multiscale_forward_pallas.27
$region0: #{multiscale_forward_pallas.27}
  #allocation0 [shape = 'u32[]', space=smem, size = 0x4, offset = 0x4, fixed_abs, tag = 'smem constant byte address 0x4 - core index']
  #allocation1 [shape = 'u32[72,128]{1,0:T(1,128)}', space=vmem, size = 0x9000, scoped, tag = 'internal scratch']
  %s0 = inlined_call_operand.vmem [shape: bf16[16,256], index: 0, kind: input, shape index: {}]
  %s1 = inlined_call_operand.vmem [shape: bf16[256,128], index: 1, kind: input, shape index: {}]
  %s2 = inlined_call_operand.vmem [shape: f32[1,128], index: 2, kind: input, shape index: {}]
  %s3 = inlined_call_operand.vmem [shape: bf16[16,128], index: 3, kind: output, shape index: {0}]
  %s4 = inlined_call_operand.vmem [shape: f32[1,8,128], index: 4, kind: output, shape index: {1}]
  %s5 = inlined_call_operand.vmem [shape: f32[1,8,128], index: 5, kind: output, shape index: {2}]
  %6 = xla_tuple %s3, %s4, %s5
  %s7 = sld [smem:[#allocation0]]
  $region38: #{multiscale_forward_pallas.27} parent=0
    _
  %s9 = ssub.s32 1, %s7
  %s10 = scalar_select 0, %s9, %s7
  // Predicated region
  $region2: #{multiscale_forward_pallas.27} parent=0 // pred_check
    _
  $region3: #{multiscale_forward_pallas.27} parent=0 // pred_check_branch
    %12 = sbr.rel (0) target = $region5
  $region4: #{multiscale_forward_pallas.27} parent=0 // pred_region
    _
  $region5: #{multiscale_forward_pallas.27} parent=0 // pred_fallthru
    _
  // Predicated region
  $region6: #{multiscale_forward_pallas.27} parent=0 // pred_check
    _
  $region7: #{multiscale_forward_pallas.27} parent=0 // pred_check_branch
    %14 = sbr.rel (0) target = $region9
  $region8: #{multiscale_forward_pallas.27} parent=0 // pred_region
    _
  $region9: #{multiscale_forward_pallas.27} parent=0 // pred_fallthru
    _
  // Predicated region
  $region10: #{multiscale_forward_pallas.27} parent=0 // pred_check
    _
  $region11: #{multiscale_forward_pallas.27} parent=0 // pred_check_branch
    %16 = sbr.rel (0) target = $region13
  $region12: #{multiscale_forward_pallas.27} parent=0 // pred_region
    _
  $region13: #{multiscale_forward_pallas.27} parent=0 // pred_fallthru
    _
  %v17 = vld [vmem:[%s0] sm:$0xff]
  %v18 = vld [vmem:[%s0 + $0x8] sm:$0xff]
  %v19 = vld [vmem:[%s1] sm:$0xf]
  %v20 = vld [vmem:[%s1 + $0x4] sm:$0xf]
  %v21 = vld [vmem:[%s1 + $0x8] sm:$0xf]
  %v22 = vld [vmem:[%s1 + $0xc] sm:$0xf]
  %v23 = vld [vmem:[%s1 + $0x10] sm:$0xf]
  %v24 = vld [vmem:[%s1 + $0x14] sm:$0xf]
  %v25 = vld [vmem:[%s1 + $0x18] sm:$0xf]
  %v26 = vld [vmem:[%s1 + $0x1c] sm:$0xf]
  %v27 = vld [vmem:[%s1 + $0x20] sm:$0xf]
  %v28 = vld [vmem:[%s1 + $0x24] sm:$0xf]
  %v29 = vld [vmem:[%s1 + $0x28] sm:$0xf]
  %v30 = vld [vmem:[%s1 + $0x2c] sm:$0xf]
  %v31 = vld [vmem:[%s1 + $0x30] sm:$0xf]
  %v32 = vld [vmem:[%s1 + $0x34] sm:$0xf]
  %v33 = vld [vmem:[%s1 + $0x38] sm:$0xf]
  %v34 = vld [vmem:[%s1 + $0x3c] sm:$0xf]
  %v35 = vld [vmem:[%s1 + $0x40] sm:$0xf]
  %v36 = vld [vmem:[%s1 + $0x44] sm:$0xf]
  %v37 = vld [vmem:[%s1 + $0x48] sm:$0xf]
  %v38 = vld [vmem:[%s1 + $0x4c] sm:$0xf]
  %v39 = vld [vmem:[%s1 + $0x50] sm:$0xf]
  %v40 = vld [vmem:[%s1 + $0x54] sm:$0xf]
  %v41 = vld [vmem:[%s1 + $0x58] sm:$0xf]
  %v42 = vld [vmem:[%s1 + $0x5c] sm:$0xf]
  %v43 = vld [vmem:[%s1 + $0x60] sm:$0xf]
  %v44 = vld [vmem:[%s1 + $0x64] sm:$0xf]
  %v45 = vld [vmem:[%s1 + $0x68] sm:$0xf]
  %v46 = vld [vmem:[%s1 + $0x6c] sm:$0xf]
  %v47 = vld [vmem:[%s1 + $0x70] sm:$0xf]
  %v48 = vld [vmem:[%s1 + $0x74] sm:$0xf]
  %v49 = vld [vmem:[%s1 + $0x78] sm:$0xf]
  %v50 = vld [vmem:[%s1 + $0x7c] sm:$0xf]
  %v51 = vld [vmem:[%s2] sm:$0x1]
  %v53 = vperm.slane %v51, 0
  %v57 = vunpack.c.l.b16 %v17
  %v58 = vunpack.c.h.b16 %v17
  %v59 = vunpack.c.l.b16 %v18
  %v60 = vunpack.c.h.b16 %v18
  %v61 = vpack.c.b16 %v59, %v57
  %v62 = vpack.c.b16 %v60, %v58
  %v97 = vunpack.c.l.b16 %v19
  %v98 = vunpack.c.l.b16 %v20
  %v99 = vunpack.c.l.b16 %v21
  %v100 = vunpack.c.l.b16 %v22
  %v101 = vunpack.c.l.b16 %v23
  %v102 = vunpack.c.l.b16 %v24
  %v103 = vunpack.c.l.b16 %v25
  %v104 = vunpack.c.l.b16 %v26
  %v105 = vunpack.c.l.b16 %v27
  %v106 = vunpack.c.l.b16 %v28
  %v107 = vunpack.c.l.b16 %v29
  %v108 = vunpack.c.l.b16 %v30
  %v109 = vunpack.c.l.b16 %v31
  %v110 = vunpack.c.l.b16 %v32
  %v111 = vunpack.c.l.b16 %v33
  %v112 = vunpack.c.l.b16 %v34
  %v113 = vunpack.c.l.b16 %v35
  %v114 = vunpack.c.l.b16 %v36
  %v115 = vunpack.c.l.b16 %v37
  %v116 = vunpack.c.l.b16 %v38
  %v117 = vunpack.c.l.b16 %v39
  %v118 = vunpack.c.l.b16 %v40
  %v119 = vunpack.c.l.b16 %v41
  %v120 = vunpack.c.l.b16 %v42
  %v121 = vunpack.c.l.b16 %v43
  %v122 = vunpack.c.l.b16 %v44
  %v123 = vunpack.c.l.b16 %v45
  %v124 = vunpack.c.l.b16 %v46
  %v125 = vunpack.c.l.b16 %v47
  %v126 = vunpack.c.l.b16 %v48
  %v127 = vunpack.c.l.b16 %v49
  %v128 = vunpack.c.l.b16 %v50
  %v129 = vpack.c.b16 %v98, %v97
  %v130 = vpack.c.b16 %v100, %v99
  %v131 = vpack.c.b16 %v102, %v101
  %v132 = vpack.c.b16 %v104, %v103
  %v133 = vpack.c.b16 %v106, %v105
  %v134 = vpack.c.b16 %v108, %v107
  %v135 = vpack.c.b16 %v110, %v109
  %v136 = vpack.c.b16 %v112, %v111
  %v137 = vpack.c.b16 %v114, %v113
  %v138 = vpack.c.b16 %v116, %v115
  %v139 = vpack.c.b16 %v118, %v117
  %v140 = vpack.c.b16 %v120, %v119
  %v141 = vpack.c.b16 %v122, %v121
  %v142 = vpack.c.b16 %v124, %v123
  %v143 = vpack.c.b16 %v126, %v125
  %v144 = vpack.c.b16 %v128, %v127
  %161 = vmatpush.bf16.msra.mxu0 %v136
  %162 = vmatpush.bf16.msra.mxu0 %v135
  %163 = vmatpush.bf16.msra.mxu0 %v134
  %164 = vmatpush.bf16.msra.mxu0 %v133
  %165 = vmatpush.bf16.msra.mxu0 %v132
  %166 = vmatpush.bf16.msra.mxu0 %v131
  %167 = vmatpush.bf16.msra.mxu0 %v130
  %168 = vmatpush.bf16.msra.mxu0 %v129
  %169 = vmatmul.bf16.gmra.mxu0 %v61
  %v170 = vpop.f32.mrf.mxu0
  %v171 = vadd.f32 %v53, %v170
  %v172 = vpop.f32.mrf.mxu0
  %v173 = vadd.f32 %v53, %v172
  %174 = vdwg.mxu0
  %175 = vmatpush.bf16.msra.mxu0 %v144
  %176 = vmatpush.bf16.msra.mxu0 %v143
  %177 = vmatpush.bf16.msra.mxu0 %v142
  %178 = vmatpush.bf16.msra.mxu0 %v141
  %179 = vmatpush.bf16.msra.mxu0 %v140
  %180 = vmatpush.bf16.msra.mxu0 %v139
  %181 = vmatpush.bf16.msra.mxu0 %v138
  %182 = vmatpush.bf16.msra.mxu0 %v137
  %183 = vmatmul.bf16.gmra.mxu0 %v62
  %v184 = vpop.f32.mrf.mxu0
  %v185 = vadd.f32 %v171, %v184
  %v186 = vpop.f32.mrf.mxu0
  %v187 = vadd.f32 %v173, %v186
  %188 = vdwg.mxu0
  %v189 = vpack.c.bf16 %v185, %v185
  %v190 = vpack.c.bf16 %v187, %v187
  %191 = vst [vmem:[%s3] sm:$0xf] %v189
  %192 = vst [vmem:[%s3 + $0x4] sm:$0xf] %v190
  %v193 = vlaneseq
  %v194 = vshrl.u32 %v193, 7
  %v195 = vadd.s32 %v194, 8
  %s196 = smul.u32 0, 16
  %v197 = vstv %s196
  %v198 = vadd.s32 %v194, %v197
  %v199 = vadd.s32 %v195, %v197
  %vm200 = vcmp.lt.s32.totalorder %v198, 8
  %vm201 = vcmp.lt.s32.totalorder %v199, 8
  %v202 = vsel %vm200, %v185, 0.0
  %v203 = vsel %vm201, %v187, 0.0
  %v204 = vadd.f32 %v202, %v203
  %205 = vst [vmem:[%s4] sm:$0xff] %v204
  %v206 = vmul.f32 %v202, %v202
  %v207 = vmul.f32 %v203, %v203
  %v208 = vadd.f32 %v206, %v207
  %209 = vst [vmem:[%s5] sm:$0xff] %v208
  // Predicated region
  $region14: #{multiscale_forward_pallas.27} parent=0 // pred_check
    _
  $region15: #{multiscale_forward_pallas.27} parent=0 // pred_check_branch
    %211 = sbr.rel (0) target = $region17
  $region16: #{multiscale_forward_pallas.27} parent=0 // pred_region
    _
  $region17: #{multiscale_forward_pallas.27} parent=0 // pred_fallthru
    _
  // Predicated region
  $region18: #{multiscale_forward_pallas.27} parent=0 // pred_check
    _
  $region19: #{multiscale_forward_pallas.27} parent=0 // pred_check_branch
    %213 = sbr.rel (0) target = $region21
  $region20: #{multiscale_forward_pallas.27} parent=0 // pred_region
    _
  $region21: #{multiscale_forward_pallas.27} parent=0 // pred_fallthru
    _
  // Predicated region
  $region22: #{multiscale_forward_pallas.27} parent=0 // pred_check
    _
  $region23: #{multiscale_forward_pallas.27} parent=0 // pred_check_branch
    %215 = sbr.rel (0) target = $region25
  $region24: #{multiscale_forward_pallas.27} parent=0 // pred_region
    _
  $region25: #{multiscale_forward_pallas.27} parent=0 // pred_fallthru
    _
  // Predicated region
  $region26: #{multiscale_forward_pallas.27} parent=0 // pred_check
    _
  $region27: #{multiscale_forward_pallas.27} parent=0 // pred_check_branch
    %217 = sbr.rel (0) target = $region29
  $region28: #{multiscale_forward_pallas.27} parent=0 // pred_region
    _
  $region29: #{multiscale_forward_pallas.27} parent=0 // pred_fallthru
    _
  // Predicated region
  $region30: #{multiscale_forward_pallas.27} parent=0 // pred_check
    _
  $region31: #{multiscale_forward_pallas.27} parent=0 // pred_check_branch
    %219 = sbr.rel (0) target = $region33
  $region32: #{multiscale_forward_pallas.27} parent=0 // pred_region
    _
  $region33: #{multiscale_forward_pallas.27} parent=0 // pred_fallthru
    _
  // Predicated region
  $region34: #{multiscale_forward_pallas.27} parent=0 // pred_check
    _
  $region35: #{multiscale_forward_pallas.27} parent=0 // pred_check_branch
    %221 = sbr.rel (0) target = $region37
  $region36: #{multiscale_forward_pallas.27} parent=0 // pred_region
    _
  $region37: #{multiscale_forward_pallas.27} parent=0 // pred_fallthru
    _

// kernel: multiscale_forward_pallas.28
$region0: #{multiscale_forward_pallas.28}
  #allocation0 [shape = 'u32[]', space=smem, size = 0x4, offset = 0x4, fixed_abs, tag = 'smem constant byte address 0x4 - core index']
  #allocation1 [shape = 'u32[72,128]{1,0:T(1,128)}', space=vmem, size = 0x9000, scoped, tag = 'internal scratch']
  %s0 = inlined_call_operand.vmem [shape: bf16[32,512], index: 0, kind: input, shape index: {}]
  %s1 = inlined_call_operand.vmem [shape: bf16[512,128], index: 1, kind: input, shape index: {}]
  %s2 = inlined_call_operand.vmem [shape: f32[1,128], index: 2, kind: input, shape index: {}]
  %s3 = inlined_call_operand.vmem [shape: bf16[32,128], index: 3, kind: output, shape index: {0}]
  %s4 = inlined_call_operand.vmem [shape: f32[1,8,128], index: 4, kind: output, shape index: {1}]
  %s5 = inlined_call_operand.vmem [shape: f32[1,8,128], index: 5, kind: output, shape index: {2}]
  %6 = xla_tuple %s3, %s4, %s5
  %s7 = sld [smem:[#allocation0]]
  $region38: #{multiscale_forward_pallas.28} parent=0
    _
  %s9 = ssub.s32 1, %s7
  %s10 = scalar_select 0, %s9, %s7
  // Predicated region
  $region2: #{multiscale_forward_pallas.28} parent=0 // pred_check
    _
  $region3: #{multiscale_forward_pallas.28} parent=0 // pred_check_branch
    %12 = sbr.rel (0) target = $region5
  $region4: #{multiscale_forward_pallas.28} parent=0 // pred_region
    _
  $region5: #{multiscale_forward_pallas.28} parent=0 // pred_fallthru
    _
  // Predicated region
  $region6: #{multiscale_forward_pallas.28} parent=0 // pred_check
    _
  $region7: #{multiscale_forward_pallas.28} parent=0 // pred_check_branch
    %14 = sbr.rel (0) target = $region9
  $region8: #{multiscale_forward_pallas.28} parent=0 // pred_region
    _
  $region9: #{multiscale_forward_pallas.28} parent=0 // pred_fallthru
    _
  // Predicated region
  $region10: #{multiscale_forward_pallas.28} parent=0 // pred_check
    _
  $region11: #{multiscale_forward_pallas.28} parent=0 // pred_check_branch
    %16 = sbr.rel (0) target = $region13
  $region12: #{multiscale_forward_pallas.28} parent=0 // pred_region
    _
  $region13: #{multiscale_forward_pallas.28} parent=0 // pred_fallthru
    _
  %v17 = vld [vmem:[%s0] sm:$0xff]
  %v18 = vld [vmem:[%s0 + $0x8] sm:$0xff]
  %v19 = vld [vmem:[%s0 + $0x10] sm:$0xff]
  %v20 = vld [vmem:[%s0 + $0x18] sm:$0xff]
  %v21 = vld [vmem:[%s0 + $0x20] sm:$0xff]
  %v22 = vld [vmem:[%s0 + $0x28] sm:$0xff]
  %v23 = vld [vmem:[%s0 + $0x30] sm:$0xff]
  %v24 = vld [vmem:[%s0 + $0x38] sm:$0xff]
  %v25 = vld [vmem:[%s1] sm:$0xf]
  %v26 = vld [vmem:[%s1 + $0x4] sm:$0xf]
  %v27 = vld [vmem:[%s1 + $0x8] sm:$0xf]
  %v28 = vld [vmem:[%s1 + $0xc] sm:$0xf]
  %v29 = vld [vmem:[%s1 + $0x10] sm:$0xf]
  %v30 = vld [vmem:[%s1 + $0x14] sm:$0xf]
  %v31 = vld [vmem:[%s1 + $0x18] sm:$0xf]
  %v32 = vld [vmem:[%s1 + $0x1c] sm:$0xf]
  %v33 = vld [vmem:[%s1 + $0x20] sm:$0xf]
  %v34 = vld [vmem:[%s1 + $0x24] sm:$0xf]
  %v35 = vld [vmem:[%s1 + $0x28] sm:$0xf]
  %v36 = vld [vmem:[%s1 + $0x2c] sm:$0xf]
  %v37 = vld [vmem:[%s1 + $0x30] sm:$0xf]
  %v38 = vld [vmem:[%s1 + $0x34] sm:$0xf]
  %v39 = vld [vmem:[%s1 + $0x38] sm:$0xf]
  %v40 = vld [vmem:[%s1 + $0x3c] sm:$0xf]
  %v41 = vld [vmem:[%s1 + $0x40] sm:$0xf]
  %v42 = vld [vmem:[%s1 + $0x44] sm:$0xf]
  %v43 = vld [vmem:[%s1 + $0x48] sm:$0xf]
  %v44 = vld [vmem:[%s1 + $0x4c] sm:$0xf]
  %v45 = vld [vmem:[%s1 + $0x50] sm:$0xf]
  %v46 = vld [vmem:[%s1 + $0x54] sm:$0xf]
  %v47 = vld [vmem:[%s1 + $0x58] sm:$0xf]
  %v48 = vld [vmem:[%s1 + $0x5c] sm:$0xf]
  %v49 = vld [vmem:[%s1 + $0x60] sm:$0xf]
  %v50 = vld [vmem:[%s1 + $0x64] sm:$0xf]
  %v51 = vld [vmem:[%s1 + $0x68] sm:$0xf]
  %v52 = vld [vmem:[%s1 + $0x6c] sm:$0xf]
  %v53 = vld [vmem:[%s1 + $0x70] sm:$0xf]
  %v54 = vld [vmem:[%s1 + $0x74] sm:$0xf]
  %v55 = vld [vmem:[%s1 + $0x78] sm:$0xf]
  %v56 = vld [vmem:[%s1 + $0x7c] sm:$0xf]
  %v57 = vld [vmem:[%s1 + $0x80] sm:$0xf]
  %v58 = vld [vmem:[%s1 + $0x84] sm:$0xf]
  %v59 = vld [vmem:[%s1 + $0x88] sm:$0xf]
  %v60 = vld [vmem:[%s1 + $0x8c] sm:$0xf]
  %v61 = vld [vmem:[%s1 + $0x90] sm:$0xf]
  %v62 = vld [vmem:[%s1 + $0x94] sm:$0xf]
  %v63 = vld [vmem:[%s1 + $0x98] sm:$0xf]
  %v64 = vld [vmem:[%s1 + $0x9c] sm:$0xf]
  %v65 = vld [vmem:[%s1 + $0xa0] sm:$0xf]
  %v66 = vld [vmem:[%s1 + $0xa4] sm:$0xf]
  %v67 = vld [vmem:[%s1 + $0xa8] sm:$0xf]
  %v68 = vld [vmem:[%s1 + $0xac] sm:$0xf]
  %v69 = vld [vmem:[%s1 + $0xb0] sm:$0xf]
  %v70 = vld [vmem:[%s1 + $0xb4] sm:$0xf]
  %v71 = vld [vmem:[%s1 + $0xb8] sm:$0xf]
  %v72 = vld [vmem:[%s1 + $0xbc] sm:$0xf]
  %v73 = vld [vmem:[%s1 + $0xc0] sm:$0xf]
  %v74 = vld [vmem:[%s1 + $0xc4] sm:$0xf]
  %v75 = vld [vmem:[%s1 + $0xc8] sm:$0xf]
  %v76 = vld [vmem:[%s1 + $0xcc] sm:$0xf]
  %v77 = vld [vmem:[%s1 + $0xd0] sm:$0xf]
  %v78 = vld [vmem:[%s1 + $0xd4] sm:$0xf]
  %v79 = vld [vmem:[%s1 + $0xd8] sm:$0xf]
  %v80 = vld [vmem:[%s1 + $0xdc] sm:$0xf]
  %v81 = vld [vmem:[%s1 + $0xe0] sm:$0xf]
  %v82 = vld [vmem:[%s1 + $0xe4] sm:$0xf]
  %v83 = vld [vmem:[%s1 + $0xe8] sm:$0xf]
  %v84 = vld [vmem:[%s1 + $0xec] sm:$0xf]
  %v85 = vld [vmem:[%s1 + $0xf0] sm:$0xf]
  %v86 = vld [vmem:[%s1 + $0xf4] sm:$0xf]
  %v87 = vld [vmem:[%s1 + $0xf8] sm:$0xf]
  %v88 = vld [vmem:[%s1 + $0xfc] sm:$0xf]
  %v89 = vld [vmem:[%s2] sm:$0x1]
  %v91 = vperm.slane %v89, 0
  %v101 = vunpack.c.l.b16 %v17
  %v102 = vunpack.c.h.b16 %v17
  %v103 = vunpack.c.l.b16 %v18
  %v104 = vunpack.c.h.b16 %v18
  %v105 = vunpack.c.l.b16 %v19
  %v106 = vunpack.c.h.b16 %v19
  %v107 = vunpack.c.l.b16 %v20
  %v108 = vunpack.c.h.b16 %v20
  %v109 = vunpack.c.l.b16 %v21
  %v110 = vunpack.c.h.b16 %v21
  %v111 = vunpack.c.l.b16 %v22
  %v112 = vunpack.c.h.b16 %v22
  %v113 = vunpack.c.l.b16 %v23
  %v114 = vunpack.c.h.b16 %v23
  %v115 = vunpack.c.l.b16 %v24
  %v116 = vunpack.c.h.b16 %v24
  %v117 = vpack.c.b16 %v105, %v101
  %v118 = vpack.c.b16 %v106, %v102
  %v119 = vpack.c.b16 %v107, %v103
  %v120 = vpack.c.b16 %v108, %v104
  %v121 = vpack.c.b16 %v113, %v109
  %v122 = vpack.c.b16 %v114, %v110
  %v123 = vpack.c.b16 %v115, %v111
  %v124 = vpack.c.b16 %v116, %v112
  %v197 = vunpack.c.l.b16 %v25
  %v198 = vunpack.c.l.b16 %v26
  %v199 = vunpack.c.l.b16 %v27
  %v200 = vunpack.c.l.b16 %v28
  %v201 = vunpack.c.l.b16 %v29
  %v202 = vunpack.c.l.b16 %v30
  %v203 = vunpack.c.l.b16 %v31
  %v204 = vunpack.c.l.b16 %v32
  %v205 = vunpack.c.l.b16 %v33
  %v206 = vunpack.c.l.b16 %v34
  %v207 = vunpack.c.l.b16 %v35
  %v208 = vunpack.c.l.b16 %v36
  %v209 = vunpack.c.l.b16 %v37
  %v210 = vunpack.c.l.b16 %v38
  %v211 = vunpack.c.l.b16 %v39
  %v212 = vunpack.c.l.b16 %v40
  %v213 = vunpack.c.l.b16 %v41
  %v214 = vunpack.c.l.b16 %v42
  %v215 = vunpack.c.l.b16 %v43
  %v216 = vunpack.c.l.b16 %v44
  %v217 = vunpack.c.l.b16 %v45
  %v218 = vunpack.c.l.b16 %v46
  %v219 = vunpack.c.l.b16 %v47
  %v220 = vunpack.c.l.b16 %v48
  %v221 = vunpack.c.l.b16 %v49
  %v222 = vunpack.c.l.b16 %v50
  %v223 = vunpack.c.l.b16 %v51
  %v224 = vunpack.c.l.b16 %v52
  %v225 = vunpack.c.l.b16 %v53
  %v226 = vunpack.c.l.b16 %v54
  %v227 = vunpack.c.l.b16 %v55
  %v228 = vunpack.c.l.b16 %v56
  %v229 = vunpack.c.l.b16 %v57
  %v230 = vunpack.c.l.b16 %v58
  %v231 = vunpack.c.l.b16 %v59
  %v232 = vunpack.c.l.b16 %v60
  %v233 = vunpack.c.l.b16 %v61
  %v234 = vunpack.c.l.b16 %v62
  %v235 = vunpack.c.l.b16 %v63
  %v236 = vunpack.c.l.b16 %v64
  %v237 = vunpack.c.l.b16 %v65
  %v238 = vunpack.c.l.b16 %v66
  %v239 = vunpack.c.l.b16 %v67
  %v240 = vunpack.c.l.b16 %v68
  %v241 = vunpack.c.l.b16 %v69
  %v242 = vunpack.c.l.b16 %v70
  %v243 = vunpack.c.l.b16 %v71
  %v244 = vunpack.c.l.b16 %v72
  %v245 = vunpack.c.l.b16 %v73
  %v246 = vunpack.c.l.b16 %v74
  %v247 = vunpack.c.l.b16 %v75
  %v248 = vunpack.c.l.b16 %v76
  %v249 = vunpack.c.l.b16 %v77
  %v250 = vunpack.c.l.b16 %v78
  %v251 = vunpack.c.l.b16 %v79
  %v252 = vunpack.c.l.b16 %v80
  %v253 = vunpack.c.l.b16 %v81
  %v254 = vunpack.c.l.b16 %v82
  %v255 = vunpack.c.l.b16 %v83
  %v256 = vunpack.c.l.b16 %v84
  %v257 = vunpack.c.l.b16 %v85
  %v258 = vunpack.c.l.b16 %v86
  %v259 = vunpack.c.l.b16 %v87
  %v260 = vunpack.c.l.b16 %v88
  %v261 = vpack.c.b16 %v198, %v197
  %v262 = vpack.c.b16 %v200, %v199
  %v263 = vpack.c.b16 %v202, %v201
  %v264 = vpack.c.b16 %v204, %v203
  %v265 = vpack.c.b16 %v206, %v205
  %v266 = vpack.c.b16 %v208, %v207
  %v267 = vpack.c.b16 %v210, %v209
  %v268 = vpack.c.b16 %v212, %v211
  %v269 = vpack.c.b16 %v214, %v213
  %v270 = vpack.c.b16 %v216, %v215
  %v271 = vpack.c.b16 %v218, %v217
  %v272 = vpack.c.b16 %v220, %v219
  %v273 = vpack.c.b16 %v222, %v221
  %v274 = vpack.c.b16 %v224, %v223
  %v275 = vpack.c.b16 %v226, %v225
  %v276 = vpack.c.b16 %v228, %v227
  %v277 = vpack.c.b16 %v230, %v229
  %v278 = vpack.c.b16 %v232, %v231
  %v279 = vpack.c.b16 %v234, %v233
  %v280 = vpack.c.b16 %v236, %v235
  %v281 = vpack.c.b16 %v238, %v237
  %v282 = vpack.c.b16 %v240, %v239
  %v283 = vpack.c.b16 %v242, %v241
  %v284 = vpack.c.b16 %v244, %v243
  %v285 = vpack.c.b16 %v246, %v245
  %v286 = vpack.c.b16 %v248, %v247
  %v287 = vpack.c.b16 %v250, %v249
  %v288 = vpack.c.b16 %v252, %v251
  %v289 = vpack.c.b16 %v254, %v253
  %v290 = vpack.c.b16 %v256, %v255
  %v291 = vpack.c.b16 %v258, %v257
  %v292 = vpack.c.b16 %v260, %v259
  %325 = vmatpush.bf16.msra.mxu0 %v268
  %326 = vmatpush.bf16.msra.mxu0 %v267
  %327 = vmatpush.bf16.msra.mxu0 %v266
  %328 = vmatpush.bf16.msra.mxu0 %v265
  %329 = vmatpush.bf16.msra.mxu0 %v264
  %330 = vmatpush.bf16.msra.mxu0 %v263
  %331 = vmatpush.bf16.msra.mxu0 %v262
  %332 = vmatpush.bf16.msra.mxu0 %v261
  %333 = vmatmul.bf16.gmra.mxu0 %v117
  %v334 = vpop.f32.mrf.mxu0
  %v335 = vadd.f32 %v91, %v334
  %v336 = vpop.f32.mrf.mxu0
  %v337 = vadd.f32 %v91, %v336
  %338 = vmatmul.bf16.gmra.mxu0 %v121
  %v339 = vpop.f32.mrf.mxu0
  %v340 = vadd.f32 %v91, %v339
  %v341 = vpop.f32.mrf.mxu0
  %v342 = vadd.f32 %v91, %v341
  %343 = vdwg.mxu0
  %344 = vmatpush.bf16.msra.mxu0 %v276
  %345 = vmatpush.bf16.msra.mxu0 %v275
  %346 = vmatpush.bf16.msra.mxu0 %v274
  %347 = vmatpush.bf16.msra.mxu0 %v273
  %348 = vmatpush.bf16.msra.mxu0 %v272
  %349 = vmatpush.bf16.msra.mxu0 %v271
  %350 = vmatpush.bf16.msra.mxu0 %v270
  %351 = vmatpush.bf16.msra.mxu0 %v269
  %352 = vmatmul.bf16.gmra.mxu0 %v118
  %v353 = vpop.f32.mrf.mxu0
  %v354 = vadd.f32 %v335, %v353
  %v355 = vpop.f32.mrf.mxu0
  %v356 = vadd.f32 %v337, %v355
  %357 = vmatmul.bf16.gmra.mxu0 %v122
  %v358 = vpop.f32.mrf.mxu0
  %v359 = vadd.f32 %v340, %v358
  %v360 = vpop.f32.mrf.mxu0
  %v361 = vadd.f32 %v342, %v360
  %362 = vdwg.mxu0
  %363 = vmatpush.bf16.msra.mxu0 %v284
  %364 = vmatpush.bf16.msra.mxu0 %v283
  %365 = vmatpush.bf16.msra.mxu0 %v282
  %366 = vmatpush.bf16.msra.mxu0 %v281
  %367 = vmatpush.bf16.msra.mxu0 %v280
  %368 = vmatpush.bf16.msra.mxu0 %v279
  %369 = vmatpush.bf16.msra.mxu0 %v278
  %370 = vmatpush.bf16.msra.mxu0 %v277
  %371 = vmatmul.bf16.gmra.mxu0 %v119
  %v372 = vpop.f32.mrf.mxu0
  %v373 = vadd.f32 %v354, %v372
  %v374 = vpop.f32.mrf.mxu0
  %v375 = vadd.f32 %v356, %v374
  %376 = vmatmul.bf16.gmra.mxu0 %v123
  %v377 = vpop.f32.mrf.mxu0
  %v378 = vadd.f32 %v359, %v377
  %v379 = vpop.f32.mrf.mxu0
  %v380 = vadd.f32 %v361, %v379
  %381 = vdwg.mxu0
  %382 = vmatpush.bf16.msra.mxu0 %v292
  %383 = vmatpush.bf16.msra.mxu0 %v291
  %384 = vmatpush.bf16.msra.mxu0 %v290
  %385 = vmatpush.bf16.msra.mxu0 %v289
  %386 = vmatpush.bf16.msra.mxu0 %v288
  %387 = vmatpush.bf16.msra.mxu0 %v287
  %388 = vmatpush.bf16.msra.mxu0 %v286
  %389 = vmatpush.bf16.msra.mxu0 %v285
  %390 = vmatmul.bf16.gmra.mxu0 %v120
  %v391 = vpop.f32.mrf.mxu0
  %v392 = vadd.f32 %v373, %v391
  %v393 = vpop.f32.mrf.mxu0
  %v394 = vadd.f32 %v375, %v393
  %395 = vmatmul.bf16.gmra.mxu0 %v124
  %v396 = vpop.f32.mrf.mxu0
  %v397 = vadd.f32 %v378, %v396
  %v398 = vpop.f32.mrf.mxu0
  %v399 = vadd.f32 %v380, %v398
  %400 = vdwg.mxu0
  %v401 = vpack.c.bf16 %v392, %v392
  %v402 = vpack.c.bf16 %v394, %v394
  %v403 = vpack.c.bf16 %v397, %v397
  %v404 = vpack.c.bf16 %v399, %v399
  %405 = vst [vmem:[%s3] sm:$0xf] %v401
  %406 = vst [vmem:[%s3 + $0x4] sm:$0xf] %v402
  %407 = vst [vmem:[%s3 + $0x8] sm:$0xf] %v403
  %408 = vst [vmem:[%s3 + $0xc] sm:$0xf] %v404
  %v409 = vlaneseq
  %v410 = vshrl.u32 %v409, 7
  %v411 = vadd.s32 %v410, 8
  %v412 = vadd.s32 %v410, 16
  %v413 = vadd.s32 %v410, 24
  %s414 = smul.u32 0, 32
  %v415 = vstv %s414
  %v416 = vadd.s32 %v410, %v415
  %v417 = vadd.s32 %v411, %v415
  %v418 = vadd.s32 %v412, %v415
  %v419 = vadd.s32 %v413, %v415
  %vm420 = vcmp.lt.s32.totalorder %v416, 18
  %vm421 = vcmp.lt.s32.totalorder %v417, 18
  %vm422 = vcmp.lt.s32.totalorder %v418, 18
  %vm423 = vcmp.lt.s32.totalorder %v419, 18
  %v424 = vsel %vm420, %v392, 0.0
  %v425 = vsel %vm421, %v394, 0.0
  %v426 = vsel %vm422, %v397, 0.0
  %v427 = vsel %vm423, %v399, 0.0
  %v428 = vadd.f32 %v424, %v425
  %v429 = vadd.f32 %v428, %v426
  %v430 = vadd.f32 %v429, %v427
  %431 = vst [vmem:[%s4] sm:$0xff] %v430
  %v432 = vmul.f32 %v424, %v424
  %v433 = vmul.f32 %v425, %v425
  %v434 = vmul.f32 %v426, %v426
  %v435 = vmul.f32 %v427, %v427
  %v436 = vadd.f32 %v432, %v433
  %v437 = vadd.f32 %v436, %v434
  %v438 = vadd.f32 %v437, %v435
  %439 = vst [vmem:[%s5] sm:$0xff] %v438
  // Predicated region
  $region14: #{multiscale_forward_pallas.28} parent=0 // pred_check
    _
  $region15: #{multiscale_forward_pallas.28} parent=0 // pred_check_branch
    %441 = sbr.rel (0) target = $region17
  $region16: #{multiscale_forward_pallas.28} parent=0 // pred_region
    _
  $region17: #{multiscale_forward_pallas.28} parent=0 // pred_fallthru
    _
  // Predicated region
  $region18: #{multiscale_forward_pallas.28} parent=0 // pred_check
    _
  $region19: #{multiscale_forward_pallas.28} parent=0 // pred_check_branch
    %443 = sbr.rel (0) target = $region21
  $region20: #{multiscale_forward_pallas.28} parent=0 // pred_region
    _
  $region21: #{multiscale_forward_pallas.28} parent=0 // pred_fallthru
    _
  // Predicated region
  $region22: #{multiscale_forward_pallas.28} parent=0 // pred_check
    _
  $region23: #{multiscale_forward_pallas.28} parent=0 // pred_check_branch
    %445 = sbr.rel (0) target = $region25
  $region24: #{multiscale_forward_pallas.28} parent=0 // pred_region
    _
  $region25: #{multiscale_forward_pallas.28} parent=0 // pred_fallthru
    _
  // Predicated region
  $region26: #{multiscale_forward_pallas.28} parent=0 // pred_check
    _
  $region27: #{multiscale_forward_pallas.28} parent=0 // pred_check_branch
    %447 = sbr.rel (0) target = $region29
  $region28: #{multiscale_forward_pallas.28} parent=0 // pred_region
    _
  $region29: #{multiscale_forward_pallas.28} parent=0 // pred_fallthru
    _
  // Predicated region
  $region30: #{multiscale_forward_pallas.28} parent=0 // pred_check
    _
  $region31: #{multiscale_forward_pallas.28} parent=0 // pred_check_branch
    %449 = sbr.rel (0) target = $region33
  $region32: #{multiscale_forward_pallas.28} parent=0 // pred_region
    _
  $region33: #{multiscale_forward_pallas.28} parent=0 // pred_fallthru
    _
  // Predicated region
  $region34: #{multiscale_forward_pallas.28} parent=0 // pred_check
    _
  $region35: #{multiscale_forward_pallas.28} parent=0 // pred_check_branch
    %451 = sbr.rel (0) target = $region37
  $region36: #{multiscale_forward_pallas.28} parent=0 // pred_region
    _
  $region37: #{multiscale_forward_pallas.28} parent=0 // pred_fallthru
    _

// kernel: multiscale_forward_pallas.29
$region0: #{multiscale_forward_pallas.29}
  #allocation0 [shape = 'u32[]', space=smem, size = 0x4, offset = 0x4, fixed_abs, tag = 'smem constant byte address 0x4 - core index']
  #allocation1 [shape = 'u32[72,128]{1,0:T(1,128)}', space=vmem, size = 0x9000, scoped, tag = 'internal scratch']
  %s0 = inlined_call_operand.vmem [shape: bf16[32,1024], index: 0, kind: input, shape index: {}]
  %s1 = inlined_call_operand.vmem [shape: bf16[1024,128], index: 1, kind: input, shape index: {}]
  %s2 = inlined_call_operand.vmem [shape: f32[1,128], index: 2, kind: input, shape index: {}]
  %s3 = inlined_call_operand.vmem [shape: bf16[32,128], index: 3, kind: output, shape index: {}]
  %s4 = sld [smem:[#allocation0]]
  $region22: #{multiscale_forward_pallas.29} parent=0
    _
  %s6 = ssub.s32 1, %s4
  %s7 = scalar_select 0, %s6, %s4
  // Predicated region
  $region2: #{multiscale_forward_pallas.29} parent=0 // pred_check
    _
  $region3: #{multiscale_forward_pallas.29} parent=0 // pred_check_branch
    %9 = sbr.rel (0) target = $region5
  $region4: #{multiscale_forward_pallas.29} parent=0 // pred_region
    _
  $region5: #{multiscale_forward_pallas.29} parent=0 // pred_fallthru
    _
  // Predicated region
  $region6: #{multiscale_forward_pallas.29} parent=0 // pred_check
    _
  $region7: #{multiscale_forward_pallas.29} parent=0 // pred_check_branch
    %11 = sbr.rel (0) target = $region9
  $region8: #{multiscale_forward_pallas.29} parent=0 // pred_region
    _
  $region9: #{multiscale_forward_pallas.29} parent=0 // pred_fallthru
    _
  // Predicated region
  $region10: #{multiscale_forward_pallas.29} parent=0 // pred_check
    _
  $region11: #{multiscale_forward_pallas.29} parent=0 // pred_check_branch
    %13 = sbr.rel (0) target = $region13
  $region12: #{multiscale_forward_pallas.29} parent=0 // pred_region
    _
  $region13: #{multiscale_forward_pallas.29} parent=0 // pred_fallthru
    _
  %v14 = vld [vmem:[%s0] sm:$0xff]
  %v15 = vld [vmem:[%s0 + $0x8] sm:$0xff]
  %v16 = vld [vmem:[%s0 + $0x10] sm:$0xff]
  %v17 = vld [vmem:[%s0 + $0x18] sm:$0xff]
  %v18 = vld [vmem:[%s0 + $0x20] sm:$0xff]
  %v19 = vld [vmem:[%s0 + $0x28] sm:$0xff]
  %v20 = vld [vmem:[%s0 + $0x30] sm:$0xff]
  %v21 = vld [vmem:[%s0 + $0x38] sm:$0xff]
  %v22 = vld [vmem:[%s0 + $0x40] sm:$0xff]
  %v23 = vld [vmem:[%s0 + $0x48] sm:$0xff]
  %v24 = vld [vmem:[%s0 + $0x50] sm:$0xff]
  %v25 = vld [vmem:[%s0 + $0x58] sm:$0xff]
  %v26 = vld [vmem:[%s0 + $0x60] sm:$0xff]
  %v27 = vld [vmem:[%s0 + $0x68] sm:$0xff]
  %v28 = vld [vmem:[%s0 + $0x70] sm:$0xff]
  %v29 = vld [vmem:[%s0 + $0x78] sm:$0xff]
  %v30 = vld [vmem:[%s1] sm:$0xf]
  %v31 = vld [vmem:[%s1 + $0x4] sm:$0xf]
  %v32 = vld [vmem:[%s1 + $0x8] sm:$0xf]
  %v33 = vld [vmem:[%s1 + $0xc] sm:$0xf]
  %v34 = vld [vmem:[%s1 + $0x10] sm:$0xf]
  %v35 = vld [vmem:[%s1 + $0x14] sm:$0xf]
  %v36 = vld [vmem:[%s1 + $0x18] sm:$0xf]
  %v37 = vld [vmem:[%s1 + $0x1c] sm:$0xf]
  %v38 = vld [vmem:[%s1 + $0x20] sm:$0xf]
  %v39 = vld [vmem:[%s1 + $0x24] sm:$0xf]
  %v40 = vld [vmem:[%s1 + $0x28] sm:$0xf]
  %v41 = vld [vmem:[%s1 + $0x2c] sm:$0xf]
  %v42 = vld [vmem:[%s1 + $0x30] sm:$0xf]
  %v43 = vld [vmem:[%s1 + $0x34] sm:$0xf]
  %v44 = vld [vmem:[%s1 + $0x38] sm:$0xf]
  %v45 = vld [vmem:[%s1 + $0x3c] sm:$0xf]
  %v46 = vld [vmem:[%s1 + $0x40] sm:$0xf]
  %v47 = vld [vmem:[%s1 + $0x44] sm:$0xf]
  %v48 = vld [vmem:[%s1 + $0x48] sm:$0xf]
  %v49 = vld [vmem:[%s1 + $0x4c] sm:$0xf]
  %v50 = vld [vmem:[%s1 + $0x50] sm:$0xf]
  %v51 = vld [vmem:[%s1 + $0x54] sm:$0xf]
  %v52 = vld [vmem:[%s1 + $0x58] sm:$0xf]
  %v53 = vld [vmem:[%s1 + $0x5c] sm:$0xf]
  %v54 = vld [vmem:[%s1 + $0x60] sm:$0xf]
  %v55 = vld [vmem:[%s1 + $0x64] sm:$0xf]
  %v56 = vld [vmem:[%s1 + $0x68] sm:$0xf]
  %v57 = vld [vmem:[%s1 + $0x6c] sm:$0xf]
  %v58 = vld [vmem:[%s1 + $0x70] sm:$0xf]
  %v59 = vld [vmem:[%s1 + $0x74] sm:$0xf]
  %v60 = vld [vmem:[%s1 + $0x78] sm:$0xf]
  %v61 = vld [vmem:[%s1 + $0x7c] sm:$0xf]
  %v62 = vld [vmem:[%s1 + $0x80] sm:$0xf]
  %v63 = vld [vmem:[%s1 + $0x84] sm:$0xf]
  %v64 = vld [vmem:[%s1 + $0x88] sm:$0xf]
  %v65 = vld [vmem:[%s1 + $0x8c] sm:$0xf]
  %v66 = vld [vmem:[%s1 + $0x90] sm:$0xf]
  %v67 = vld [vmem:[%s1 + $0x94] sm:$0xf]
  %v68 = vld [vmem:[%s1 + $0x98] sm:$0xf]
  %v69 = vld [vmem:[%s1 + $0x9c] sm:$0xf]
  %v70 = vld [vmem:[%s1 + $0xa0] sm:$0xf]
  %v71 = vld [vmem:[%s1 + $0xa4] sm:$0xf]
  %v72 = vld [vmem:[%s1 + $0xa8] sm:$0xf]
  %v73 = vld [vmem:[%s1 + $0xac] sm:$0xf]
  %v74 = vld [vmem:[%s1 + $0xb0] sm:$0xf]
  %v75 = vld [vmem:[%s1 + $0xb4] sm:$0xf]
  %v76 = vld [vmem:[%s1 + $0xb8] sm:$0xf]
  %v77 = vld [vmem:[%s1 + $0xbc] sm:$0xf]
  %v78 = vld [vmem:[%s1 + $0xc0] sm:$0xf]
  %v79 = vld [vmem:[%s1 + $0xc4] sm:$0xf]
  %v80 = vld [vmem:[%s1 + $0xc8] sm:$0xf]
  %v81 = vld [vmem:[%s1 + $0xcc] sm:$0xf]
  %v82 = vld [vmem:[%s1 + $0xd0] sm:$0xf]
  %v83 = vld [vmem:[%s1 + $0xd4] sm:$0xf]
  %v84 = vld [vmem:[%s1 + $0xd8] sm:$0xf]
  %v85 = vld [vmem:[%s1 + $0xdc] sm:$0xf]
  %v86 = vld [vmem:[%s1 + $0xe0] sm:$0xf]
  %v87 = vld [vmem:[%s1 + $0xe4] sm:$0xf]
  %v88 = vld [vmem:[%s1 + $0xe8] sm:$0xf]
  %v89 = vld [vmem:[%s1 + $0xec] sm:$0xf]
  %v90 = vld [vmem:[%s1 + $0xf0] sm:$0xf]
  %v91 = vld [vmem:[%s1 + $0xf4] sm:$0xf]
  %v92 = vld [vmem:[%s1 + $0xf8] sm:$0xf]
  %v93 = vld [vmem:[%s1 + $0xfc] sm:$0xf]
  %v94 = vld [vmem:[%s1 + $0x100] sm:$0xf]
  %v95 = vld [vmem:[%s1 + $0x104] sm:$0xf]
  %v96 = vld [vmem:[%s1 + $0x108] sm:$0xf]
  %v97 = vld [vmem:[%s1 + $0x10c] sm:$0xf]
  %v98 = vld [vmem:[%s1 + $0x110] sm:$0xf]
  %v99 = vld [vmem:[%s1 + $0x114] sm:$0xf]
  %v100 = vld [vmem:[%s1 + $0x118] sm:$0xf]
  %v101 = vld [vmem:[%s1 + $0x11c] sm:$0xf]
  %v102 = vld [vmem:[%s1 + $0x120] sm:$0xf]
  %v103 = vld [vmem:[%s1 + $0x124] sm:$0xf]
  %v104 = vld [vmem:[%s1 + $0x128] sm:$0xf]
  %v105 = vld [vmem:[%s1 + $0x12c] sm:$0xf]
  %v106 = vld [vmem:[%s1 + $0x130] sm:$0xf]
  %v107 = vld [vmem:[%s1 + $0x134] sm:$0xf]
  %v108 = vld [vmem:[%s1 + $0x138] sm:$0xf]
  %v109 = vld [vmem:[%s1 + $0x13c] sm:$0xf]
  %v110 = vld [vmem:[%s1 + $0x140] sm:$0xf]
  %v111 = vld [vmem:[%s1 + $0x144] sm:$0xf]
  %v112 = vld [vmem:[%s1 + $0x148] sm:$0xf]
  %v113 = vld [vmem:[%s1 + $0x14c] sm:$0xf]
  %v114 = vld [vmem:[%s1 + $0x150] sm:$0xf]
  %v115 = vld [vmem:[%s1 + $0x154] sm:$0xf]
  %v116 = vld [vmem:[%s1 + $0x158] sm:$0xf]
  %v117 = vld [vmem:[%s1 + $0x15c] sm:$0xf]
  %v118 = vld [vmem:[%s1 + $0x160] sm:$0xf]
  %v119 = vld [vmem:[%s1 + $0x164] sm:$0xf]
  %v120 = vld [vmem:[%s1 + $0x168] sm:$0xf]
  %v121 = vld [vmem:[%s1 + $0x16c] sm:$0xf]
  %v122 = vld [vmem:[%s1 + $0x170] sm:$0xf]
  %v123 = vld [vmem:[%s1 + $0x174] sm:$0xf]
  %v124 = vld [vmem:[%s1 + $0x178] sm:$0xf]
  %v125 = vld [vmem:[%s1 + $0x17c] sm:$0xf]
  %v126 = vld [vmem:[%s1 + $0x180] sm:$0xf]
  %v127 = vld [vmem:[%s1 + $0x184] sm:$0xf]
  %v128 = vld [vmem:[%s1 + $0x188] sm:$0xf]
  %v129 = vld [vmem:[%s1 + $0x18c] sm:$0xf]
  %v130 = vld [vmem:[%s1 + $0x190] sm:$0xf]
  %v131 = vld [vmem:[%s1 + $0x194] sm:$0xf]
  %v132 = vld [vmem:[%s1 + $0x198] sm:$0xf]
  %v133 = vld [vmem:[%s1 + $0x19c] sm:$0xf]
  %v134 = vld [vmem:[%s1 + $0x1a0] sm:$0xf]
  %v135 = vld [vmem:[%s1 + $0x1a4] sm:$0xf]
  %v136 = vld [vmem:[%s1 + $0x1a8] sm:$0xf]
  %v137 = vld [vmem:[%s1 + $0x1ac] sm:$0xf]
  %v138 = vld [vmem:[%s1 + $0x1b0] sm:$0xf]
  %v139 = vld [vmem:[%s1 + $0x1b4] sm:$0xf]
  %v140 = vld [vmem:[%s1 + $0x1b8] sm:$0xf]
  %v141 = vld [vmem:[%s1 + $0x1bc] sm:$0xf]
  %v142 = vld [vmem:[%s1 + $0x1c0] sm:$0xf]
  %v143 = vld [vmem:[%s1 + $0x1c4] sm:$0xf]
  %v144 = vld [vmem:[%s1 + $0x1c8] sm:$0xf]
  %v145 = vld [vmem:[%s1 + $0x1cc] sm:$0xf]
  %v146 = vld [vmem:[%s1 + $0x1d0] sm:$0xf]
  %v147 = vld [vmem:[%s1 + $0x1d4] sm:$0xf]
  %v148 = vld [vmem:[%s1 + $0x1d8] sm:$0xf]
  %v149 = vld [vmem:[%s1 + $0x1dc] sm:$0xf]
  %v150 = vld [vmem:[%s1 + $0x1e0] sm:$0xf]
  %v151 = vld [vmem:[%s1 + $0x1e4] sm:$0xf]
  %v152 = vld [vmem:[%s1 + $0x1e8] sm:$0xf]
  %v153 = vld [vmem:[%s1 + $0x1ec] sm:$0xf]
  %v154 = vld [vmem:[%s1 + $0x1f0] sm:$0xf]
  %v155 = vld [vmem:[%s1 + $0x1f4] sm:$0xf]
  %v156 = vld [vmem:[%s1 + $0x1f8] sm:$0xf]
  %v157 = vld [vmem:[%s1 + $0x1fc] sm:$0xf]
  %v158 = vld [vmem:[%s2] sm:$0x1]
  %v160 = vperm.slane %v158, 0
  %v178 = vunpack.c.l.b16 %v14
  %v179 = vunpack.c.h.b16 %v14
  %v180 = vunpack.c.l.b16 %v15
  %v181 = vunpack.c.h.b16 %v15
  %v182 = vunpack.c.l.b16 %v16
  %v183 = vunpack.c.h.b16 %v16
  %v184 = vunpack.c.l.b16 %v17
  %v185 = vunpack.c.h.b16 %v17
  %v186 = vunpack.c.l.b16 %v18
  %v187 = vunpack.c.h.b16 %v18
  %v188 = vunpack.c.l.b16 %v19
  %v189 = vunpack.c.h.b16 %v19
  %v190 = vunpack.c.l.b16 %v20
  %v191 = vunpack.c.h.b16 %v20
  %v192 = vunpack.c.l.b16 %v21
  %v193 = vunpack.c.h.b16 %v21
  %v194 = vunpack.c.l.b16 %v22
  %v195 = vunpack.c.h.b16 %v22
  %v196 = vunpack.c.l.b16 %v23
  %v197 = vunpack.c.h.b16 %v23
  %v198 = vunpack.c.l.b16 %v24
  %v199 = vunpack.c.h.b16 %v24
  %v200 = vunpack.c.l.b16 %v25
  %v201 = vunpack.c.h.b16 %v25
  %v202 = vunpack.c.l.b16 %v26
  %v203 = vunpack.c.h.b16 %v26
  %v204 = vunpack.c.l.b16 %v27
  %v205 = vunpack.c.h.b16 %v27
  %v206 = vunpack.c.l.b16 %v28
  %v207 = vunpack.c.h.b16 %v28
  %v208 = vunpack.c.l.b16 %v29
  %v209 = vunpack.c.h.b16 %v29
  %v210 = vpack.c.b16 %v186, %v178
  %v211 = vpack.c.b16 %v187, %v179
  %v212 = vpack.c.b16 %v188, %v180
  %v213 = vpack.c.b16 %v189, %v181
  %v214 = vpack.c.b16 %v190, %v182
  %v215 = vpack.c.b16 %v191, %v183
  %v216 = vpack.c.b16 %v192, %v184
  %v217 = vpack.c.b16 %v193, %v185
  %v218 = vpack.c.b16 %v202, %v194
  %v219 = vpack.c.b16 %v203, %v195
  %v220 = vpack.c.b16 %v204, %v196
  %v221 = vpack.c.b16 %v205, %v197
  %v222 = vpack.c.b16 %v206, %v198
  %v223 = vpack.c.b16 %v207, %v199
  %v224 = vpack.c.b16 %v208, %v200
  %v225 = vpack.c.b16 %v209, %v201
  %v370 = vunpack.c.l.b16 %v30
  %v371 = vunpack.c.l.b16 %v31
  %v372 = vunpack.c.l.b16 %v32
  %v373 = vunpack.c.l.b16 %v33
  %v374 = vunpack.c.l.b16 %v34
  %v375 = vunpack.c.l.b16 %v35
  %v376 = vunpack.c.l.b16 %v36
  %v377 = vunpack.c.l.b16 %v37
  %v378 = vunpack.c.l.b16 %v38
  %v379 = vunpack.c.l.b16 %v39
  %v380 = vunpack.c.l.b16 %v40
  %v381 = vunpack.c.l.b16 %v41
  %v382 = vunpack.c.l.b16 %v42
  %v383 = vunpack.c.l.b16 %v43
  %v384 = vunpack.c.l.b16 %v44
  %v385 = vunpack.c.l.b16 %v45
  %v386 = vunpack.c.l.b16 %v46
  %v387 = vunpack.c.l.b16 %v47
  %v388 = vunpack.c.l.b16 %v48
  %v389 = vunpack.c.l.b16 %v49
  %v390 = vunpack.c.l.b16 %v50
  %v391 = vunpack.c.l.b16 %v51
  %v392 = vunpack.c.l.b16 %v52
  %v393 = vunpack.c.l.b16 %v53
  %v394 = vunpack.c.l.b16 %v54
  %v395 = vunpack.c.l.b16 %v55
  %v396 = vunpack.c.l.b16 %v56
  %v397 = vunpack.c.l.b16 %v57
  %v398 = vunpack.c.l.b16 %v58
  %v399 = vunpack.c.l.b16 %v59
  %v400 = vunpack.c.l.b16 %v60
  %v401 = vunpack.c.l.b16 %v61
  %v402 = vunpack.c.l.b16 %v62
  %v403 = vunpack.c.l.b16 %v63
  %v404 = vunpack.c.l.b16 %v64
  %v405 = vunpack.c.l.b16 %v65
  %v406 = vunpack.c.l.b16 %v66
  %v407 = vunpack.c.l.b16 %v67
  %v408 = vunpack.c.l.b16 %v68
  %v409 = vunpack.c.l.b16 %v69
  %v410 = vunpack.c.l.b16 %v70
  %v411 = vunpack.c.l.b16 %v71
  %v412 = vunpack.c.l.b16 %v72
  %v413 = vunpack.c.l.b16 %v73
  %v414 = vunpack.c.l.b16 %v74
  %v415 = vunpack.c.l.b16 %v75
  %v416 = vunpack.c.l.b16 %v76
  %v417 = vunpack.c.l.b16 %v77
  %v418 = vunpack.c.l.b16 %v78
  %v419 = vunpack.c.l.b16 %v79
  %v420 = vunpack.c.l.b16 %v80
  %v421 = vunpack.c.l.b16 %v81
  %v422 = vunpack.c.l.b16 %v82
  %v423 = vunpack.c.l.b16 %v83
  %v424 = vunpack.c.l.b16 %v84
  %v425 = vunpack.c.l.b16 %v85
  %v426 = vunpack.c.l.b16 %v86
  %v427 = vunpack.c.l.b16 %v87
  %v428 = vunpack.c.l.b16 %v88
  %v429 = vunpack.c.l.b16 %v89
  %v430 = vunpack.c.l.b16 %v90
  %v431 = vunpack.c.l.b16 %v91
  %v432 = vunpack.c.l.b16 %v92
  %v433 = vunpack.c.l.b16 %v93
  %v434 = vunpack.c.l.b16 %v94
  %v435 = vunpack.c.l.b16 %v95
  %v436 = vunpack.c.l.b16 %v96
  %v437 = vunpack.c.l.b16 %v97
  %v438 = vunpack.c.l.b16 %v98
  %v439 = vunpack.c.l.b16 %v99
  %v440 = vunpack.c.l.b16 %v100
  %v441 = vunpack.c.l.b16 %v101
  %v442 = vunpack.c.l.b16 %v102
  %v443 = vunpack.c.l.b16 %v103
  %v444 = vunpack.c.l.b16 %v104
  %v445 = vunpack.c.l.b16 %v105
  %v446 = vunpack.c.l.b16 %v106
  %v447 = vunpack.c.l.b16 %v107
  %v448 = vunpack.c.l.b16 %v108
  %v449 = vunpack.c.l.b16 %v109
  %v450 = vunpack.c.l.b16 %v110
  %v451 = vunpack.c.l.b16 %v111
  %v452 = vunpack.c.l.b16 %v112
  %v453 = vunpack.c.l.b16 %v113
  %v454 = vunpack.c.l.b16 %v114
  %v455 = vunpack.c.l.b16 %v115
  %v456 = vunpack.c.l.b16 %v116
  %v457 = vunpack.c.l.b16 %v117
  %v458 = vunpack.c.l.b16 %v118
  %v459 = vunpack.c.l.b16 %v119
  %v460 = vunpack.c.l.b16 %v120
  %v461 = vunpack.c.l.b16 %v121
  %v462 = vunpack.c.l.b16 %v122
  %v463 = vunpack.c.l.b16 %v123
  %v464 = vunpack.c.l.b16 %v124
  %v465 = vunpack.c.l.b16 %v125
  %v466 = vunpack.c.l.b16 %v126
  %v467 = vunpack.c.l.b16 %v127
  %v468 = vunpack.c.l.b16 %v128
  %v469 = vunpack.c.l.b16 %v129
  %v470 = vunpack.c.l.b16 %v130
  %v471 = vunpack.c.l.b16 %v131
  %v472 = vunpack.c.l.b16 %v132
  %v473 = vunpack.c.l.b16 %v133
  %v474 = vunpack.c.l.b16 %v134
  %v475 = vunpack.c.l.b16 %v135
  %v476 = vunpack.c.l.b16 %v136
  %v477 = vunpack.c.l.b16 %v137
  %v478 = vunpack.c.l.b16 %v138
  %v479 = vunpack.c.l.b16 %v139
  %v480 = vunpack.c.l.b16 %v140
  %v481 = vunpack.c.l.b16 %v141
  %v482 = vunpack.c.l.b16 %v142
  %v483 = vunpack.c.l.b16 %v143
  %v484 = vunpack.c.l.b16 %v144
  %v485 = vunpack.c.l.b16 %v145
  %v486 = vunpack.c.l.b16 %v146
  %v487 = vunpack.c.l.b16 %v147
  %v488 = vunpack.c.l.b16 %v148
  %v489 = vunpack.c.l.b16 %v149
  %v490 = vunpack.c.l.b16 %v150
  %v491 = vunpack.c.l.b16 %v151
  %v492 = vunpack.c.l.b16 %v152
  %v493 = vunpack.c.l.b16 %v153
  %v494 = vunpack.c.l.b16 %v154
  %v495 = vunpack.c.l.b16 %v155
  %v496 = vunpack.c.l.b16 %v156
  %v497 = vunpack.c.l.b16 %v157
  %v498 = vpack.c.b16 %v371, %v370
  %v499 = vpack.c.b16 %v373, %v372
  %v500 = vpack.c.b16 %v375, %v374
  %v501 = vpack.c.b16 %v377, %v376
  %v502 = vpack.c.b16 %v379, %v378
  %v503 = vpack.c.b16 %v381, %v380
  %v504 = vpack.c.b16 %v383, %v382
  %v505 = vpack.c.b16 %v385, %v384
  %v506 = vpack.c.b16 %v387, %v386
  %v507 = vpack.c.b16 %v389, %v388
  %v508 = vpack.c.b16 %v391, %v390
  %v509 = vpack.c.b16 %v393, %v392
  %v510 = vpack.c.b16 %v395, %v394
  %v511 = vpack.c.b16 %v397, %v396
  %v512 = vpack.c.b16 %v399, %v398
  %v513 = vpack.c.b16 %v401, %v400
  %v514 = vpack.c.b16 %v403, %v402
  %v515 = vpack.c.b16 %v405, %v404
  %v516 = vpack.c.b16 %v407, %v406
  %v517 = vpack.c.b16 %v409, %v408
  %v518 = vpack.c.b16 %v411, %v410
  %v519 = vpack.c.b16 %v413, %v412
  %v520 = vpack.c.b16 %v415, %v414
  %v521 = vpack.c.b16 %v417, %v416
  %v522 = vpack.c.b16 %v419, %v418
  %v523 = vpack.c.b16 %v421, %v420
  %v524 = vpack.c.b16 %v423, %v422
  %v525 = vpack.c.b16 %v425, %v424
  %v526 = vpack.c.b16 %v427, %v426
  %v527 = vpack.c.b16 %v429, %v428
  %v528 = vpack.c.b16 %v431, %v430
  %v529 = vpack.c.b16 %v433, %v432
  %v530 = vpack.c.b16 %v435, %v434
  %v531 = vpack.c.b16 %v437, %v436
  %v532 = vpack.c.b16 %v439, %v438
  %v533 = vpack.c.b16 %v441, %v440
  %v534 = vpack.c.b16 %v443, %v442
  %v535 = vpack.c.b16 %v445, %v444
  %v536 = vpack.c.b16 %v447, %v446
  %v537 = vpack.c.b16 %v449, %v448
  %v538 = vpack.c.b16 %v451, %v450
  %v539 = vpack.c.b16 %v453, %v452
  %v540 = vpack.c.b16 %v455, %v454
  %v541 = vpack.c.b16 %v457, %v456
  %v542 = vpack.c.b16 %v459, %v458
  %v543 = vpack.c.b16 %v461, %v460
  %v544 = vpack.c.b16 %v463, %v462
  %v545 = vpack.c.b16 %v465, %v464
  %v546 = vpack.c.b16 %v467, %v466
  %v547 = vpack.c.b16 %v469, %v468
  %v548 = vpack.c.b16 %v471, %v470
  %v549 = vpack.c.b16 %v473, %v472
  %v550 = vpack.c.b16 %v475, %v474
  %v551 = vpack.c.b16 %v477, %v476
  %v552 = vpack.c.b16 %v479, %v478
  %v553 = vpack.c.b16 %v481, %v480
  %v554 = vpack.c.b16 %v483, %v482
  %v555 = vpack.c.b16 %v485, %v484
  %v556 = vpack.c.b16 %v487, %v486
  %v557 = vpack.c.b16 %v489, %v488
  %v558 = vpack.c.b16 %v491, %v490
  %v559 = vpack.c.b16 %v493, %v492
  %v560 = vpack.c.b16 %v495, %v494
  %v561 = vpack.c.b16 %v497, %v496
  %626 = vmatpush.bf16.msra.mxu0 %v505
  %627 = vmatpush.bf16.msra.mxu0 %v504
  %628 = vmatpush.bf16.msra.mxu0 %v503
  %629 = vmatpush.bf16.msra.mxu0 %v502
  %630 = vmatpush.bf16.msra.mxu0 %v501
  %631 = vmatpush.bf16.msra.mxu0 %v500
  %632 = vmatpush.bf16.msra.mxu0 %v499
  %633 = vmatpush.bf16.msra.mxu0 %v498
  %634 = vmatmul.bf16.gmra.mxu0 %v210
  %v635 = vpop.f32.mrf.mxu0
  %v636 = vadd.f32 %v160, %v635
  %v637 = vpop.f32.mrf.mxu0
  %v638 = vadd.f32 %v160, %v637
  %639 = vmatmul.bf16.gmra.mxu0 %v218
  %v640 = vpop.f32.mrf.mxu0
  %v641 = vadd.f32 %v160, %v640
  %v642 = vpop.f32.mrf.mxu0
  %v643 = vadd.f32 %v160, %v642
  %644 = vdwg.mxu0
  %645 = vmatpush.bf16.msra.mxu0 %v513
  %646 = vmatpush.bf16.msra.mxu0 %v512
  %647 = vmatpush.bf16.msra.mxu0 %v511
  %648 = vmatpush.bf16.msra.mxu0 %v510
  %649 = vmatpush.bf16.msra.mxu0 %v509
  %650 = vmatpush.bf16.msra.mxu0 %v508
  %651 = vmatpush.bf16.msra.mxu0 %v507
  %652 = vmatpush.bf16.msra.mxu0 %v506
  %653 = vmatmul.bf16.gmra.mxu0 %v211
  %v654 = vpop.f32.mrf.mxu0
  %v655 = vadd.f32 %v636, %v654
  %v656 = vpop.f32.mrf.mxu0
  %v657 = vadd.f32 %v638, %v656
  %658 = vmatmul.bf16.gmra.mxu0 %v219
  %v659 = vpop.f32.mrf.mxu0
  %v660 = vadd.f32 %v641, %v659
  %v661 = vpop.f32.mrf.mxu0
  %v662 = vadd.f32 %v643, %v661
  %663 = vdwg.mxu0
  %664 = vmatpush.bf16.msra.mxu0 %v521
  %665 = vmatpush.bf16.msra.mxu0 %v520
  %666 = vmatpush.bf16.msra.mxu0 %v519
  %667 = vmatpush.bf16.msra.mxu0 %v518
  %668 = vmatpush.bf16.msra.mxu0 %v517
  %669 = vmatpush.bf16.msra.mxu0 %v516
  %670 = vmatpush.bf16.msra.mxu0 %v515
  %671 = vmatpush.bf16.msra.mxu0 %v514
  %672 = vmatmul.bf16.gmra.mxu0 %v212
  %v673 = vpop.f32.mrf.mxu0
  %v674 = vadd.f32 %v655, %v673
  %v675 = vpop.f32.mrf.mxu0
  %v676 = vadd.f32 %v657, %v675
  %677 = vmatmul.bf16.gmra.mxu0 %v220
  %v678 = vpop.f32.mrf.mxu0
  %v679 = vadd.f32 %v660, %v678
  %v680 = vpop.f32.mrf.mxu0
  %v681 = vadd.f32 %v662, %v680
  %682 = vdwg.mxu0
  %683 = vmatpush.bf16.msra.mxu0 %v529
  %684 = vmatpush.bf16.msra.mxu0 %v528
  %685 = vmatpush.bf16.msra.mxu0 %v527
  %686 = vmatpush.bf16.msra.mxu0 %v526
  %687 = vmatpush.bf16.msra.mxu0 %v525
  %688 = vmatpush.bf16.msra.mxu0 %v524
  %689 = vmatpush.bf16.msra.mxu0 %v523
  %690 = vmatpush.bf16.msra.mxu0 %v522
  %691 = vmatmul.bf16.gmra.mxu0 %v213
  %v692 = vpop.f32.mrf.mxu0
  %v693 = vadd.f32 %v674, %v692
  %v694 = vpop.f32.mrf.mxu0
  %v695 = vadd.f32 %v676, %v694
  %696 = vmatmul.bf16.gmra.mxu0 %v221
  %v697 = vpop.f32.mrf.mxu0
  %v698 = vadd.f32 %v679, %v697
  %v699 = vpop.f32.mrf.mxu0
  %v700 = vadd.f32 %v681, %v699
  %701 = vdwg.mxu0
  %702 = vmatpush.bf16.msra.mxu0 %v537
  %703 = vmatpush.bf16.msra.mxu0 %v536
  %704 = vmatpush.bf16.msra.mxu0 %v535
  %705 = vmatpush.bf16.msra.mxu0 %v534
  %706 = vmatpush.bf16.msra.mxu0 %v533
  %707 = vmatpush.bf16.msra.mxu0 %v532
  %708 = vmatpush.bf16.msra.mxu0 %v531
  %709 = vmatpush.bf16.msra.mxu0 %v530
  %710 = vmatmul.bf16.gmra.mxu0 %v214
  %v711 = vpop.f32.mrf.mxu0
  %v712 = vadd.f32 %v693, %v711
  %v713 = vpop.f32.mrf.mxu0
  %v714 = vadd.f32 %v695, %v713
  %715 = vmatmul.bf16.gmra.mxu0 %v222
  %v716 = vpop.f32.mrf.mxu0
  %v717 = vadd.f32 %v698, %v716
  %v718 = vpop.f32.mrf.mxu0
  %v719 = vadd.f32 %v700, %v718
  %720 = vdwg.mxu0
  %721 = vmatpush.bf16.msra.mxu0 %v545
  %722 = vmatpush.bf16.msra.mxu0 %v544
  %723 = vmatpush.bf16.msra.mxu0 %v543
  %724 = vmatpush.bf16.msra.mxu0 %v542
  %725 = vmatpush.bf16.msra.mxu0 %v541
  %726 = vmatpush.bf16.msra.mxu0 %v540
  %727 = vmatpush.bf16.msra.mxu0 %v539
  %728 = vmatpush.bf16.msra.mxu0 %v538
  %729 = vmatmul.bf16.gmra.mxu0 %v215
  %v730 = vpop.f32.mrf.mxu0
  %v731 = vadd.f32 %v712, %v730
  %v732 = vpop.f32.mrf.mxu0
  %v733 = vadd.f32 %v714, %v732
  %734 = vmatmul.bf16.gmra.mxu0 %v223
  %v735 = vpop.f32.mrf.mxu0
  %v736 = vadd.f32 %v717, %v735
  %v737 = vpop.f32.mrf.mxu0
  %v738 = vadd.f32 %v719, %v737
  %739 = vdwg.mxu0
  %740 = vmatpush.bf16.msra.mxu0 %v553
  %741 = vmatpush.bf16.msra.mxu0 %v552
  %742 = vmatpush.bf16.msra.mxu0 %v551
  %743 = vmatpush.bf16.msra.mxu0 %v550
  %744 = vmatpush.bf16.msra.mxu0 %v549
  %745 = vmatpush.bf16.msra.mxu0 %v548
  %746 = vmatpush.bf16.msra.mxu0 %v547
  %747 = vmatpush.bf16.msra.mxu0 %v546
  %748 = vmatmul.bf16.gmra.mxu0 %v216
  %v749 = vpop.f32.mrf.mxu0
  %v750 = vadd.f32 %v731, %v749
  %v751 = vpop.f32.mrf.mxu0
  %v752 = vadd.f32 %v733, %v751
  %753 = vmatmul.bf16.gmra.mxu0 %v224
  %v754 = vpop.f32.mrf.mxu0
  %v755 = vadd.f32 %v736, %v754
  %v756 = vpop.f32.mrf.mxu0
  %v757 = vadd.f32 %v738, %v756
  %758 = vdwg.mxu0
  %759 = vmatpush.bf16.msra.mxu0 %v561
  %760 = vmatpush.bf16.msra.mxu0 %v560
  %761 = vmatpush.bf16.msra.mxu0 %v559
  %762 = vmatpush.bf16.msra.mxu0 %v558
  %763 = vmatpush.bf16.msra.mxu0 %v557
  %764 = vmatpush.bf16.msra.mxu0 %v556
  %765 = vmatpush.bf16.msra.mxu0 %v555
  %766 = vmatpush.bf16.msra.mxu0 %v554
  %767 = vmatmul.bf16.gmra.mxu0 %v217
  %v768 = vpop.f32.mrf.mxu0
  %v769 = vadd.f32 %v750, %v768
  %v770 = vpop.f32.mrf.mxu0
  %v771 = vadd.f32 %v752, %v770
  %772 = vmatmul.bf16.gmra.mxu0 %v225
  %v773 = vpop.f32.mrf.mxu0
  %v774 = vadd.f32 %v755, %v773
  %v775 = vpop.f32.mrf.mxu0
  %v776 = vadd.f32 %v757, %v775
  %777 = vdwg.mxu0
  %v778 = vpack.c.bf16 %v769, %v769
  %v779 = vpack.c.bf16 %v771, %v771
  %v780 = vpack.c.bf16 %v774, %v774
  %v781 = vpack.c.bf16 %v776, %v776
  %782 = vst [vmem:[%s3] sm:$0xf] %v778
  %783 = vst [vmem:[%s3 + $0x4] sm:$0xf] %v779
  %784 = vst [vmem:[%s3 + $0x8] sm:$0xf] %v780
  %785 = vst [vmem:[%s3 + $0xc] sm:$0xf] %v781
  // Predicated region
  $region14: #{multiscale_forward_pallas.29} parent=0 // pred_check
    _
  $region15: #{multiscale_forward_pallas.29} parent=0 // pred_check_branch
    %787 = sbr.rel (0) target = $region17
  $region16: #{multiscale_forward_pallas.29} parent=0 // pred_region
    _
  $region17: #{multiscale_forward_pallas.29} parent=0 // pred_fallthru
    _
  // Predicated region
  $region18: #{multiscale_forward_pallas.29} parent=0 // pred_check
    _
  $region19: #{multiscale_forward_pallas.29} parent=0 // pred_check_branch
    %789 = sbr.rel (0) target = $region21
  $region20: #{multiscale_forward_pallas.29} parent=0 // pred_region
    _
  $region21: #{multiscale_forward_pallas.29} parent=0 // pred_fallthru
    _

// kernel: multiscale_forward_pallas.20
$region0: #{multiscale_forward_pallas.20}
  #allocation0 [shape = 'u32[]', space=smem, size = 0x4, offset = 0x4, fixed_abs, tag = 'smem constant byte address 0x4 - core index']
  #allocation1 [shape = 'u32[72,128]{1,0:T(1,128)}', space=vmem, size = 0x9000, scoped, tag = 'internal scratch']
  %s0 = inlined_call_operand.vmem [shape: bf16[192,128], index: 0, kind: input, shape index: {}]
  %s1 = inlined_call_operand.vmem [shape: bf16[128,128], index: 1, kind: input, shape index: {}]
  %s2 = inlined_call_operand.vmem [shape: f32[1,128], index: 2, kind: input, shape index: {}]
  %s3 = inlined_call_operand.vmem [shape: bf16[192,128], index: 3, kind: output, shape index: {}]
  %s4 = sld [smem:[#allocation0]]
  $region45: #{multiscale_forward_pallas.20} parent=0
    _
  %s6 = ssub.s32 1, %s4
  %s7 = scalar_select 0, %s6, %s4
  loop: start=0, step=1, limit=4
  $region2: #{multiscale_forward_pallas.20} parent=0 // loop_pre_header
    _
  $region3: #{multiscale_forward_pallas.20} parent=0 // loop_header
    %s9 = sphi 0, %s13
    %p10 = scmp.ge.s32.totalorder %s9, 4
    %s16 = sphi 0, %s28
    %s17 = sphi 0, %s24
    %s18 = sphi 0, %s16
    %s19 = sphi 0, %s17
    %s20 = sphi 0, %s18
    %s21 = sphi 0, %s19
    %s31 = sphi 0, %s33
    %s34 = sphi 0, %s31
    %s35 = sphi 0, %s34
    %s51 = sphi 0, %s35
    %s57 = sphi 0, %s59
    %s60 = sphi 0, %s57
    %s61 = sphi 0, %s60
    %s77 = sphi 0, %s61
    %s83 = sphi 0, %s85
    %s86 = sphi 0, %s83
    %s87 = sphi 0, %s86
    %s103 = sphi 0, %s87
    %s111 = sphi 0, %s113
    %s114 = sphi 0, %s111
    %s115 = sphi 0, %s114
    %s131 = sphi 0, %s115
  $region4: #{multiscale_forward_pallas.20} parent=0 // loop_header_branch
    %12 = sbr.rel (%p10) target = $region8
  $region5: #{multiscale_forward_pallas.20} parent=0 // loop_body
    %s14 = ssub.s32 %s9, 1
    %s15 = ssub.s32 %s9, 2
    %s22 = sadd.s32 1, %s17
    %p23 = scmp.ge.s32.totalorder %s22, 2
    %s24 = scalar_select %p23, 0, %s22
    %s25 = sadd.s32 1, %s16
    %s26 = scalar_select %p23, %s25, %s16
    %p27 = scmp.ge.s32.totalorder %s26, 1
    %s28 = scalar_select %p27, 0, %s26
    %s29 = ssub.s32 %s17, %s24
    %p30 = scmp.eq.s32.totalorder %s29, 0
    %s32 = sadd.s32 %s31, 1
    %s33 = scalar_select %p30, %s31, %s32
    %p36 = pneg %p30
    %p37 = scmp.eq.s32.totalorder %s9, 1
    %p38 = por %p36, %p37
    %p39 = scmp.ne.s32.totalorder %s31, %s34
    %p40 = scmp.eq.s32.totalorder %s9, 0
    %p41 = por %p39, %p40
    %p42 = scmp.ne.s32.totalorder %s31, %s34
    %p43 = scmp.eq.s32.totalorder %s14, 1
    %p44 = por %p42, %p43
    %p45 = scmp.ne.s32.totalorder %s34, %s35
    %p46 = scmp.eq.s32.totalorder %s14, 0
    %p47 = por %p45, %p46
    %p48 = scmp.ne.s32.totalorder %s34, %s35
    %p49 = scmp.eq.s32.totalorder %s15, 1
    %p50 = por %p48, %p49
    %p52 = scmp.ne.s32.totalorder %s35, %s51
    %p53 = scmp.eq.s32.totalorder %s15, 0
    %p54 = por %p52, %p53
    %s55 = ssub.s32 %s16, %s28
    %p56 = scmp.eq.s32.totalorder %s55, 0
    %s58 = sadd.s32 %s57, 1
    %s59 = scalar_select %p56, %s57, %s58
    %p62 = pneg %p56
    %p63 = scmp.eq.s32.totalorder %s9, 1
    %p64 = por %p62, %p63
    %p65 = scmp.ne.s32.totalorder %s57, %s60
    %p66 = scmp.eq.s32.totalorder %s9, 0
    %p67 = por %p65, %p66
    %p68 = scmp.ne.s32.totalorder %s57, %s60
    %p69 = scmp.eq.s32.totalorder %s14, 1
    %p70 = por %p68, %p69
    %p71 = scmp.ne.s32.totalorder %s60, %s61
    %p72 = scmp.eq.s32.totalorder %s14, 0
    %p73 = por %p71, %p72
    %p74 = scmp.ne.s32.totalorder %s60, %s61
    %p75 = scmp.eq.s32.totalorder %s15, 1
    %p76 = por %p74, %p75
    %p78 = scmp.ne.s32.totalorder %s61, %s77
    %p79 = scmp.eq.s32.totalorder %s15, 0
    %p80 = por %p78, %p79
    %s81 = ssub.s32 %s16, %s28
    %p82 = scmp.eq.s32.totalorder %s81, 0
    %s84 = sadd.s32 %s83, 1
    %s85 = scalar_select %p82, %s83, %s84
    %p88 = pneg %p82
    %p89 = scmp.eq.s32.totalorder %s9, 1
    %p90 = por %p88, %p89
    %p91 = scmp.ne.s32.totalorder %s83, %s86
    %p92 = scmp.eq.s32.totalorder %s9, 0
    %p93 = por %p91, %p92
    %p94 = scmp.ne.s32.totalorder %s83, %s86
    %p95 = scmp.eq.s32.totalorder %s14, 1
    %p96 = por %p94, %p95
    %p97 = scmp.ne.s32.totalorder %s86, %s87
    %p98 = scmp.eq.s32.totalorder %s14, 0
    %p99 = por %p97, %p98
    %p100 = scmp.ne.s32.totalorder %s86, %s87
    %p101 = scmp.eq.s32.totalorder %s15, 1
    %p102 = por %p100, %p101
    %p104 = scmp.ne.s32.totalorder %s87, %s103
    %p105 = scmp.eq.s32.totalorder %s15, 0
    %p106 = por %p104, %p105
    %s107 = ssub.s32 %s17, %s24
    %s108 = ssub.s32 %s16, %s28
    %s109 = sor.u32 %s107, %s108
    %p110 = scmp.eq.s32.totalorder %s109, 0
    %s112 = sadd.s32 %s111, 1
    %s113 = scalar_select %p110, %s111, %s112
    %p116 = pneg %p110
    %p117 = scmp.eq.s32.totalorder %s9, 1
    %p118 = por %p116, %p117
    %p119 = scmp.ne.s32.totalorder %s111, %s114
    %p120 = scmp.eq.s32.totalorder %s9, 0
    %p121 = por %p119, %p120
    %p122 = scmp.ne.s32.totalorder %s111, %s114
    %p123 = scmp.eq.s32.totalorder %s14, 1
    %p124 = por %p122, %p123
    %p125 = scmp.ne.s32.totalorder %s114, %s115
    %p126 = scmp.eq.s32.totalorder %s14, 0
    %p127 = por %p125, %p126
    %p128 = scmp.ne.s32.totalorder %s114, %s115
    %p129 = scmp.eq.s32.totalorder %s15, 1
    %p130 = por %p128, %p129
    %p132 = scmp.ne.s32.totalorder %s115, %s131
    %p133 = scmp.eq.s32.totalorder %s15, 0
    %p134 = por %p132, %p133
    %p135 = scmp.le.s32.totalorder 1, %s9
    %p136 = scmp.lt.s32.totalorder %s9, 3
    %p137 = pnand %p135, %p136
    %p138 = pneg %p137
    // Predicated region
    $region9: #{multiscale_forward_pallas.20} parent=5 // pred_check
      _
    $region10: #{multiscale_forward_pallas.20} parent=5 // pred_check_branch
      %140 = sbr.rel (%p137) target = $region12
    $region11: #{multiscale_forward_pallas.20} parent=5 // pred_region
      %s141 = ssub.s32 %s9, 1
      // Predicated region
      $region13: #{multiscale_forward_pallas.20} parent=11 // pred_check
        %p142 = pneg %p73
      $region14: #{multiscale_forward_pallas.20} parent=11 // pred_check_branch
        %144 = sbr.rel (%p142) target = $region16
      $region15: #{multiscale_forward_pallas.20} parent=11 // pred_region
        %p145 = scmp.lt.s32.totalorder %s18, 0
        %s146 = scalar_select %p145, %s18, 0
        %s147 = smul.addr %s146, 4
        %s148 = scalar_lea.vmem %s1, %s147
      $region16: #{multiscale_forward_pallas.20} parent=11 // pred_fallthru
        _
      // Predicated region
      $region17: #{multiscale_forward_pallas.20} parent=11 // pred_check
        %p149 = pneg %p99
      $region18: #{multiscale_forward_pallas.20} parent=11 // pred_check_branch
        %151 = sbr.rel (%p149) target = $region20
      $region19: #{multiscale_forward_pallas.20} parent=11 // pred_region
        %p152 = scmp.lt.s32.totalorder %s18, 0
        %s153 = scalar_select %p152, %s18, 0
        %s154 = scalar_lea.vmem %s2, %s153
      $region20: #{multiscale_forward_pallas.20} parent=11 // pred_fallthru
        _
    $region12: #{multiscale_forward_pallas.20} parent=5 // pred_fallthru
      _
    %p155 = scmp.lt.s32.totalorder %s9, 2
    // Predicated region
    $region21: #{multiscale_forward_pallas.20} parent=5 // pred_check
      %p156 = pneg %p155
    $region22: #{multiscale_forward_pallas.20} parent=5 // pred_check_branch
      %158 = sbr.rel (%p156) target = $region24
    $region23: #{multiscale_forward_pallas.20} parent=5 // pred_region
      // Predicated region
      $region25: #{multiscale_forward_pallas.20} parent=23 // pred_check
        %p159 = pneg %p41
      $region26: #{multiscale_forward_pallas.20} parent=23 // pred_check_branch
        %161 = sbr.rel (%p159) target = $region28
      $region27: #{multiscale_forward_pallas.20} parent=23 // pred_region
        %s162 = smul.u32 12, %s17
        %p163 = scmp.lt.s32.totalorder %s162, 23
        %s164 = scalar_select %p163, %s162, 23
        %s165 = smul.addr %s164, 4
        %s166 = scalar_lea.vmem %s0, %s165
        %s167 = smul.u32 12, %s17
      $region28: #{multiscale_forward_pallas.20} parent=23 // pred_fallthru
        _
    $region24: #{multiscale_forward_pallas.20} parent=5 // pred_fallthru
      _
    %p168 = scmp.le.s32.totalorder 1, %s9
    %p169 = scmp.lt.s32.totalorder %s9, 3
    %p170 = pnand %p168, %p169
    %p171 = pneg %p170
    // Predicated region
    $region29: #{multiscale_forward_pallas.20} parent=5 // pred_check
      _
    $region30: #{multiscale_forward_pallas.20} parent=5 // pred_check_branch
      %173 = sbr.rel (%p170) target = $region32
    $region31: #{multiscale_forward_pallas.20} parent=5 // pred_region
      %s174 = ssub.s32 %s9, 1
      %s175 = smul.u32 12, %s19
      %p176 = scmp.lt.s32.totalorder %s175, 23
      %s177 = scalar_select %p176, %s175, 23
      %s178 = smul.addr %s177, 4
      %s179 = scalar_lea.vmem %s0, %s178
      %p180 = pneg %p47
      %p181 = pneg %p44
      %p182 = scmp.lt.s32.totalorder %s18, 0
      %s183 = scalar_select %p182, %s18, 0
      %s184 = smul.addr %s183, 4
      %s185 = scalar_lea.vmem %s1, %s184
      %p186 = pneg %p73
      %p187 = pneg %p70
      %p188 = scmp.lt.s32.totalorder %s18, 0
      %s189 = scalar_select %p188, %s18, 0
      %s190 = scalar_lea.vmem %s2, %s189
      %p191 = pneg %p99
      %p192 = pneg %p96
      %p193 = pneg %p127
      %p194 = pneg %p124
      %s195 = smul.u32 12, %s19
      %p196 = scmp.lt.s32.totalorder %s195, 23
      %s197 = scalar_select %p196, %s195, 23
      %p198 = scmp.lt.s32.totalorder %s18, 0
      %s199 = scalar_select %p198, %s18, 0
      %s200 = sadd.s32 %s199, %s197
      %s201 = smul.addr %s200, 4
      %s202 = scalar_lea.vmem %s3, %s201
      %s203 = smul.u32 12, %s19
      %p204 = scmp.lt.s32.totalorder %s203, 23
      %s205 = scalar_select %p204, %s203, 23
      %s206 = smul.addr %s205, 4
      %s207 = scalar_lea.vmem %s0, %s206
      %s208 = smul.u32 12, %s19
      %p209 = scmp.lt.s32.totalorder %s18, 0
      %s210 = scalar_select %p209, %s18, 0
      %s211 = smul.addr %s210, 4
      %s212 = scalar_lea.vmem %s1, %s211
      %p213 = scmp.lt.s32.totalorder %s18, 0
      %s214 = scalar_select %p213, %s18, 0
      %s215 = scalar_lea.vmem %s2, %s214
      %s216 = smul.u32 12, %s19
      %p217 = scmp.lt.s32.totalorder %s216, 23
      %s218 = scalar_select %p217, %s216, 23
      %p219 = scmp.lt.s32.totalorder %s18, 0
      %s220 = scalar_select %p219, %s18, 0
      %s221 = sadd.s32 %s220, %s218
      %s222 = smul.addr %s221, 4
      %s223 = scalar_lea.vmem %s3, %s222
      %s224 = smul.u32 12, %s19
      %v225 = vld [vmem:[%s207] sm:$0xf]
      %v226 = vld [vmem:[%s207 + $0x4] sm:$0xf]
      %v227 = vld [vmem:[%s207 + $0x8] sm:$0xf]
      %v228 = vld [vmem:[%s207 + $0xc] sm:$0xf]
      %v229 = vld [vmem:[%s207 + $0x10] sm:$0xf]
      %v230 = vld [vmem:[%s207 + $0x14] sm:$0xf]
      %v231 = vld [vmem:[%s207 + $0x18] sm:$0xf]
      %v232 = vld [vmem:[%s207 + $0x1c] sm:$0xf]
      %v233 = vld [vmem:[%s207 + $0x20] sm:$0xf]
      %v234 = vld [vmem:[%s207 + $0x24] sm:$0xf]
      %v235 = vld [vmem:[%s207 + $0x28] sm:$0xf]
      %v236 = vld [vmem:[%s207 + $0x2c] sm:$0xf]
      %v237 = vld [vmem:[%s212] sm:$0xf]
      %v238 = vld [vmem:[%s212 + $0x4] sm:$0xf]
      %v239 = vld [vmem:[%s212 + $0x8] sm:$0xf]
      %v240 = vld [vmem:[%s212 + $0xc] sm:$0xf]
      %v241 = vld [vmem:[%s212 + $0x10] sm:$0xf]
      %v242 = vld [vmem:[%s212 + $0x14] sm:$0xf]
      %v243 = vld [vmem:[%s212 + $0x18] sm:$0xf]
      %v244 = vld [vmem:[%s212 + $0x1c] sm:$0xf]
      %v245 = vld [vmem:[%s212 + $0x20] sm:$0xf]
      %v246 = vld [vmem:[%s212 + $0x24] sm:$0xf]
      %v247 = vld [vmem:[%s212 + $0x28] sm:$0xf]
      %v248 = vld [vmem:[%s212 + $0x2c] sm:$0xf]
      %v249 = vld [vmem:[%s212 + $0x30] sm:$0xf]
      %v250 = vld [vmem:[%s212 + $0x34] sm:$0xf]
      %v251 = vld [vmem:[%s212 + $0x38] sm:$0xf]
      %v252 = vld [vmem:[%s212 + $0x3c] sm:$0xf]
      %v253 = vld [vmem:[%s215] sm:$0x1]
      %v255 = vperm.slane %v253, 0
      %v269 = vunpack.c.l.b16 %v225
      %v270 = vunpack.c.l.b16 %v226
      %v271 = vunpack.c.l.b16 %v227
      %v272 = vunpack.c.l.b16 %v228
      %v273 = vunpack.c.l.b16 %v229
      %v274 = vunpack.c.l.b16 %v230
      %v275 = vunpack.c.l.b16 %v231
      %v276 = vunpack.c.l.b16 %v232
      %v277 = vunpack.c.l.b16 %v233
      %v278 = vunpack.c.l.b16 %v234
      %v279 = vunpack.c.l.b16 %v235
      %v280 = vunpack.c.l.b16 %v236
      %v281 = vpack.c.b16 %v270, %v269
      %v282 = vpack.c.b16 %v272, %v271
      %v283 = vpack.c.b16 %v274, %v273
      %v284 = vpack.c.b16 %v276, %v275
      %v285 = vpack.c.b16 %v278, %v277
      %v286 = vpack.c.b16 %v280, %v279
      %v309 = vunpack.c.l.b16 %v237
      %v310 = vunpack.c.l.b16 %v238
      %v311 = vunpack.c.l.b16 %v239
      %v312 = vunpack.c.l.b16 %v240
      %v313 = vunpack.c.l.b16 %v241
      %v314 = vunpack.c.l.b16 %v242
      %v315 = vunpack.c.l.b16 %v243
      %v316 = vunpack.c.l.b16 %v244
      %v317 = vunpack.c.l.b16 %v245
      %v318 = vunpack.c.l.b16 %v246
      %v319 = vunpack.c.l.b16 %v247
      %v320 = vunpack.c.l.b16 %v248
      %v321 = vunpack.c.l.b16 %v249
      %v322 = vunpack.c.l.b16 %v250
      %v323 = vunpack.c.l.b16 %v251
      %v324 = vunpack.c.l.b16 %v252
      %v325 = vpack.c.b16 %v310, %v309
      %v326 = vpack.c.b16 %v312, %v311
      %v327 = vpack.c.b16 %v314, %v313
      %v328 = vpack.c.b16 %v316, %v315
      %v329 = vpack.c.b16 %v318, %v317
      %v330 = vpack.c.b16 %v320, %v319
      %v331 = vpack.c.b16 %v322, %v321
      %v332 = vpack.c.b16 %v324, %v323
      %341 = vmatpush.bf16.msra.mxu0 %v332
      %342 = vmatpush.bf16.msra.mxu0 %v331
      %343 = vmatpush.bf16.msra.mxu0 %v330
      %344 = vmatpush.bf16.msra.mxu0 %v329
      %345 = vmatpush.bf16.msra.mxu0 %v328
      %346 = vmatpush.bf16.msra.mxu0 %v327
      %347 = vmatpush.bf16.msra.mxu0 %v326
      %348 = vmatpush.bf16.msra.mxu0 %v325
      %349 = vmatmul.bf16.gmra.mxu0 %v281
      %v350 = vpop.f32.mrf.mxu0
      %v351 = vadd.f32 %v255, %v350
      %v352 = vpop.f32.mrf.mxu0
      %v353 = vadd.f32 %v255, %v352
      %354 = vmatmul.bf16.gmra.mxu0 %v282
      %v355 = vpop.f32.mrf.mxu0
      %v356 = vadd.f32 %v255, %v355
      %v357 = vpop.f32.mrf.mxu0
      %v358 = vadd.f32 %v255, %v357
      %359 = vmatmul.bf16.gmra.mxu0 %v283
      %v360 = vpop.f32.mrf.mxu0
      %v361 = vadd.f32 %v255, %v360
      %v362 = vpop.f32.mrf.mxu0
      %v363 = vadd.f32 %v255, %v362
      %364 = vmatmul.bf16.gmra.mxu0 %v284
      %v365 = vpop.f32.mrf.mxu0
      %v366 = vadd.f32 %v255, %v365
      %v367 = vpop.f32.mrf.mxu0
      %v368 = vadd.f32 %v255, %v367
      %369 = vmatmul.bf16.gmra.mxu0 %v285
      %v370 = vpop.f32.mrf.mxu0
      %v371 = vadd.f32 %v255, %v370
      %v372 = vpop.f32.mrf.mxu0
      %v373 = vadd.f32 %v255, %v372
      %374 = vmatmul.bf16.gmra.mxu0 %v286
      %v375 = vpop.f32.mrf.mxu0
      %v376 = vadd.f32 %v255, %v375
      %v377 = vpop.f32.mrf.mxu0
      %v378 = vadd.f32 %v255, %v377
      %379 = vdwg.mxu0
      %vm380 = vcmp.ge.f32.partialorder %v351, 0.0
      %vm381 = vcmp.ge.f32.partialorder %v353, 0.0
      %vm382 = vcmp.ge.f32.partialorder %v356, 0.0
      %vm383 = vcmp.ge.f32.partialorder %v358, 0.0
      %vm384 = vcmp.ge.f32.partialorder %v361, 0.0
      %vm385 = vcmp.ge.f32.partialorder %v363, 0.0
      %vm386 = vcmp.ge.f32.partialorder %v366, 0.0
      %vm387 = vcmp.ge.f32.partialorder %v368, 0.0
      %vm388 = vcmp.ge.f32.partialorder %v371, 0.0
      %vm389 = vcmp.ge.f32.partialorder %v373, 0.0
      %vm390 = vcmp.ge.f32.partialorder %v376, 0.0
      %vm391 = vcmp.ge.f32.partialorder %v378, 0.0
      %v392 = vmul.f32 %v351, 0.2
      %v393 = vmul.f32 %v353, 0.2
      %v394 = vmul.f32 %v356, 0.2
      %v395 = vmul.f32 %v358, 0.2
      %v396 = vmul.f32 %v361, 0.2
      %v397 = vmul.f32 %v363, 0.2
      %v398 = vmul.f32 %v366, 0.2
      %v399 = vmul.f32 %v368, 0.2
      %v400 = vmul.f32 %v371, 0.2
      %v401 = vmul.f32 %v373, 0.2
      %v402 = vmul.f32 %v376, 0.2
      %v403 = vmul.f32 %v378, 0.2
      %v404 = vsel %vm380, %v351, %v392
      %v405 = vsel %vm381, %v353, %v393
      %v406 = vsel %vm382, %v356, %v394
      %v407 = vsel %vm383, %v358, %v395
      %v408 = vsel %vm384, %v361, %v396
      %v409 = vsel %vm385, %v363, %v397
      %v410 = vsel %vm386, %v366, %v398
      %v411 = vsel %vm387, %v368, %v399
      %v412 = vsel %vm388, %v371, %v400
      %v413 = vsel %vm389, %v373, %v401
      %v414 = vsel %vm390, %v376, %v402
      %v415 = vsel %vm391, %v378, %v403
      %v416 = vpack.c.bf16 %v404, %v404
      %v417 = vpack.c.bf16 %v405, %v405
      %v418 = vpack.c.bf16 %v406, %v406
      %v419 = vpack.c.bf16 %v407, %v407
      %v420 = vpack.c.bf16 %v408, %v408
      %v421 = vpack.c.bf16 %v409, %v409
      %v422 = vpack.c.bf16 %v410, %v410
      %v423 = vpack.c.bf16 %v411, %v411
      %v424 = vpack.c.bf16 %v412, %v412
      %v425 = vpack.c.bf16 %v413, %v413
      %v426 = vpack.c.bf16 %v414, %v414
      %v427 = vpack.c.bf16 %v415, %v415
      %428 = vst [vmem:[%s223] sm:$0xf] %v416
      %429 = vst [vmem:[%s223 + $0x4] sm:$0xf] %v417
      %430 = vst [vmem:[%s223 + $0x8] sm:$0xf] %v418
      %431 = vst [vmem:[%s223 + $0xc] sm:$0xf] %v419
      %432 = vst [vmem:[%s223 + $0x10] sm:$0xf] %v420
      %433 = vst [vmem:[%s223 + $0x14] sm:$0xf] %v421
      %434 = vst [vmem:[%s223 + $0x18] sm:$0xf] %v422
      %435 = vst [vmem:[%s223 + $0x1c] sm:$0xf] %v423
      %436 = vst [vmem:[%s223 + $0x20] sm:$0xf] %v424
      %437 = vst [vmem:[%s223 + $0x24] sm:$0xf] %v425
      %438 = vst [vmem:[%s223 + $0x28] sm:$0xf] %v426
      %439 = vst [vmem:[%s223 + $0x2c] sm:$0xf] %v427
      %s440 = smul.u32 12, %s19
      %p441 = scmp.lt.s32.totalorder %s440, 23
      %s442 = scalar_select %p441, %s440, 23
      %p443 = scmp.lt.s32.totalorder %s18, 0
      %s444 = scalar_select %p443, %s18, 0
      %s445 = sadd.s32 %s444, %s442
      %s446 = smul.addr %s445, 4
      %s447 = scalar_lea.vmem %s3, %s446
      // Predicated region
      $region33: #{multiscale_forward_pallas.20} parent=31 // pred_check
        %p448 = pneg %p124
      $region34: #{multiscale_forward_pallas.20} parent=31 // pred_check_branch
        %450 = sbr.rel (%p448) target = $region36
      $region35: #{multiscale_forward_pallas.20} parent=31 // pred_region
        %s451 = smul.u32 12, %s19
      $region36: #{multiscale_forward_pallas.20} parent=31 // pred_fallthru
        _
    $region32: #{multiscale_forward_pallas.20} parent=5 // pred_fallthru
      _
    %p452 = scmp.le.s32.totalorder 2, %s9
    // Predicated region
    $region37: #{multiscale_forward_pallas.20} parent=5 // pred_check
      %p453 = pneg %p452
    $region38: #{multiscale_forward_pallas.20} parent=5 // pred_check_branch
      %455 = sbr.rel (%p453) target = $region40
    $region39: #{multiscale_forward_pallas.20} parent=5 // pred_region
      %s456 = ssub.s32 %s9, 2
      // Predicated region
      $region41: #{multiscale_forward_pallas.20} parent=39 // pred_check
        %p457 = pneg %p130
      $region42: #{multiscale_forward_pallas.20} parent=39 // pred_check_branch
        %459 = sbr.rel (%p457) target = $region44
      $region43: #{multiscale_forward_pallas.20} parent=39 // pred_region
        %s460 = smul.u32 12, %s21
        %p461 = scmp.lt.s32.totalorder %s460, 23
        %s462 = scalar_select %p461, %s460, 23
        %p463 = scmp.lt.s32.totalorder %s20, 0
        %s464 = scalar_select %p463, %s20, 0
        %s465 = sadd.s32 %s464, %s462
        %s466 = smul.addr %s465, 4
        %s467 = scalar_lea.vmem %s3, %s466
      $region44: #{multiscale_forward_pallas.20} parent=39 // pred_fallthru
        _
    $region40: #{multiscale_forward_pallas.20} parent=5 // pred_fallthru
      _
  $region6: #{multiscale_forward_pallas.20} parent=0 // loop_footer
    %s13 = sadd.s32 1, %s9
  $region7: #{multiscale_forward_pallas.20} parent=0 // loop_footer_branch
    %8 = sbr.rel target = $region3
  $region8: #{multiscale_forward_pallas.20} parent=0 // loop_exit
    _

// kernel: multiscale_forward_pallas.21
$region0: #{multiscale_forward_pallas.21}
  #allocation0 [shape = 'u32[]', space=smem, size = 0x4, offset = 0x4, fixed_abs, tag = 'smem constant byte address 0x4 - core index']
  #allocation1 [shape = 'u32[72,128]{1,0:T(1,128)}', space=vmem, size = 0x9000, scoped, tag = 'internal scratch']
  %s0 = inlined_call_operand.vmem [shape: bf16[64,128], index: 0, kind: input, shape index: {}]
  %s1 = inlined_call_operand.vmem [shape: bf16[128,128], index: 1, kind: input, shape index: {}]
  %s2 = inlined_call_operand.vmem [shape: f32[1,128], index: 2, kind: input, shape index: {}]
  %s3 = inlined_call_operand.vmem [shape: bf16[64,128], index: 3, kind: output, shape index: {0}]
  %s4 = inlined_call_operand.vmem [shape: f32[1,8,128], index: 4, kind: output, shape index: {1}]
  %s5 = inlined_call_operand.vmem [shape: f32[1,8,128], index: 5, kind: output, shape index: {2}]
  %6 = xla_tuple %s3, %s4, %s5
  %s7 = sld [smem:[#allocation0]]
  $region38: #{multiscale_forward_pallas.21} parent=0
    _
  %s9 = ssub.s32 1, %s7
  %s10 = scalar_select 0, %s9, %s7
  // Predicated region
  $region2: #{multiscale_forward_pallas.21} parent=0 // pred_check
    _
  $region3: #{multiscale_forward_pallas.21} parent=0 // pred_check_branch
    %12 = sbr.rel (0) target = $region5
  $region4: #{multiscale_forward_pallas.21} parent=0 // pred_region
    _
  $region5: #{multiscale_forward_pallas.21} parent=0 // pred_fallthru
    _
  // Predicated region
  $region6: #{multiscale_forward_pallas.21} parent=0 // pred_check
    _
  $region7: #{multiscale_forward_pallas.21} parent=0 // pred_check_branch
    %14 = sbr.rel (0) target = $region9
  $region8: #{multiscale_forward_pallas.21} parent=0 // pred_region
    _
  $region9: #{multiscale_forward_pallas.21} parent=0 // pred_fallthru
    _
  // Predicated region
  $region10: #{multiscale_forward_pallas.21} parent=0 // pred_check
    _
  $region11: #{multiscale_forward_pallas.21} parent=0 // pred_check_branch
    %16 = sbr.rel (0) target = $region13
  $region12: #{multiscale_forward_pallas.21} parent=0 // pred_region
    _
  $region13: #{multiscale_forward_pallas.21} parent=0 // pred_fallthru
    _
  %v17 = vld [vmem:[%s0] sm:$0xf]
  %v18 = vld [vmem:[%s0 + $0x4] sm:$0xf]
  %v19 = vld [vmem:[%s0 + $0x8] sm:$0xf]
  %v20 = vld [vmem:[%s0 + $0xc] sm:$0xf]
  %v21 = vld [vmem:[%s0 + $0x10] sm:$0xf]
  %v22 = vld [vmem:[%s0 + $0x14] sm:$0xf]
  %v23 = vld [vmem:[%s0 + $0x18] sm:$0xf]
  %v24 = vld [vmem:[%s0 + $0x1c] sm:$0xf]
  %v25 = vld [vmem:[%s1] sm:$0xf]
  %v26 = vld [vmem:[%s1 + $0x4] sm:$0xf]
  %v27 = vld [vmem:[%s1 + $0x8] sm:$0xf]
  %v28 = vld [vmem:[%s1 + $0xc] sm:$0xf]
  %v29 = vld [vmem:[%s1 + $0x10] sm:$0xf]
  %v30 = vld [vmem:[%s1 + $0x14] sm:$0xf]
  %v31 = vld [vmem:[%s1 + $0x18] sm:$0xf]
  %v32 = vld [vmem:[%s1 + $0x1c] sm:$0xf]
  %v33 = vld [vmem:[%s1 + $0x20] sm:$0xf]
  %v34 = vld [vmem:[%s1 + $0x24] sm:$0xf]
  %v35 = vld [vmem:[%s1 + $0x28] sm:$0xf]
  %v36 = vld [vmem:[%s1 + $0x2c] sm:$0xf]
  %v37 = vld [vmem:[%s1 + $0x30] sm:$0xf]
  %v38 = vld [vmem:[%s1 + $0x34] sm:$0xf]
  %v39 = vld [vmem:[%s1 + $0x38] sm:$0xf]
  %v40 = vld [vmem:[%s1 + $0x3c] sm:$0xf]
  %v41 = vld [vmem:[%s2] sm:$0x1]
  %v43 = vperm.slane %v41, 0
  %v53 = vunpack.c.l.b16 %v17
  %v54 = vunpack.c.l.b16 %v18
  %v55 = vunpack.c.l.b16 %v19
  %v56 = vunpack.c.l.b16 %v20
  %v57 = vunpack.c.l.b16 %v21
  %v58 = vunpack.c.l.b16 %v22
  %v59 = vunpack.c.l.b16 %v23
  %v60 = vunpack.c.l.b16 %v24
  %v61 = vpack.c.b16 %v54, %v53
  %v62 = vpack.c.b16 %v56, %v55
  %v63 = vpack.c.b16 %v58, %v57
  %v64 = vpack.c.b16 %v60, %v59
  %v85 = vunpack.c.l.b16 %v25
  %v86 = vunpack.c.l.b16 %v26
  %v87 = vunpack.c.l.b16 %v27
  %v88 = vunpack.c.l.b16 %v28
  %v89 = vunpack.c.l.b16 %v29
  %v90 = vunpack.c.l.b16 %v30
  %v91 = vunpack.c.l.b16 %v31
  %v92 = vunpack.c.l.b16 %v32
  %v93 = vunpack.c.l.b16 %v33
  %v94 = vunpack.c.l.b16 %v34
  %v95 = vunpack.c.l.b16 %v35
  %v96 = vunpack.c.l.b16 %v36
  %v97 = vunpack.c.l.b16 %v37
  %v98 = vunpack.c.l.b16 %v38
  %v99 = vunpack.c.l.b16 %v39
  %v100 = vunpack.c.l.b16 %v40
  %v101 = vpack.c.b16 %v86, %v85
  %v102 = vpack.c.b16 %v88, %v87
  %v103 = vpack.c.b16 %v90, %v89
  %v104 = vpack.c.b16 %v92, %v91
  %v105 = vpack.c.b16 %v94, %v93
  %v106 = vpack.c.b16 %v96, %v95
  %v107 = vpack.c.b16 %v98, %v97
  %v108 = vpack.c.b16 %v100, %v99
  %117 = vmatpush.bf16.msra.mxu0 %v108
  %118 = vmatpush.bf16.msra.mxu0 %v107
  %119 = vmatpush.bf16.msra.mxu0 %v106
  %120 = vmatpush.bf16.msra.mxu0 %v105
  %121 = vmatpush.bf16.msra.mxu0 %v104
  %122 = vmatpush.bf16.msra.mxu0 %v103
  %123 = vmatpush.bf16.msra.mxu0 %v102
  %124 = vmatpush.bf16.msra.mxu0 %v101
  %125 = vmatmul.bf16.gmra.mxu0 %v61
  %v126 = vpop.f32.mrf.mxu0
  %v127 = vadd.f32 %v43, %v126
  %v128 = vpop.f32.mrf.mxu0
  %v129 = vadd.f32 %v43, %v128
  %130 = vmatmul.bf16.gmra.mxu0 %v62
  %v131 = vpop.f32.mrf.mxu0
  %v132 = vadd.f32 %v43, %v131
  %v133 = vpop.f32.mrf.mxu0
  %v134 = vadd.f32 %v43, %v133
  %135 = vmatmul.bf16.gmra.mxu0 %v63
  %v136 = vpop.f32.mrf.mxu0
  %v137 = vadd.f32 %v43, %v136
  %v138 = vpop.f32.mrf.mxu0
  %v139 = vadd.f32 %v43, %v138
  %140 = vmatmul.bf16.gmra.mxu0 %v64
  %v141 = vpop.f32.mrf.mxu0
  %v142 = vadd.f32 %v43, %v141
  %v143 = vpop.f32.mrf.mxu0
  %v144 = vadd.f32 %v43, %v143
  %145 = vdwg.mxu0
  %v146 = vpack.c.bf16 %v127, %v127
  %v147 = vpack.c.bf16 %v129, %v129
  %v148 = vpack.c.bf16 %v132, %v132
  %v149 = vpack.c.bf16 %v134, %v134
  %v150 = vpack.c.bf16 %v137, %v137
  %v151 = vpack.c.bf16 %v139, %v139
  %v152 = vpack.c.bf16 %v142, %v142
  %v153 = vpack.c.bf16 %v144, %v144
  %154 = vst [vmem:[%s3] sm:$0xf] %v146
  %155 = vst [vmem:[%s3 + $0x4] sm:$0xf] %v147
  %156 = vst [vmem:[%s3 + $0x8] sm:$0xf] %v148
  %157 = vst [vmem:[%s3 + $0xc] sm:$0xf] %v149
  %158 = vst [vmem:[%s3 + $0x10] sm:$0xf] %v150
  %159 = vst [vmem:[%s3 + $0x14] sm:$0xf] %v151
  %160 = vst [vmem:[%s3 + $0x18] sm:$0xf] %v152
  %161 = vst [vmem:[%s3 + $0x1c] sm:$0xf] %v153
  %v162 = vlaneseq
  %v163 = vshrl.u32 %v162, 7
  %v164 = vadd.s32 %v163, 8
  %v165 = vadd.s32 %v163, 16
  %v166 = vadd.s32 %v163, 24
  %v167 = vadd.s32 %v163, 32
  %v168 = vadd.s32 %v163, 40
  %v169 = vadd.s32 %v163, 48
  %v170 = vadd.s32 %v163, 56
  %s171 = smul.u32 0, 64
  %v172 = vstv %s171
  %v173 = vadd.s32 %v163, %v172
  %v174 = vadd.s32 %v164, %v172
  %v175 = vadd.s32 %v165, %v172
  %v176 = vadd.s32 %v166, %v172
  %v177 = vadd.s32 %v167, %v172
  %v178 = vadd.s32 %v168, %v172
  %v179 = vadd.s32 %v169, %v172
  %v180 = vadd.s32 %v170, %v172
  %vm181 = vcmp.lt.s32.totalorder %v173, 50
  %vm182 = vcmp.lt.s32.totalorder %v174, 50
  %vm183 = vcmp.lt.s32.totalorder %v175, 50
  %vm184 = vcmp.lt.s32.totalorder %v176, 50
  %vm185 = vcmp.lt.s32.totalorder %v177, 50
  %vm186 = vcmp.lt.s32.totalorder %v178, 50
  %vm187 = vcmp.lt.s32.totalorder %v179, 50
  %vm188 = vcmp.lt.s32.totalorder %v180, 50
  %v189 = vsel %vm181, %v127, 0.0
  %v190 = vsel %vm182, %v129, 0.0
  %v191 = vsel %vm183, %v132, 0.0
  %v192 = vsel %vm184, %v134, 0.0
  %v193 = vsel %vm185, %v137, 0.0
  %v194 = vsel %vm186, %v139, 0.0
  %v195 = vsel %vm187, %v142, 0.0
  %v196 = vsel %vm188, %v144, 0.0
  %v197 = vadd.f32 %v189, %v190
  %v198 = vadd.f32 %v197, %v191
  %v199 = vadd.f32 %v198, %v192
  %v200 = vadd.f32 %v199, %v193
  %v201 = vadd.f32 %v200, %v194
  %v202 = vadd.f32 %v201, %v195
  %v203 = vadd.f32 %v202, %v196
  %204 = vst [vmem:[%s4] sm:$0xff] %v203
  %v205 = vmul.f32 %v189, %v189
  %v206 = vmul.f32 %v190, %v190
  %v207 = vmul.f32 %v191, %v191
  %v208 = vmul.f32 %v192, %v192
  %v209 = vmul.f32 %v193, %v193
  %v210 = vmul.f32 %v194, %v194
  %v211 = vmul.f32 %v195, %v195
  %v212 = vmul.f32 %v196, %v196
  %v213 = vadd.f32 %v205, %v206
  %v214 = vadd.f32 %v213, %v207
  %v215 = vadd.f32 %v214, %v208
  %v216 = vadd.f32 %v215, %v209
  %v217 = vadd.f32 %v216, %v210
  %v218 = vadd.f32 %v217, %v211
  %v219 = vadd.f32 %v218, %v212
  %220 = vst [vmem:[%s5] sm:$0xff] %v219
  // Predicated region
  $region14: #{multiscale_forward_pallas.21} parent=0 // pred_check
    _
  $region15: #{multiscale_forward_pallas.21} parent=0 // pred_check_branch
    %222 = sbr.rel (0) target = $region17
  $region16: #{multiscale_forward_pallas.21} parent=0 // pred_region
    _
  $region17: #{multiscale_forward_pallas.21} parent=0 // pred_fallthru
    _
  // Predicated region
  $region18: #{multiscale_forward_pallas.21} parent=0 // pred_check
    _
  $region19: #{multiscale_forward_pallas.21} parent=0 // pred_check_branch
    %224 = sbr.rel (0) target = $region21
  $region20: #{multiscale_forward_pallas.21} parent=0 // pred_region
    _
  $region21: #{multiscale_forward_pallas.21} parent=0 // pred_fallthru
    _
  // Predicated region
  $region22: #{multiscale_forward_pallas.21} parent=0 // pred_check
    _
  $region23: #{multiscale_forward_pallas.21} parent=0 // pred_check_branch
    %226 = sbr.rel (0) target = $region25
  $region24: #{multiscale_forward_pallas.21} parent=0 // pred_region
    _
  $region25: #{multiscale_forward_pallas.21} parent=0 // pred_fallthru
    _
  // Predicated region
  $region26: #{multiscale_forward_pallas.21} parent=0 // pred_check
    _
  $region27: #{multiscale_forward_pallas.21} parent=0 // pred_check_branch
    %228 = sbr.rel (0) target = $region29
  $region28: #{multiscale_forward_pallas.21} parent=0 // pred_region
    _
  $region29: #{multiscale_forward_pallas.21} parent=0 // pred_fallthru
    _
  // Predicated region
  $region30: #{multiscale_forward_pallas.21} parent=0 // pred_check
    _
  $region31: #{multiscale_forward_pallas.21} parent=0 // pred_check_branch
    %230 = sbr.rel (0) target = $region33
  $region32: #{multiscale_forward_pallas.21} parent=0 // pred_region
    _
  $region33: #{multiscale_forward_pallas.21} parent=0 // pred_fallthru
    _
  // Predicated region
  $region34: #{multiscale_forward_pallas.21} parent=0 // pred_check
    _
  $region35: #{multiscale_forward_pallas.21} parent=0 // pred_check_branch
    %232 = sbr.rel (0) target = $region37
  $region36: #{multiscale_forward_pallas.21} parent=0 // pred_region
    _
  $region37: #{multiscale_forward_pallas.21} parent=0 // pred_fallthru
    _

// kernel: multiscale_forward_pallas.22
$region0: #{multiscale_forward_pallas.22}
  #allocation0 [shape = 'u32[]', space=smem, size = 0x4, offset = 0x4, fixed_abs, tag = 'smem constant byte address 0x4 - core index']
  #allocation1 [shape = 'u32[72,128]{1,0:T(1,128)}', space=vmem, size = 0x9000, scoped, tag = 'internal scratch']
  %s0 = inlined_call_operand.vmem [shape: bf16[32,256], index: 0, kind: input, shape index: {}]
  %s1 = inlined_call_operand.vmem [shape: bf16[256,128], index: 1, kind: input, shape index: {}]
  %s2 = inlined_call_operand.vmem [shape: f32[1,128], index: 2, kind: input, shape index: {}]
  %s3 = inlined_call_operand.vmem [shape: bf16[32,128], index: 3, kind: output, shape index: {0}]
  %s4 = inlined_call_operand.vmem [shape: f32[1,8,128], index: 4, kind: output, shape index: {1}]
  %s5 = inlined_call_operand.vmem [shape: f32[1,8,128], index: 5, kind: output, shape index: {2}]
  %6 = xla_tuple %s3, %s4, %s5
  %s7 = sld [smem:[#allocation0]]
  $region38: #{multiscale_forward_pallas.22} parent=0
    _
  %s9 = ssub.s32 1, %s7
  %s10 = scalar_select 0, %s9, %s7
  // Predicated region
  $region2: #{multiscale_forward_pallas.22} parent=0 // pred_check
    _
  $region3: #{multiscale_forward_pallas.22} parent=0 // pred_check_branch
    %12 = sbr.rel (0) target = $region5
  $region4: #{multiscale_forward_pallas.22} parent=0 // pred_region
    _
  $region5: #{multiscale_forward_pallas.22} parent=0 // pred_fallthru
    _
  // Predicated region
  $region6: #{multiscale_forward_pallas.22} parent=0 // pred_check
    _
  $region7: #{multiscale_forward_pallas.22} parent=0 // pred_check_branch
    %14 = sbr.rel (0) target = $region9
  $region8: #{multiscale_forward_pallas.22} parent=0 // pred_region
    _
  $region9: #{multiscale_forward_pallas.22} parent=0 // pred_fallthru
    _
  // Predicated region
  $region10: #{multiscale_forward_pallas.22} parent=0 // pred_check
    _
  $region11: #{multiscale_forward_pallas.22} parent=0 // pred_check_branch
    %16 = sbr.rel (0) target = $region13
  $region12: #{multiscale_forward_pallas.22} parent=0 // pred_region
    _
  $region13: #{multiscale_forward_pallas.22} parent=0 // pred_fallthru
    _
  %v17 = vld [vmem:[%s0] sm:$0xff]
  %v18 = vld [vmem:[%s0 + $0x8] sm:$0xff]
  %v19 = vld [vmem:[%s0 + $0x10] sm:$0xff]
  %v20 = vld [vmem:[%s0 + $0x18] sm:$0xff]
  %v21 = vld [vmem:[%s1] sm:$0xf]
  %v22 = vld [vmem:[%s1 + $0x4] sm:$0xf]
  %v23 = vld [vmem:[%s1 + $0x8] sm:$0xf]
  %v24 = vld [vmem:[%s1 + $0xc] sm:$0xf]
  %v25 = vld [vmem:[%s1 + $0x10] sm:$0xf]
  %v26 = vld [vmem:[%s1 + $0x14] sm:$0xf]
  %v27 = vld [vmem:[%s1 + $0x18] sm:$0xf]
  %v28 = vld [vmem:[%s1 + $0x1c] sm:$0xf]
  %v29 = vld [vmem:[%s1 + $0x20] sm:$0xf]
  %v30 = vld [vmem:[%s1 + $0x24] sm:$0xf]
  %v31 = vld [vmem:[%s1 + $0x28] sm:$0xf]
  %v32 = vld [vmem:[%s1 + $0x2c] sm:$0xf]
  %v33 = vld [vmem:[%s1 + $0x30] sm:$0xf]
  %v34 = vld [vmem:[%s1 + $0x34] sm:$0xf]
  %v35 = vld [vmem:[%s1 + $0x38] sm:$0xf]
  %v36 = vld [vmem:[%s1 + $0x3c] sm:$0xf]
  %v37 = vld [vmem:[%s1 + $0x40] sm:$0xf]
  %v38 = vld [vmem:[%s1 + $0x44] sm:$0xf]
  %v39 = vld [vmem:[%s1 + $0x48] sm:$0xf]
  %v40 = vld [vmem:[%s1 + $0x4c] sm:$0xf]
  %v41 = vld [vmem:[%s1 + $0x50] sm:$0xf]
  %v42 = vld [vmem:[%s1 + $0x54] sm:$0xf]
  %v43 = vld [vmem:[%s1 + $0x58] sm:$0xf]
  %v44 = vld [vmem:[%s1 + $0x5c] sm:$0xf]
  %v45 = vld [vmem:[%s1 + $0x60] sm:$0xf]
  %v46 = vld [vmem:[%s1 + $0x64] sm:$0xf]
  %v47 = vld [vmem:[%s1 + $0x68] sm:$0xf]
  %v48 = vld [vmem:[%s1 + $0x6c] sm:$0xf]
  %v49 = vld [vmem:[%s1 + $0x70] sm:$0xf]
  %v50 = vld [vmem:[%s1 + $0x74] sm:$0xf]
  %v51 = vld [vmem:[%s1 + $0x78] sm:$0xf]
  %v52 = vld [vmem:[%s1 + $0x7c] sm:$0xf]
  %v53 = vld [vmem:[%s2] sm:$0x1]
  %v55 = vperm.slane %v53, 0
  %v61 = vunpack.c.l.b16 %v17
  %v62 = vunpack.c.h.b16 %v17
  %v63 = vunpack.c.l.b16 %v18
  %v64 = vunpack.c.h.b16 %v18
  %v65 = vunpack.c.l.b16 %v19
  %v66 = vunpack.c.h.b16 %v19
  %v67 = vunpack.c.l.b16 %v20
  %v68 = vunpack.c.h.b16 %v20
  %v69 = vpack.c.b16 %v63, %v61
  %v70 = vpack.c.b16 %v64, %v62
  %v71 = vpack.c.b16 %v67, %v65
  %v72 = vpack.c.b16 %v68, %v66
  %v109 = vunpack.c.l.b16 %v21
  %v110 = vunpack.c.l.b16 %v22
  %v111 = vunpack.c.l.b16 %v23
  %v112 = vunpack.c.l.b16 %v24
  %v113 = vunpack.c.l.b16 %v25
  %v114 = vunpack.c.l.b16 %v26
  %v115 = vunpack.c.l.b16 %v27
  %v116 = vunpack.c.l.b16 %v28
  %v117 = vunpack.c.l.b16 %v29
  %v118 = vunpack.c.l.b16 %v30
  %v119 = vunpack.c.l.b16 %v31
  %v120 = vunpack.c.l.b16 %v32
  %v121 = vunpack.c.l.b16 %v33
  %v122 = vunpack.c.l.b16 %v34
  %v123 = vunpack.c.l.b16 %v35
  %v124 = vunpack.c.l.b16 %v36
  %v125 = vunpack.c.l.b16 %v37
  %v126 = vunpack.c.l.b16 %v38
  %v127 = vunpack.c.l.b16 %v39
  %v128 = vunpack.c.l.b16 %v40
  %v129 = vunpack.c.l.b16 %v41
  %v130 = vunpack.c.l.b16 %v42
  %v131 = vunpack.c.l.b16 %v43
  %v132 = vunpack.c.l.b16 %v44
  %v133 = vunpack.c.l.b16 %v45
  %v134 = vunpack.c.l.b16 %v46
  %v135 = vunpack.c.l.b16 %v47
  %v136 = vunpack.c.l.b16 %v48
  %v137 = vunpack.c.l.b16 %v49
  %v138 = vunpack.c.l.b16 %v50
  %v139 = vunpack.c.l.b16 %v51
  %v140 = vunpack.c.l.b16 %v52
  %v141 = vpack.c.b16 %v110, %v109
  %v142 = vpack.c.b16 %v112, %v111
  %v143 = vpack.c.b16 %v114, %v113
  %v144 = vpack.c.b16 %v116, %v115
  %v145 = vpack.c.b16 %v118, %v117
  %v146 = vpack.c.b16 %v120, %v119
  %v147 = vpack.c.b16 %v122, %v121
  %v148 = vpack.c.b16 %v124, %v123
  %v149 = vpack.c.b16 %v126, %v125
  %v150 = vpack.c.b16 %v128, %v127
  %v151 = vpack.c.b16 %v130, %v129
  %v152 = vpack.c.b16 %v132, %v131
  %v153 = vpack.c.b16 %v134, %v133
  %v154 = vpack.c.b16 %v136, %v135
  %v155 = vpack.c.b16 %v138, %v137
  %v156 = vpack.c.b16 %v140, %v139
  %173 = vmatpush.bf16.msra.mxu0 %v148
  %174 = vmatpush.bf16.msra.mxu0 %v147
  %175 = vmatpush.bf16.msra.mxu0 %v146
  %176 = vmatpush.bf16.msra.mxu0 %v145
  %177 = vmatpush.bf16.msra.mxu0 %v144
  %178 = vmatpush.bf16.msra.mxu0 %v143
  %179 = vmatpush.bf16.msra.mxu0 %v142
  %180 = vmatpush.bf16.msra.mxu0 %v141
  %181 = vmatmul.bf16.gmra.mxu0 %v69
  %v182 = vpop.f32.mrf.mxu0
  %v183 = vadd.f32 %v55, %v182
  %v184 = vpop.f32.mrf.mxu0
  %v185 = vadd.f32 %v55, %v184
  %186 = vmatmul.bf16.gmra.mxu0 %v71
  %v187 = vpop.f32.mrf.mxu0
  %v188 = vadd.f32 %v55, %v187
  %v189 = vpop.f32.mrf.mxu0
  %v190 = vadd.f32 %v55, %v189
  %191 = vdwg.mxu0
  %192 = vmatpush.bf16.msra.mxu0 %v156
  %193 = vmatpush.bf16.msra.mxu0 %v155
  %194 = vmatpush.bf16.msra.mxu0 %v154
  %195 = vmatpush.bf16.msra.mxu0 %v153
  %196 = vmatpush.bf16.msra.mxu0 %v152
  %197 = vmatpush.bf16.msra.mxu0 %v151
  %198 = vmatpush.bf16.msra.mxu0 %v150
  %199 = vmatpush.bf16.msra.mxu0 %v149
  %200 = vmatmul.bf16.gmra.mxu0 %v70
  %v201 = vpop.f32.mrf.mxu0
  %v202 = vadd.f32 %v183, %v201
  %v203 = vpop.f32.mrf.mxu0
  %v204 = vadd.f32 %v185, %v203
  %205 = vmatmul.bf16.gmra.mxu0 %v72
  %v206 = vpop.f32.mrf.mxu0
  %v207 = vadd.f32 %v188, %v206
  %v208 = vpop.f32.mrf.mxu0
  %v209 = vadd.f32 %v190, %v208
  %210 = vdwg.mxu0
  %v211 = vpack.c.bf16 %v202, %v202
  %v212 = vpack.c.bf16 %v204, %v204
  %v213 = vpack.c.bf16 %v207, %v207
  %v214 = vpack.c.bf16 %v209, %v209
  %215 = vst [vmem:[%s3] sm:$0xf] %v211
  %216 = vst [vmem:[%s3 + $0x4] sm:$0xf] %v212
  %217 = vst [vmem:[%s3 + $0x8] sm:$0xf] %v213
  %218 = vst [vmem:[%s3 + $0xc] sm:$0xf] %v214
  %v219 = vlaneseq
  %v220 = vshrl.u32 %v219, 7
  %v221 = vadd.s32 %v220, 8
  %v222 = vadd.s32 %v220, 16
  %v223 = vadd.s32 %v220, 24
  %s224 = smul.u32 0, 32
  %v225 = vstv %s224
  %v226 = vadd.s32 %v220, %v225
  %v227 = vadd.s32 %v221, %v225
  %v228 = vadd.s32 %v222, %v225
  %v229 = vadd.s32 %v223, %v225
  %vm230 = vcmp.lt.s32.totalorder %v226, 18
  %vm231 = vcmp.lt.s32.totalorder %v227, 18
  %vm232 = vcmp.lt.s32.totalorder %v228, 18
  %vm233 = vcmp.lt.s32.totalorder %v229, 18
  %v234 = vsel %vm230, %v202, 0.0
  %v235 = vsel %vm231, %v204, 0.0
  %v236 = vsel %vm232, %v207, 0.0
  %v237 = vsel %vm233, %v209, 0.0
  %v238 = vadd.f32 %v234, %v235
  %v239 = vadd.f32 %v238, %v236
  %v240 = vadd.f32 %v239, %v237
  %241 = vst [vmem:[%s4] sm:$0xff] %v240
  %v242 = vmul.f32 %v234, %v234
  %v243 = vmul.f32 %v235, %v235
  %v244 = vmul.f32 %v236, %v236
  %v245 = vmul.f32 %v237, %v237
  %v246 = vadd.f32 %v242, %v243
  %v247 = vadd.f32 %v246, %v244
  %v248 = vadd.f32 %v247, %v245
  %249 = vst [vmem:[%s5] sm:$0xff] %v248
  // Predicated region
  $region14: #{multiscale_forward_pallas.22} parent=0 // pred_check
    _
  $region15: #{multiscale_forward_pallas.22} parent=0 // pred_check_branch
    %251 = sbr.rel (0) target = $region17
  $region16: #{multiscale_forward_pallas.22} parent=0 // pred_region
    _
  $region17: #{multiscale_forward_pallas.22} parent=0 // pred_fallthru
    _
  // Predicated region
  $region18: #{multiscale_forward_pallas.22} parent=0 // pred_check
    _
  $region19: #{multiscale_forward_pallas.22} parent=0 // pred_check_branch
    %253 = sbr.rel (0) target = $region21
  $region20: #{multiscale_forward_pallas.22} parent=0 // pred_region
    _
  $region21: #{multiscale_forward_pallas.22} parent=0 // pred_fallthru
    _
  // Predicated region
  $region22: #{multiscale_forward_pallas.22} parent=0 // pred_check
    _
  $region23: #{multiscale_forward_pallas.22} parent=0 // pred_check_branch
    %255 = sbr.rel (0) target = $region25
  $region24: #{multiscale_forward_pallas.22} parent=0 // pred_region
    _
  $region25: #{multiscale_forward_pallas.22} parent=0 // pred_fallthru
    _
  // Predicated region
  $region26: #{multiscale_forward_pallas.22} parent=0 // pred_check
    _
  $region27: #{multiscale_forward_pallas.22} parent=0 // pred_check_branch
    %257 = sbr.rel (0) target = $region29
  $region28: #{multiscale_forward_pallas.22} parent=0 // pred_region
    _
  $region29: #{multiscale_forward_pallas.22} parent=0 // pred_fallthru
    _
  // Predicated region
  $region30: #{multiscale_forward_pallas.22} parent=0 // pred_check
    _
  $region31: #{multiscale_forward_pallas.22} parent=0 // pred_check_branch
    %259 = sbr.rel (0) target = $region33
  $region32: #{multiscale_forward_pallas.22} parent=0 // pred_region
    _
  $region33: #{multiscale_forward_pallas.22} parent=0 // pred_fallthru
    _
  // Predicated region
  $region34: #{multiscale_forward_pallas.22} parent=0 // pred_check
    _
  $region35: #{multiscale_forward_pallas.22} parent=0 // pred_check_branch
    %261 = sbr.rel (0) target = $region37
  $region36: #{multiscale_forward_pallas.22} parent=0 // pred_region
    _
  $region37: #{multiscale_forward_pallas.22} parent=0 // pred_fallthru
    _

// kernel: multiscale_forward_pallas.23
$region0: #{multiscale_forward_pallas.23}
  #allocation0 [shape = 'u32[]', space=smem, size = 0x4, offset = 0x4, fixed_abs, tag = 'smem constant byte address 0x4 - core index']
  #allocation1 [shape = 'u32[72,128]{1,0:T(1,128)}', space=vmem, size = 0x9000, scoped, tag = 'internal scratch']
  %s0 = inlined_call_operand.vmem [shape: bf16[32,512], index: 0, kind: input, shape index: {}]
  %s1 = inlined_call_operand.vmem [shape: bf16[512,128], index: 1, kind: input, shape index: {}]
  %s2 = inlined_call_operand.vmem [shape: f32[1,128], index: 2, kind: input, shape index: {}]
  %s3 = inlined_call_operand.vmem [shape: bf16[32,128], index: 3, kind: output, shape index: {0}]
  %s4 = inlined_call_operand.vmem [shape: f32[1,8,128], index: 4, kind: output, shape index: {1}]
  %s5 = inlined_call_operand.vmem [shape: f32[1,8,128], index: 5, kind: output, shape index: {2}]
  %6 = xla_tuple %s3, %s4, %s5
  %s7 = sld [smem:[#allocation0]]
  $region38: #{multiscale_forward_pallas.23} parent=0
    _
  %s9 = ssub.s32 1, %s7
  %s10 = scalar_select 0, %s9, %s7
  // Predicated region
  $region2: #{multiscale_forward_pallas.23} parent=0 // pred_check
    _
  $region3: #{multiscale_forward_pallas.23} parent=0 // pred_check_branch
    %12 = sbr.rel (0) target = $region5
  $region4: #{multiscale_forward_pallas.23} parent=0 // pred_region
    _
  $region5: #{multiscale_forward_pallas.23} parent=0 // pred_fallthru
    _
  // Predicated region
  $region6: #{multiscale_forward_pallas.23} parent=0 // pred_check
    _
  $region7: #{multiscale_forward_pallas.23} parent=0 // pred_check_branch
    %14 = sbr.rel (0) target = $region9
  $region8: #{multiscale_forward_pallas.23} parent=0 // pred_region
    _
  $region9: #{multiscale_forward_pallas.23} parent=0 // pred_fallthru
    _
  // Predicated region
  $region10: #{multiscale_forward_pallas.23} parent=0 // pred_check
    _
  $region11: #{multiscale_forward_pallas.23} parent=0 // pred_check_branch
    %16 = sbr.rel (0) target = $region13
  $region12: #{multiscale_forward_pallas.23} parent=0 // pred_region
    _
  $region13: #{multiscale_forward_pallas.23} parent=0 // pred_fallthru
    _
  %v17 = vld [vmem:[%s0] sm:$0xff]
  %v18 = vld [vmem:[%s0 + $0x8] sm:$0xff]
  %v19 = vld [vmem:[%s0 + $0x10] sm:$0xff]
  %v20 = vld [vmem:[%s0 + $0x18] sm:$0xff]
  %v21 = vld [vmem:[%s0 + $0x20] sm:$0xff]
  %v22 = vld [vmem:[%s0 + $0x28] sm:$0xff]
  %v23 = vld [vmem:[%s0 + $0x30] sm:$0xff]
  %v24 = vld [vmem:[%s0 + $0x38] sm:$0xff]
  %v25 = vld [vmem:[%s1] sm:$0xf]
  %v26 = vld [vmem:[%s1 + $0x4] sm:$0xf]
  %v27 = vld [vmem:[%s1 + $0x8] sm:$0xf]
  %v28 = vld [vmem:[%s1 + $0xc] sm:$0xf]
  %v29 = vld [vmem:[%s1 + $0x10] sm:$0xf]
  %v30 = vld [vmem:[%s1 + $0x14] sm:$0xf]
  %v31 = vld [vmem:[%s1 + $0x18] sm:$0xf]
  %v32 = vld [vmem:[%s1 + $0x1c] sm:$0xf]
  %v33 = vld [vmem:[%s1 + $0x20] sm:$0xf]
  %v34 = vld [vmem:[%s1 + $0x24] sm:$0xf]
  %v35 = vld [vmem:[%s1 + $0x28] sm:$0xf]
  %v36 = vld [vmem:[%s1 + $0x2c] sm:$0xf]
  %v37 = vld [vmem:[%s1 + $0x30] sm:$0xf]
  %v38 = vld [vmem:[%s1 + $0x34] sm:$0xf]
  %v39 = vld [vmem:[%s1 + $0x38] sm:$0xf]
  %v40 = vld [vmem:[%s1 + $0x3c] sm:$0xf]
  %v41 = vld [vmem:[%s1 + $0x40] sm:$0xf]
  %v42 = vld [vmem:[%s1 + $0x44] sm:$0xf]
  %v43 = vld [vmem:[%s1 + $0x48] sm:$0xf]
  %v44 = vld [vmem:[%s1 + $0x4c] sm:$0xf]
  %v45 = vld [vmem:[%s1 + $0x50] sm:$0xf]
  %v46 = vld [vmem:[%s1 + $0x54] sm:$0xf]
  %v47 = vld [vmem:[%s1 + $0x58] sm:$0xf]
  %v48 = vld [vmem:[%s1 + $0x5c] sm:$0xf]
  %v49 = vld [vmem:[%s1 + $0x60] sm:$0xf]
  %v50 = vld [vmem:[%s1 + $0x64] sm:$0xf]
  %v51 = vld [vmem:[%s1 + $0x68] sm:$0xf]
  %v52 = vld [vmem:[%s1 + $0x6c] sm:$0xf]
  %v53 = vld [vmem:[%s1 + $0x70] sm:$0xf]
  %v54 = vld [vmem:[%s1 + $0x74] sm:$0xf]
  %v55 = vld [vmem:[%s1 + $0x78] sm:$0xf]
  %v56 = vld [vmem:[%s1 + $0x7c] sm:$0xf]
  %v57 = vld [vmem:[%s1 + $0x80] sm:$0xf]
  %v58 = vld [vmem:[%s1 + $0x84] sm:$0xf]
  %v59 = vld [vmem:[%s1 + $0x88] sm:$0xf]
  %v60 = vld [vmem:[%s1 + $0x8c] sm:$0xf]
  %v61 = vld [vmem:[%s1 + $0x90] sm:$0xf]
  %v62 = vld [vmem:[%s1 + $0x94] sm:$0xf]
  %v63 = vld [vmem:[%s1 + $0x98] sm:$0xf]
  %v64 = vld [vmem:[%s1 + $0x9c] sm:$0xf]
  %v65 = vld [vmem:[%s1 + $0xa0] sm:$0xf]
  %v66 = vld [vmem:[%s1 + $0xa4] sm:$0xf]
  %v67 = vld [vmem:[%s1 + $0xa8] sm:$0xf]
  %v68 = vld [vmem:[%s1 + $0xac] sm:$0xf]
  %v69 = vld [vmem:[%s1 + $0xb0] sm:$0xf]
  %v70 = vld [vmem:[%s1 + $0xb4] sm:$0xf]
  %v71 = vld [vmem:[%s1 + $0xb8] sm:$0xf]
  %v72 = vld [vmem:[%s1 + $0xbc] sm:$0xf]
  %v73 = vld [vmem:[%s1 + $0xc0] sm:$0xf]
  %v74 = vld [vmem:[%s1 + $0xc4] sm:$0xf]
  %v75 = vld [vmem:[%s1 + $0xc8] sm:$0xf]
  %v76 = vld [vmem:[%s1 + $0xcc] sm:$0xf]
  %v77 = vld [vmem:[%s1 + $0xd0] sm:$0xf]
  %v78 = vld [vmem:[%s1 + $0xd4] sm:$0xf]
  %v79 = vld [vmem:[%s1 + $0xd8] sm:$0xf]
  %v80 = vld [vmem:[%s1 + $0xdc] sm:$0xf]
  %v81 = vld [vmem:[%s1 + $0xe0] sm:$0xf]
  %v82 = vld [vmem:[%s1 + $0xe4] sm:$0xf]
  %v83 = vld [vmem:[%s1 + $0xe8] sm:$0xf]
  %v84 = vld [vmem:[%s1 + $0xec] sm:$0xf]
  %v85 = vld [vmem:[%s1 + $0xf0] sm:$0xf]
  %v86 = vld [vmem:[%s1 + $0xf4] sm:$0xf]
  %v87 = vld [vmem:[%s1 + $0xf8] sm:$0xf]
  %v88 = vld [vmem:[%s1 + $0xfc] sm:$0xf]
  %v89 = vld [vmem:[%s2] sm:$0x1]
  %v91 = vperm.slane %v89, 0
  %v101 = vunpack.c.l.b16 %v17
  %v102 = vunpack.c.h.b16 %v17
  %v103 = vunpack.c.l.b16 %v18
  %v104 = vunpack.c.h.b16 %v18
  %v105 = vunpack.c.l.b16 %v19
  %v106 = vunpack.c.h.b16 %v19
  %v107 = vunpack.c.l.b16 %v20
  %v108 = vunpack.c.h.b16 %v20
  %v109 = vunpack.c.l.b16 %v21
  %v110 = vunpack.c.h.b16 %v21
  %v111 = vunpack.c.l.b16 %v22
  %v112 = vunpack.c.h.b16 %v22
  %v113 = vunpack.c.l.b16 %v23
  %v114 = vunpack.c.h.b16 %v23
  %v115 = vunpack.c.l.b16 %v24
  %v116 = vunpack.c.h.b16 %v24
  %v117 = vpack.c.b16 %v105, %v101
  %v118 = vpack.c.b16 %v106, %v102
  %v119 = vpack.c.b16 %v107, %v103
  %v120 = vpack.c.b16 %v108, %v104
  %v121 = vpack.c.b16 %v113, %v109
  %v122 = vpack.c.b16 %v114, %v110
  %v123 = vpack.c.b16 %v115, %v111
  %v124 = vpack.c.b16 %v116, %v112
  %v197 = vunpack.c.l.b16 %v25
  %v198 = vunpack.c.l.b16 %v26
  %v199 = vunpack.c.l.b16 %v27
  %v200 = vunpack.c.l.b16 %v28
  %v201 = vunpack.c.l.b16 %v29
  %v202 = vunpack.c.l.b16 %v30
  %v203 = vunpack.c.l.b16 %v31
  %v204 = vunpack.c.l.b16 %v32
  %v205 = vunpack.c.l.b16 %v33
  %v206 = vunpack.c.l.b16 %v34
  %v207 = vunpack.c.l.b16 %v35
  %v208 = vunpack.c.l.b16 %v36
  %v209 = vunpack.c.l.b16 %v37
  %v210 = vunpack.c.l.b16 %v38
  %v211 = vunpack.c.l.b16 %v39
  %v212 = vunpack.c.l.b16 %v40
  %v213 = vunpack.c.l.b16 %v41
  %v214 = vunpack.c.l.b16 %v42
  %v215 = vunpack.c.l.b16 %v43
  %v216 = vunpack.c.l.b16 %v44
  %v217 = vunpack.c.l.b16 %v45
  %v218 = vunpack.c.l.b16 %v46
  %v219 = vunpack.c.l.b16 %v47
  %v220 = vunpack.c.l.b16 %v48
  %v221 = vunpack.c.l.b16 %v49
  %v222 = vunpack.c.l.b16 %v50
  %v223 = vunpack.c.l.b16 %v51
  %v224 = vunpack.c.l.b16 %v52
  %v225 = vunpack.c.l.b16 %v53
  %v226 = vunpack.c.l.b16 %v54
  %v227 = vunpack.c.l.b16 %v55
  %v228 = vunpack.c.l.b16 %v56
  %v229 = vunpack.c.l.b16 %v57
  %v230 = vunpack.c.l.b16 %v58
  %v231 = vunpack.c.l.b16 %v59
  %v232 = vunpack.c.l.b16 %v60
  %v233 = vunpack.c.l.b16 %v61
  %v234 = vunpack.c.l.b16 %v62
  %v235 = vunpack.c.l.b16 %v63
  %v236 = vunpack.c.l.b16 %v64
  %v237 = vunpack.c.l.b16 %v65
  %v238 = vunpack.c.l.b16 %v66
  %v239 = vunpack.c.l.b16 %v67
  %v240 = vunpack.c.l.b16 %v68
  %v241 = vunpack.c.l.b16 %v69
  %v242 = vunpack.c.l.b16 %v70
  %v243 = vunpack.c.l.b16 %v71
  %v244 = vunpack.c.l.b16 %v72
  %v245 = vunpack.c.l.b16 %v73
  %v246 = vunpack.c.l.b16 %v74
  %v247 = vunpack.c.l.b16 %v75
  %v248 = vunpack.c.l.b16 %v76
  %v249 = vunpack.c.l.b16 %v77
  %v250 = vunpack.c.l.b16 %v78
  %v251 = vunpack.c.l.b16 %v79
  %v252 = vunpack.c.l.b16 %v80
  %v253 = vunpack.c.l.b16 %v81
  %v254 = vunpack.c.l.b16 %v82
  %v255 = vunpack.c.l.b16 %v83
  %v256 = vunpack.c.l.b16 %v84
  %v257 = vunpack.c.l.b16 %v85
  %v258 = vunpack.c.l.b16 %v86
  %v259 = vunpack.c.l.b16 %v87
  %v260 = vunpack.c.l.b16 %v88
  %v261 = vpack.c.b16 %v198, %v197
  %v262 = vpack.c.b16 %v200, %v199
  %v263 = vpack.c.b16 %v202, %v201
  %v264 = vpack.c.b16 %v204, %v203
  %v265 = vpack.c.b16 %v206, %v205
  %v266 = vpack.c.b16 %v208, %v207
  %v267 = vpack.c.b16 %v210, %v209
  %v268 = vpack.c.b16 %v212, %v211
  %v269 = vpack.c.b16 %v214, %v213
  %v270 = vpack.c.b16 %v216, %v215
  %v271 = vpack.c.b16 %v218, %v217
  %v272 = vpack.c.b16 %v220, %v219
  %v273 = vpack.c.b16 %v222, %v221
  %v274 = vpack.c.b16 %v224, %v223
  %v275 = vpack.c.b16 %v226, %v225
  %v276 = vpack.c.b16 %v228, %v227
  %v277 = vpack.c.b16 %v230, %v229
  %v278 = vpack.c.b16 %v232, %v231
  %v279 = vpack.c.b16 %v234, %v233
  %v280 = vpack.c.b16 %v236, %v235
  %v281 = vpack.c.b16 %v238, %v237
  %v282 = vpack.c.b16 %v240, %v239
  %v283 = vpack.c.b16 %v242, %v241
  %v284 = vpack.c.b16 %v244, %v243
  %v285 = vpack.c.b16 %v246, %v245
  %v286 = vpack.c.b16 %v248, %v247
  %v287 = vpack.c.b16 %v250, %v249
  %v288 = vpack.c.b16 %v252, %v251
  %v289 = vpack.c.b16 %v254, %v253
  %v290 = vpack.c.b16 %v256, %v255
  %v291 = vpack.c.b16 %v258, %v257
  %v292 = vpack.c.b16 %v260, %v259
  %325 = vmatpush.bf16.msra.mxu0 %v268
  %326 = vmatpush.bf16.msra.mxu0 %v267
  %327 = vmatpush.bf16.msra.mxu0 %v266
  %328 = vmatpush.bf16.msra.mxu0 %v265
  %329 = vmatpush.bf16.msra.mxu0 %v264
  %330 = vmatpush.bf16.msra.mxu0 %v263
  %331 = vmatpush.bf16.msra.mxu0 %v262
  %332 = vmatpush.bf16.msra.mxu0 %v261
  %333 = vmatmul.bf16.gmra.mxu0 %v117
  %v334 = vpop.f32.mrf.mxu0
  %v335 = vadd.f32 %v91, %v334
  %v336 = vpop.f32.mrf.mxu0
  %v337 = vadd.f32 %v91, %v336
  %338 = vmatmul.bf16.gmra.mxu0 %v121
  %v339 = vpop.f32.mrf.mxu0
  %v340 = vadd.f32 %v91, %v339
  %v341 = vpop.f32.mrf.mxu0
  %v342 = vadd.f32 %v91, %v341
  %343 = vdwg.mxu0
  %344 = vmatpush.bf16.msra.mxu0 %v276
  %345 = vmatpush.bf16.msra.mxu0 %v275
  %346 = vmatpush.bf16.msra.mxu0 %v274
  %347 = vmatpush.bf16.msra.mxu0 %v273
  %348 = vmatpush.bf16.msra.mxu0 %v272
  %349 = vmatpush.bf16.msra.mxu0 %v271
  %350 = vmatpush.bf16.msra.mxu0 %v270
  %351 = vmatpush.bf16.msra.mxu0 %v269
  %352 = vmatmul.bf16.gmra.mxu0 %v118
  %v353 = vpop.f32.mrf.mxu0
  %v354 = vadd.f32 %v335, %v353
  %v355 = vpop.f32.mrf.mxu0
  %v356 = vadd.f32 %v337, %v355
  %357 = vmatmul.bf16.gmra.mxu0 %v122
  %v358 = vpop.f32.mrf.mxu0
  %v359 = vadd.f32 %v340, %v358
  %v360 = vpop.f32.mrf.mxu0
  %v361 = vadd.f32 %v342, %v360
  %362 = vdwg.mxu0
  %363 = vmatpush.bf16.msra.mxu0 %v284
  %364 = vmatpush.bf16.msra.mxu0 %v283
  %365 = vmatpush.bf16.msra.mxu0 %v282
  %366 = vmatpush.bf16.msra.mxu0 %v281
  %367 = vmatpush.bf16.msra.mxu0 %v280
  %368 = vmatpush.bf16.msra.mxu0 %v279
  %369 = vmatpush.bf16.msra.mxu0 %v278
  %370 = vmatpush.bf16.msra.mxu0 %v277
  %371 = vmatmul.bf16.gmra.mxu0 %v119
  %v372 = vpop.f32.mrf.mxu0
  %v373 = vadd.f32 %v354, %v372
  %v374 = vpop.f32.mrf.mxu0
  %v375 = vadd.f32 %v356, %v374
  %376 = vmatmul.bf16.gmra.mxu0 %v123
  %v377 = vpop.f32.mrf.mxu0
  %v378 = vadd.f32 %v359, %v377
  %v379 = vpop.f32.mrf.mxu0
  %v380 = vadd.f32 %v361, %v379
  %381 = vdwg.mxu0
  %382 = vmatpush.bf16.msra.mxu0 %v292
  %383 = vmatpush.bf16.msra.mxu0 %v291
  %384 = vmatpush.bf16.msra.mxu0 %v290
  %385 = vmatpush.bf16.msra.mxu0 %v289
  %386 = vmatpush.bf16.msra.mxu0 %v288
  %387 = vmatpush.bf16.msra.mxu0 %v287
  %388 = vmatpush.bf16.msra.mxu0 %v286
  %389 = vmatpush.bf16.msra.mxu0 %v285
  %390 = vmatmul.bf16.gmra.mxu0 %v120
  %v391 = vpop.f32.mrf.mxu0
  %v392 = vadd.f32 %v373, %v391
  %v393 = vpop.f32.mrf.mxu0
  %v394 = vadd.f32 %v375, %v393
  %395 = vmatmul.bf16.gmra.mxu0 %v124
  %v396 = vpop.f32.mrf.mxu0
  %v397 = vadd.f32 %v378, %v396
  %v398 = vpop.f32.mrf.mxu0
  %v399 = vadd.f32 %v380, %v398
  %400 = vdwg.mxu0
  %v401 = vpack.c.bf16 %v392, %v392
  %v402 = vpack.c.bf16 %v394, %v394
  %v403 = vpack.c.bf16 %v397, %v397
  %v404 = vpack.c.bf16 %v399, %v399
  %405 = vst [vmem:[%s3] sm:$0xf] %v401
  %406 = vst [vmem:[%s3 + $0x4] sm:$0xf] %v402
  %407 = vst [vmem:[%s3 + $0x8] sm:$0xf] %v403
  %408 = vst [vmem:[%s3 + $0xc] sm:$0xf] %v404
  %v409 = vlaneseq
  %v410 = vshrl.u32 %v409, 7
  %v411 = vadd.s32 %v410, 8
  %v412 = vadd.s32 %v410, 16
  %v413 = vadd.s32 %v410, 24
  %s414 = smul.u32 0, 32
  %v415 = vstv %s414
  %v416 = vadd.s32 %v410, %v415
  %v417 = vadd.s32 %v411, %v415
  %v418 = vadd.s32 %v412, %v415
  %v419 = vadd.s32 %v413, %v415
  %vm420 = vcmp.lt.s32.totalorder %v416, 32
  %vm421 = vcmp.lt.s32.totalorder %v417, 32
  %vm422 = vcmp.lt.s32.totalorder %v418, 32
  %vm423 = vcmp.lt.s32.totalorder %v419, 32
  %v424 = vsel %vm420, %v392, 0.0
  %v425 = vsel %vm421, %v394, 0.0
  %v426 = vsel %vm422, %v397, 0.0
  %v427 = vsel %vm423, %v399, 0.0
  %v428 = vadd.f32 %v424, %v425
  %v429 = vadd.f32 %v428, %v426
  %v430 = vadd.f32 %v429, %v427
  %431 = vst [vmem:[%s4] sm:$0xff] %v430
  %v432 = vmul.f32 %v424, %v424
  %v433 = vmul.f32 %v425, %v425
  %v434 = vmul.f32 %v426, %v426
  %v435 = vmul.f32 %v427, %v427
  %v436 = vadd.f32 %v432, %v433
  %v437 = vadd.f32 %v436, %v434
  %v438 = vadd.f32 %v437, %v435
  %439 = vst [vmem:[%s5] sm:$0xff] %v438
  // Predicated region
  $region14: #{multiscale_forward_pallas.23} parent=0 // pred_check
    _
  $region15: #{multiscale_forward_pallas.23} parent=0 // pred_check_branch
    %441 = sbr.rel (0) target = $region17
  $region16: #{multiscale_forward_pallas.23} parent=0 // pred_region
    _
  $region17: #{multiscale_forward_pallas.23} parent=0 // pred_fallthru
    _
  // Predicated region
  $region18: #{multiscale_forward_pallas.23} parent=0 // pred_check
    _
  $region19: #{multiscale_forward_pallas.23} parent=0 // pred_check_branch
    %443 = sbr.rel (0) target = $region21
  $region20: #{multiscale_forward_pallas.23} parent=0 // pred_region
    _
  $region21: #{multiscale_forward_pallas.23} parent=0 // pred_fallthru
    _
  // Predicated region
  $region22: #{multiscale_forward_pallas.23} parent=0 // pred_check
    _
  $region23: #{multiscale_forward_pallas.23} parent=0 // pred_check_branch
    %445 = sbr.rel (0) target = $region25
  $region24: #{multiscale_forward_pallas.23} parent=0 // pred_region
    _
  $region25: #{multiscale_forward_pallas.23} parent=0 // pred_fallthru
    _
  // Predicated region
  $region26: #{multiscale_forward_pallas.23} parent=0 // pred_check
    _
  $region27: #{multiscale_forward_pallas.23} parent=0 // pred_check_branch
    %447 = sbr.rel (0) target = $region29
  $region28: #{multiscale_forward_pallas.23} parent=0 // pred_region
    _
  $region29: #{multiscale_forward_pallas.23} parent=0 // pred_fallthru
    _
  // Predicated region
  $region30: #{multiscale_forward_pallas.23} parent=0 // pred_check
    _
  $region31: #{multiscale_forward_pallas.23} parent=0 // pred_check_branch
    %449 = sbr.rel (0) target = $region33
  $region32: #{multiscale_forward_pallas.23} parent=0 // pred_region
    _
  $region33: #{multiscale_forward_pallas.23} parent=0 // pred_fallthru
    _
  // Predicated region
  $region34: #{multiscale_forward_pallas.23} parent=0 // pred_check
    _
  $region35: #{multiscale_forward_pallas.23} parent=0 // pred_check_branch
    %451 = sbr.rel (0) target = $region37
  $region36: #{multiscale_forward_pallas.23} parent=0 // pred_region
    _
  $region37: #{multiscale_forward_pallas.23} parent=0 // pred_fallthru
    _

// kernel: multiscale_forward_pallas.24
$region0: #{multiscale_forward_pallas.24}
  #allocation0 [shape = 'u32[]', space=smem, size = 0x4, offset = 0x4, fixed_abs, tag = 'smem constant byte address 0x4 - core index']
  #allocation1 [shape = 'u32[72,128]{1,0:T(1,128)}', space=vmem, size = 0x9000, scoped, tag = 'internal scratch']
  %s0 = inlined_call_operand.vmem [shape: bf16[64,1024], index: 0, kind: input, shape index: {}]
  %s1 = inlined_call_operand.vmem [shape: bf16[1024,128], index: 1, kind: input, shape index: {}]
  %s2 = inlined_call_operand.vmem [shape: f32[1,128], index: 2, kind: input, shape index: {}]
  %s3 = inlined_call_operand.vmem [shape: bf16[64,128], index: 3, kind: output, shape index: {}]
  %s4 = sld [smem:[#allocation0]]
  $region22: #{multiscale_forward_pallas.24} parent=0
    _
  %s6 = ssub.s32 1, %s4
  %s7 = scalar_select 0, %s6, %s4
  // Predicated region
  $region2: #{multiscale_forward_pallas.24} parent=0 // pred_check
    _
  $region3: #{multiscale_forward_pallas.24} parent=0 // pred_check_branch
    %9 = sbr.rel (0) target = $region5
  $region4: #{multiscale_forward_pallas.24} parent=0 // pred_region
    _
  $region5: #{multiscale_forward_pallas.24} parent=0 // pred_fallthru
    _
  // Predicated region
  $region6: #{multiscale_forward_pallas.24} parent=0 // pred_check
    _
  $region7: #{multiscale_forward_pallas.24} parent=0 // pred_check_branch
    %11 = sbr.rel (0) target = $region9
  $region8: #{multiscale_forward_pallas.24} parent=0 // pred_region
    _
  $region9: #{multiscale_forward_pallas.24} parent=0 // pred_fallthru
    _
  // Predicated region
  $region10: #{multiscale_forward_pallas.24} parent=0 // pred_check
    _
  $region11: #{multiscale_forward_pallas.24} parent=0 // pred_check_branch
    %13 = sbr.rel (0) target = $region13
  $region12: #{multiscale_forward_pallas.24} parent=0 // pred_region
    _
  $region13: #{multiscale_forward_pallas.24} parent=0 // pred_fallthru
    _
  %v14 = vld [vmem:[%s0] sm:$0xff]
  %v15 = vld [vmem:[%s0 + $0x8] sm:$0xff]
  %v16 = vld [vmem:[%s0 + $0x10] sm:$0xff]
  %v17 = vld [vmem:[%s0 + $0x18] sm:$0xff]
  %v18 = vld [vmem:[%s0 + $0x20] sm:$0xff]
  %v19 = vld [vmem:[%s0 + $0x28] sm:$0xff]
  %v20 = vld [vmem:[%s0 + $0x30] sm:$0xff]
  %v21 = vld [vmem:[%s0 + $0x38] sm:$0xff]
  %v22 = vld [vmem:[%s0 + $0x40] sm:$0xff]
  %v23 = vld [vmem:[%s0 + $0x48] sm:$0xff]
  %v24 = vld [vmem:[%s0 + $0x50] sm:$0xff]
  %v25 = vld [vmem:[%s0 + $0x58] sm:$0xff]
  %v26 = vld [vmem:[%s0 + $0x60] sm:$0xff]
  %v27 = vld [vmem:[%s0 + $0x68] sm:$0xff]
  %v28 = vld [vmem:[%s0 + $0x70] sm:$0xff]
  %v29 = vld [vmem:[%s0 + $0x78] sm:$0xff]
  %v30 = vld [vmem:[%s0 + $0x80] sm:$0xff]
  %v31 = vld [vmem:[%s0 + $0x88] sm:$0xff]
  %v32 = vld [vmem:[%s0 + $0x90] sm:$0xff]
  %v33 = vld [vmem:[%s0 + $0x98] sm:$0xff]
  %v34 = vld [vmem:[%s0 + $0xa0] sm:$0xff]
  %v35 = vld [vmem:[%s0 + $0xa8] sm:$0xff]
  %v36 = vld [vmem:[%s0 + $0xb0] sm:$0xff]
  %v37 = vld [vmem:[%s0 + $0xb8] sm:$0xff]
  %v38 = vld [vmem:[%s0 + $0xc0] sm:$0xff]
  %v39 = vld [vmem:[%s0 + $0xc8] sm:$0xff]
  %v40 = vld [vmem:[%s0 + $0xd0] sm:$0xff]
  %v41 = vld [vmem:[%s0 + $0xd8] sm:$0xff]
  %v42 = vld [vmem:[%s0 + $0xe0] sm:$0xff]
  %v43 = vld [vmem:[%s0 + $0xe8] sm:$0xff]
  %v44 = vld [vmem:[%s0 + $0xf0] sm:$0xff]
  %v45 = vld [vmem:[%s0 + $0xf8] sm:$0xff]
  %v46 = vld [vmem:[%s1] sm:$0xf]
  %v47 = vld [vmem:[%s1 + $0x4] sm:$0xf]
  %v48 = vld [vmem:[%s1 + $0x8] sm:$0xf]
  %v49 = vld [vmem:[%s1 + $0xc] sm:$0xf]
  %v50 = vld [vmem:[%s1 + $0x10] sm:$0xf]
  %v51 = vld [vmem:[%s1 + $0x14] sm:$0xf]
  %v52 = vld [vmem:[%s1 + $0x18] sm:$0xf]
  %v53 = vld [vmem:[%s1 + $0x1c] sm:$0xf]
  %v54 = vld [vmem:[%s1 + $0x20] sm:$0xf]
  %v55 = vld [vmem:[%s1 + $0x24] sm:$0xf]
  %v56 = vld [vmem:[%s1 + $0x28] sm:$0xf]
  %v57 = vld [vmem:[%s1 + $0x2c] sm:$0xf]
  %v58 = vld [vmem:[%s1 + $0x30] sm:$0xf]
  %v59 = vld [vmem:[%s1 + $0x34] sm:$0xf]
  %v60 = vld [vmem:[%s1 + $0x38] sm:$0xf]
  %v61 = vld [vmem:[%s1 + $0x3c] sm:$0xf]
  %v62 = vld [vmem:[%s1 + $0x40] sm:$0xf]
  %v63 = vld [vmem:[%s1 + $0x44] sm:$0xf]
  %v64 = vld [vmem:[%s1 + $0x48] sm:$0xf]
  %v65 = vld [vmem:[%s1 + $0x4c] sm:$0xf]
  %v66 = vld [vmem:[%s1 + $0x50] sm:$0xf]
  %v67 = vld [vmem:[%s1 + $0x54] sm:$0xf]
  %v68 = vld [vmem:[%s1 + $0x58] sm:$0xf]
  %v69 = vld [vmem:[%s1 + $0x5c] sm:$0xf]
  %v70 = vld [vmem:[%s1 + $0x60] sm:$0xf]
  %v71 = vld [vmem:[%s1 + $0x64] sm:$0xf]
  %v72 = vld [vmem:[%s1 + $0x68] sm:$0xf]
  %v73 = vld [vmem:[%s1 + $0x6c] sm:$0xf]
  %v74 = vld [vmem:[%s1 + $0x70] sm:$0xf]
  %v75 = vld [vmem:[%s1 + $0x74] sm:$0xf]
  %v76 = vld [vmem:[%s1 + $0x78] sm:$0xf]
  %v77 = vld [vmem:[%s1 + $0x7c] sm:$0xf]
  %v78 = vld [vmem:[%s1 + $0x80] sm:$0xf]
  %v79 = vld [vmem:[%s1 + $0x84] sm:$0xf]
  %v80 = vld [vmem:[%s1 + $0x88] sm:$0xf]
  %v81 = vld [vmem:[%s1 + $0x8c] sm:$0xf]
  %v82 = vld [vmem:[%s1 + $0x90] sm:$0xf]
  %v83 = vld [vmem:[%s1 + $0x94] sm:$0xf]
  %v84 = vld [vmem:[%s1 + $0x98] sm:$0xf]
  %v85 = vld [vmem:[%s1 + $0x9c] sm:$0xf]
  %v86 = vld [vmem:[%s1 + $0xa0] sm:$0xf]
  %v87 = vld [vmem:[%s1 + $0xa4] sm:$0xf]
  %v88 = vld [vmem:[%s1 + $0xa8] sm:$0xf]
  %v89 = vld [vmem:[%s1 + $0xac] sm:$0xf]
  %v90 = vld [vmem:[%s1 + $0xb0] sm:$0xf]
  %v91 = vld [vmem:[%s1 + $0xb4] sm:$0xf]
  %v92 = vld [vmem:[%s1 + $0xb8] sm:$0xf]
  %v93 = vld [vmem:[%s1 + $0xbc] sm:$0xf]
  %v94 = vld [vmem:[%s1 + $0xc0] sm:$0xf]
  %v95 = vld [vmem:[%s1 + $0xc4] sm:$0xf]
  %v96 = vld [vmem:[%s1 + $0xc8] sm:$0xf]
  %v97 = vld [vmem:[%s1 + $0xcc] sm:$0xf]
  %v98 = vld [vmem:[%s1 + $0xd0] sm:$0xf]
  %v99 = vld [vmem:[%s1 + $0xd4] sm:$0xf]
  %v100 = vld [vmem:[%s1 + $0xd8] sm:$0xf]
  %v101 = vld [vmem:[%s1 + $0xdc] sm:$0xf]
  %v102 = vld [vmem:[%s1 + $0xe0] sm:$0xf]
  %v103 = vld [vmem:[%s1 + $0xe4] sm:$0xf]
  %v104 = vld [vmem:[%s1 + $0xe8] sm:$0xf]
  %v105 = vld [vmem:[%s1 + $0xec] sm:$0xf]
  %v106 = vld [vmem:[%s1 + $0xf0] sm:$0xf]
  %v107 = vld [vmem:[%s1 + $0xf4] sm:$0xf]
  %v108 = vld [vmem:[%s1 + $0xf8] sm:$0xf]
  %v109 = vld [vmem:[%s1 + $0xfc] sm:$0xf]
  %v110 = vld [vmem:[%s1 + $0x100] sm:$0xf]
  %v111 = vld [vmem:[%s1 + $0x104] sm:$0xf]
  %v112 = vld [vmem:[%s1 + $0x108] sm:$0xf]
  %v113 = vld [vmem:[%s1 + $0x10c] sm:$0xf]
  %v114 = vld [vmem:[%s1 + $0x110] sm:$0xf]
  %v115 = vld [vmem:[%s1 + $0x114] sm:$0xf]
  %v116 = vld [vmem:[%s1 + $0x118] sm:$0xf]
  %v117 = vld [vmem:[%s1 + $0x11c] sm:$0xf]
  %v118 = vld [vmem:[%s1 + $0x120] sm:$0xf]
  %v119 = vld [vmem:[%s1 + $0x124] sm:$0xf]
  %v120 = vld [vmem:[%s1 + $0x128] sm:$0xf]
  %v121 = vld [vmem:[%s1 + $0x12c] sm:$0xf]
  %v122 = vld [vmem:[%s1 + $0x130] sm:$0xf]
  %v123 = vld [vmem:[%s1 + $0x134] sm:$0xf]
  %v124 = vld [vmem:[%s1 + $0x138] sm:$0xf]
  %v125 = vld [vmem:[%s1 + $0x13c] sm:$0xf]
  %v126 = vld [vmem:[%s1 + $0x140] sm:$0xf]
  %v127 = vld [vmem:[%s1 + $0x144] sm:$0xf]
  %v128 = vld [vmem:[%s1 + $0x148] sm:$0xf]
  %v129 = vld [vmem:[%s1 + $0x14c] sm:$0xf]
  %v130 = vld [vmem:[%s1 + $0x150] sm:$0xf]
  %v131 = vld [vmem:[%s1 + $0x154] sm:$0xf]
  %v132 = vld [vmem:[%s1 + $0x158] sm:$0xf]
  %v133 = vld [vmem:[%s1 + $0x15c] sm:$0xf]
  %v134 = vld [vmem:[%s1 + $0x160] sm:$0xf]
  %v135 = vld [vmem:[%s1 + $0x164] sm:$0xf]
  %v136 = vld [vmem:[%s1 + $0x168] sm:$0xf]
  %v137 = vld [vmem:[%s1 + $0x16c] sm:$0xf]
  %v138 = vld [vmem:[%s1 + $0x170] sm:$0xf]
  %v139 = vld [vmem:[%s1 + $0x174] sm:$0xf]
  %v140 = vld [vmem:[%s1 + $0x178] sm:$0xf]
  %v141 = vld [vmem:[%s1 + $0x17c] sm:$0xf]
  %v142 = vld [vmem:[%s1 + $0x180] sm:$0xf]
  %v143 = vld [vmem:[%s1 + $0x184] sm:$0xf]
  %v144 = vld [vmem:[%s1 + $0x188] sm:$0xf]
  %v145 = vld [vmem:[%s1 + $0x18c] sm:$0xf]
  %v146 = vld [vmem:[%s1 + $0x190] sm:$0xf]
  %v147 = vld [vmem:[%s1 + $0x194] sm:$0xf]
  %v148 = vld [vmem:[%s1 + $0x198] sm:$0xf]
  %v149 = vld [vmem:[%s1 + $0x19c] sm:$0xf]
  %v150 = vld [vmem:[%s1 + $0x1a0] sm:$0xf]
  %v151 = vld [vmem:[%s1 + $0x1a4] sm:$0xf]
  %v152 = vld [vmem:[%s1 + $0x1a8] sm:$0xf]
  %v153 = vld [vmem:[%s1 + $0x1ac] sm:$0xf]
  %v154 = vld [vmem:[%s1 + $0x1b0] sm:$0xf]
  %v155 = vld [vmem:[%s1 + $0x1b4] sm:$0xf]
  %v156 = vld [vmem:[%s1 + $0x1b8] sm:$0xf]
  %v157 = vld [vmem:[%s1 + $0x1bc] sm:$0xf]
  %v158 = vld [vmem:[%s1 + $0x1c0] sm:$0xf]
  %v159 = vld [vmem:[%s1 + $0x1c4] sm:$0xf]
  %v160 = vld [vmem:[%s1 + $0x1c8] sm:$0xf]
  %v161 = vld [vmem:[%s1 + $0x1cc] sm:$0xf]
  %v162 = vld [vmem:[%s1 + $0x1d0] sm:$0xf]
  %v163 = vld [vmem:[%s1 + $0x1d4] sm:$0xf]
  %v164 = vld [vmem:[%s1 + $0x1d8] sm:$0xf]
  %v165 = vld [vmem:[%s1 + $0x1dc] sm:$0xf]
  %v166 = vld [vmem:[%s1 + $0x1e0] sm:$0xf]
  %v167 = vld [vmem:[%s1 + $0x1e4] sm:$0xf]
  %v168 = vld [vmem:[%s1 + $0x1e8] sm:$0xf]
  %v169 = vld [vmem:[%s1 + $0x1ec] sm:$0xf]
  %v170 = vld [vmem:[%s1 + $0x1f0] sm:$0xf]
  %v171 = vld [vmem:[%s1 + $0x1f4] sm:$0xf]
  %v172 = vld [vmem:[%s1 + $0x1f8] sm:$0xf]
  %v173 = vld [vmem:[%s1 + $0x1fc] sm:$0xf]
  %v174 = vld [vmem:[%s2] sm:$0x1]
  %v176 = vperm.slane %v174, 0
  %v210 = vunpack.c.l.b16 %v14
  %v211 = vunpack.c.h.b16 %v14
  %v212 = vunpack.c.l.b16 %v15
  %v213 = vunpack.c.h.b16 %v15
  %v214 = vunpack.c.l.b16 %v16
  %v215 = vunpack.c.h.b16 %v16
  %v216 = vunpack.c.l.b16 %v17
  %v217 = vunpack.c.h.b16 %v17
  %v218 = vunpack.c.l.b16 %v18
  %v219 = vunpack.c.h.b16 %v18
  %v220 = vunpack.c.l.b16 %v19
  %v221 = vunpack.c.h.b16 %v19
  %v222 = vunpack.c.l.b16 %v20
  %v223 = vunpack.c.h.b16 %v20
  %v224 = vunpack.c.l.b16 %v21
  %v225 = vunpack.c.h.b16 %v21
  %v226 = vunpack.c.l.b16 %v22
  %v227 = vunpack.c.h.b16 %v22
  %v228 = vunpack.c.l.b16 %v23
  %v229 = vunpack.c.h.b16 %v23
  %v230 = vunpack.c.l.b16 %v24
  %v231 = vunpack.c.h.b16 %v24
  %v232 = vunpack.c.l.b16 %v25
  %v233 = vunpack.c.h.b16 %v25
  %v234 = vunpack.c.l.b16 %v26
  %v235 = vunpack.c.h.b16 %v26
  %v236 = vunpack.c.l.b16 %v27
  %v237 = vunpack.c.h.b16 %v27
  %v238 = vunpack.c.l.b16 %v28
  %v239 = vunpack.c.h.b16 %v28
  %v240 = vunpack.c.l.b16 %v29
  %v241 = vunpack.c.h.b16 %v29
  %v242 = vunpack.c.l.b16 %v30
  %v243 = vunpack.c.h.b16 %v30
  %v244 = vunpack.c.l.b16 %v31
  %v245 = vunpack.c.h.b16 %v31
  %v246 = vunpack.c.l.b16 %v32
  %v247 = vunpack.c.h.b16 %v32
  %v248 = vunpack.c.l.b16 %v33
  %v249 = vunpack.c.h.b16 %v33
  %v250 = vunpack.c.l.b16 %v34
  %v251 = vunpack.c.h.b16 %v34
  %v252 = vunpack.c.l.b16 %v35
  %v253 = vunpack.c.h.b16 %v35
  %v254 = vunpack.c.l.b16 %v36
  %v255 = vunpack.c.h.b16 %v36
  %v256 = vunpack.c.l.b16 %v37
  %v257 = vunpack.c.h.b16 %v37
  %v258 = vunpack.c.l.b16 %v38
  %v259 = vunpack.c.h.b16 %v38
  %v260 = vunpack.c.l.b16 %v39
  %v261 = vunpack.c.h.b16 %v39
  %v262 = vunpack.c.l.b16 %v40
  %v263 = vunpack.c.h.b16 %v40
  %v264 = vunpack.c.l.b16 %v41
  %v265 = vunpack.c.h.b16 %v41
  %v266 = vunpack.c.l.b16 %v42
  %v267 = vunpack.c.h.b16 %v42
  %v268 = vunpack.c.l.b16 %v43
  %v269 = vunpack.c.h.b16 %v43
  %v270 = vunpack.c.l.b16 %v44
  %v271 = vunpack.c.h.b16 %v44
  %v272 = vunpack.c.l.b16 %v45
  %v273 = vunpack.c.h.b16 %v45
  %v274 = vpack.c.b16 %v218, %v210
  %v275 = vpack.c.b16 %v219, %v211
  %v276 = vpack.c.b16 %v220, %v212
  %v277 = vpack.c.b16 %v221, %v213
  %v278 = vpack.c.b16 %v222, %v214
  %v279 = vpack.c.b16 %v223, %v215
  %v280 = vpack.c.b16 %v224, %v216
  %v281 = vpack.c.b16 %v225, %v217
  %v282 = vpack.c.b16 %v234, %v226
  %v283 = vpack.c.b16 %v235, %v227
  %v284 = vpack.c.b16 %v236, %v228
  %v285 = vpack.c.b16 %v237, %v229
  %v286 = vpack.c.b16 %v238, %v230
  %v287 = vpack.c.b16 %v239, %v231
  %v288 = vpack.c.b16 %v240, %v232
  %v289 = vpack.c.b16 %v241, %v233
  %v290 = vpack.c.b16 %v250, %v242
  %v291 = vpack.c.b16 %v251, %v243
  %v292 = vpack.c.b16 %v252, %v244
  %v293 = vpack.c.b16 %v253, %v245
  %v294 = vpack.c.b16 %v254, %v246
  %v295 = vpack.c.b16 %v255, %v247
  %v296 = vpack.c.b16 %v256, %v248
  %v297 = vpack.c.b16 %v257, %v249
  %v298 = vpack.c.b16 %v266, %v258
  %v299 = vpack.c.b16 %v267, %v259
  %v300 = vpack.c.b16 %v268, %v260
  %v301 = vpack.c.b16 %v269, %v261
  %v302 = vpack.c.b16 %v270, %v262
  %v303 = vpack.c.b16 %v271, %v263
  %v304 = vpack.c.b16 %v272, %v264
  %v305 = vpack.c.b16 %v273, %v265
  %v466 = vunpack.c.l.b16 %v46
  %v467 = vunpack.c.l.b16 %v47
  %v468 = vunpack.c.l.b16 %v48
  %v469 = vunpack.c.l.b16 %v49
  %v470 = vunpack.c.l.b16 %v50
  %v471 = vunpack.c.l.b16 %v51
  %v472 = vunpack.c.l.b16 %v52
  %v473 = vunpack.c.l.b16 %v53
  %v474 = vunpack.c.l.b16 %v54
  %v475 = vunpack.c.l.b16 %v55
  %v476 = vunpack.c.l.b16 %v56
  %v477 = vunpack.c.l.b16 %v57
  %v478 = vunpack.c.l.b16 %v58
  %v479 = vunpack.c.l.b16 %v59
  %v480 = vunpack.c.l.b16 %v60
  %v481 = vunpack.c.l.b16 %v61
  %v482 = vunpack.c.l.b16 %v62
  %v483 = vunpack.c.l.b16 %v63
  %v484 = vunpack.c.l.b16 %v64
  %v485 = vunpack.c.l.b16 %v65
  %v486 = vunpack.c.l.b16 %v66
  %v487 = vunpack.c.l.b16 %v67
  %v488 = vunpack.c.l.b16 %v68
  %v489 = vunpack.c.l.b16 %v69
  %v490 = vunpack.c.l.b16 %v70
  %v491 = vunpack.c.l.b16 %v71
  %v492 = vunpack.c.l.b16 %v72
  %v493 = vunpack.c.l.b16 %v73
  %v494 = vunpack.c.l.b16 %v74
  %v495 = vunpack.c.l.b16 %v75
  %v496 = vunpack.c.l.b16 %v76
  %v497 = vunpack.c.l.b16 %v77
  %v498 = vunpack.c.l.b16 %v78
  %v499 = vunpack.c.l.b16 %v79
  %v500 = vunpack.c.l.b16 %v80
  %v501 = vunpack.c.l.b16 %v81
  %v502 = vunpack.c.l.b16 %v82
  %v503 = vunpack.c.l.b16 %v83
  %v504 = vunpack.c.l.b16 %v84
  %v505 = vunpack.c.l.b16 %v85
  %v506 = vunpack.c.l.b16 %v86
  %v507 = vunpack.c.l.b16 %v87
  %v508 = vunpack.c.l.b16 %v88
  %v509 = vunpack.c.l.b16 %v89
  %v510 = vunpack.c.l.b16 %v90
  %v511 = vunpack.c.l.b16 %v91
  %v512 = vunpack.c.l.b16 %v92
  %v513 = vunpack.c.l.b16 %v93
  %v514 = vunpack.c.l.b16 %v94
  %v515 = vunpack.c.l.b16 %v95
  %v516 = vunpack.c.l.b16 %v96
  %v517 = vunpack.c.l.b16 %v97
  %v518 = vunpack.c.l.b16 %v98
  %v519 = vunpack.c.l.b16 %v99
  %v520 = vunpack.c.l.b16 %v100
  %v521 = vunpack.c.l.b16 %v101
  %v522 = vunpack.c.l.b16 %v102
  %v523 = vunpack.c.l.b16 %v103
  %v524 = vunpack.c.l.b16 %v104
  %v525 = vunpack.c.l.b16 %v105
  %v526 = vunpack.c.l.b16 %v106
  %v527 = vunpack.c.l.b16 %v107
  %v528 = vunpack.c.l.b16 %v108
  %v529 = vunpack.c.l.b16 %v109
  %v530 = vunpack.c.l.b16 %v110
  %v531 = vunpack.c.l.b16 %v111
  %v532 = vunpack.c.l.b16 %v112
  %v533 = vunpack.c.l.b16 %v113
  %v534 = vunpack.c.l.b16 %v114
  %v535 = vunpack.c.l.b16 %v115
  %v536 = vunpack.c.l.b16 %v116
  %v537 = vunpack.c.l.b16 %v117
  %v538 = vunpack.c.l.b16 %v118
  %v539 = vunpack.c.l.b16 %v119
  %v540 = vunpack.c.l.b16 %v120
  %v541 = vunpack.c.l.b16 %v121
  %v542 = vunpack.c.l.b16 %v122
  %v543 = vunpack.c.l.b16 %v123
  %v544 = vunpack.c.l.b16 %v124
  %v545 = vunpack.c.l.b16 %v125
  %v546 = vunpack.c.l.b16 %v126
  %v547 = vunpack.c.l.b16 %v127
  %v548 = vunpack.c.l.b16 %v128
  %v549 = vunpack.c.l.b16 %v129
  %v550 = vunpack.c.l.b16 %v130
  %v551 = vunpack.c.l.b16 %v131
  %v552 = vunpack.c.l.b16 %v132
  %v553 = vunpack.c.l.b16 %v133
  %v554 = vunpack.c.l.b16 %v134
  %v555 = vunpack.c.l.b16 %v135
  %v556 = vunpack.c.l.b16 %v136
  %v557 = vunpack.c.l.b16 %v137
  %v558 = vunpack.c.l.b16 %v138
  %v559 = vunpack.c.l.b16 %v139
  %v560 = vunpack.c.l.b16 %v140
  %v561 = vunpack.c.l.b16 %v141
  %v562 = vunpack.c.l.b16 %v142
  %v563 = vunpack.c.l.b16 %v143
  %v564 = vunpack.c.l.b16 %v144
  %v565 = vunpack.c.l.b16 %v145
  %v566 = vunpack.c.l.b16 %v146
  %v567 = vunpack.c.l.b16 %v147
  %v568 = vunpack.c.l.b16 %v148
  %v569 = vunpack.c.l.b16 %v149
  %v570 = vunpack.c.l.b16 %v150
  %v571 = vunpack.c.l.b16 %v151
  %v572 = vunpack.c.l.b16 %v152
  %v573 = vunpack.c.l.b16 %v153
  %v574 = vunpack.c.l.b16 %v154
  %v575 = vunpack.c.l.b16 %v155
  %v576 = vunpack.c.l.b16 %v156
  %v577 = vunpack.c.l.b16 %v157
  %v578 = vunpack.c.l.b16 %v158
  %v579 = vunpack.c.l.b16 %v159
  %v580 = vunpack.c.l.b16 %v160
  %v581 = vunpack.c.l.b16 %v161
  %v582 = vunpack.c.l.b16 %v162
  %v583 = vunpack.c.l.b16 %v163
  %v584 = vunpack.c.l.b16 %v164
  %v585 = vunpack.c.l.b16 %v165
  %v586 = vunpack.c.l.b16 %v166
  %v587 = vunpack.c.l.b16 %v167
  %v588 = vunpack.c.l.b16 %v168
  %v589 = vunpack.c.l.b16 %v169
  %v590 = vunpack.c.l.b16 %v170
  %v591 = vunpack.c.l.b16 %v171
  %v592 = vunpack.c.l.b16 %v172
  %v593 = vunpack.c.l.b16 %v173
  %v594 = vpack.c.b16 %v467, %v466
  %v595 = vpack.c.b16 %v469, %v468
  %v596 = vpack.c.b16 %v471, %v470
  %v597 = vpack.c.b16 %v473, %v472
  %v598 = vpack.c.b16 %v475, %v474
  %v599 = vpack.c.b16 %v477, %v476
  %v600 = vpack.c.b16 %v479, %v478
  %v601 = vpack.c.b16 %v481, %v480
  %v602 = vpack.c.b16 %v483, %v482
  %v603 = vpack.c.b16 %v485, %v484
  %v604 = vpack.c.b16 %v487, %v486
  %v605 = vpack.c.b16 %v489, %v488
  %v606 = vpack.c.b16 %v491, %v490
  %v607 = vpack.c.b16 %v493, %v492
  %v608 = vpack.c.b16 %v495, %v494
  %v609 = vpack.c.b16 %v497, %v496
  %v610 = vpack.c.b16 %v499, %v498
  %v611 = vpack.c.b16 %v501, %v500
  %v612 = vpack.c.b16 %v503, %v502
  %v613 = vpack.c.b16 %v505, %v504
  %v614 = vpack.c.b16 %v507, %v506
  %v615 = vpack.c.b16 %v509, %v508
  %v616 = vpack.c.b16 %v511, %v510
  %v617 = vpack.c.b16 %v513, %v512
  %v618 = vpack.c.b16 %v515, %v514
  %v619 = vpack.c.b16 %v517, %v516
  %v620 = vpack.c.b16 %v519, %v518
  %v621 = vpack.c.b16 %v521, %v520
  %v622 = vpack.c.b16 %v523, %v522
  %v623 = vpack.c.b16 %v525, %v524
  %v624 = vpack.c.b16 %v527, %v526
  %v625 = vpack.c.b16 %v529, %v528
  %v626 = vpack.c.b16 %v531, %v530
  %v627 = vpack.c.b16 %v533, %v532
  %v628 = vpack.c.b16 %v535, %v534
  %v629 = vpack.c.b16 %v537, %v536
  %v630 = vpack.c.b16 %v539, %v538
  %v631 = vpack.c.b16 %v541, %v540
  %v632 = vpack.c.b16 %v543, %v542
  %v633 = vpack.c.b16 %v545, %v544
  %v634 = vpack.c.b16 %v547, %v546
  %v635 = vpack.c.b16 %v549, %v548
  %v636 = vpack.c.b16 %v551, %v550
  %v637 = vpack.c.b16 %v553, %v552
  %v638 = vpack.c.b16 %v555, %v554
  %v639 = vpack.c.b16 %v557, %v556
  %v640 = vpack.c.b16 %v559, %v558
  %v641 = vpack.c.b16 %v561, %v560
  %v642 = vpack.c.b16 %v563, %v562
  %v643 = vpack.c.b16 %v565, %v564
  %v644 = vpack.c.b16 %v567, %v566
  %v645 = vpack.c.b16 %v569, %v568
  %v646 = vpack.c.b16 %v571, %v570
  %v647 = vpack.c.b16 %v573, %v572
  %v648 = vpack.c.b16 %v575, %v574
  %v649 = vpack.c.b16 %v577, %v576
  %v650 = vpack.c.b16 %v579, %v578
  %v651 = vpack.c.b16 %v581, %v580
  %v652 = vpack.c.b16 %v583, %v582
  %v653 = vpack.c.b16 %v585, %v584
  %v654 = vpack.c.b16 %v587, %v586
  %v655 = vpack.c.b16 %v589, %v588
  %v656 = vpack.c.b16 %v591, %v590
  %v657 = vpack.c.b16 %v593, %v592
  %722 = vmatpush.bf16.msra.mxu0 %v601
  %723 = vmatpush.bf16.msra.mxu0 %v600
  %724 = vmatpush.bf16.msra.mxu0 %v599
  %725 = vmatpush.bf16.msra.mxu0 %v598
  %726 = vmatpush.bf16.msra.mxu0 %v597
  %727 = vmatpush.bf16.msra.mxu0 %v596
  %728 = vmatpush.bf16.msra.mxu0 %v595
  %729 = vmatpush.bf16.msra.mxu0 %v594
  %730 = vmatmul.bf16.gmra.mxu0 %v274
  %v731 = vpop.f32.mrf.mxu0
  %v732 = vadd.f32 %v176, %v731
  %v733 = vpop.f32.mrf.mxu0
  %v734 = vadd.f32 %v176, %v733
  %735 = vmatmul.bf16.gmra.mxu0 %v282
  %v736 = vpop.f32.mrf.mxu0
  %v737 = vadd.f32 %v176, %v736
  %v738 = vpop.f32.mrf.mxu0
  %v739 = vadd.f32 %v176, %v738
  %740 = vmatmul.bf16.gmra.mxu0 %v290
  %v741 = vpop.f32.mrf.mxu0
  %v742 = vadd.f32 %v176, %v741
  %v743 = vpop.f32.mrf.mxu0
  %v744 = vadd.f32 %v176, %v743
  %745 = vmatmul.bf16.gmra.mxu0 %v298
  %v746 = vpop.f32.mrf.mxu0
  %v747 = vadd.f32 %v176, %v746
  %v748 = vpop.f32.mrf.mxu0
  %v749 = vadd.f32 %v176, %v748
  %750 = vdwg.mxu0
  %751 = vmatpush.bf16.msra.mxu0 %v609
  %752 = vmatpush.bf16.msra.mxu0 %v608
  %753 = vmatpush.bf16.msra.mxu0 %v607
  %754 = vmatpush.bf16.msra.mxu0 %v606
  %755 = vmatpush.bf16.msra.mxu0 %v605
  %756 = vmatpush.bf16.msra.mxu0 %v604
  %757 = vmatpush.bf16.msra.mxu0 %v603
  %758 = vmatpush.bf16.msra.mxu0 %v602
  %759 = vmatmul.bf16.gmra.mxu0 %v275
  %v760 = vpop.f32.mrf.mxu0
  %v761 = vadd.f32 %v732, %v760
  %v762 = vpop.f32.mrf.mxu0
  %v763 = vadd.f32 %v734, %v762
  %764 = vmatmul.bf16.gmra.mxu0 %v283
  %v765 = vpop.f32.mrf.mxu0
  %v766 = vadd.f32 %v737, %v765
  %v767 = vpop.f32.mrf.mxu0
  %v768 = vadd.f32 %v739, %v767
  %769 = vmatmul.bf16.gmra.mxu0 %v291
  %v770 = vpop.f32.mrf.mxu0
  %v771 = vadd.f32 %v742, %v770
  %v772 = vpop.f32.mrf.mxu0
  %v773 = vadd.f32 %v744, %v772
  %774 = vmatmul.bf16.gmra.mxu0 %v299
  %v775 = vpop.f32.mrf.mxu0
  %v776 = vadd.f32 %v747, %v775
  %v777 = vpop.f32.mrf.mxu0
  %v778 = vadd.f32 %v749, %v777
  %779 = vdwg.mxu0
  %780 = vmatpush.bf16.msra.mxu0 %v617
  %781 = vmatpush.bf16.msra.mxu0 %v616
  %782 = vmatpush.bf16.msra.mxu0 %v615
  %783 = vmatpush.bf16.msra.mxu0 %v614
  %784 = vmatpush.bf16.msra.mxu0 %v613
  %785 = vmatpush.bf16.msra.mxu0 %v612
  %786 = vmatpush.bf16.msra.mxu0 %v611
  %787 = vmatpush.bf16.msra.mxu0 %v610
  %788 = vmatmul.bf16.gmra.mxu0 %v276
  %v789 = vpop.f32.mrf.mxu0
  %v790 = vadd.f32 %v761, %v789
  %v791 = vpop.f32.mrf.mxu0
  %v792 = vadd.f32 %v763, %v791
  %793 = vmatmul.bf16.gmra.mxu0 %v284
  %v794 = vpop.f32.mrf.mxu0
  %v795 = vadd.f32 %v766, %v794
  %v796 = vpop.f32.mrf.mxu0
  %v797 = vadd.f32 %v768, %v796
  %798 = vmatmul.bf16.gmra.mxu0 %v292
  %v799 = vpop.f32.mrf.mxu0
  %v800 = vadd.f32 %v771, %v799
  %v801 = vpop.f32.mrf.mxu0
  %v802 = vadd.f32 %v773, %v801
  %803 = vmatmul.bf16.gmra.mxu0 %v300
  %v804 = vpop.f32.mrf.mxu0
  %v805 = vadd.f32 %v776, %v804
  %v806 = vpop.f32.mrf.mxu0
  %v807 = vadd.f32 %v778, %v806
  %808 = vdwg.mxu0
  %809 = vmatpush.bf16.msra.mxu0 %v625
  %810 = vmatpush.bf16.msra.mxu0 %v624
  %811 = vmatpush.bf16.msra.mxu0 %v623
  %812 = vmatpush.bf16.msra.mxu0 %v622
  %813 = vmatpush.bf16.msra.mxu0 %v621
  %814 = vmatpush.bf16.msra.mxu0 %v620
  %815 = vmatpush.bf16.msra.mxu0 %v619
  %816 = vmatpush.bf16.msra.mxu0 %v618
  %817 = vmatmul.bf16.gmra.mxu0 %v277
  %v818 = vpop.f32.mrf.mxu0
  %v819 = vadd.f32 %v790, %v818
  %v820 = vpop.f32.mrf.mxu0
  %v821 = vadd.f32 %v792, %v820
  %822 = vmatmul.bf16.gmra.mxu0 %v285
  %v823 = vpop.f32.mrf.mxu0
  %v824 = vadd.f32 %v795, %v823
  %v825 = vpop.f32.mrf.mxu0
  %v826 = vadd.f32 %v797, %v825
  %827 = vmatmul.bf16.gmra.mxu0 %v293
  %v828 = vpop.f32.mrf.mxu0
  %v829 = vadd.f32 %v800, %v828
  %v830 = vpop.f32.mrf.mxu0
  %v831 = vadd.f32 %v802, %v830
  %832 = vmatmul.bf16.gmra.mxu0 %v301
  %v833 = vpop.f32.mrf.mxu0
  %v834 = vadd.f32 %v805, %v833
  %v835 = vpop.f32.mrf.mxu0
  %v836 = vadd.f32 %v807, %v835
  %837 = vdwg.mxu0
  %838 = vmatpush.bf16.msra.mxu0 %v633
  %839 = vmatpush.bf16.msra.mxu0 %v632
  %840 = vmatpush.bf16.msra.mxu0 %v631
  %841 = vmatpush.bf16.msra.mxu0 %v630
  %842 = vmatpush.bf16.msra.mxu0 %v629
  %843 = vmatpush.bf16.msra.mxu0 %v628
  %844 = vmatpush.bf16.msra.mxu0 %v627
  %845 = vmatpush.bf16.msra.mxu0 %v626
  %846 = vmatmul.bf16.gmra.mxu0 %v278
  %v847 = vpop.f32.mrf.mxu0
  %v848 = vadd.f32 %v819, %v847
  %v849 = vpop.f32.mrf.mxu0
  %v850 = vadd.f32 %v821, %v849
  %851 = vmatmul.bf16.gmra.mxu0 %v286
  %v852 = vpop.f32.mrf.mxu0
  %v853 = vadd.f32 %v824, %v852
  %v854 = vpop.f32.mrf.mxu0
  %v855 = vadd.f32 %v826, %v854
  %856 = vmatmul.bf16.gmra.mxu0 %v294
  %v857 = vpop.f32.mrf.mxu0
  %v858 = vadd.f32 %v829, %v857
  %v859 = vpop.f32.mrf.mxu0
  %v860 = vadd.f32 %v831, %v859
  %861 = vmatmul.bf16.gmra.mxu0 %v302
  %v862 = vpop.f32.mrf.mxu0
  %v863 = vadd.f32 %v834, %v862
  %v864 = vpop.f32.mrf.mxu0
  %v865 = vadd.f32 %v836, %v864
  %866 = vdwg.mxu0
  %867 = vmatpush.bf16.msra.mxu0 %v641
  %868 = vmatpush.bf16.msra.mxu0 %v640
  %869 = vmatpush.bf16.msra.mxu0 %v639
  %870 = vmatpush.bf16.msra.mxu0 %v638
  %871 = vmatpush.bf16.msra.mxu0 %v637
  %872 = vmatpush.bf16.msra.mxu0 %v636
  %873 = vmatpush.bf16.msra.mxu0 %v635
  %874 = vmatpush.bf16.msra.mxu0 %v634
  %875 = vmatmul.bf16.gmra.mxu0 %v279
  %v876 = vpop.f32.mrf.mxu0
  %v877 = vadd.f32 %v848, %v876
  %v878 = vpop.f32.mrf.mxu0
  %v879 = vadd.f32 %v850, %v878
  %880 = vmatmul.bf16.gmra.mxu0 %v287
  %v881 = vpop.f32.mrf.mxu0
  %v882 = vadd.f32 %v853, %v881
  %v883 = vpop.f32.mrf.mxu0
  %v884 = vadd.f32 %v855, %v883
  %885 = vmatmul.bf16.gmra.mxu0 %v295
  %v886 = vpop.f32.mrf.mxu0
  %v887 = vadd.f32 %v858, %v886
  %v888 = vpop.f32.mrf.mxu0
  %v889 = vadd.f32 %v860, %v888
  %890 = vmatmul.bf16.gmra.mxu0 %v303
  %v891 = vpop.f32.mrf.mxu0
  %v892 = vadd.f32 %v863, %v891
  %v893 = vpop.f32.mrf.mxu0
  %v894 = vadd.f32 %v865, %v893
  %895 = vdwg.mxu0
  %896 = vmatpush.bf16.msra.mxu0 %v649
  %897 = vmatpush.bf16.msra.mxu0 %v648
  %898 = vmatpush.bf16.msra.mxu0 %v647
  %899 = vmatpush.bf16.msra.mxu0 %v646
  %900 = vmatpush.bf16.msra.mxu0 %v645
  %901 = vmatpush.bf16.msra.mxu0 %v644
  %902 = vmatpush.bf16.msra.mxu0 %v643
  %903 = vmatpush.bf16.msra.mxu0 %v642
  %904 = vmatmul.bf16.gmra.mxu0 %v280
  %v905 = vpop.f32.mrf.mxu0
  %v906 = vadd.f32 %v877, %v905
  %v907 = vpop.f32.mrf.mxu0
  %v908 = vadd.f32 %v879, %v907
  %909 = vmatmul.bf16.gmra.mxu0 %v288
  %v910 = vpop.f32.mrf.mxu0
  %v911 = vadd.f32 %v882, %v910
  %v912 = vpop.f32.mrf.mxu0
  %v913 = vadd.f32 %v884, %v912
  %914 = vmatmul.bf16.gmra.mxu0 %v296
  %v915 = vpop.f32.mrf.mxu0
  %v916 = vadd.f32 %v887, %v915
  %v917 = vpop.f32.mrf.mxu0
  %v918 = vadd.f32 %v889, %v917
  %919 = vmatmul.bf16.gmra.mxu0 %v304
  %v920 = vpop.f32.mrf.mxu0
  %v921 = vadd.f32 %v892, %v920
  %v922 = vpop.f32.mrf.mxu0
  %v923 = vadd.f32 %v894, %v922
  %924 = vdwg.mxu0
  %925 = vmatpush.bf16.msra.mxu0 %v657
  %926 = vmatpush.bf16.msra.mxu0 %v656
  %927 = vmatpush.bf16.msra.mxu0 %v655
  %928 = vmatpush.bf16.msra.mxu0 %v654
  %929 = vmatpush.bf16.msra.mxu0 %v653
  %930 = vmatpush.bf16.msra.mxu0 %v652
  %931 = vmatpush.bf16.msra.mxu0 %v651
  %932 = vmatpush.bf16.msra.mxu0 %v650
  %933 = vmatmul.bf16.gmra.mxu0 %v281
  %v934 = vpop.f32.mrf.mxu0
  %v935 = vadd.f32 %v906, %v934
  %v936 = vpop.f32.mrf.mxu0
  %v937 = vadd.f32 %v908, %v936
  %938 = vmatmul.bf16.gmra.mxu0 %v289
  %v939 = vpop.f32.mrf.mxu0
  %v940 = vadd.f32 %v911, %v939
  %v941 = vpop.f32.mrf.mxu0
  %v942 = vadd.f32 %v913, %v941
  %943 = vmatmul.bf16.gmra.mxu0 %v297
  %v944 = vpop.f32.mrf.mxu0
  %v945 = vadd.f32 %v916, %v944
  %v946 = vpop.f32.mrf.mxu0
  %v947 = vadd.f32 %v918, %v946
  %948 = vmatmul.bf16.gmra.mxu0 %v305
  %v949 = vpop.f32.mrf.mxu0
  %v950 = vadd.f32 %v921, %v949
  %v951 = vpop.f32.mrf.mxu0
  %v952 = vadd.f32 %v923, %v951
  %953 = vdwg.mxu0
  %v954 = vpack.c.bf16 %v935, %v935
  %v955 = vpack.c.bf16 %v937, %v937
  %v956 = vpack.c.bf16 %v940, %v940
  %v957 = vpack.c.bf16 %v942, %v942
  %v958 = vpack.c.bf16 %v945, %v945
  %v959 = vpack.c.bf16 %v947, %v947
  %v960 = vpack.c.bf16 %v950, %v950
  %v961 = vpack.c.bf16 %v952, %v952
  %962 = vst [vmem:[%s3] sm:$0xf] %v954
  %963 = vst [vmem:[%s3 + $0x4] sm:$0xf] %v955
  %964 = vst [vmem:[%s3 + $0x8] sm:$0xf] %v956
  %965 = vst [vmem:[%s3 + $0xc] sm:$0xf] %v957
  %966 = vst [vmem:[%s3 + $0x10] sm:$0xf] %v958
  %967 = vst [vmem:[%s3 + $0x14] sm:$0xf] %v959
  %968 = vst [vmem:[%s3 + $0x18] sm:$0xf] %v960
  %969 = vst [vmem:[%s3 + $0x1c] sm:$0xf] %v961
  // Predicated region
  $region14: #{multiscale_forward_pallas.24} parent=0 // pred_check
    _
  $region15: #{multiscale_forward_pallas.24} parent=0 // pred_check_branch
    %971 = sbr.rel (0) target = $region17
  $region16: #{multiscale_forward_pallas.24} parent=0 // pred_region
    _
  $region17: #{multiscale_forward_pallas.24} parent=0 // pred_fallthru
    _
  // Predicated region
  $region18: #{multiscale_forward_pallas.24} parent=0 // pred_check
    _
  $region19: #{multiscale_forward_pallas.24} parent=0 // pred_check_branch
    %973 = sbr.rel (0) target = $region21
  $region20: #{multiscale_forward_pallas.24} parent=0 // pred_region
    _
  $region21: #{multiscale_forward_pallas.24} parent=0 // pred_fallthru
    _

// kernel: multiscale_forward_pallas.15
$region0: #{multiscale_forward_pallas.15}
  #allocation0 [shape = 'u32[]', space=smem, size = 0x4, offset = 0x4, fixed_abs, tag = 'smem constant byte address 0x4 - core index']
  #allocation1 [shape = 'u32[72,128]{1,0:T(1,128)}', space=vmem, size = 0x9000, scoped, tag = 'internal scratch']
  %s0 = inlined_call_operand.vmem [shape: bf16[608,128], index: 0, kind: input, shape index: {}]
  %s1 = inlined_call_operand.vmem [shape: bf16[128,128], index: 1, kind: input, shape index: {}]
  %s2 = inlined_call_operand.vmem [shape: f32[1,128], index: 2, kind: input, shape index: {}]
  %s3 = inlined_call_operand.vmem [shape: bf16[608,128], index: 3, kind: output, shape index: {}]
  %s4 = sld [smem:[#allocation0]]
  $region45: #{multiscale_forward_pallas.15} parent=0
    _
  %s6 = ssub.s32 1, %s4
  %s7 = scalar_select 0, %s6, %s4
  loop: start=0, step=1, limit=4
  $region2: #{multiscale_forward_pallas.15} parent=0 // loop_pre_header
    _
  $region3: #{multiscale_forward_pallas.15} parent=0 // loop_header
    %s9 = sphi 0, %s13
    %p10 = scmp.ge.s32.totalorder %s9, 4
    %s16 = sphi 0, %s28
    %s17 = sphi 0, %s24
    %s18 = sphi 0, %s16
    %s19 = sphi 0, %s17
    %s20 = sphi 0, %s18
    %s21 = sphi 0, %s19
    %s31 = sphi 0, %s33
    %s34 = sphi 0, %s31
    %s35 = sphi 0, %s34
    %s51 = sphi 0, %s35
    %s57 = sphi 0, %s59
    %s60 = sphi 0, %s57
    %s61 = sphi 0, %s60
    %s77 = sphi 0, %s61
    %s83 = sphi 0, %s85
    %s86 = sphi 0, %s83
    %s87 = sphi 0, %s86
    %s103 = sphi 0, %s87
    %s111 = sphi 0, %s113
    %s114 = sphi 0, %s111
    %s115 = sphi 0, %s114
    %s131 = sphi 0, %s115
  $region4: #{multiscale_forward_pallas.15} parent=0 // loop_header_branch
    %12 = sbr.rel (%p10) target = $region8
  $region5: #{multiscale_forward_pallas.15} parent=0 // loop_body
    %s14 = ssub.s32 %s9, 1
    %s15 = ssub.s32 %s9, 2
    %s22 = sadd.s32 1, %s17
    %p23 = scmp.ge.s32.totalorder %s22, 2
    %s24 = scalar_select %p23, 0, %s22
    %s25 = sadd.s32 1, %s16
    %s26 = scalar_select %p23, %s25, %s16
    %p27 = scmp.ge.s32.totalorder %s26, 1
    %s28 = scalar_select %p27, 0, %s26
    %s29 = ssub.s32 %s17, %s24
    %p30 = scmp.eq.s32.totalorder %s29, 0
    %s32 = sadd.s32 %s31, 1
    %s33 = scalar_select %p30, %s31, %s32
    %p36 = pneg %p30
    %p37 = scmp.eq.s32.totalorder %s9, 1
    %p38 = por %p36, %p37
    %p39 = scmp.ne.s32.totalorder %s31, %s34
    %p40 = scmp.eq.s32.totalorder %s9, 0
    %p41 = por %p39, %p40
    %p42 = scmp.ne.s32.totalorder %s31, %s34
    %p43 = scmp.eq.s32.totalorder %s14, 1
    %p44 = por %p42, %p43
    %p45 = scmp.ne.s32.totalorder %s34, %s35
    %p46 = scmp.eq.s32.totalorder %s14, 0
    %p47 = por %p45, %p46
    %p48 = scmp.ne.s32.totalorder %s34, %s35
    %p49 = scmp.eq.s32.totalorder %s15, 1
    %p50 = por %p48, %p49
    %p52 = scmp.ne.s32.totalorder %s35, %s51
    %p53 = scmp.eq.s32.totalorder %s15, 0
    %p54 = por %p52, %p53
    %s55 = ssub.s32 %s16, %s28
    %p56 = scmp.eq.s32.totalorder %s55, 0
    %s58 = sadd.s32 %s57, 1
    %s59 = scalar_select %p56, %s57, %s58
    %p62 = pneg %p56
    %p63 = scmp.eq.s32.totalorder %s9, 1
    %p64 = por %p62, %p63
    %p65 = scmp.ne.s32.totalorder %s57, %s60
    %p66 = scmp.eq.s32.totalorder %s9, 0
    %p67 = por %p65, %p66
    %p68 = scmp.ne.s32.totalorder %s57, %s60
    %p69 = scmp.eq.s32.totalorder %s14, 1
    %p70 = por %p68, %p69
    %p71 = scmp.ne.s32.totalorder %s60, %s61
    %p72 = scmp.eq.s32.totalorder %s14, 0
    %p73 = por %p71, %p72
    %p74 = scmp.ne.s32.totalorder %s60, %s61
    %p75 = scmp.eq.s32.totalorder %s15, 1
    %p76 = por %p74, %p75
    %p78 = scmp.ne.s32.totalorder %s61, %s77
    %p79 = scmp.eq.s32.totalorder %s15, 0
    %p80 = por %p78, %p79
    %s81 = ssub.s32 %s16, %s28
    %p82 = scmp.eq.s32.totalorder %s81, 0
    %s84 = sadd.s32 %s83, 1
    %s85 = scalar_select %p82, %s83, %s84
    %p88 = pneg %p82
    %p89 = scmp.eq.s32.totalorder %s9, 1
    %p90 = por %p88, %p89
    %p91 = scmp.ne.s32.totalorder %s83, %s86
    %p92 = scmp.eq.s32.totalorder %s9, 0
    %p93 = por %p91, %p92
    %p94 = scmp.ne.s32.totalorder %s83, %s86
    %p95 = scmp.eq.s32.totalorder %s14, 1
    %p96 = por %p94, %p95
    %p97 = scmp.ne.s32.totalorder %s86, %s87
    %p98 = scmp.eq.s32.totalorder %s14, 0
    %p99 = por %p97, %p98
    %p100 = scmp.ne.s32.totalorder %s86, %s87
    %p101 = scmp.eq.s32.totalorder %s15, 1
    %p102 = por %p100, %p101
    %p104 = scmp.ne.s32.totalorder %s87, %s103
    %p105 = scmp.eq.s32.totalorder %s15, 0
    %p106 = por %p104, %p105
    %s107 = ssub.s32 %s17, %s24
    %s108 = ssub.s32 %s16, %s28
    %s109 = sor.u32 %s107, %s108
    %p110 = scmp.eq.s32.totalorder %s109, 0
    %s112 = sadd.s32 %s111, 1
    %s113 = scalar_select %p110, %s111, %s112
    %p116 = pneg %p110
    %p117 = scmp.eq.s32.totalorder %s9, 1
    %p118 = por %p116, %p117
    %p119 = scmp.ne.s32.totalorder %s111, %s114
    %p120 = scmp.eq.s32.totalorder %s9, 0
    %p121 = por %p119, %p120
    %p122 = scmp.ne.s32.totalorder %s111, %s114
    %p123 = scmp.eq.s32.totalorder %s14, 1
    %p124 = por %p122, %p123
    %p125 = scmp.ne.s32.totalorder %s114, %s115
    %p126 = scmp.eq.s32.totalorder %s14, 0
    %p127 = por %p125, %p126
    %p128 = scmp.ne.s32.totalorder %s114, %s115
    %p129 = scmp.eq.s32.totalorder %s15, 1
    %p130 = por %p128, %p129
    %p132 = scmp.ne.s32.totalorder %s115, %s131
    %p133 = scmp.eq.s32.totalorder %s15, 0
    %p134 = por %p132, %p133
    %p135 = scmp.le.s32.totalorder 1, %s9
    %p136 = scmp.lt.s32.totalorder %s9, 3
    %p137 = pnand %p135, %p136
    %p138 = pneg %p137
    // Predicated region
    $region9: #{multiscale_forward_pallas.15} parent=5 // pred_check
      _
    $region10: #{multiscale_forward_pallas.15} parent=5 // pred_check_branch
      %140 = sbr.rel (%p137) target = $region12
    $region11: #{multiscale_forward_pallas.15} parent=5 // pred_region
      %s141 = ssub.s32 %s9, 1
      // Predicated region
      $region13: #{multiscale_forward_pallas.15} parent=11 // pred_check
        %p142 = pneg %p73
      $region14: #{multiscale_forward_pallas.15} parent=11 // pred_check_branch
        %144 = sbr.rel (%p142) target = $region16
      $region15: #{multiscale_forward_pallas.15} parent=11 // pred_region
        %p145 = scmp.lt.s32.totalorder %s18, 0
        %s146 = scalar_select %p145, %s18, 0
        %s147 = smul.addr %s146, 4
        %s148 = scalar_lea.vmem %s1, %s147
      $region16: #{multiscale_forward_pallas.15} parent=11 // pred_fallthru
        _
      // Predicated region
      $region17: #{multiscale_forward_pallas.15} parent=11 // pred_check
        %p149 = pneg %p99
      $region18: #{multiscale_forward_pallas.15} parent=11 // pred_check_branch
        %151 = sbr.rel (%p149) target = $region20
      $region19: #{multiscale_forward_pallas.15} parent=11 // pred_region
        %p152 = scmp.lt.s32.totalorder %s18, 0
        %s153 = scalar_select %p152, %s18, 0
        %s154 = scalar_lea.vmem %s2, %s153
      $region20: #{multiscale_forward_pallas.15} parent=11 // pred_fallthru
        _
    $region12: #{multiscale_forward_pallas.15} parent=5 // pred_fallthru
      _
    %p155 = scmp.lt.s32.totalorder %s9, 2
    // Predicated region
    $region21: #{multiscale_forward_pallas.15} parent=5 // pred_check
      %p156 = pneg %p155
    $region22: #{multiscale_forward_pallas.15} parent=5 // pred_check_branch
      %158 = sbr.rel (%p156) target = $region24
    $region23: #{multiscale_forward_pallas.15} parent=5 // pred_region
      // Predicated region
      $region25: #{multiscale_forward_pallas.15} parent=23 // pred_check
        %p159 = pneg %p41
      $region26: #{multiscale_forward_pallas.15} parent=23 // pred_check_branch
        %161 = sbr.rel (%p159) target = $region28
      $region27: #{multiscale_forward_pallas.15} parent=23 // pred_region
        %s162 = smul.u32 38, %s17
        %p163 = scmp.lt.s32.totalorder %s162, 75
        %s164 = scalar_select %p163, %s162, 75
        %s165 = smul.addr %s164, 4
        %s166 = scalar_lea.vmem %s0, %s165
        %s167 = smul.u32 38, %s17
      $region28: #{multiscale_forward_pallas.15} parent=23 // pred_fallthru
        _
    $region24: #{multiscale_forward_pallas.15} parent=5 // pred_fallthru
      _
    %p168 = scmp.le.s32.totalorder 1, %s9
    %p169 = scmp.lt.s32.totalorder %s9, 3
    %p170 = pnand %p168, %p169
    %p171 = pneg %p170
    // Predicated region
    $region29: #{multiscale_forward_pallas.15} parent=5 // pred_check
      _
    $region30: #{multiscale_forward_pallas.15} parent=5 // pred_check_branch
      %173 = sbr.rel (%p170) target = $region32
    $region31: #{multiscale_forward_pallas.15} parent=5 // pred_region
      %s174 = ssub.s32 %s9, 1
      %s175 = smul.u32 38, %s19
      %p176 = scmp.lt.s32.totalorder %s175, 75
      %s177 = scalar_select %p176, %s175, 75
      %s178 = smul.addr %s177, 4
      %s179 = scalar_lea.vmem %s0, %s178
      %p180 = pneg %p47
      %p181 = pneg %p44
      %p182 = scmp.lt.s32.totalorder %s18, 0
      %s183 = scalar_select %p182, %s18, 0
      %s184 = smul.addr %s183, 4
      %s185 = scalar_lea.vmem %s1, %s184
      %p186 = pneg %p73
      %p187 = pneg %p70
      %p188 = scmp.lt.s32.totalorder %s18, 0
      %s189 = scalar_select %p188, %s18, 0
      %s190 = scalar_lea.vmem %s2, %s189
      %p191 = pneg %p99
      %p192 = pneg %p96
      %p193 = pneg %p127
      %p194 = pneg %p124
      %s195 = smul.u32 38, %s19
      %p196 = scmp.lt.s32.totalorder %s195, 75
      %s197 = scalar_select %p196, %s195, 75
      %p198 = scmp.lt.s32.totalorder %s18, 0
      %s199 = scalar_select %p198, %s18, 0
      %s200 = sadd.s32 %s199, %s197
      %s201 = smul.addr %s200, 4
      %s202 = scalar_lea.vmem %s3, %s201
      %s203 = smul.u32 38, %s19
      %p204 = scmp.lt.s32.totalorder %s203, 75
      %s205 = scalar_select %p204, %s203, 75
      %s206 = smul.addr %s205, 4
      %s207 = scalar_lea.vmem %s0, %s206
      %s208 = smul.u32 38, %s19
      %p209 = scmp.lt.s32.totalorder %s18, 0
      %s210 = scalar_select %p209, %s18, 0
      %s211 = smul.addr %s210, 4
      %s212 = scalar_lea.vmem %s1, %s211
      %p213 = scmp.lt.s32.totalorder %s18, 0
      %s214 = scalar_select %p213, %s18, 0
      %s215 = scalar_lea.vmem %s2, %s214
      %s216 = smul.u32 38, %s19
      %p217 = scmp.lt.s32.totalorder %s216, 75
      %s218 = scalar_select %p217, %s216, 75
      %p219 = scmp.lt.s32.totalorder %s18, 0
      %s220 = scalar_select %p219, %s18, 0
      %s221 = sadd.s32 %s220, %s218
      %s222 = smul.addr %s221, 4
      %s223 = scalar_lea.vmem %s3, %s222
      %s224 = smul.u32 38, %s19
      %v225 = vld [vmem:[%s207] sm:$0xf]
      %v226 = vld [vmem:[%s207 + $0x4] sm:$0xf]
      %v227 = vld [vmem:[%s207 + $0x8] sm:$0xf]
      %v228 = vld [vmem:[%s207 + $0xc] sm:$0xf]
      %v229 = vld [vmem:[%s207 + $0x10] sm:$0xf]
      %v230 = vld [vmem:[%s207 + $0x14] sm:$0xf]
      %v231 = vld [vmem:[%s207 + $0x18] sm:$0xf]
      %v232 = vld [vmem:[%s207 + $0x1c] sm:$0xf]
      %v233 = vld [vmem:[%s207 + $0x20] sm:$0xf]
      %v234 = vld [vmem:[%s207 + $0x24] sm:$0xf]
      %v235 = vld [vmem:[%s207 + $0x28] sm:$0xf]
      %v236 = vld [vmem:[%s207 + $0x2c] sm:$0xf]
      %v237 = vld [vmem:[%s207 + $0x30] sm:$0xf]
      %v238 = vld [vmem:[%s207 + $0x34] sm:$0xf]
      %v239 = vld [vmem:[%s207 + $0x38] sm:$0xf]
      %v240 = vld [vmem:[%s207 + $0x3c] sm:$0xf]
      %v241 = vld [vmem:[%s207 + $0x40] sm:$0xf]
      %v242 = vld [vmem:[%s207 + $0x44] sm:$0xf]
      %v243 = vld [vmem:[%s207 + $0x48] sm:$0xf]
      %v244 = vld [vmem:[%s207 + $0x4c] sm:$0xf]
      %v245 = vld [vmem:[%s207 + $0x50] sm:$0xf]
      %v246 = vld [vmem:[%s207 + $0x54] sm:$0xf]
      %v247 = vld [vmem:[%s207 + $0x58] sm:$0xf]
      %v248 = vld [vmem:[%s207 + $0x5c] sm:$0xf]
      %v249 = vld [vmem:[%s207 + $0x60] sm:$0xf]
      %v250 = vld [vmem:[%s207 + $0x64] sm:$0xf]
      %v251 = vld [vmem:[%s207 + $0x68] sm:$0xf]
      %v252 = vld [vmem:[%s207 + $0x6c] sm:$0xf]
      %v253 = vld [vmem:[%s207 + $0x70] sm:$0xf]
      %v254 = vld [vmem:[%s207 + $0x74] sm:$0xf]
      %v255 = vld [vmem:[%s207 + $0x78] sm:$0xf]
      %v256 = vld [vmem:[%s207 + $0x7c] sm:$0xf]
      %v257 = vld [vmem:[%s207 + $0x80] sm:$0xf]
      %v258 = vld [vmem:[%s207 + $0x84] sm:$0xf]
      %v259 = vld [vmem:[%s207 + $0x88] sm:$0xf]
      %v260 = vld [vmem:[%s207 + $0x8c] sm:$0xf]
      %v261 = vld [vmem:[%s207 + $0x90] sm:$0xf]
      %v262 = vld [vmem:[%s207 + $0x94] sm:$0xf]
      %v263 = vld [vmem:[%s212] sm:$0xf]
      %v264 = vld [vmem:[%s212 + $0x4] sm:$0xf]
      %v265 = vld [vmem:[%s212 + $0x8] sm:$0xf]
      %v266 = vld [vmem:[%s212 + $0xc] sm:$0xf]
      %v267 = vld [vmem:[%s212 + $0x10] sm:$0xf]
      %v268 = vld [vmem:[%s212 + $0x14] sm:$0xf]
      %v269 = vld [vmem:[%s212 + $0x18] sm:$0xf]
      %v270 = vld [vmem:[%s212 + $0x1c] sm:$0xf]
      %v271 = vld [vmem:[%s212 + $0x20] sm:$0xf]
      %v272 = vld [vmem:[%s212 + $0x24] sm:$0xf]
      %v273 = vld [vmem:[%s212 + $0x28] sm:$0xf]
      %v274 = vld [vmem:[%s212 + $0x2c] sm:$0xf]
      %v275 = vld [vmem:[%s212 + $0x30] sm:$0xf]
      %v276 = vld [vmem:[%s212 + $0x34] sm:$0xf]
      %v277 = vld [vmem:[%s212 + $0x38] sm:$0xf]
      %v278 = vld [vmem:[%s212 + $0x3c] sm:$0xf]
      %v279 = vld [vmem:[%s215] sm:$0x1]
      %v281 = vperm.slane %v279, 0
      %v321 = vunpack.c.l.b16 %v225
      %v322 = vunpack.c.l.b16 %v226
      %v323 = vunpack.c.l.b16 %v227
      %v324 = vunpack.c.l.b16 %v228
      %v325 = vunpack.c.l.b16 %v229
      %v326 = vunpack.c.l.b16 %v230
      %v327 = vunpack.c.l.b16 %v231
      %v328 = vunpack.c.l.b16 %v232
      %v329 = vunpack.c.l.b16 %v233
      %v330 = vunpack.c.l.b16 %v234
      %v331 = vunpack.c.l.b16 %v235
      %v332 = vunpack.c.l.b16 %v236
      %v333 = vunpack.c.l.b16 %v237
      %v334 = vunpack.c.l.b16 %v238
      %v335 = vunpack.c.l.b16 %v239
      %v336 = vunpack.c.l.b16 %v240
      %v337 = vunpack.c.l.b16 %v241
      %v338 = vunpack.c.l.b16 %v242
      %v339 = vunpack.c.l.b16 %v243
      %v340 = vunpack.c.l.b16 %v244
      %v341 = vunpack.c.l.b16 %v245
      %v342 = vunpack.c.l.b16 %v246
      %v343 = vunpack.c.l.b16 %v247
      %v344 = vunpack.c.l.b16 %v248
      %v345 = vunpack.c.l.b16 %v249
      %v346 = vunpack.c.l.b16 %v250
      %v347 = vunpack.c.l.b16 %v251
      %v348 = vunpack.c.l.b16 %v252
      %v349 = vunpack.c.l.b16 %v253
      %v350 = vunpack.c.l.b16 %v254
      %v351 = vunpack.c.l.b16 %v255
      %v352 = vunpack.c.l.b16 %v256
      %v353 = vunpack.c.l.b16 %v257
      %v354 = vunpack.c.l.b16 %v258
      %v355 = vunpack.c.l.b16 %v259
      %v356 = vunpack.c.l.b16 %v260
      %v357 = vunpack.c.l.b16 %v261
      %v358 = vunpack.c.l.b16 %v262
      %v359 = vpack.c.b16 %v322, %v321
      %v360 = vpack.c.b16 %v324, %v323
      %v361 = vpack.c.b16 %v326, %v325
      %v362 = vpack.c.b16 %v328, %v327
      %v363 = vpack.c.b16 %v330, %v329
      %v364 = vpack.c.b16 %v332, %v331
      %v365 = vpack.c.b16 %v334, %v333
      %v366 = vpack.c.b16 %v336, %v335
      %v367 = vpack.c.b16 %v338, %v337
      %v368 = vpack.c.b16 %v340, %v339
      %v369 = vpack.c.b16 %v342, %v341
      %v370 = vpack.c.b16 %v344, %v343
      %v371 = vpack.c.b16 %v346, %v345
      %v372 = vpack.c.b16 %v348, %v347
      %v373 = vpack.c.b16 %v350, %v349
      %v374 = vpack.c.b16 %v352, %v351
      %v375 = vpack.c.b16 %v354, %v353
      %v376 = vpack.c.b16 %v356, %v355
      %v377 = vpack.c.b16 %v358, %v357
      %v413 = vunpack.c.l.b16 %v263
      %v414 = vunpack.c.l.b16 %v264
      %v415 = vunpack.c.l.b16 %v265
      %v416 = vunpack.c.l.b16 %v266
      %v417 = vunpack.c.l.b16 %v267
      %v418 = vunpack.c.l.b16 %v268
      %v419 = vunpack.c.l.b16 %v269
      %v420 = vunpack.c.l.b16 %v270
      %v421 = vunpack.c.l.b16 %v271
      %v422 = vunpack.c.l.b16 %v272
      %v423 = vunpack.c.l.b16 %v273
      %v424 = vunpack.c.l.b16 %v274
      %v425 = vunpack.c.l.b16 %v275
      %v426 = vunpack.c.l.b16 %v276
      %v427 = vunpack.c.l.b16 %v277
      %v428 = vunpack.c.l.b16 %v278
      %v429 = vpack.c.b16 %v414, %v413
      %v430 = vpack.c.b16 %v416, %v415
      %v431 = vpack.c.b16 %v418, %v417
      %v432 = vpack.c.b16 %v420, %v419
      %v433 = vpack.c.b16 %v422, %v421
      %v434 = vpack.c.b16 %v424, %v423
      %v435 = vpack.c.b16 %v426, %v425
      %v436 = vpack.c.b16 %v428, %v427
      %445 = vmatpush.bf16.msra.mxu0 %v436
      %446 = vmatpush.bf16.msra.mxu0 %v435
      %447 = vmatpush.bf16.msra.mxu0 %v434
      %448 = vmatpush.bf16.msra.mxu0 %v433
      %449 = vmatpush.bf16.msra.mxu0 %v432
      %450 = vmatpush.bf16.msra.mxu0 %v431
      %451 = vmatpush.bf16.msra.mxu0 %v430
      %452 = vmatpush.bf16.msra.mxu0 %v429
      %453 = vmatmul.bf16.gmra.mxu0 %v359
      %v454 = vpop.f32.mrf.mxu0
      %v455 = vadd.f32 %v281, %v454
      %v456 = vpop.f32.mrf.mxu0
      %v457 = vadd.f32 %v281, %v456
      %458 = vmatmul.bf16.gmra.mxu0 %v360
      %v459 = vpop.f32.mrf.mxu0
      %v460 = vadd.f32 %v281, %v459
      %v461 = vpop.f32.mrf.mxu0
      %v462 = vadd.f32 %v281, %v461
      %463 = vmatmul.bf16.gmra.mxu0 %v361
      %v464 = vpop.f32.mrf.mxu0
      %v465 = vadd.f32 %v281, %v464
      %v466 = vpop.f32.mrf.mxu0
      %v467 = vadd.f32 %v281, %v466
      %468 = vmatmul.bf16.gmra.mxu0 %v362
      %v469 = vpop.f32.mrf.mxu0
      %v470 = vadd.f32 %v281, %v469
      %v471 = vpop.f32.mrf.mxu0
      %v472 = vadd.f32 %v281, %v471
      %473 = vmatmul.bf16.gmra.mxu0 %v363
      %v474 = vpop.f32.mrf.mxu0
      %v475 = vadd.f32 %v281, %v474
      %v476 = vpop.f32.mrf.mxu0
      %v477 = vadd.f32 %v281, %v476
      %478 = vmatmul.bf16.gmra.mxu0 %v364
      %v479 = vpop.f32.mrf.mxu0
      %v480 = vadd.f32 %v281, %v479
      %v481 = vpop.f32.mrf.mxu0
      %v482 = vadd.f32 %v281, %v481
      %483 = vmatmul.bf16.gmra.mxu0 %v365
      %v484 = vpop.f32.mrf.mxu0
      %v485 = vadd.f32 %v281, %v484
      %v486 = vpop.f32.mrf.mxu0
      %v487 = vadd.f32 %v281, %v486
      %488 = vmatmul.bf16.gmra.mxu0 %v366
      %v489 = vpop.f32.mrf.mxu0
      %v490 = vadd.f32 %v281, %v489
      %v491 = vpop.f32.mrf.mxu0
      %v492 = vadd.f32 %v281, %v491
      %493 = vmatmul.bf16.gmra.mxu0 %v367
      %v494 = vpop.f32.mrf.mxu0
      %v495 = vadd.f32 %v281, %v494
      %v496 = vpop.f32.mrf.mxu0
      %v497 = vadd.f32 %v281, %v496
      %498 = vmatmul.bf16.gmra.mxu0 %v368
      %v499 = vpop.f32.mrf.mxu0
      %v500 = vadd.f32 %v281, %v499
      %v501 = vpop.f32.mrf.mxu0
      %v502 = vadd.f32 %v281, %v501
      %503 = vmatmul.bf16.gmra.mxu0 %v369
      %v504 = vpop.f32.mrf.mxu0
      %v505 = vadd.f32 %v281, %v504
      %v506 = vpop.f32.mrf.mxu0
      %v507 = vadd.f32 %v281, %v506
      %508 = vmatmul.bf16.gmra.mxu0 %v370
      %v509 = vpop.f32.mrf.mxu0
      %v510 = vadd.f32 %v281, %v509
      %v511 = vpop.f32.mrf.mxu0
      %v512 = vadd.f32 %v281, %v511
      %513 = vmatmul.bf16.gmra.mxu0 %v371
      %v514 = vpop.f32.mrf.mxu0
      %v515 = vadd.f32 %v281, %v514
      %v516 = vpop.f32.mrf.mxu0
      %v517 = vadd.f32 %v281, %v516
      %518 = vmatmul.bf16.gmra.mxu0 %v372
      %v519 = vpop.f32.mrf.mxu0
      %v520 = vadd.f32 %v281, %v519
      %v521 = vpop.f32.mrf.mxu0
      %v522 = vadd.f32 %v281, %v521
      %523 = vmatmul.bf16.gmra.mxu0 %v373
      %v524 = vpop.f32.mrf.mxu0
      %v525 = vadd.f32 %v281, %v524
      %v526 = vpop.f32.mrf.mxu0
      %v527 = vadd.f32 %v281, %v526
      %528 = vmatmul.bf16.gmra.mxu0 %v374
      %v529 = vpop.f32.mrf.mxu0
      %v530 = vadd.f32 %v281, %v529
      %v531 = vpop.f32.mrf.mxu0
      %v532 = vadd.f32 %v281, %v531
      %533 = vmatmul.bf16.gmra.mxu0 %v375
      %v534 = vpop.f32.mrf.mxu0
      %v535 = vadd.f32 %v281, %v534
      %v536 = vpop.f32.mrf.mxu0
      %v537 = vadd.f32 %v281, %v536
      %538 = vmatmul.bf16.gmra.mxu0 %v376
      %v539 = vpop.f32.mrf.mxu0
      %v540 = vadd.f32 %v281, %v539
      %v541 = vpop.f32.mrf.mxu0
      %v542 = vadd.f32 %v281, %v541
      %543 = vmatmul.bf16.gmra.mxu0 %v377
      %v544 = vpop.f32.mrf.mxu0
      %v545 = vadd.f32 %v281, %v544
      %v546 = vpop.f32.mrf.mxu0
      %v547 = vadd.f32 %v281, %v546
      %548 = vdwg.mxu0
      %vm549 = vcmp.ge.f32.partialorder %v455, 0.0
      %vm550 = vcmp.ge.f32.partialorder %v457, 0.0
      %vm551 = vcmp.ge.f32.partialorder %v460, 0.0
      %vm552 = vcmp.ge.f32.partialorder %v462, 0.0
      %vm553 = vcmp.ge.f32.partialorder %v465, 0.0
      %vm554 = vcmp.ge.f32.partialorder %v467, 0.0
      %vm555 = vcmp.ge.f32.partialorder %v470, 0.0
      %vm556 = vcmp.ge.f32.partialorder %v472, 0.0
      %vm557 = vcmp.ge.f32.partialorder %v475, 0.0
      %vm558 = vcmp.ge.f32.partialorder %v477, 0.0
      %vm559 = vcmp.ge.f32.partialorder %v480, 0.0
      %vm560 = vcmp.ge.f32.partialorder %v482, 0.0
      %vm561 = vcmp.ge.f32.partialorder %v485, 0.0
      %vm562 = vcmp.ge.f32.partialorder %v487, 0.0
      %vm563 = vcmp.ge.f32.partialorder %v490, 0.0
      %vm564 = vcmp.ge.f32.partialorder %v492, 0.0
      %vm565 = vcmp.ge.f32.partialorder %v495, 0.0
      %vm566 = vcmp.ge.f32.partialorder %v497, 0.0
      %vm567 = vcmp.ge.f32.partialorder %v500, 0.0
      %vm568 = vcmp.ge.f32.partialorder %v502, 0.0
      %vm569 = vcmp.ge.f32.partialorder %v505, 0.0
      %vm570 = vcmp.ge.f32.partialorder %v507, 0.0
      %vm571 = vcmp.ge.f32.partialorder %v510, 0.0
      %vm572 = vcmp.ge.f32.partialorder %v512, 0.0
      %vm573 = vcmp.ge.f32.partialorder %v515, 0.0
      %vm574 = vcmp.ge.f32.partialorder %v517, 0.0
      %vm575 = vcmp.ge.f32.partialorder %v520, 0.0
      %vm576 = vcmp.ge.f32.partialorder %v522, 0.0
      %vm577 = vcmp.ge.f32.partialorder %v525, 0.0
      %vm578 = vcmp.ge.f32.partialorder %v527, 0.0
      %vm579 = vcmp.ge.f32.partialorder %v530, 0.0
      %vm580 = vcmp.ge.f32.partialorder %v532, 0.0
      %vm581 = vcmp.ge.f32.partialorder %v535, 0.0
      %vm582 = vcmp.ge.f32.partialorder %v537, 0.0
      %vm583 = vcmp.ge.f32.partialorder %v540, 0.0
      %vm584 = vcmp.ge.f32.partialorder %v542, 0.0
      %vm585 = vcmp.ge.f32.partialorder %v545, 0.0
      %vm586 = vcmp.ge.f32.partialorder %v547, 0.0
      %v587 = vmul.f32 %v455, 0.2
      %v588 = vmul.f32 %v457, 0.2
      %v589 = vmul.f32 %v460, 0.2
      %v590 = vmul.f32 %v462, 0.2
      %v591 = vmul.f32 %v465, 0.2
      %v592 = vmul.f32 %v467, 0.2
      %v593 = vmul.f32 %v470, 0.2
      %v594 = vmul.f32 %v472, 0.2
      %v595 = vmul.f32 %v475, 0.2
      %v596 = vmul.f32 %v477, 0.2
      %v597 = vmul.f32 %v480, 0.2
      %v598 = vmul.f32 %v482, 0.2
      %v599 = vmul.f32 %v485, 0.2
      %v600 = vmul.f32 %v487, 0.2
      %v601 = vmul.f32 %v490, 0.2
      %v602 = vmul.f32 %v492, 0.2
      %v603 = vmul.f32 %v495, 0.2
      %v604 = vmul.f32 %v497, 0.2
      %v605 = vmul.f32 %v500, 0.2
      %v606 = vmul.f32 %v502, 0.2
      %v607 = vmul.f32 %v505, 0.2
      %v608 = vmul.f32 %v507, 0.2
      %v609 = vmul.f32 %v510, 0.2
      %v610 = vmul.f32 %v512, 0.2
      %v611 = vmul.f32 %v515, 0.2
      %v612 = vmul.f32 %v517, 0.2
      %v613 = vmul.f32 %v520, 0.2
      %v614 = vmul.f32 %v522, 0.2
      %v615 = vmul.f32 %v525, 0.2
      %v616 = vmul.f32 %v527, 0.2
      %v617 = vmul.f32 %v530, 0.2
      %v618 = vmul.f32 %v532, 0.2
      %v619 = vmul.f32 %v535, 0.2
      %v620 = vmul.f32 %v537, 0.2
      %v621 = vmul.f32 %v540, 0.2
      %v622 = vmul.f32 %v542, 0.2
      %v623 = vmul.f32 %v545, 0.2
      %v624 = vmul.f32 %v547, 0.2
      %v625 = vsel %vm549, %v455, %v587
      %v626 = vsel %vm550, %v457, %v588
      %v627 = vsel %vm551, %v460, %v589
      %v628 = vsel %vm552, %v462, %v590
      %v629 = vsel %vm553, %v465, %v591
      %v630 = vsel %vm554, %v467, %v592
      %v631 = vsel %vm555, %v470, %v593
      %v632 = vsel %vm556, %v472, %v594
      %v633 = vsel %vm557, %v475, %v595
      %v634 = vsel %vm558, %v477, %v596
      %v635 = vsel %vm559, %v480, %v597
      %v636 = vsel %vm560, %v482, %v598
      %v637 = vsel %vm561, %v485, %v599
      %v638 = vsel %vm562, %v487, %v600
      %v639 = vsel %vm563, %v490, %v601
      %v640 = vsel %vm564, %v492, %v602
      %v641 = vsel %vm565, %v495, %v603
      %v642 = vsel %vm566, %v497, %v604
      %v643 = vsel %vm567, %v500, %v605
      %v644 = vsel %vm568, %v502, %v606
      %v645 = vsel %vm569, %v505, %v607
      %v646 = vsel %vm570, %v507, %v608
      %v647 = vsel %vm571, %v510, %v609
      %v648 = vsel %vm572, %v512, %v610
      %v649 = vsel %vm573, %v515, %v611
      %v650 = vsel %vm574, %v517, %v612
      %v651 = vsel %vm575, %v520, %v613
      %v652 = vsel %vm576, %v522, %v614
      %v653 = vsel %vm577, %v525, %v615
      %v654 = vsel %vm578, %v527, %v616
      %v655 = vsel %vm579, %v530, %v617
      %v656 = vsel %vm580, %v532, %v618
      %v657 = vsel %vm581, %v535, %v619
      %v658 = vsel %vm582, %v537, %v620
      %v659 = vsel %vm583, %v540, %v621
      %v660 = vsel %vm584, %v542, %v622
      %v661 = vsel %vm585, %v545, %v623
      %v662 = vsel %vm586, %v547, %v624
      %v663 = vpack.c.bf16 %v625, %v625
      %v664 = vpack.c.bf16 %v626, %v626
      %v665 = vpack.c.bf16 %v627, %v627
      %v666 = vpack.c.bf16 %v628, %v628
      %v667 = vpack.c.bf16 %v629, %v629
      %v668 = vpack.c.bf16 %v630, %v630
      %v669 = vpack.c.bf16 %v631, %v631
      %v670 = vpack.c.bf16 %v632, %v632
      %v671 = vpack.c.bf16 %v633, %v633
      %v672 = vpack.c.bf16 %v634, %v634
      %v673 = vpack.c.bf16 %v635, %v635
      %v674 = vpack.c.bf16 %v636, %v636
      %v675 = vpack.c.bf16 %v637, %v637
      %v676 = vpack.c.bf16 %v638, %v638
      %v677 = vpack.c.bf16 %v639, %v639
      %v678 = vpack.c.bf16 %v640, %v640
      %v679 = vpack.c.bf16 %v641, %v641
      %v680 = vpack.c.bf16 %v642, %v642
      %v681 = vpack.c.bf16 %v643, %v643
      %v682 = vpack.c.bf16 %v644, %v644
      %v683 = vpack.c.bf16 %v645, %v645
      %v684 = vpack.c.bf16 %v646, %v646
      %v685 = vpack.c.bf16 %v647, %v647
      %v686 = vpack.c.bf16 %v648, %v648
      %v687 = vpack.c.bf16 %v649, %v649
      %v688 = vpack.c.bf16 %v650, %v650
      %v689 = vpack.c.bf16 %v651, %v651
      %v690 = vpack.c.bf16 %v652, %v652
      %v691 = vpack.c.bf16 %v653, %v653
      %v692 = vpack.c.bf16 %v654, %v654
      %v693 = vpack.c.bf16 %v655, %v655
      %v694 = vpack.c.bf16 %v656, %v656
      %v695 = vpack.c.bf16 %v657, %v657
      %v696 = vpack.c.bf16 %v658, %v658
      %v697 = vpack.c.bf16 %v659, %v659
      %v698 = vpack.c.bf16 %v660, %v660
      %v699 = vpack.c.bf16 %v661, %v661
      %v700 = vpack.c.bf16 %v662, %v662
      %701 = vst [vmem:[%s223] sm:$0xf] %v663
      %702 = vst [vmem:[%s223 + $0x4] sm:$0xf] %v664
      %703 = vst [vmem:[%s223 + $0x8] sm:$0xf] %v665
      %704 = vst [vmem:[%s223 + $0xc] sm:$0xf] %v666
      %705 = vst [vmem:[%s223 + $0x10] sm:$0xf] %v667
      %706 = vst [vmem:[%s223 + $0x14] sm:$0xf] %v668
      %707 = vst [vmem:[%s223 + $0x18] sm:$0xf] %v669
      %708 = vst [vmem:[%s223 + $0x1c] sm:$0xf] %v670
      %709 = vst [vmem:[%s223 + $0x20] sm:$0xf] %v671
      %710 = vst [vmem:[%s223 + $0x24] sm:$0xf] %v672
      %711 = vst [vmem:[%s223 + $0x28] sm:$0xf] %v673
      %712 = vst [vmem:[%s223 + $0x2c] sm:$0xf] %v674
      %713 = vst [vmem:[%s223 + $0x30] sm:$0xf] %v675
      %714 = vst [vmem:[%s223 + $0x34] sm:$0xf] %v676
      %715 = vst [vmem:[%s223 + $0x38] sm:$0xf] %v677
      %716 = vst [vmem:[%s223 + $0x3c] sm:$0xf] %v678
      %717 = vst [vmem:[%s223 + $0x40] sm:$0xf] %v679
      %718 = vst [vmem:[%s223 + $0x44] sm:$0xf] %v680
      %719 = vst [vmem:[%s223 + $0x48] sm:$0xf] %v681
      %720 = vst [vmem:[%s223 + $0x4c] sm:$0xf] %v682
      %721 = vst [vmem:[%s223 + $0x50] sm:$0xf] %v683
      %722 = vst [vmem:[%s223 + $0x54] sm:$0xf] %v684
      %723 = vst [vmem:[%s223 + $0x58] sm:$0xf] %v685
      %724 = vst [vmem:[%s223 + $0x5c] sm:$0xf] %v686
      %725 = vst [vmem:[%s223 + $0x60] sm:$0xf] %v687
      %726 = vst [vmem:[%s223 + $0x64] sm:$0xf] %v688
      %727 = vst [vmem:[%s223 + $0x68] sm:$0xf] %v689
      %728 = vst [vmem:[%s223 + $0x6c] sm:$0xf] %v690
      %729 = vst [vmem:[%s223 + $0x70] sm:$0xf] %v691
      %730 = vst [vmem:[%s223 + $0x74] sm:$0xf] %v692
      %731 = vst [vmem:[%s223 + $0x78] sm:$0xf] %v693
      %732 = vst [vmem:[%s223 + $0x7c] sm:$0xf] %v694
      %733 = vst [vmem:[%s223 + $0x80] sm:$0xf] %v695
      %734 = vst [vmem:[%s223 + $0x84] sm:$0xf] %v696
      %735 = vst [vmem:[%s223 + $0x88] sm:$0xf] %v697
      %736 = vst [vmem:[%s223 + $0x8c] sm:$0xf] %v698
      %737 = vst [vmem:[%s223 + $0x90] sm:$0xf] %v699
      %738 = vst [vmem:[%s223 + $0x94] sm:$0xf] %v700
      %s739 = smul.u32 38, %s19
      %p740 = scmp.lt.s32.totalorder %s739, 75
      %s741 = scalar_select %p740, %s739, 75
      %p742 = scmp.lt.s32.totalorder %s18, 0
      %s743 = scalar_select %p742, %s18, 0
      %s744 = sadd.s32 %s743, %s741
      %s745 = smul.addr %s744, 4
      %s746 = scalar_lea.vmem %s3, %s745
      // Predicated region
      $region33: #{multiscale_forward_pallas.15} parent=31 // pred_check
        %p747 = pneg %p124
      $region34: #{multiscale_forward_pallas.15} parent=31 // pred_check_branch
        %749 = sbr.rel (%p747) target = $region36
      $region35: #{multiscale_forward_pallas.15} parent=31 // pred_region
        %s750 = smul.u32 38, %s19
      $region36: #{multiscale_forward_pallas.15} parent=31 // pred_fallthru
        _
    $region32: #{multiscale_forward_pallas.15} parent=5 // pred_fallthru
      _
    %p751 = scmp.le.s32.totalorder 2, %s9
    // Predicated region
    $region37: #{multiscale_forward_pallas.15} parent=5 // pred_check
      %p752 = pneg %p751
    $region38: #{multiscale_forward_pallas.15} parent=5 // pred_check_branch
      %754 = sbr.rel (%p752) target = $region40
    $region39: #{multiscale_forward_pallas.15} parent=5 // pred_region
      %s755 = ssub.s32 %s9, 2
      // Predicated region
      $region41: #{multiscale_forward_pallas.15} parent=39 // pred_check
        %p756 = pneg %p130
      $region42: #{multiscale_forward_pallas.15} parent=39 // pred_check_branch
        %758 = sbr.rel (%p756) target = $region44
      $region43: #{multiscale_forward_pallas.15} parent=39 // pred_region
        %s759 = smul.u32 38, %s21
        %p760 = scmp.lt.s32.totalorder %s759, 75
        %s761 = scalar_select %p760, %s759, 75
        %p762 = scmp.lt.s32.totalorder %s20, 0
        %s763 = scalar_select %p762, %s20, 0
        %s764 = sadd.s32 %s763, %s761
        %s765 = smul.addr %s764, 4
        %s766 = scalar_lea.vmem %s3, %s765
      $region44: #{multiscale_forward_pallas.15} parent=39 // pred_fallthru
        _
    $region40: #{multiscale_forward_pallas.15} parent=5 // pred_fallthru
      _
  $region6: #{multiscale_forward_pallas.15} parent=0 // loop_footer
    %s13 = sadd.s32 1, %s9
  $region7: #{multiscale_forward_pallas.15} parent=0 // loop_footer_branch
    %8 = sbr.rel target = $region3
  $region8: #{multiscale_forward_pallas.15} parent=0 // loop_exit
    _

// kernel: multiscale_forward_pallas.16
$region0: #{multiscale_forward_pallas.16}
  #allocation0 [shape = 'u32[]', space=smem, size = 0x4, offset = 0x4, fixed_abs, tag = 'smem constant byte address 0x4 - core index']
  #allocation1 [shape = 'u32[72,128]{1,0:T(1,128)}', space=vmem, size = 0x9000, scoped, tag = 'internal scratch']
  %s0 = inlined_call_operand.vmem [shape: bf16[192,128], index: 0, kind: input, shape index: {}]
  %s1 = inlined_call_operand.vmem [shape: bf16[128,128], index: 1, kind: input, shape index: {}]
  %s2 = inlined_call_operand.vmem [shape: f32[1,128], index: 2, kind: input, shape index: {}]
  %s3 = inlined_call_operand.vmem [shape: bf16[192,128], index: 3, kind: output, shape index: {0}]
  %s4 = inlined_call_operand.vmem [shape: f32[2,8,128], index: 4, kind: output, shape index: {1}]
  %s5 = inlined_call_operand.vmem [shape: f32[2,8,128], index: 5, kind: output, shape index: {2}]
  %6 = xla_tuple %s3, %s4, %s5
  %s7 = sld [smem:[#allocation0]]
  $region61: #{multiscale_forward_pallas.16} parent=0
    _
  %s9 = ssub.s32 1, %s7
  %s10 = scalar_select 0, %s9, %s7
  loop: start=0, step=1, limit=4
  $region2: #{multiscale_forward_pallas.16} parent=0 // loop_pre_header
    _
  $region3: #{multiscale_forward_pallas.16} parent=0 // loop_header
    %s12 = sphi 0, %s16
    %p13 = scmp.ge.s32.totalorder %s12, 4
    %s19 = sphi 0, %s31
    %s20 = sphi 0, %s27
    %s21 = sphi 0, %s19
    %s22 = sphi 0, %s20
    %s23 = sphi 0, %s21
    %s24 = sphi 0, %s22
    %s34 = sphi 0, %s36
    %s37 = sphi 0, %s34
    %s38 = sphi 0, %s37
    %s54 = sphi 0, %s38
    %s60 = sphi 0, %s62
    %s63 = sphi 0, %s60
    %s64 = sphi 0, %s63
    %s80 = sphi 0, %s64
    %s86 = sphi 0, %s88
    %s89 = sphi 0, %s86
    %s90 = sphi 0, %s89
    %s106 = sphi 0, %s90
    %s114 = sphi 0, %s116
    %s117 = sphi 0, %s114
    %s118 = sphi 0, %s117
    %s134 = sphi 0, %s118
    %s142 = sphi 0, %s144
    %s145 = sphi 0, %s142
    %s146 = sphi 0, %s145
    %s162 = sphi 0, %s146
    %s170 = sphi 0, %s172
    %s173 = sphi 0, %s170
    %s174 = sphi 0, %s173
    %s190 = sphi 0, %s174
  $region4: #{multiscale_forward_pallas.16} parent=0 // loop_header_branch
    %15 = sbr.rel (%p13) target = $region8
  $region5: #{multiscale_forward_pallas.16} parent=0 // loop_body
    %s17 = ssub.s32 %s12, 1
    %s18 = ssub.s32 %s12, 2
    %s25 = sadd.s32 1, %s20
    %p26 = scmp.ge.s32.totalorder %s25, 2
    %s27 = scalar_select %p26, 0, %s25
    %s28 = sadd.s32 1, %s19
    %s29 = scalar_select %p26, %s28, %s19
    %p30 = scmp.ge.s32.totalorder %s29, 1
    %s31 = scalar_select %p30, 0, %s29
    %s32 = ssub.s32 %s20, %s27
    %p33 = scmp.eq.s32.totalorder %s32, 0
    %s35 = sadd.s32 %s34, 1
    %s36 = scalar_select %p33, %s34, %s35
    %p39 = pneg %p33
    %p40 = scmp.eq.s32.totalorder %s12, 1
    %p41 = por %p39, %p40
    %p42 = scmp.ne.s32.totalorder %s34, %s37
    %p43 = scmp.eq.s32.totalorder %s12, 0
    %p44 = por %p42, %p43
    %p45 = scmp.ne.s32.totalorder %s34, %s37
    %p46 = scmp.eq.s32.totalorder %s17, 1
    %p47 = por %p45, %p46
    %p48 = scmp.ne.s32.totalorder %s37, %s38
    %p49 = scmp.eq.s32.totalorder %s17, 0
    %p50 = por %p48, %p49
    %p51 = scmp.ne.s32.totalorder %s37, %s38
    %p52 = scmp.eq.s32.totalorder %s18, 1
    %p53 = por %p51, %p52
    %p55 = scmp.ne.s32.totalorder %s38, %s54
    %p56 = scmp.eq.s32.totalorder %s18, 0
    %p57 = por %p55, %p56
    %s58 = ssub.s32 %s19, %s31
    %p59 = scmp.eq.s32.totalorder %s58, 0
    %s61 = sadd.s32 %s60, 1
    %s62 = scalar_select %p59, %s60, %s61
    %p65 = pneg %p59
    %p66 = scmp.eq.s32.totalorder %s12, 1
    %p67 = por %p65, %p66
    %p68 = scmp.ne.s32.totalorder %s60, %s63
    %p69 = scmp.eq.s32.totalorder %s12, 0
    %p70 = por %p68, %p69
    %p71 = scmp.ne.s32.totalorder %s60, %s63
    %p72 = scmp.eq.s32.totalorder %s17, 1
    %p73 = por %p71, %p72
    %p74 = scmp.ne.s32.totalorder %s63, %s64
    %p75 = scmp.eq.s32.totalorder %s17, 0
    %p76 = por %p74, %p75
    %p77 = scmp.ne.s32.totalorder %s63, %s64
    %p78 = scmp.eq.s32.totalorder %s18, 1
    %p79 = por %p77, %p78
    %p81 = scmp.ne.s32.totalorder %s64, %s80
    %p82 = scmp.eq.s32.totalorder %s18, 0
    %p83 = por %p81, %p82
    %s84 = ssub.s32 %s19, %s31
    %p85 = scmp.eq.s32.totalorder %s84, 0
    %s87 = sadd.s32 %s86, 1
    %s88 = scalar_select %p85, %s86, %s87
    %p91 = pneg %p85
    %p92 = scmp.eq.s32.totalorder %s12, 1
    %p93 = por %p91, %p92
    %p94 = scmp.ne.s32.totalorder %s86, %s89
    %p95 = scmp.eq.s32.totalorder %s12, 0
    %p96 = por %p94, %p95
    %p97 = scmp.ne.s32.totalorder %s86, %s89
    %p98 = scmp.eq.s32.totalorder %s17, 1
    %p99 = por %p97, %p98
    %p100 = scmp.ne.s32.totalorder %s89, %s90
    %p101 = scmp.eq.s32.totalorder %s17, 0
    %p102 = por %p100, %p101
    %p103 = scmp.ne.s32.totalorder %s89, %s90
    %p104 = scmp.eq.s32.totalorder %s18, 1
    %p105 = por %p103, %p104
    %p107 = scmp.ne.s32.totalorder %s90, %s106
    %p108 = scmp.eq.s32.totalorder %s18, 0
    %p109 = por %p107, %p108
    %s110 = ssub.s32 %s20, %s27
    %s111 = ssub.s32 %s19, %s31
    %s112 = sor.u32 %s110, %s111
    %p113 = scmp.eq.s32.totalorder %s112, 0
    %s115 = sadd.s32 %s114, 1
    %s116 = scalar_select %p113, %s114, %s115
    %p119 = pneg %p113
    %p120 = scmp.eq.s32.totalorder %s12, 1
    %p121 = por %p119, %p120
    %p122 = scmp.ne.s32.totalorder %s114, %s117
    %p123 = scmp.eq.s32.totalorder %s12, 0
    %p124 = por %p122, %p123
    %p125 = scmp.ne.s32.totalorder %s114, %s117
    %p126 = scmp.eq.s32.totalorder %s17, 1
    %p127 = por %p125, %p126
    %p128 = scmp.ne.s32.totalorder %s117, %s118
    %p129 = scmp.eq.s32.totalorder %s17, 0
    %p130 = por %p128, %p129
    %p131 = scmp.ne.s32.totalorder %s117, %s118
    %p132 = scmp.eq.s32.totalorder %s18, 1
    %p133 = por %p131, %p132
    %p135 = scmp.ne.s32.totalorder %s118, %s134
    %p136 = scmp.eq.s32.totalorder %s18, 0
    %p137 = por %p135, %p136
    %s138 = ssub.s32 %s20, %s27
    %s139 = ssub.s32 %s19, %s31
    %s140 = sor.u32 %s138, %s139
    %p141 = scmp.eq.s32.totalorder %s140, 0
    %s143 = sadd.s32 %s142, 1
    %s144 = scalar_select %p141, %s142, %s143
    %p147 = pneg %p141
    %p148 = scmp.eq.s32.totalorder %s12, 1
    %p149 = por %p147, %p148
    %p150 = scmp.ne.s32.totalorder %s142, %s145
    %p151 = scmp.eq.s32.totalorder %s12, 0
    %p152 = por %p150, %p151
    %p153 = scmp.ne.s32.totalorder %s142, %s145
    %p154 = scmp.eq.s32.totalorder %s17, 1
    %p155 = por %p153, %p154
    %p156 = scmp.ne.s32.totalorder %s145, %s146
    %p157 = scmp.eq.s32.totalorder %s17, 0
    %p158 = por %p156, %p157
    %p159 = scmp.ne.s32.totalorder %s145, %s146
    %p160 = scmp.eq.s32.totalorder %s18, 1
    %p161 = por %p159, %p160
    %p163 = scmp.ne.s32.totalorder %s146, %s162
    %p164 = scmp.eq.s32.totalorder %s18, 0
    %p165 = por %p163, %p164
    %s166 = ssub.s32 %s20, %s27
    %s167 = ssub.s32 %s19, %s31
    %s168 = sor.u32 %s166, %s167
    %p169 = scmp.eq.s32.totalorder %s168, 0
    %s171 = sadd.s32 %s170, 1
    %s172 = scalar_select %p169, %s170, %s171
    %p175 = pneg %p169
    %p176 = scmp.eq.s32.totalorder %s12, 1
    %p177 = por %p175, %p176
    %p178 = scmp.ne.s32.totalorder %s170, %s173
    %p179 = scmp.eq.s32.totalorder %s12, 0
    %p180 = por %p178, %p179
    %p181 = scmp.ne.s32.totalorder %s170, %s173
    %p182 = scmp.eq.s32.totalorder %s17, 1
    %p183 = por %p181, %p182
    %p184 = scmp.ne.s32.totalorder %s173, %s174
    %p185 = scmp.eq.s32.totalorder %s17, 0
    %p186 = por %p184, %p185
    %p187 = scmp.ne.s32.totalorder %s173, %s174
    %p188 = scmp.eq.s32.totalorder %s18, 1
    %p189 = por %p187, %p188
    %p191 = scmp.ne.s32.totalorder %s174, %s190
    %p192 = scmp.eq.s32.totalorder %s18, 0
    %p193 = por %p191, %p192
    %p194 = scmp.le.s32.totalorder 1, %s12
    %p195 = scmp.lt.s32.totalorder %s12, 3
    %p196 = pnand %p194, %p195
    %p197 = pneg %p196
    // Predicated region
    $region9: #{multiscale_forward_pallas.16} parent=5 // pred_check
      _
    $region10: #{multiscale_forward_pallas.16} parent=5 // pred_check_branch
      %199 = sbr.rel (%p196) target = $region12
    $region11: #{multiscale_forward_pallas.16} parent=5 // pred_region
      %s200 = ssub.s32 %s12, 1
      // Predicated region
      $region13: #{multiscale_forward_pallas.16} parent=11 // pred_check
        %p201 = pneg %p76
      $region14: #{multiscale_forward_pallas.16} parent=11 // pred_check_branch
        %203 = sbr.rel (%p201) target = $region16
      $region15: #{multiscale_forward_pallas.16} parent=11 // pred_region
        %p204 = scmp.lt.s32.totalorder %s21, 0
        %s205 = scalar_select %p204, %s21, 0
        %s206 = smul.addr %s205, 4
        %s207 = scalar_lea.vmem %s1, %s206
      $region16: #{multiscale_forward_pallas.16} parent=11 // pred_fallthru
        _
      // Predicated region
      $region17: #{multiscale_forward_pallas.16} parent=11 // pred_check
        %p208 = pneg %p102
      $region18: #{multiscale_forward_pallas.16} parent=11 // pred_check_branch
        %210 = sbr.rel (%p208) target = $region20
      $region19: #{multiscale_forward_pallas.16} parent=11 // pred_region
        %p211 = scmp.lt.s32.totalorder %s21, 0
        %s212 = scalar_select %p211, %s21, 0
        %s213 = scalar_lea.vmem %s2, %s212
      $region20: #{multiscale_forward_pallas.16} parent=11 // pred_fallthru
        _
    $region12: #{multiscale_forward_pallas.16} parent=5 // pred_fallthru
      _
    %p214 = scmp.lt.s32.totalorder %s12, 2
    // Predicated region
    $region21: #{multiscale_forward_pallas.16} parent=5 // pred_check
      %p215 = pneg %p214
    $region22: #{multiscale_forward_pallas.16} parent=5 // pred_check_branch
      %217 = sbr.rel (%p215) target = $region24
    $region23: #{multiscale_forward_pallas.16} parent=5 // pred_region
      // Predicated region
      $region25: #{multiscale_forward_pallas.16} parent=23 // pred_check
        %p218 = pneg %p44
      $region26: #{multiscale_forward_pallas.16} parent=23 // pred_check_branch
        %220 = sbr.rel (%p218) target = $region28
      $region27: #{multiscale_forward_pallas.16} parent=23 // pred_region
        %s221 = smul.u32 12, %s20
        %p222 = scmp.lt.s32.totalorder %s221, 23
        %s223 = scalar_select %p222, %s221, 23
        %s224 = smul.addr %s223, 4
        %s225 = scalar_lea.vmem %s0, %s224
        %s226 = smul.u32 12, %s20
      $region28: #{multiscale_forward_pallas.16} parent=23 // pred_fallthru
        _
    $region24: #{multiscale_forward_pallas.16} parent=5 // pred_fallthru
      _
    %p227 = scmp.le.s32.totalorder 1, %s12
    %p228 = scmp.lt.s32.totalorder %s12, 3
    %p229 = pnand %p227, %p228
    %p230 = pneg %p229
    // Predicated region
    $region29: #{multiscale_forward_pallas.16} parent=5 // pred_check
      _
    $region30: #{multiscale_forward_pallas.16} parent=5 // pred_check_branch
      %232 = sbr.rel (%p229) target = $region32
    $region31: #{multiscale_forward_pallas.16} parent=5 // pred_region
      %s233 = ssub.s32 %s12, 1
      %s234 = smul.u32 12, %s22
      %p235 = scmp.lt.s32.totalorder %s234, 23
      %s236 = scalar_select %p235, %s234, 23
      %s237 = smul.addr %s236, 4
      %s238 = scalar_lea.vmem %s0, %s237
      %p239 = pneg %p50
      %p240 = pneg %p47
      %p241 = scmp.lt.s32.totalorder %s21, 0
      %s242 = scalar_select %p241, %s21, 0
      %s243 = smul.addr %s242, 4
      %s244 = scalar_lea.vmem %s1, %s243
      %p245 = pneg %p76
      %p246 = pneg %p73
      %p247 = scmp.lt.s32.totalorder %s21, 0
      %s248 = scalar_select %p247, %s21, 0
      %s249 = scalar_lea.vmem %s2, %s248
      %p250 = pneg %p102
      %p251 = pneg %p99
      %p252 = pneg %p130
      %p253 = pneg %p127
      %s254 = smul.u32 12, %s22
      %p255 = scmp.lt.s32.totalorder %s254, 23
      %s256 = scalar_select %p255, %s254, 23
      %p257 = scmp.lt.s32.totalorder %s21, 0
      %s258 = scalar_select %p257, %s21, 0
      %s259 = sadd.s32 %s258, %s256
      %s260 = smul.addr %s259, 4
      %s261 = scalar_lea.vmem %s3, %s260
      %p262 = pneg %p158
      %p263 = pneg %p155
      %p264 = scmp.lt.s32.totalorder %s22, 1
      %s265 = scalar_select %p264, %s22, 1
      %p266 = scmp.lt.s32.totalorder %s21, 0
      %s267 = scalar_select %p266, %s21, 0
      %s268 = sadd.s32 %s267, %s265
      %s269 = smul.addr %s268, 8
      %s270 = scalar_lea.vmem %s4, %s269
      %p271 = pneg %p186
      %p272 = pneg %p183
      %p273 = scmp.lt.s32.totalorder %s22, 1
      %s274 = scalar_select %p273, %s22, 1
      %p275 = scmp.lt.s32.totalorder %s21, 0
      %s276 = scalar_select %p275, %s21, 0
      %s277 = sadd.s32 %s276, %s274
      %s278 = smul.addr %s277, 8
      %s279 = scalar_lea.vmem %s5, %s278
      %s280 = smul.u32 12, %s22
      %p281 = scmp.lt.s32.totalorder %s280, 23
      %s282 = scalar_select %p281, %s280, 23
      %s283 = smul.addr %s282, 4
      %s284 = scalar_lea.vmem %s0, %s283
      %s285 = smul.u32 12, %s22
      %p286 = scmp.lt.s32.totalorder %s21, 0
      %s287 = scalar_select %p286, %s21, 0
      %s288 = smul.addr %s287, 4
      %s289 = scalar_lea.vmem %s1, %s288
      %p290 = scmp.lt.s32.totalorder %s21, 0
      %s291 = scalar_select %p290, %s21, 0
      %s292 = scalar_lea.vmem %s2, %s291
      %s293 = smul.u32 12, %s22
      %p294 = scmp.lt.s32.totalorder %s293, 23
      %s295 = scalar_select %p294, %s293, 23
      %p296 = scmp.lt.s32.totalorder %s21, 0
      %s297 = scalar_select %p296, %s21, 0
      %s298 = sadd.s32 %s297, %s295
      %s299 = smul.addr %s298, 4
      %s300 = scalar_lea.vmem %s3, %s299
      %s301 = smul.u32 12, %s22
      %p302 = scmp.lt.s32.totalorder %s22, 1
      %s303 = scalar_select %p302, %s22, 1
      %p304 = scmp.lt.s32.totalorder %s21, 0
      %s305 = scalar_select %p304, %s21, 0
      %s306 = sadd.s32 %s305, %s303
      %s307 = smul.addr %s306, 8
      %s308 = scalar_lea.vmem %s4, %s307
      %p309 = scmp.lt.s32.totalorder %s22, 1
      %s310 = scalar_select %p309, %s22, 1
      %p311 = scmp.lt.s32.totalorder %s21, 0
      %s312 = scalar_select %p311, %s21, 0
      %s313 = sadd.s32 %s312, %s310
      %s314 = smul.addr %s313, 8
      %s315 = scalar_lea.vmem %s5, %s314
      %v316 = vld [vmem:[%s284] sm:$0xf]
      %v317 = vld [vmem:[%s284 + $0x4] sm:$0xf]
      %v318 = vld [vmem:[%s284 + $0x8] sm:$0xf]
      %v319 = vld [vmem:[%s284 + $0xc] sm:$0xf]
      %v320 = vld [vmem:[%s284 + $0x10] sm:$0xf]
      %v321 = vld [vmem:[%s284 + $0x14] sm:$0xf]
      %v322 = vld [vmem:[%s284 + $0x18] sm:$0xf]
      %v323 = vld [vmem:[%s284 + $0x1c] sm:$0xf]
      %v324 = vld [vmem:[%s284 + $0x20] sm:$0xf]
      %v325 = vld [vmem:[%s284 + $0x24] sm:$0xf]
      %v326 = vld [vmem:[%s284 + $0x28] sm:$0xf]
      %v327 = vld [vmem:[%s284 + $0x2c] sm:$0xf]
      %v328 = vld [vmem:[%s289] sm:$0xf]
      %v329 = vld [vmem:[%s289 + $0x4] sm:$0xf]
      %v330 = vld [vmem:[%s289 + $0x8] sm:$0xf]
      %v331 = vld [vmem:[%s289 + $0xc] sm:$0xf]
      %v332 = vld [vmem:[%s289 + $0x10] sm:$0xf]
      %v333 = vld [vmem:[%s289 + $0x14] sm:$0xf]
      %v334 = vld [vmem:[%s289 + $0x18] sm:$0xf]
      %v335 = vld [vmem:[%s289 + $0x1c] sm:$0xf]
      %v336 = vld [vmem:[%s289 + $0x20] sm:$0xf]
      %v337 = vld [vmem:[%s289 + $0x24] sm:$0xf]
      %v338 = vld [vmem:[%s289 + $0x28] sm:$0xf]
      %v339 = vld [vmem:[%s289 + $0x2c] sm:$0xf]
      %v340 = vld [vmem:[%s289 + $0x30] sm:$0xf]
      %v341 = vld [vmem:[%s289 + $0x34] sm:$0xf]
      %v342 = vld [vmem:[%s289 + $0x38] sm:$0xf]
      %v343 = vld [vmem:[%s289 + $0x3c] sm:$0xf]
      %v344 = vld [vmem:[%s292] sm:$0x1]
      %v346 = vperm.slane %v344, 0
      %v360 = vunpack.c.l.b16 %v316
      %v361 = vunpack.c.l.b16 %v317
      %v362 = vunpack.c.l.b16 %v318
      %v363 = vunpack.c.l.b16 %v319
      %v364 = vunpack.c.l.b16 %v320
      %v365 = vunpack.c.l.b16 %v321
      %v366 = vunpack.c.l.b16 %v322
      %v367 = vunpack.c.l.b16 %v323
      %v368 = vunpack.c.l.b16 %v324
      %v369 = vunpack.c.l.b16 %v325
      %v370 = vunpack.c.l.b16 %v326
      %v371 = vunpack.c.l.b16 %v327
      %v372 = vpack.c.b16 %v361, %v360
      %v373 = vpack.c.b16 %v363, %v362
      %v374 = vpack.c.b16 %v365, %v364
      %v375 = vpack.c.b16 %v367, %v366
      %v376 = vpack.c.b16 %v369, %v368
      %v377 = vpack.c.b16 %v371, %v370
      %v400 = vunpack.c.l.b16 %v328
      %v401 = vunpack.c.l.b16 %v329
      %v402 = vunpack.c.l.b16 %v330
      %v403 = vunpack.c.l.b16 %v331
      %v404 = vunpack.c.l.b16 %v332
      %v405 = vunpack.c.l.b16 %v333
      %v406 = vunpack.c.l.b16 %v334
      %v407 = vunpack.c.l.b16 %v335
      %v408 = vunpack.c.l.b16 %v336
      %v409 = vunpack.c.l.b16 %v337
      %v410 = vunpack.c.l.b16 %v338
      %v411 = vunpack.c.l.b16 %v339
      %v412 = vunpack.c.l.b16 %v340
      %v413 = vunpack.c.l.b16 %v341
      %v414 = vunpack.c.l.b16 %v342
      %v415 = vunpack.c.l.b16 %v343
      %v416 = vpack.c.b16 %v401, %v400
      %v417 = vpack.c.b16 %v403, %v402
      %v418 = vpack.c.b16 %v405, %v404
      %v419 = vpack.c.b16 %v407, %v406
      %v420 = vpack.c.b16 %v409, %v408
      %v421 = vpack.c.b16 %v411, %v410
      %v422 = vpack.c.b16 %v413, %v412
      %v423 = vpack.c.b16 %v415, %v414
      %432 = vmatpush.bf16.msra.mxu0 %v423
      %433 = vmatpush.bf16.msra.mxu0 %v422
      %434 = vmatpush.bf16.msra.mxu0 %v421
      %435 = vmatpush.bf16.msra.mxu0 %v420
      %436 = vmatpush.bf16.msra.mxu0 %v419
      %437 = vmatpush.bf16.msra.mxu0 %v418
      %438 = vmatpush.bf16.msra.mxu0 %v417
      %439 = vmatpush.bf16.msra.mxu0 %v416
      %440 = vmatmul.bf16.gmra.mxu0 %v372
      %v441 = vpop.f32.mrf.mxu0
      %v442 = vadd.f32 %v346, %v441
      %v443 = vpop.f32.mrf.mxu0
      %v444 = vadd.f32 %v346, %v443
      %445 = vmatmul.bf16.gmra.mxu0 %v373
      %v446 = vpop.f32.mrf.mxu0
      %v447 = vadd.f32 %v346, %v446
      %v448 = vpop.f32.mrf.mxu0
      %v449 = vadd.f32 %v346, %v448
      %450 = vmatmul.bf16.gmra.mxu0 %v374
      %v451 = vpop.f32.mrf.mxu0
      %v452 = vadd.f32 %v346, %v451
      %v453 = vpop.f32.mrf.mxu0
      %v454 = vadd.f32 %v346, %v453
      %455 = vmatmul.bf16.gmra.mxu0 %v375
      %v456 = vpop.f32.mrf.mxu0
      %v457 = vadd.f32 %v346, %v456
      %v458 = vpop.f32.mrf.mxu0
      %v459 = vadd.f32 %v346, %v458
      %460 = vmatmul.bf16.gmra.mxu0 %v376
      %v461 = vpop.f32.mrf.mxu0
      %v462 = vadd.f32 %v346, %v461
      %v463 = vpop.f32.mrf.mxu0
      %v464 = vadd.f32 %v346, %v463
      %465 = vmatmul.bf16.gmra.mxu0 %v377
      %v466 = vpop.f32.mrf.mxu0
      %v467 = vadd.f32 %v346, %v466
      %v468 = vpop.f32.mrf.mxu0
      %v469 = vadd.f32 %v346, %v468
      %470 = vdwg.mxu0
      %v471 = vpack.c.bf16 %v442, %v442
      %v472 = vpack.c.bf16 %v444, %v444
      %v473 = vpack.c.bf16 %v447, %v447
      %v474 = vpack.c.bf16 %v449, %v449
      %v475 = vpack.c.bf16 %v452, %v452
      %v476 = vpack.c.bf16 %v454, %v454
      %v477 = vpack.c.bf16 %v457, %v457
      %v478 = vpack.c.bf16 %v459, %v459
      %v479 = vpack.c.bf16 %v462, %v462
      %v480 = vpack.c.bf16 %v464, %v464
      %v481 = vpack.c.bf16 %v467, %v467
      %v482 = vpack.c.bf16 %v469, %v469
      %483 = vst [vmem:[%s300] sm:$0xf] %v471
      %484 = vst [vmem:[%s300 + $0x4] sm:$0xf] %v472
      %485 = vst [vmem:[%s300 + $0x8] sm:$0xf] %v473
      %486 = vst [vmem:[%s300 + $0xc] sm:$0xf] %v474
      %487 = vst [vmem:[%s300 + $0x10] sm:$0xf] %v475
      %488 = vst [vmem:[%s300 + $0x14] sm:$0xf] %v476
      %489 = vst [vmem:[%s300 + $0x18] sm:$0xf] %v477
      %490 = vst [vmem:[%s300 + $0x1c] sm:$0xf] %v478
      %491 = vst [vmem:[%s300 + $0x20] sm:$0xf] %v479
      %492 = vst [vmem:[%s300 + $0x24] sm:$0xf] %v480
      %493 = vst [vmem:[%s300 + $0x28] sm:$0xf] %v481
      %494 = vst [vmem:[%s300 + $0x2c] sm:$0xf] %v482
      %v495 = vlaneseq
      %v496 = vshrl.u32 %v495, 7
      %v497 = vadd.s32 %v496, 8
      %v498 = vadd.s32 %v496, 16
      %v499 = vadd.s32 %v496, 24
      %v500 = vadd.s32 %v496, 32
      %v501 = vadd.s32 %v496, 40
      %v502 = vadd.s32 %v496, 48
      %v503 = vadd.s32 %v496, 56
      %v504 = vadd.s32 %v496, 64
      %v505 = vadd.s32 %v496, 72
      %v506 = vadd.s32 %v496, 80
      %v507 = vadd.s32 %v496, 88
      %s508 = smul.u32 %s22, 96
      %v509 = vstv %s508
      %v510 = vadd.s32 %v496, %v509
      %v511 = vadd.s32 %v497, %v509
      %v512 = vadd.s32 %v498, %v509
      %v513 = vadd.s32 %v499, %v509
      %v514 = vadd.s32 %v500, %v509
      %v515 = vadd.s32 %v501, %v509
      %v516 = vadd.s32 %v502, %v509
      %v517 = vadd.s32 %v503, %v509
      %v518 = vadd.s32 %v504, %v509
      %v519 = vadd.s32 %v505, %v509
      %v520 = vadd.s32 %v506, %v509
      %v521 = vadd.s32 %v507, %v509
      %vm522 = vcmp.lt.s32.totalorder %v510, 162
      %vm523 = vcmp.lt.s32.totalorder %v511, 162
      %vm524 = vcmp.lt.s32.totalorder %v512, 162
      %vm525 = vcmp.lt.s32.totalorder %v513, 162
      %vm526 = vcmp.lt.s32.totalorder %v514, 162
      %vm527 = vcmp.lt.s32.totalorder %v515, 162
      %vm528 = vcmp.lt.s32.totalorder %v516, 162
      %vm529 = vcmp.lt.s32.totalorder %v517, 162
      %vm530 = vcmp.lt.s32.totalorder %v518, 162
      %vm531 = vcmp.lt.s32.totalorder %v519, 162
      %vm532 = vcmp.lt.s32.totalorder %v520, 162
      %vm533 = vcmp.lt.s32.totalorder %v521, 162
      %v534 = vsel %vm522, %v442, 0.0
      %v535 = vsel %vm523, %v444, 0.0
      %v536 = vsel %vm524, %v447, 0.0
      %v537 = vsel %vm525, %v449, 0.0
      %v538 = vsel %vm526, %v452, 0.0
      %v539 = vsel %vm527, %v454, 0.0
      %v540 = vsel %vm528, %v457, 0.0
      %v541 = vsel %vm529, %v459, 0.0
      %v542 = vsel %vm530, %v462, 0.0
      %v543 = vsel %vm531, %v464, 0.0
      %v544 = vsel %vm532, %v467, 0.0
      %v545 = vsel %vm533, %v469, 0.0
      %v546 = vadd.f32 %v534, %v535
      %v547 = vadd.f32 %v546, %v536
      %v548 = vadd.f32 %v547, %v537
      %v549 = vadd.f32 %v548, %v538
      %v550 = vadd.f32 %v549, %v539
      %v551 = vadd.f32 %v550, %v540
      %v552 = vadd.f32 %v551, %v541
      %v553 = vadd.f32 %v552, %v542
      %v554 = vadd.f32 %v553, %v543
      %v555 = vadd.f32 %v554, %v544
      %v556 = vadd.f32 %v555, %v545
      %557 = vst [vmem:[%s308] sm:$0xff] %v556
      %v558 = vmul.f32 %v534, %v534
      %v559 = vmul.f32 %v535, %v535
      %v560 = vmul.f32 %v536, %v536
      %v561 = vmul.f32 %v537, %v537
      %v562 = vmul.f32 %v538, %v538
      %v563 = vmul.f32 %v539, %v539
      %v564 = vmul.f32 %v540, %v540
      %v565 = vmul.f32 %v541, %v541
      %v566 = vmul.f32 %v542, %v542
      %v567 = vmul.f32 %v543, %v543
      %v568 = vmul.f32 %v544, %v544
      %v569 = vmul.f32 %v545, %v545
      %v570 = vadd.f32 %v558, %v559
      %v571 = vadd.f32 %v570, %v560
      %v572 = vadd.f32 %v571, %v561
      %v573 = vadd.f32 %v572, %v562
      %v574 = vadd.f32 %v573, %v563
      %v575 = vadd.f32 %v574, %v564
      %v576 = vadd.f32 %v575, %v565
      %v577 = vadd.f32 %v576, %v566
      %v578 = vadd.f32 %v577, %v567
      %v579 = vadd.f32 %v578, %v568
      %v580 = vadd.f32 %v579, %v569
      %581 = vst [vmem:[%s315] sm:$0xff] %v580
      %s582 = smul.u32 12, %s22
      %p583 = scmp.lt.s32.totalorder %s582, 23
      %s584 = scalar_select %p583, %s582, 23
      %p585 = scmp.lt.s32.totalorder %s21, 0
      %s586 = scalar_select %p585, %s21, 0
      %s587 = sadd.s32 %s586, %s584
      %s588 = smul.addr %s587, 4
      %s589 = scalar_lea.vmem %s3, %s588
      %p590 = scmp.lt.s32.totalorder %s22, 1
      %s591 = scalar_select %p590, %s22, 1
      %p592 = scmp.lt.s32.totalorder %s21, 0
      %s593 = scalar_select %p592, %s21, 0
      %s594 = sadd.s32 %s593, %s591
      %s595 = smul.addr %s594, 8
      %s596 = scalar_lea.vmem %s4, %s595
      %p597 = scmp.lt.s32.totalorder %s22, 1
      %s598 = scalar_select %p597, %s22, 1
      %p599 = scmp.lt.s32.totalorder %s21, 0
      %s600 = scalar_select %p599, %s21, 0
      %s601 = sadd.s32 %s600, %s598
      %s602 = smul.addr %s601, 8
      %s603 = scalar_lea.vmem %s5, %s602
      // Predicated region
      $region33: #{multiscale_forward_pallas.16} parent=31 // pred_check
        %p604 = pneg %p127
      $region34: #{multiscale_forward_pallas.16} parent=31 // pred_check_branch
        %606 = sbr.rel (%p604) target = $region36
      $region35: #{multiscale_forward_pallas.16} parent=31 // pred_region
        %s607 = smul.u32 12, %s22
      $region36: #{multiscale_forward_pallas.16} parent=31 // pred_fallthru
        _
      // Predicated region
      $region37: #{multiscale_forward_pallas.16} parent=31 // pred_check
        %p608 = pneg %p155
      $region38: #{multiscale_forward_pallas.16} parent=31 // pred_check_branch
        %610 = sbr.rel (%p608) target = $region40
      $region39: #{multiscale_forward_pallas.16} parent=31 // pred_region
        _
      $region40: #{multiscale_forward_pallas.16} parent=31 // pred_fallthru
        _
      // Predicated region
      $region41: #{multiscale_forward_pallas.16} parent=31 // pred_check
        %p611 = pneg %p183
      $region42: #{multiscale_forward_pallas.16} parent=31 // pred_check_branch
        %613 = sbr.rel (%p611) target = $region44
      $region43: #{multiscale_forward_pallas.16} parent=31 // pred_region
        _
      $region44: #{multiscale_forward_pallas.16} parent=31 // pred_fallthru
        _
    $region32: #{multiscale_forward_pallas.16} parent=5 // pred_fallthru
      _
    %p614 = scmp.le.s32.totalorder 2, %s12
    // Predicated region
    $region45: #{multiscale_forward_pallas.16} parent=5 // pred_check
      %p615 = pneg %p614
    $region46: #{multiscale_forward_pallas.16} parent=5 // pred_check_branch
      %617 = sbr.rel (%p615) target = $region48
    $region47: #{multiscale_forward_pallas.16} parent=5 // pred_region
      %s618 = ssub.s32 %s12, 2
      // Predicated region
      $region49: #{multiscale_forward_pallas.16} parent=47 // pred_check
        %p619 = pneg %p133
      $region50: #{multiscale_forward_pallas.16} parent=47 // pred_check_branch
        %621 = sbr.rel (%p619) target = $region52
      $region51: #{multiscale_forward_pallas.16} parent=47 // pred_region
        %s622 = smul.u32 12, %s24
        %p623 = scmp.lt.s32.totalorder %s622, 23
        %s624 = scalar_select %p623, %s622, 23
        %p625 = scmp.lt.s32.totalorder %s23, 0
        %s626 = scalar_select %p625, %s23, 0
        %s627 = sadd.s32 %s626, %s624
        %s628 = smul.addr %s627, 4
        %s629 = scalar_lea.vmem %s3, %s628
      $region52: #{multiscale_forward_pallas.16} parent=47 // pred_fallthru
        _
      // Predicated region
      $region53: #{multiscale_forward_pallas.16} parent=47 // pred_check
        %p630 = pneg %p161
      $region54: #{multiscale_forward_pallas.16} parent=47 // pred_check_branch
        %632 = sbr.rel (%p630) target = $region56
      $region55: #{multiscale_forward_pallas.16} parent=47 // pred_region
        %p633 = scmp.lt.s32.totalorder %s24, 1
        %s634 = scalar_select %p633, %s24, 1
        %p635 = scmp.lt.s32.totalorder %s23, 0
        %s636 = scalar_select %p635, %s23, 0
        %s637 = sadd.s32 %s636, %s634
        %s638 = smul.addr %s637, 8
        %s639 = scalar_lea.vmem %s4, %s638
      $region56: #{multiscale_forward_pallas.16} parent=47 // pred_fallthru
        _
      // Predicated region
      $region57: #{multiscale_forward_pallas.16} parent=47 // pred_check
        %p640 = pneg %p189
      $region58: #{multiscale_forward_pallas.16} parent=47 // pred_check_branch
        %642 = sbr.rel (%p640) target = $region60
      $region59: #{multiscale_forward_pallas.16} parent=47 // pred_region
        %p643 = scmp.lt.s32.totalorder %s24, 1
        %s644 = scalar_select %p643, %s24, 1
        %p645 = scmp.lt.s32.totalorder %s23, 0
        %s646 = scalar_select %p645, %s23, 0
        %s647 = sadd.s32 %s646, %s644
        %s648 = smul.addr %s647, 8
        %s649 = scalar_lea.vmem %s5, %s648
      $region60: #{multiscale_forward_pallas.16} parent=47 // pred_fallthru
        _
    $region48: #{multiscale_forward_pallas.16} parent=5 // pred_fallthru
      _
  $region6: #{multiscale_forward_pallas.16} parent=0 // loop_footer
    %s16 = sadd.s32 1, %s12
  $region7: #{multiscale_forward_pallas.16} parent=0 // loop_footer_branch
    %11 = sbr.rel target = $region3
  $region8: #{multiscale_forward_pallas.16} parent=0 // loop_exit
    _

// kernel: multiscale_forward_pallas.17
$region0: #{multiscale_forward_pallas.17}
  #allocation0 [shape = 'u32[]', space=smem, size = 0x4, offset = 0x4, fixed_abs, tag = 'smem constant byte address 0x4 - core index']
  #allocation1 [shape = 'u32[72,128]{1,0:T(1,128)}', space=vmem, size = 0x9000, scoped, tag = 'internal scratch']
  %s0 = inlined_call_operand.vmem [shape: bf16[64,256], index: 0, kind: input, shape index: {}]
  %s1 = inlined_call_operand.vmem [shape: bf16[256,128], index: 1, kind: input, shape index: {}]
  %s2 = inlined_call_operand.vmem [shape: f32[1,128], index: 2, kind: input, shape index: {}]
  %s3 = inlined_call_operand.vmem [shape: bf16[64,128], index: 3, kind: output, shape index: {0}]
  %s4 = inlined_call_operand.vmem [shape: f32[1,8,128], index: 4, kind: output, shape index: {1}]
  %s5 = inlined_call_operand.vmem [shape: f32[1,8,128], index: 5, kind: output, shape index: {2}]
  %6 = xla_tuple %s3, %s4, %s5
  %s7 = sld [smem:[#allocation0]]
  $region38: #{multiscale_forward_pallas.17} parent=0
    _
  %s9 = ssub.s32 1, %s7
  %s10 = scalar_select 0, %s9, %s7
  // Predicated region
  $region2: #{multiscale_forward_pallas.17} parent=0 // pred_check
    _
  $region3: #{multiscale_forward_pallas.17} parent=0 // pred_check_branch
    %12 = sbr.rel (0) target = $region5
  $region4: #{multiscale_forward_pallas.17} parent=0 // pred_region
    _
  $region5: #{multiscale_forward_pallas.17} parent=0 // pred_fallthru
    _
  // Predicated region
  $region6: #{multiscale_forward_pallas.17} parent=0 // pred_check
    _
  $region7: #{multiscale_forward_pallas.17} parent=0 // pred_check_branch
    %14 = sbr.rel (0) target = $region9
  $region8: #{multiscale_forward_pallas.17} parent=0 // pred_region
    _
  $region9: #{multiscale_forward_pallas.17} parent=0 // pred_fallthru
    _
  // Predicated region
  $region10: #{multiscale_forward_pallas.17} parent=0 // pred_check
    _
  $region11: #{multiscale_forward_pallas.17} parent=0 // pred_check_branch
    %16 = sbr.rel (0) target = $region13
  $region12: #{multiscale_forward_pallas.17} parent=0 // pred_region
    _
  $region13: #{multiscale_forward_pallas.17} parent=0 // pred_fallthru
    _
  %v17 = vld [vmem:[%s0] sm:$0xff]
  %v18 = vld [vmem:[%s0 + $0x8] sm:$0xff]
  %v19 = vld [vmem:[%s0 + $0x10] sm:$0xff]
  %v20 = vld [vmem:[%s0 + $0x18] sm:$0xff]
  %v21 = vld [vmem:[%s0 + $0x20] sm:$0xff]
  %v22 = vld [vmem:[%s0 + $0x28] sm:$0xff]
  %v23 = vld [vmem:[%s0 + $0x30] sm:$0xff]
  %v24 = vld [vmem:[%s0 + $0x38] sm:$0xff]
  %v25 = vld [vmem:[%s1] sm:$0xf]
  %v26 = vld [vmem:[%s1 + $0x4] sm:$0xf]
  %v27 = vld [vmem:[%s1 + $0x8] sm:$0xf]
  %v28 = vld [vmem:[%s1 + $0xc] sm:$0xf]
  %v29 = vld [vmem:[%s1 + $0x10] sm:$0xf]
  %v30 = vld [vmem:[%s1 + $0x14] sm:$0xf]
  %v31 = vld [vmem:[%s1 + $0x18] sm:$0xf]
  %v32 = vld [vmem:[%s1 + $0x1c] sm:$0xf]
  %v33 = vld [vmem:[%s1 + $0x20] sm:$0xf]
  %v34 = vld [vmem:[%s1 + $0x24] sm:$0xf]
  %v35 = vld [vmem:[%s1 + $0x28] sm:$0xf]
  %v36 = vld [vmem:[%s1 + $0x2c] sm:$0xf]
  %v37 = vld [vmem:[%s1 + $0x30] sm:$0xf]
  %v38 = vld [vmem:[%s1 + $0x34] sm:$0xf]
  %v39 = vld [vmem:[%s1 + $0x38] sm:$0xf]
  %v40 = vld [vmem:[%s1 + $0x3c] sm:$0xf]
  %v41 = vld [vmem:[%s1 + $0x40] sm:$0xf]
  %v42 = vld [vmem:[%s1 + $0x44] sm:$0xf]
  %v43 = vld [vmem:[%s1 + $0x48] sm:$0xf]
  %v44 = vld [vmem:[%s1 + $0x4c] sm:$0xf]
  %v45 = vld [vmem:[%s1 + $0x50] sm:$0xf]
  %v46 = vld [vmem:[%s1 + $0x54] sm:$0xf]
  %v47 = vld [vmem:[%s1 + $0x58] sm:$0xf]
  %v48 = vld [vmem:[%s1 + $0x5c] sm:$0xf]
  %v49 = vld [vmem:[%s1 + $0x60] sm:$0xf]
  %v50 = vld [vmem:[%s1 + $0x64] sm:$0xf]
  %v51 = vld [vmem:[%s1 + $0x68] sm:$0xf]
  %v52 = vld [vmem:[%s1 + $0x6c] sm:$0xf]
  %v53 = vld [vmem:[%s1 + $0x70] sm:$0xf]
  %v54 = vld [vmem:[%s1 + $0x74] sm:$0xf]
  %v55 = vld [vmem:[%s1 + $0x78] sm:$0xf]
  %v56 = vld [vmem:[%s1 + $0x7c] sm:$0xf]
  %v57 = vld [vmem:[%s2] sm:$0x1]
  %v59 = vperm.slane %v57, 0
  %v69 = vunpack.c.l.b16 %v17
  %v70 = vunpack.c.h.b16 %v17
  %v71 = vunpack.c.l.b16 %v18
  %v72 = vunpack.c.h.b16 %v18
  %v73 = vunpack.c.l.b16 %v19
  %v74 = vunpack.c.h.b16 %v19
  %v75 = vunpack.c.l.b16 %v20
  %v76 = vunpack.c.h.b16 %v20
  %v77 = vunpack.c.l.b16 %v21
  %v78 = vunpack.c.h.b16 %v21
  %v79 = vunpack.c.l.b16 %v22
  %v80 = vunpack.c.h.b16 %v22
  %v81 = vunpack.c.l.b16 %v23
  %v82 = vunpack.c.h.b16 %v23
  %v83 = vunpack.c.l.b16 %v24
  %v84 = vunpack.c.h.b16 %v24
  %v85 = vpack.c.b16 %v71, %v69
  %v86 = vpack.c.b16 %v72, %v70
  %v87 = vpack.c.b16 %v75, %v73
  %v88 = vpack.c.b16 %v76, %v74
  %v89 = vpack.c.b16 %v79, %v77
  %v90 = vpack.c.b16 %v80, %v78
  %v91 = vpack.c.b16 %v83, %v81
  %v92 = vpack.c.b16 %v84, %v82
  %v133 = vunpack.c.l.b16 %v25
  %v134 = vunpack.c.l.b16 %v26
  %v135 = vunpack.c.l.b16 %v27
  %v136 = vunpack.c.l.b16 %v28
  %v137 = vunpack.c.l.b16 %v29
  %v138 = vunpack.c.l.b16 %v30
  %v139 = vunpack.c.l.b16 %v31
  %v140 = vunpack.c.l.b16 %v32
  %v141 = vunpack.c.l.b16 %v33
  %v142 = vunpack.c.l.b16 %v34
  %v143 = vunpack.c.l.b16 %v35
  %v144 = vunpack.c.l.b16 %v36
  %v145 = vunpack.c.l.b16 %v37
  %v146 = vunpack.c.l.b16 %v38
  %v147 = vunpack.c.l.b16 %v39
  %v148 = vunpack.c.l.b16 %v40
  %v149 = vunpack.c.l.b16 %v41
  %v150 = vunpack.c.l.b16 %v42
  %v151 = vunpack.c.l.b16 %v43
  %v152 = vunpack.c.l.b16 %v44
  %v153 = vunpack.c.l.b16 %v45
  %v154 = vunpack.c.l.b16 %v46
  %v155 = vunpack.c.l.b16 %v47
  %v156 = vunpack.c.l.b16 %v48
  %v157 = vunpack.c.l.b16 %v49
  %v158 = vunpack.c.l.b16 %v50
  %v159 = vunpack.c.l.b16 %v51
  %v160 = vunpack.c.l.b16 %v52
  %v161 = vunpack.c.l.b16 %v53
  %v162 = vunpack.c.l.b16 %v54
  %v163 = vunpack.c.l.b16 %v55
  %v164 = vunpack.c.l.b16 %v56
  %v165 = vpack.c.b16 %v134, %v133
  %v166 = vpack.c.b16 %v136, %v135
  %v167 = vpack.c.b16 %v138, %v137
  %v168 = vpack.c.b16 %v140, %v139
  %v169 = vpack.c.b16 %v142, %v141
  %v170 = vpack.c.b16 %v144, %v143
  %v171 = vpack.c.b16 %v146, %v145
  %v172 = vpack.c.b16 %v148, %v147
  %v173 = vpack.c.b16 %v150, %v149
  %v174 = vpack.c.b16 %v152, %v151
  %v175 = vpack.c.b16 %v154, %v153
  %v176 = vpack.c.b16 %v156, %v155
  %v177 = vpack.c.b16 %v158, %v157
  %v178 = vpack.c.b16 %v160, %v159
  %v179 = vpack.c.b16 %v162, %v161
  %v180 = vpack.c.b16 %v164, %v163
  %197 = vmatpush.bf16.msra.mxu0 %v172
  %198 = vmatpush.bf16.msra.mxu0 %v171
  %199 = vmatpush.bf16.msra.mxu0 %v170
  %200 = vmatpush.bf16.msra.mxu0 %v169
  %201 = vmatpush.bf16.msra.mxu0 %v168
  %202 = vmatpush.bf16.msra.mxu0 %v167
  %203 = vmatpush.bf16.msra.mxu0 %v166
  %204 = vmatpush.bf16.msra.mxu0 %v165
  %205 = vmatmul.bf16.gmra.mxu0 %v85
  %v206 = vpop.f32.mrf.mxu0
  %v207 = vadd.f32 %v59, %v206
  %v208 = vpop.f32.mrf.mxu0
  %v209 = vadd.f32 %v59, %v208
  %210 = vmatmul.bf16.gmra.mxu0 %v87
  %v211 = vpop.f32.mrf.mxu0
  %v212 = vadd.f32 %v59, %v211
  %v213 = vpop.f32.mrf.mxu0
  %v214 = vadd.f32 %v59, %v213
  %215 = vmatmul.bf16.gmra.mxu0 %v89
  %v216 = vpop.f32.mrf.mxu0
  %v217 = vadd.f32 %v59, %v216
  %v218 = vpop.f32.mrf.mxu0
  %v219 = vadd.f32 %v59, %v218
  %220 = vmatmul.bf16.gmra.mxu0 %v91
  %v221 = vpop.f32.mrf.mxu0
  %v222 = vadd.f32 %v59, %v221
  %v223 = vpop.f32.mrf.mxu0
  %v224 = vadd.f32 %v59, %v223
  %225 = vdwg.mxu0
  %226 = vmatpush.bf16.msra.mxu0 %v180
  %227 = vmatpush.bf16.msra.mxu0 %v179
  %228 = vmatpush.bf16.msra.mxu0 %v178
  %229 = vmatpush.bf16.msra.mxu0 %v177
  %230 = vmatpush.bf16.msra.mxu0 %v176
  %231 = vmatpush.bf16.msra.mxu0 %v175
  %232 = vmatpush.bf16.msra.mxu0 %v174
  %233 = vmatpush.bf16.msra.mxu0 %v173
  %234 = vmatmul.bf16.gmra.mxu0 %v86
  %v235 = vpop.f32.mrf.mxu0
  %v236 = vadd.f32 %v207, %v235
  %v237 = vpop.f32.mrf.mxu0
  %v238 = vadd.f32 %v209, %v237
  %239 = vmatmul.bf16.gmra.mxu0 %v88
  %v240 = vpop.f32.mrf.mxu0
  %v241 = vadd.f32 %v212, %v240
  %v242 = vpop.f32.mrf.mxu0
  %v243 = vadd.f32 %v214, %v242
  %244 = vmatmul.bf16.gmra.mxu0 %v90
  %v245 = vpop.f32.mrf.mxu0
  %v246 = vadd.f32 %v217, %v245
  %v247 = vpop.f32.mrf.mxu0
  %v248 = vadd.f32 %v219, %v247
  %249 = vmatmul.bf16.gmra.mxu0 %v92
  %v250 = vpop.f32.mrf.mxu0
  %v251 = vadd.f32 %v222, %v250
  %v252 = vpop.f32.mrf.mxu0
  %v253 = vadd.f32 %v224, %v252
  %254 = vdwg.mxu0
  %v255 = vpack.c.bf16 %v236, %v236
  %v256 = vpack.c.bf16 %v238, %v238
  %v257 = vpack.c.bf16 %v241, %v241
  %v258 = vpack.c.bf16 %v243, %v243
  %v259 = vpack.c.bf16 %v246, %v246
  %v260 = vpack.c.bf16 %v248, %v248
  %v261 = vpack.c.bf16 %v251, %v251
  %v262 = vpack.c.bf16 %v253, %v253
  %263 = vst [vmem:[%s3] sm:$0xf] %v255
  %264 = vst [vmem:[%s3 + $0x4] sm:$0xf] %v256
  %265 = vst [vmem:[%s3 + $0x8] sm:$0xf] %v257
  %266 = vst [vmem:[%s3 + $0xc] sm:$0xf] %v258
  %267 = vst [vmem:[%s3 + $0x10] sm:$0xf] %v259
  %268 = vst [vmem:[%s3 + $0x14] sm:$0xf] %v260
  %269 = vst [vmem:[%s3 + $0x18] sm:$0xf] %v261
  %270 = vst [vmem:[%s3 + $0x1c] sm:$0xf] %v262
  %v271 = vlaneseq
  %v272 = vshrl.u32 %v271, 7
  %v273 = vadd.s32 %v272, 8
  %v274 = vadd.s32 %v272, 16
  %v275 = vadd.s32 %v272, 24
  %v276 = vadd.s32 %v272, 32
  %v277 = vadd.s32 %v272, 40
  %v278 = vadd.s32 %v272, 48
  %v279 = vadd.s32 %v272, 56
  %s280 = smul.u32 0, 64
  %v281 = vstv %s280
  %v282 = vadd.s32 %v272, %v281
  %v283 = vadd.s32 %v273, %v281
  %v284 = vadd.s32 %v274, %v281
  %v285 = vadd.s32 %v275, %v281
  %v286 = vadd.s32 %v276, %v281
  %v287 = vadd.s32 %v277, %v281
  %v288 = vadd.s32 %v278, %v281
  %v289 = vadd.s32 %v279, %v281
  %vm290 = vcmp.lt.s32.totalorder %v282, 50
  %vm291 = vcmp.lt.s32.totalorder %v283, 50
  %vm292 = vcmp.lt.s32.totalorder %v284, 50
  %vm293 = vcmp.lt.s32.totalorder %v285, 50
  %vm294 = vcmp.lt.s32.totalorder %v286, 50
  %vm295 = vcmp.lt.s32.totalorder %v287, 50
  %vm296 = vcmp.lt.s32.totalorder %v288, 50
  %vm297 = vcmp.lt.s32.totalorder %v289, 50
  %v298 = vsel %vm290, %v236, 0.0
  %v299 = vsel %vm291, %v238, 0.0
  %v300 = vsel %vm292, %v241, 0.0
  %v301 = vsel %vm293, %v243, 0.0
  %v302 = vsel %vm294, %v246, 0.0
  %v303 = vsel %vm295, %v248, 0.0
  %v304 = vsel %vm296, %v251, 0.0
  %v305 = vsel %vm297, %v253, 0.0
  %v306 = vadd.f32 %v298, %v299
  %v307 = vadd.f32 %v306, %v300
  %v308 = vadd.f32 %v307, %v301
  %v309 = vadd.f32 %v308, %v302
  %v310 = vadd.f32 %v309, %v303
  %v311 = vadd.f32 %v310, %v304
  %v312 = vadd.f32 %v311, %v305
  %313 = vst [vmem:[%s4] sm:$0xff] %v312
  %v314 = vmul.f32 %v298, %v298
  %v315 = vmul.f32 %v299, %v299
  %v316 = vmul.f32 %v300, %v300
  %v317 = vmul.f32 %v301, %v301
  %v318 = vmul.f32 %v302, %v302
  %v319 = vmul.f32 %v303, %v303
  %v320 = vmul.f32 %v304, %v304
  %v321 = vmul.f32 %v305, %v305
  %v322 = vadd.f32 %v314, %v315
  %v323 = vadd.f32 %v322, %v316
  %v324 = vadd.f32 %v323, %v317
  %v325 = vadd.f32 %v324, %v318
  %v326 = vadd.f32 %v325, %v319
  %v327 = vadd.f32 %v326, %v320
  %v328 = vadd.f32 %v327, %v321
  %329 = vst [vmem:[%s5] sm:$0xff] %v328
  // Predicated region
  $region14: #{multiscale_forward_pallas.17} parent=0 // pred_check
    _
  $region15: #{multiscale_forward_pallas.17} parent=0 // pred_check_branch
    %331 = sbr.rel (0) target = $region17
  $region16: #{multiscale_forward_pallas.17} parent=0 // pred_region
    _
  $region17: #{multiscale_forward_pallas.17} parent=0 // pred_fallthru
    _
  // Predicated region
  $region18: #{multiscale_forward_pallas.17} parent=0 // pred_check
    _
  $region19: #{multiscale_forward_pallas.17} parent=0 // pred_check_branch
    %333 = sbr.rel (0) target = $region21
  $region20: #{multiscale_forward_pallas.17} parent=0 // pred_region
    _
  $region21: #{multiscale_forward_pallas.17} parent=0 // pred_fallthru
    _
  // Predicated region
  $region22: #{multiscale_forward_pallas.17} parent=0 // pred_check
    _
  $region23: #{multiscale_forward_pallas.17} parent=0 // pred_check_branch
    %335 = sbr.rel (0) target = $region25
  $region24: #{multiscale_forward_pallas.17} parent=0 // pred_region
    _
  $region25: #{multiscale_forward_pallas.17} parent=0 // pred_fallthru
    _
  // Predicated region
  $region26: #{multiscale_forward_pallas.17} parent=0 // pred_check
    _
  $region27: #{multiscale_forward_pallas.17} parent=0 // pred_check_branch
    %337 = sbr.rel (0) target = $region29
  $region28: #{multiscale_forward_pallas.17} parent=0 // pred_region
    _
  $region29: #{multiscale_forward_pallas.17} parent=0 // pred_fallthru
    _
  // Predicated region
  $region30: #{multiscale_forward_pallas.17} parent=0 // pred_check
    _
  $region31: #{multiscale_forward_pallas.17} parent=0 // pred_check_branch
    %339 = sbr.rel (0) target = $region33
  $region32: #{multiscale_forward_pallas.17} parent=0 // pred_region
    _
  $region33: #{multiscale_forward_pallas.17} parent=0 // pred_fallthru
    _
  // Predicated region
  $region34: #{multiscale_forward_pallas.17} parent=0 // pred_check
    _
  $region35: #{multiscale_forward_pallas.17} parent=0 // pred_check_branch
    %341 = sbr.rel (0) target = $region37
  $region36: #{multiscale_forward_pallas.17} parent=0 // pred_region
    _
  $region37: #{multiscale_forward_pallas.17} parent=0 // pred_fallthru
    _

// kernel: multiscale_forward_pallas.18
$region0: #{multiscale_forward_pallas.18}
  #allocation0 [shape = 'u32[]', space=smem, size = 0x4, offset = 0x4, fixed_abs, tag = 'smem constant byte address 0x4 - core index']
  #allocation1 [shape = 'u32[72,128]{1,0:T(1,128)}', space=vmem, size = 0x9000, scoped, tag = 'internal scratch']
  %s0 = inlined_call_operand.vmem [shape: bf16[96,512], index: 0, kind: input, shape index: {}]
  %s1 = inlined_call_operand.vmem [shape: bf16[512,128], index: 1, kind: input, shape index: {}]
  %s2 = inlined_call_operand.vmem [shape: f32[1,128], index: 2, kind: input, shape index: {}]
  %s3 = inlined_call_operand.vmem [shape: bf16[96,128], index: 3, kind: output, shape index: {0}]
  %s4 = inlined_call_operand.vmem [shape: f32[2,8,128], index: 4, kind: output, shape index: {1}]
  %s5 = inlined_call_operand.vmem [shape: f32[2,8,128], index: 5, kind: output, shape index: {2}]
  %6 = xla_tuple %s3, %s4, %s5
  %s7 = sld [smem:[#allocation0]]
  $region61: #{multiscale_forward_pallas.18} parent=0
    _
  %s9 = ssub.s32 1, %s7
  %s10 = scalar_select 0, %s9, %s7
  loop: start=0, step=1, limit=4
  $region2: #{multiscale_forward_pallas.18} parent=0 // loop_pre_header
    _
  $region3: #{multiscale_forward_pallas.18} parent=0 // loop_header
    %s12 = sphi 0, %s16
    %p13 = scmp.ge.s32.totalorder %s12, 4
    %s19 = sphi 0, %s31
    %s20 = sphi 0, %s27
    %s21 = sphi 0, %s19
    %s22 = sphi 0, %s20
    %s23 = sphi 0, %s21
    %s24 = sphi 0, %s22
    %s34 = sphi 0, %s36
    %s37 = sphi 0, %s34
    %s38 = sphi 0, %s37
    %s54 = sphi 0, %s38
    %s60 = sphi 0, %s62
    %s63 = sphi 0, %s60
    %s64 = sphi 0, %s63
    %s80 = sphi 0, %s64
    %s86 = sphi 0, %s88
    %s89 = sphi 0, %s86
    %s90 = sphi 0, %s89
    %s106 = sphi 0, %s90
    %s114 = sphi 0, %s116
    %s117 = sphi 0, %s114
    %s118 = sphi 0, %s117
    %s134 = sphi 0, %s118
    %s142 = sphi 0, %s144
    %s145 = sphi 0, %s142
    %s146 = sphi 0, %s145
    %s162 = sphi 0, %s146
    %s170 = sphi 0, %s172
    %s173 = sphi 0, %s170
    %s174 = sphi 0, %s173
    %s190 = sphi 0, %s174
  $region4: #{multiscale_forward_pallas.18} parent=0 // loop_header_branch
    %15 = sbr.rel (%p13) target = $region8
  $region5: #{multiscale_forward_pallas.18} parent=0 // loop_body
    %s17 = ssub.s32 %s12, 1
    %s18 = ssub.s32 %s12, 2
    %s25 = sadd.s32 1, %s20
    %p26 = scmp.ge.s32.totalorder %s25, 2
    %s27 = scalar_select %p26, 0, %s25
    %s28 = sadd.s32 1, %s19
    %s29 = scalar_select %p26, %s28, %s19
    %p30 = scmp.ge.s32.totalorder %s29, 1
    %s31 = scalar_select %p30, 0, %s29
    %s32 = ssub.s32 %s20, %s27
    %p33 = scmp.eq.s32.totalorder %s32, 0
    %s35 = sadd.s32 %s34, 1
    %s36 = scalar_select %p33, %s34, %s35
    %p39 = pneg %p33
    %p40 = scmp.eq.s32.totalorder %s12, 1
    %p41 = por %p39, %p40
    %p42 = scmp.ne.s32.totalorder %s34, %s37
    %p43 = scmp.eq.s32.totalorder %s12, 0
    %p44 = por %p42, %p43
    %p45 = scmp.ne.s32.totalorder %s34, %s37
    %p46 = scmp.eq.s32.totalorder %s17, 1
    %p47 = por %p45, %p46
    %p48 = scmp.ne.s32.totalorder %s37, %s38
    %p49 = scmp.eq.s32.totalorder %s17, 0
    %p50 = por %p48, %p49
    %p51 = scmp.ne.s32.totalorder %s37, %s38
    %p52 = scmp.eq.s32.totalorder %s18, 1
    %p53 = por %p51, %p52
    %p55 = scmp.ne.s32.totalorder %s38, %s54
    %p56 = scmp.eq.s32.totalorder %s18, 0
    %p57 = por %p55, %p56
    %s58 = ssub.s32 %s19, %s31
    %p59 = scmp.eq.s32.totalorder %s58, 0
    %s61 = sadd.s32 %s60, 1
    %s62 = scalar_select %p59, %s60, %s61
    %p65 = pneg %p59
    %p66 = scmp.eq.s32.totalorder %s12, 1
    %p67 = por %p65, %p66
    %p68 = scmp.ne.s32.totalorder %s60, %s63
    %p69 = scmp.eq.s32.totalorder %s12, 0
    %p70 = por %p68, %p69
    %p71 = scmp.ne.s32.totalorder %s60, %s63
    %p72 = scmp.eq.s32.totalorder %s17, 1
    %p73 = por %p71, %p72
    %p74 = scmp.ne.s32.totalorder %s63, %s64
    %p75 = scmp.eq.s32.totalorder %s17, 0
    %p76 = por %p74, %p75
    %p77 = scmp.ne.s32.totalorder %s63, %s64
    %p78 = scmp.eq.s32.totalorder %s18, 1
    %p79 = por %p77, %p78
    %p81 = scmp.ne.s32.totalorder %s64, %s80
    %p82 = scmp.eq.s32.totalorder %s18, 0
    %p83 = por %p81, %p82
    %s84 = ssub.s32 %s19, %s31
    %p85 = scmp.eq.s32.totalorder %s84, 0
    %s87 = sadd.s32 %s86, 1
    %s88 = scalar_select %p85, %s86, %s87
    %p91 = pneg %p85
    %p92 = scmp.eq.s32.totalorder %s12, 1
    %p93 = por %p91, %p92
    %p94 = scmp.ne.s32.totalorder %s86, %s89
    %p95 = scmp.eq.s32.totalorder %s12, 0
    %p96 = por %p94, %p95
    %p97 = scmp.ne.s32.totalorder %s86, %s89
    %p98 = scmp.eq.s32.totalorder %s17, 1
    %p99 = por %p97, %p98
    %p100 = scmp.ne.s32.totalorder %s89, %s90
    %p101 = scmp.eq.s32.totalorder %s17, 0
    %p102 = por %p100, %p101
    %p103 = scmp.ne.s32.totalorder %s89, %s90
    %p104 = scmp.eq.s32.totalorder %s18, 1
    %p105 = por %p103, %p104
    %p107 = scmp.ne.s32.totalorder %s90, %s106
    %p108 = scmp.eq.s32.totalorder %s18, 0
    %p109 = por %p107, %p108
    %s110 = ssub.s32 %s20, %s27
    %s111 = ssub.s32 %s19, %s31
    %s112 = sor.u32 %s110, %s111
    %p113 = scmp.eq.s32.totalorder %s112, 0
    %s115 = sadd.s32 %s114, 1
    %s116 = scalar_select %p113, %s114, %s115
    %p119 = pneg %p113
    %p120 = scmp.eq.s32.totalorder %s12, 1
    %p121 = por %p119, %p120
    %p122 = scmp.ne.s32.totalorder %s114, %s117
    %p123 = scmp.eq.s32.totalorder %s12, 0
    %p124 = por %p122, %p123
    %p125 = scmp.ne.s32.totalorder %s114, %s117
    %p126 = scmp.eq.s32.totalorder %s17, 1
    %p127 = por %p125, %p126
    %p128 = scmp.ne.s32.totalorder %s117, %s118
    %p129 = scmp.eq.s32.totalorder %s17, 0
    %p130 = por %p128, %p129
    %p131 = scmp.ne.s32.totalorder %s117, %s118
    %p132 = scmp.eq.s32.totalorder %s18, 1
    %p133 = por %p131, %p132
    %p135 = scmp.ne.s32.totalorder %s118, %s134
    %p136 = scmp.eq.s32.totalorder %s18, 0
    %p137 = por %p135, %p136
    %s138 = ssub.s32 %s20, %s27
    %s139 = ssub.s32 %s19, %s31
    %s140 = sor.u32 %s138, %s139
    %p141 = scmp.eq.s32.totalorder %s140, 0
    %s143 = sadd.s32 %s142, 1
    %s144 = scalar_select %p141, %s142, %s143
    %p147 = pneg %p141
    %p148 = scmp.eq.s32.totalorder %s12, 1
    %p149 = por %p147, %p148
    %p150 = scmp.ne.s32.totalorder %s142, %s145
    %p151 = scmp.eq.s32.totalorder %s12, 0
    %p152 = por %p150, %p151
    %p153 = scmp.ne.s32.totalorder %s142, %s145
    %p154 = scmp.eq.s32.totalorder %s17, 1
    %p155 = por %p153, %p154
    %p156 = scmp.ne.s32.totalorder %s145, %s146
    %p157 = scmp.eq.s32.totalorder %s17, 0
    %p158 = por %p156, %p157
    %p159 = scmp.ne.s32.totalorder %s145, %s146
    %p160 = scmp.eq.s32.totalorder %s18, 1
    %p161 = por %p159, %p160
    %p163 = scmp.ne.s32.totalorder %s146, %s162
    %p164 = scmp.eq.s32.totalorder %s18, 0
    %p165 = por %p163, %p164
    %s166 = ssub.s32 %s20, %s27
    %s167 = ssub.s32 %s19, %s31
    %s168 = sor.u32 %s166, %s167
    %p169 = scmp.eq.s32.totalorder %s168, 0
    %s171 = sadd.s32 %s170, 1
    %s172 = scalar_select %p169, %s170, %s171
    %p175 = pneg %p169
    %p176 = scmp.eq.s32.totalorder %s12, 1
    %p177 = por %p175, %p176
    %p178 = scmp.ne.s32.totalorder %s170, %s173
    %p179 = scmp.eq.s32.totalorder %s12, 0
    %p180 = por %p178, %p179
    %p181 = scmp.ne.s32.totalorder %s170, %s173
    %p182 = scmp.eq.s32.totalorder %s17, 1
    %p183 = por %p181, %p182
    %p184 = scmp.ne.s32.totalorder %s173, %s174
    %p185 = scmp.eq.s32.totalorder %s17, 0
    %p186 = por %p184, %p185
    %p187 = scmp.ne.s32.totalorder %s173, %s174
    %p188 = scmp.eq.s32.totalorder %s18, 1
    %p189 = por %p187, %p188
    %p191 = scmp.ne.s32.totalorder %s174, %s190
    %p192 = scmp.eq.s32.totalorder %s18, 0
    %p193 = por %p191, %p192
    %p194 = scmp.le.s32.totalorder 1, %s12
    %p195 = scmp.lt.s32.totalorder %s12, 3
    %p196 = pnand %p194, %p195
    %p197 = pneg %p196
    // Predicated region
    $region9: #{multiscale_forward_pallas.18} parent=5 // pred_check
      _
    $region10: #{multiscale_forward_pallas.18} parent=5 // pred_check_branch
      %199 = sbr.rel (%p196) target = $region12
    $region11: #{multiscale_forward_pallas.18} parent=5 // pred_region
      %s200 = ssub.s32 %s12, 1
      // Predicated region
      $region13: #{multiscale_forward_pallas.18} parent=11 // pred_check
        %p201 = pneg %p76
      $region14: #{multiscale_forward_pallas.18} parent=11 // pred_check_branch
        %203 = sbr.rel (%p201) target = $region16
      $region15: #{multiscale_forward_pallas.18} parent=11 // pred_region
        %p204 = scmp.lt.s32.totalorder %s21, 0
        %s205 = scalar_select %p204, %s21, 0
        %s206 = smul.addr %s205, 4
        %s207 = scalar_lea.vmem %s1, %s206
      $region16: #{multiscale_forward_pallas.18} parent=11 // pred_fallthru
        _
      // Predicated region
      $region17: #{multiscale_forward_pallas.18} parent=11 // pred_check
        %p208 = pneg %p102
      $region18: #{multiscale_forward_pallas.18} parent=11 // pred_check_branch
        %210 = sbr.rel (%p208) target = $region20
      $region19: #{multiscale_forward_pallas.18} parent=11 // pred_region
        %p211 = scmp.lt.s32.totalorder %s21, 0
        %s212 = scalar_select %p211, %s21, 0
        %s213 = scalar_lea.vmem %s2, %s212
      $region20: #{multiscale_forward_pallas.18} parent=11 // pred_fallthru
        _
    $region12: #{multiscale_forward_pallas.18} parent=5 // pred_fallthru
      _
    %p214 = scmp.lt.s32.totalorder %s12, 2
    // Predicated region
    $region21: #{multiscale_forward_pallas.18} parent=5 // pred_check
      %p215 = pneg %p214
    $region22: #{multiscale_forward_pallas.18} parent=5 // pred_check_branch
      %217 = sbr.rel (%p215) target = $region24
    $region23: #{multiscale_forward_pallas.18} parent=5 // pred_region
      // Predicated region
      $region25: #{multiscale_forward_pallas.18} parent=23 // pred_check
        %p218 = pneg %p44
      $region26: #{multiscale_forward_pallas.18} parent=23 // pred_check_branch
        %220 = sbr.rel (%p218) target = $region28
      $region27: #{multiscale_forward_pallas.18} parent=23 // pred_region
        %s221 = smul.u32 6, %s20
        %p222 = scmp.lt.s32.totalorder %s221, 11
        %s223 = scalar_select %p222, %s221, 11
        %s224 = smul.addr %s223, 4
        %s225 = smul.addr %s224, 4
        %s226 = scalar_lea.vmem %s0, %s225
        %s227 = smul.u32 6, %s20
      $region28: #{multiscale_forward_pallas.18} parent=23 // pred_fallthru
        _
    $region24: #{multiscale_forward_pallas.18} parent=5 // pred_fallthru
      _
    %p228 = scmp.le.s32.totalorder 1, %s12
    %p229 = scmp.lt.s32.totalorder %s12, 3
    %p230 = pnand %p228, %p229
    %p231 = pneg %p230
    // Predicated region
    $region29: #{multiscale_forward_pallas.18} parent=5 // pred_check
      _
    $region30: #{multiscale_forward_pallas.18} parent=5 // pred_check_branch
      %233 = sbr.rel (%p230) target = $region32
    $region31: #{multiscale_forward_pallas.18} parent=5 // pred_region
      %s234 = ssub.s32 %s12, 1
      %s235 = smul.u32 6, %s22
      %p236 = scmp.lt.s32.totalorder %s235, 11
      %s237 = scalar_select %p236, %s235, 11
      %s238 = smul.addr %s237, 4
      %s239 = smul.addr %s238, 4
      %s240 = scalar_lea.vmem %s0, %s239
      %p241 = pneg %p50
      %p242 = pneg %p47
      %p243 = scmp.lt.s32.totalorder %s21, 0
      %s244 = scalar_select %p243, %s21, 0
      %s245 = smul.addr %s244, 4
      %s246 = scalar_lea.vmem %s1, %s245
      %p247 = pneg %p76
      %p248 = pneg %p73
      %p249 = scmp.lt.s32.totalorder %s21, 0
      %s250 = scalar_select %p249, %s21, 0
      %s251 = scalar_lea.vmem %s2, %s250
      %p252 = pneg %p102
      %p253 = pneg %p99
      %p254 = pneg %p130
      %p255 = pneg %p127
      %s256 = smul.u32 6, %s22
      %p257 = scmp.lt.s32.totalorder %s256, 11
      %s258 = scalar_select %p257, %s256, 11
      %p259 = scmp.lt.s32.totalorder %s21, 0
      %s260 = scalar_select %p259, %s21, 0
      %s261 = sadd.s32 %s260, %s258
      %s262 = smul.addr %s261, 4
      %s263 = scalar_lea.vmem %s3, %s262
      %p264 = pneg %p158
      %p265 = pneg %p155
      %p266 = scmp.lt.s32.totalorder %s22, 1
      %s267 = scalar_select %p266, %s22, 1
      %p268 = scmp.lt.s32.totalorder %s21, 0
      %s269 = scalar_select %p268, %s21, 0
      %s270 = sadd.s32 %s269, %s267
      %s271 = smul.addr %s270, 8
      %s272 = scalar_lea.vmem %s4, %s271
      %p273 = pneg %p186
      %p274 = pneg %p183
      %p275 = scmp.lt.s32.totalorder %s22, 1
      %s276 = scalar_select %p275, %s22, 1
      %p277 = scmp.lt.s32.totalorder %s21, 0
      %s278 = scalar_select %p277, %s21, 0
      %s279 = sadd.s32 %s278, %s276
      %s280 = smul.addr %s279, 8
      %s281 = scalar_lea.vmem %s5, %s280
      %s282 = smul.u32 6, %s22
      %p283 = scmp.lt.s32.totalorder %s282, 11
      %s284 = scalar_select %p283, %s282, 11
      %s285 = smul.addr %s284, 4
      %s286 = smul.addr %s285, 4
      %s287 = scalar_lea.vmem %s0, %s286
      %s288 = smul.u32 6, %s22
      %p289 = scmp.lt.s32.totalorder %s21, 0
      %s290 = scalar_select %p289, %s21, 0
      %s291 = smul.addr %s290, 4
      %s292 = scalar_lea.vmem %s1, %s291
      %p293 = scmp.lt.s32.totalorder %s21, 0
      %s294 = scalar_select %p293, %s21, 0
      %s295 = scalar_lea.vmem %s2, %s294
      %s296 = smul.u32 6, %s22
      %p297 = scmp.lt.s32.totalorder %s296, 11
      %s298 = scalar_select %p297, %s296, 11
      %p299 = scmp.lt.s32.totalorder %s21, 0
      %s300 = scalar_select %p299, %s21, 0
      %s301 = sadd.s32 %s300, %s298
      %s302 = smul.addr %s301, 4
      %s303 = scalar_lea.vmem %s3, %s302
      %s304 = smul.u32 6, %s22
      %p305 = scmp.lt.s32.totalorder %s22, 1
      %s306 = scalar_select %p305, %s22, 1
      %p307 = scmp.lt.s32.totalorder %s21, 0
      %s308 = scalar_select %p307, %s21, 0
      %s309 = sadd.s32 %s308, %s306
      %s310 = smul.addr %s309, 8
      %s311 = scalar_lea.vmem %s4, %s310
      %p312 = scmp.lt.s32.totalorder %s22, 1
      %s313 = scalar_select %p312, %s22, 1
      %p314 = scmp.lt.s32.totalorder %s21, 0
      %s315 = scalar_select %p314, %s21, 0
      %s316 = sadd.s32 %s315, %s313
      %s317 = smul.addr %s316, 8
      %s318 = scalar_lea.vmem %s5, %s317
      %v319 = vld [vmem:[%s287] sm:$0xff]
      %v320 = vld [vmem:[%s287 + $0x8] sm:$0xff]
      %v321 = vld [vmem:[%s287 + $0x10] sm:$0xff]
      %v322 = vld [vmem:[%s287 + $0x18] sm:$0xff]
      %v323 = vld [vmem:[%s287 + $0x20] sm:$0xff]
      %v324 = vld [vmem:[%s287 + $0x28] sm:$0xff]
      %v325 = vld [vmem:[%s287 + $0x30] sm:$0xff]
      %v326 = vld [vmem:[%s287 + $0x38] sm:$0xff]
      %v327 = vld [vmem:[%s287 + $0x40] sm:$0xff]
      %v328 = vld [vmem:[%s287 + $0x48] sm:$0xff]
      %v329 = vld [vmem:[%s287 + $0x50] sm:$0xff]
      %v330 = vld [vmem:[%s287 + $0x58] sm:$0xff]
      %v331 = vld [vmem:[%s292] sm:$0xf]
      %v332 = vld [vmem:[%s292 + $0x4] sm:$0xf]
      %v333 = vld [vmem:[%s292 + $0x8] sm:$0xf]
      %v334 = vld [vmem:[%s292 + $0xc] sm:$0xf]
      %v335 = vld [vmem:[%s292 + $0x10] sm:$0xf]
      %v336 = vld [vmem:[%s292 + $0x14] sm:$0xf]
      %v337 = vld [vmem:[%s292 + $0x18] sm:$0xf]
      %v338 = vld [vmem:[%s292 + $0x1c] sm:$0xf]
      %v339 = vld [vmem:[%s292 + $0x20] sm:$0xf]
      %v340 = vld [vmem:[%s292 + $0x24] sm:$0xf]
      %v341 = vld [vmem:[%s292 + $0x28] sm:$0xf]
      %v342 = vld [vmem:[%s292 + $0x2c] sm:$0xf]
      %v343 = vld [vmem:[%s292 + $0x30] sm:$0xf]
      %v344 = vld [vmem:[%s292 + $0x34] sm:$0xf]
      %v345 = vld [vmem:[%s292 + $0x38] sm:$0xf]
      %v346 = vld [vmem:[%s292 + $0x3c] sm:$0xf]
      %v347 = vld [vmem:[%s292 + $0x40] sm:$0xf]
      %v348 = vld [vmem:[%s292 + $0x44] sm:$0xf]
      %v349 = vld [vmem:[%s292 + $0x48] sm:$0xf]
      %v350 = vld [vmem:[%s292 + $0x4c] sm:$0xf]
      %v351 = vld [vmem:[%s292 + $0x50] sm:$0xf]
      %v352 = vld [vmem:[%s292 + $0x54] sm:$0xf]
      %v353 = vld [vmem:[%s292 + $0x58] sm:$0xf]
      %v354 = vld [vmem:[%s292 + $0x5c] sm:$0xf]
      %v355 = vld [vmem:[%s292 + $0x60] sm:$0xf]
      %v356 = vld [vmem:[%s292 + $0x64] sm:$0xf]
      %v357 = vld [vmem:[%s292 + $0x68] sm:$0xf]
      %v358 = vld [vmem:[%s292 + $0x6c] sm:$0xf]
      %v359 = vld [vmem:[%s292 + $0x70] sm:$0xf]
      %v360 = vld [vmem:[%s292 + $0x74] sm:$0xf]
      %v361 = vld [vmem:[%s292 + $0x78] sm:$0xf]
      %v362 = vld [vmem:[%s292 + $0x7c] sm:$0xf]
      %v363 = vld [vmem:[%s292 + $0x80] sm:$0xf]
      %v364 = vld [vmem:[%s292 + $0x84] sm:$0xf]
      %v365 = vld [vmem:[%s292 + $0x88] sm:$0xf]
      %v366 = vld [vmem:[%s292 + $0x8c] sm:$0xf]
      %v367 = vld [vmem:[%s292 + $0x90] sm:$0xf]
      %v368 = vld [vmem:[%s292 + $0x94] sm:$0xf]
      %v369 = vld [vmem:[%s292 + $0x98] sm:$0xf]
      %v370 = vld [vmem:[%s292 + $0x9c] sm:$0xf]
      %v371 = vld [vmem:[%s292 + $0xa0] sm:$0xf]
      %v372 = vld [vmem:[%s292 + $0xa4] sm:$0xf]
      %v373 = vld [vmem:[%s292 + $0xa8] sm:$0xf]
      %v374 = vld [vmem:[%s292 + $0xac] sm:$0xf]
      %v375 = vld [vmem:[%s292 + $0xb0] sm:$0xf]
      %v376 = vld [vmem:[%s292 + $0xb4] sm:$0xf]
      %v377 = vld [vmem:[%s292 + $0xb8] sm:$0xf]
      %v378 = vld [vmem:[%s292 + $0xbc] sm:$0xf]
      %v379 = vld [vmem:[%s292 + $0xc0] sm:$0xf]
      %v380 = vld [vmem:[%s292 + $0xc4] sm:$0xf]
      %v381 = vld [vmem:[%s292 + $0xc8] sm:$0xf]
      %v382 = vld [vmem:[%s292 + $0xcc] sm:$0xf]
      %v383 = vld [vmem:[%s292 + $0xd0] sm:$0xf]
      %v384 = vld [vmem:[%s292 + $0xd4] sm:$0xf]
      %v385 = vld [vmem:[%s292 + $0xd8] sm:$0xf]
      %v386 = vld [vmem:[%s292 + $0xdc] sm:$0xf]
      %v387 = vld [vmem:[%s292 + $0xe0] sm:$0xf]
      %v388 = vld [vmem:[%s292 + $0xe4] sm:$0xf]
      %v389 = vld [vmem:[%s292 + $0xe8] sm:$0xf]
      %v390 = vld [vmem:[%s292 + $0xec] sm:$0xf]
      %v391 = vld [vmem:[%s292 + $0xf0] sm:$0xf]
      %v392 = vld [vmem:[%s292 + $0xf4] sm:$0xf]
      %v393 = vld [vmem:[%s292 + $0xf8] sm:$0xf]
      %v394 = vld [vmem:[%s292 + $0xfc] sm:$0xf]
      %v395 = vld [vmem:[%s295] sm:$0x1]
      %v397 = vperm.slane %v395, 0
      %v411 = vunpack.c.l.b16 %v319
      %v412 = vunpack.c.h.b16 %v319
      %v413 = vunpack.c.l.b16 %v320
      %v414 = vunpack.c.h.b16 %v320
      %v415 = vunpack.c.l.b16 %v321
      %v416 = vunpack.c.h.b16 %v321
      %v417 = vunpack.c.l.b16 %v322
      %v418 = vunpack.c.h.b16 %v322
      %v419 = vunpack.c.l.b16 %v323
      %v420 = vunpack.c.h.b16 %v323
      %v421 = vunpack.c.l.b16 %v324
      %v422 = vunpack.c.h.b16 %v324
      %v423 = vunpack.c.l.b16 %v325
      %v424 = vunpack.c.h.b16 %v325
      %v425 = vunpack.c.l.b16 %v326
      %v426 = vunpack.c.h.b16 %v326
      %v427 = vunpack.c.l.b16 %v327
      %v428 = vunpack.c.h.b16 %v327
      %v429 = vunpack.c.l.b16 %v328
      %v430 = vunpack.c.h.b16 %v328
      %v431 = vunpack.c.l.b16 %v329
      %v432 = vunpack.c.h.b16 %v329
      %v433 = vunpack.c.l.b16 %v330
      %v434 = vunpack.c.h.b16 %v330
      %v435 = vpack.c.b16 %v415, %v411
      %v436 = vpack.c.b16 %v416, %v412
      %v437 = vpack.c.b16 %v417, %v413
      %v438 = vpack.c.b16 %v418, %v414
      %v439 = vpack.c.b16 %v423, %v419
      %v440 = vpack.c.b16 %v424, %v420
      %v441 = vpack.c.b16 %v425, %v421
      %v442 = vpack.c.b16 %v426, %v422
      %v443 = vpack.c.b16 %v431, %v427
      %v444 = vpack.c.b16 %v432, %v428
      %v445 = vpack.c.b16 %v433, %v429
      %v446 = vpack.c.b16 %v434, %v430
      %v523 = vunpack.c.l.b16 %v331
      %v524 = vunpack.c.l.b16 %v332
      %v525 = vunpack.c.l.b16 %v333
      %v526 = vunpack.c.l.b16 %v334
      %v527 = vunpack.c.l.b16 %v335
      %v528 = vunpack.c.l.b16 %v336
      %v529 = vunpack.c.l.b16 %v337
      %v530 = vunpack.c.l.b16 %v338
      %v531 = vunpack.c.l.b16 %v339
      %v532 = vunpack.c.l.b16 %v340
      %v533 = vunpack.c.l.b16 %v341
      %v534 = vunpack.c.l.b16 %v342
      %v535 = vunpack.c.l.b16 %v343
      %v536 = vunpack.c.l.b16 %v344
      %v537 = vunpack.c.l.b16 %v345
      %v538 = vunpack.c.l.b16 %v346
      %v539 = vunpack.c.l.b16 %v347
      %v540 = vunpack.c.l.b16 %v348
      %v541 = vunpack.c.l.b16 %v349
      %v542 = vunpack.c.l.b16 %v350
      %v543 = vunpack.c.l.b16 %v351
      %v544 = vunpack.c.l.b16 %v352
      %v545 = vunpack.c.l.b16 %v353
      %v546 = vunpack.c.l.b16 %v354
      %v547 = vunpack.c.l.b16 %v355
      %v548 = vunpack.c.l.b16 %v356
      %v549 = vunpack.c.l.b16 %v357
      %v550 = vunpack.c.l.b16 %v358
      %v551 = vunpack.c.l.b16 %v359
      %v552 = vunpack.c.l.b16 %v360
      %v553 = vunpack.c.l.b16 %v361
      %v554 = vunpack.c.l.b16 %v362
      %v555 = vunpack.c.l.b16 %v363
      %v556 = vunpack.c.l.b16 %v364
      %v557 = vunpack.c.l.b16 %v365
      %v558 = vunpack.c.l.b16 %v366
      %v559 = vunpack.c.l.b16 %v367
      %v560 = vunpack.c.l.b16 %v368
      %v561 = vunpack.c.l.b16 %v369
      %v562 = vunpack.c.l.b16 %v370
      %v563 = vunpack.c.l.b16 %v371
      %v564 = vunpack.c.l.b16 %v372
      %v565 = vunpack.c.l.b16 %v373
      %v566 = vunpack.c.l.b16 %v374
      %v567 = vunpack.c.l.b16 %v375
      %v568 = vunpack.c.l.b16 %v376
      %v569 = vunpack.c.l.b16 %v377
      %v570 = vunpack.c.l.b16 %v378
      %v571 = vunpack.c.l.b16 %v379
      %v572 = vunpack.c.l.b16 %v380
      %v573 = vunpack.c.l.b16 %v381
      %v574 = vunpack.c.l.b16 %v382
      %v575 = vunpack.c.l.b16 %v383
      %v576 = vunpack.c.l.b16 %v384
      %v577 = vunpack.c.l.b16 %v385
      %v578 = vunpack.c.l.b16 %v386
      %v579 = vunpack.c.l.b16 %v387
      %v580 = vunpack.c.l.b16 %v388
      %v581 = vunpack.c.l.b16 %v389
      %v582 = vunpack.c.l.b16 %v390
      %v583 = vunpack.c.l.b16 %v391
      %v584 = vunpack.c.l.b16 %v392
      %v585 = vunpack.c.l.b16 %v393
      %v586 = vunpack.c.l.b16 %v394
      %v587 = vpack.c.b16 %v524, %v523
      %v588 = vpack.c.b16 %v526, %v525
      %v589 = vpack.c.b16 %v528, %v527
      %v590 = vpack.c.b16 %v530, %v529
      %v591 = vpack.c.b16 %v532, %v531
      %v592 = vpack.c.b16 %v534, %v533
      %v593 = vpack.c.b16 %v536, %v535
      %v594 = vpack.c.b16 %v538, %v537
      %v595 = vpack.c.b16 %v540, %v539
      %v596 = vpack.c.b16 %v542, %v541
      %v597 = vpack.c.b16 %v544, %v543
      %v598 = vpack.c.b16 %v546, %v545
      %v599 = vpack.c.b16 %v548, %v547
      %v600 = vpack.c.b16 %v550, %v549
      %v601 = vpack.c.b16 %v552, %v551
      %v602 = vpack.c.b16 %v554, %v553
      %v603 = vpack.c.b16 %v556, %v555
      %v604 = vpack.c.b16 %v558, %v557
      %v605 = vpack.c.b16 %v560, %v559
      %v606 = vpack.c.b16 %v562, %v561
      %v607 = vpack.c.b16 %v564, %v563
      %v608 = vpack.c.b16 %v566, %v565
      %v609 = vpack.c.b16 %v568, %v567
      %v610 = vpack.c.b16 %v570, %v569
      %v611 = vpack.c.b16 %v572, %v571
      %v612 = vpack.c.b16 %v574, %v573
      %v613 = vpack.c.b16 %v576, %v575
      %v614 = vpack.c.b16 %v578, %v577
      %v615 = vpack.c.b16 %v580, %v579
      %v616 = vpack.c.b16 %v582, %v581
      %v617 = vpack.c.b16 %v584, %v583
      %v618 = vpack.c.b16 %v586, %v585
      %651 = vmatpush.bf16.msra.mxu0 %v594
      %652 = vmatpush.bf16.msra.mxu0 %v593
      %653 = vmatpush.bf16.msra.mxu0 %v592
      %654 = vmatpush.bf16.msra.mxu0 %v591
      %655 = vmatpush.bf16.msra.mxu0 %v590
      %656 = vmatpush.bf16.msra.mxu0 %v589
      %657 = vmatpush.bf16.msra.mxu0 %v588
      %658 = vmatpush.bf16.msra.mxu0 %v587
      %659 = vmatmul.bf16.gmra.mxu0 %v435
      %v660 = vpop.f32.mrf.mxu0
      %v661 = vadd.f32 %v397, %v660
      %v662 = vpop.f32.mrf.mxu0
      %v663 = vadd.f32 %v397, %v662
      %664 = vmatmul.bf16.gmra.mxu0 %v439
      %v665 = vpop.f32.mrf.mxu0
      %v666 = vadd.f32 %v397, %v665
      %v667 = vpop.f32.mrf.mxu0
      %v668 = vadd.f32 %v397, %v667
      %669 = vmatmul.bf16.gmra.mxu0 %v443
      %v670 = vpop.f32.mrf.mxu0
      %v671 = vadd.f32 %v397, %v670
      %v672 = vpop.f32.mrf.mxu0
      %v673 = vadd.f32 %v397, %v672
      %674 = vdwg.mxu0
      %675 = vmatpush.bf16.msra.mxu0 %v602
      %676 = vmatpush.bf16.msra.mxu0 %v601
      %677 = vmatpush.bf16.msra.mxu0 %v600
      %678 = vmatpush.bf16.msra.mxu0 %v599
      %679 = vmatpush.bf16.msra.mxu0 %v598
      %680 = vmatpush.bf16.msra.mxu0 %v597
      %681 = vmatpush.bf16.msra.mxu0 %v596
      %682 = vmatpush.bf16.msra.mxu0 %v595
      %683 = vmatmul.bf16.gmra.mxu0 %v436
      %v684 = vpop.f32.mrf.mxu0
      %v685 = vadd.f32 %v661, %v684
      %v686 = vpop.f32.mrf.mxu0
      %v687 = vadd.f32 %v663, %v686
      %688 = vmatmul.bf16.gmra.mxu0 %v440
      %v689 = vpop.f32.mrf.mxu0
      %v690 = vadd.f32 %v666, %v689
      %v691 = vpop.f32.mrf.mxu0
      %v692 = vadd.f32 %v668, %v691
      %693 = vmatmul.bf16.gmra.mxu0 %v444
      %v694 = vpop.f32.mrf.mxu0
      %v695 = vadd.f32 %v671, %v694
      %v696 = vpop.f32.mrf.mxu0
      %v697 = vadd.f32 %v673, %v696
      %698 = vdwg.mxu0
      %699 = vmatpush.bf16.msra.mxu0 %v610
      %700 = vmatpush.bf16.msra.mxu0 %v609
      %701 = vmatpush.bf16.msra.mxu0 %v608
      %702 = vmatpush.bf16.msra.mxu0 %v607
      %703 = vmatpush.bf16.msra.mxu0 %v606
      %704 = vmatpush.bf16.msra.mxu0 %v605
      %705 = vmatpush.bf16.msra.mxu0 %v604
      %706 = vmatpush.bf16.msra.mxu0 %v603
      %707 = vmatmul.bf16.gmra.mxu0 %v437
      %v708 = vpop.f32.mrf.mxu0
      %v709 = vadd.f32 %v685, %v708
      %v710 = vpop.f32.mrf.mxu0
      %v711 = vadd.f32 %v687, %v710
      %712 = vmatmul.bf16.gmra.mxu0 %v441
      %v713 = vpop.f32.mrf.mxu0
      %v714 = vadd.f32 %v690, %v713
      %v715 = vpop.f32.mrf.mxu0
      %v716 = vadd.f32 %v692, %v715
      %717 = vmatmul.bf16.gmra.mxu0 %v445
      %v718 = vpop.f32.mrf.mxu0
      %v719 = vadd.f32 %v695, %v718
      %v720 = vpop.f32.mrf.mxu0
      %v721 = vadd.f32 %v697, %v720
      %722 = vdwg.mxu0
      %723 = vmatpush.bf16.msra.mxu0 %v618
      %724 = vmatpush.bf16.msra.mxu0 %v617
      %725 = vmatpush.bf16.msra.mxu0 %v616
      %726 = vmatpush.bf16.msra.mxu0 %v615
      %727 = vmatpush.bf16.msra.mxu0 %v614
      %728 = vmatpush.bf16.msra.mxu0 %v613
      %729 = vmatpush.bf16.msra.mxu0 %v612
      %730 = vmatpush.bf16.msra.mxu0 %v611
      %731 = vmatmul.bf16.gmra.mxu0 %v438
      %v732 = vpop.f32.mrf.mxu0
      %v733 = vadd.f32 %v709, %v732
      %v734 = vpop.f32.mrf.mxu0
      %v735 = vadd.f32 %v711, %v734
      %736 = vmatmul.bf16.gmra.mxu0 %v442
      %v737 = vpop.f32.mrf.mxu0
      %v738 = vadd.f32 %v714, %v737
      %v739 = vpop.f32.mrf.mxu0
      %v740 = vadd.f32 %v716, %v739
      %741 = vmatmul.bf16.gmra.mxu0 %v446
      %v742 = vpop.f32.mrf.mxu0
      %v743 = vadd.f32 %v719, %v742
      %v744 = vpop.f32.mrf.mxu0
      %v745 = vadd.f32 %v721, %v744
      %746 = vdwg.mxu0
      %v747 = vpack.c.bf16 %v733, %v733
      %v748 = vpack.c.bf16 %v735, %v735
      %v749 = vpack.c.bf16 %v738, %v738
      %v750 = vpack.c.bf16 %v740, %v740
      %v751 = vpack.c.bf16 %v743, %v743
      %v752 = vpack.c.bf16 %v745, %v745
      %753 = vst [vmem:[%s303] sm:$0xf] %v747
      %754 = vst [vmem:[%s303 + $0x4] sm:$0xf] %v748
      %755 = vst [vmem:[%s303 + $0x8] sm:$0xf] %v749
      %756 = vst [vmem:[%s303 + $0xc] sm:$0xf] %v750
      %757 = vst [vmem:[%s303 + $0x10] sm:$0xf] %v751
      %758 = vst [vmem:[%s303 + $0x14] sm:$0xf] %v752
      %v759 = vlaneseq
      %v760 = vshrl.u32 %v759, 7
      %v761 = vadd.s32 %v760, 8
      %v762 = vadd.s32 %v760, 16
      %v763 = vadd.s32 %v760, 24
      %v764 = vadd.s32 %v760, 32
      %v765 = vadd.s32 %v760, 40
      %s766 = smul.u32 %s22, 48
      %v767 = vstv %s766
      %v768 = vadd.s32 %v760, %v767
      %v769 = vadd.s32 %v761, %v767
      %v770 = vadd.s32 %v762, %v767
      %v771 = vadd.s32 %v763, %v767
      %v772 = vadd.s32 %v764, %v767
      %v773 = vadd.s32 %v765, %v767
      %vm774 = vcmp.lt.s32.totalorder %v768, 72
      %vm775 = vcmp.lt.s32.totalorder %v769, 72
      %vm776 = vcmp.lt.s32.totalorder %v770, 72
      %vm777 = vcmp.lt.s32.totalorder %v771, 72
      %vm778 = vcmp.lt.s32.totalorder %v772, 72
      %vm779 = vcmp.lt.s32.totalorder %v773, 72
      %v780 = vsel %vm774, %v733, 0.0
      %v781 = vsel %vm775, %v735, 0.0
      %v782 = vsel %vm776, %v738, 0.0
      %v783 = vsel %vm777, %v740, 0.0
      %v784 = vsel %vm778, %v743, 0.0
      %v785 = vsel %vm779, %v745, 0.0
      %v786 = vadd.f32 %v780, %v781
      %v787 = vadd.f32 %v786, %v782
      %v788 = vadd.f32 %v787, %v783
      %v789 = vadd.f32 %v788, %v784
      %v790 = vadd.f32 %v789, %v785
      %791 = vst [vmem:[%s311] sm:$0xff] %v790
      %v792 = vmul.f32 %v780, %v780
      %v793 = vmul.f32 %v781, %v781
      %v794 = vmul.f32 %v782, %v782
      %v795 = vmul.f32 %v783, %v783
      %v796 = vmul.f32 %v784, %v784
      %v797 = vmul.f32 %v785, %v785
      %v798 = vadd.f32 %v792, %v793
      %v799 = vadd.f32 %v798, %v794
      %v800 = vadd.f32 %v799, %v795
      %v801 = vadd.f32 %v800, %v796
      %v802 = vadd.f32 %v801, %v797
      %803 = vst [vmem:[%s318] sm:$0xff] %v802
      %s804 = smul.u32 6, %s22
      %p805 = scmp.lt.s32.totalorder %s804, 11
      %s806 = scalar_select %p805, %s804, 11
      %p807 = scmp.lt.s32.totalorder %s21, 0
      %s808 = scalar_select %p807, %s21, 0
      %s809 = sadd.s32 %s808, %s806
      %s810 = smul.addr %s809, 4
      %s811 = scalar_lea.vmem %s3, %s810
      %p812 = scmp.lt.s32.totalorder %s22, 1
      %s813 = scalar_select %p812, %s22, 1
      %p814 = scmp.lt.s32.totalorder %s21, 0
      %s815 = scalar_select %p814, %s21, 0
      %s816 = sadd.s32 %s815, %s813
      %s817 = smul.addr %s816, 8
      %s818 = scalar_lea.vmem %s4, %s817
      %p819 = scmp.lt.s32.totalorder %s22, 1
      %s820 = scalar_select %p819, %s22, 1
      %p821 = scmp.lt.s32.totalorder %s21, 0
      %s822 = scalar_select %p821, %s21, 0
      %s823 = sadd.s32 %s822, %s820
      %s824 = smul.addr %s823, 8
      %s825 = scalar_lea.vmem %s5, %s824
      // Predicated region
      $region33: #{multiscale_forward_pallas.18} parent=31 // pred_check
        %p826 = pneg %p127
      $region34: #{multiscale_forward_pallas.18} parent=31 // pred_check_branch
        %828 = sbr.rel (%p826) target = $region36
      $region35: #{multiscale_forward_pallas.18} parent=31 // pred_region
        %s829 = smul.u32 6, %s22
      $region36: #{multiscale_forward_pallas.18} parent=31 // pred_fallthru
        _
      // Predicated region
      $region37: #{multiscale_forward_pallas.18} parent=31 // pred_check
        %p830 = pneg %p155
      $region38: #{multiscale_forward_pallas.18} parent=31 // pred_check_branch
        %832 = sbr.rel (%p830) target = $region40
      $region39: #{multiscale_forward_pallas.18} parent=31 // pred_region
        _
      $region40: #{multiscale_forward_pallas.18} parent=31 // pred_fallthru
        _
      // Predicated region
      $region41: #{multiscale_forward_pallas.18} parent=31 // pred_check
        %p833 = pneg %p183
      $region42: #{multiscale_forward_pallas.18} parent=31 // pred_check_branch
        %835 = sbr.rel (%p833) target = $region44
      $region43: #{multiscale_forward_pallas.18} parent=31 // pred_region
        _
      $region44: #{multiscale_forward_pallas.18} parent=31 // pred_fallthru
        _
    $region32: #{multiscale_forward_pallas.18} parent=5 // pred_fallthru
      _
    %p836 = scmp.le.s32.totalorder 2, %s12
    // Predicated region
    $region45: #{multiscale_forward_pallas.18} parent=5 // pred_check
      %p837 = pneg %p836
    $region46: #{multiscale_forward_pallas.18} parent=5 // pred_check_branch
      %839 = sbr.rel (%p837) target = $region48
    $region47: #{multiscale_forward_pallas.18} parent=5 // pred_region
      %s840 = ssub.s32 %s12, 2
      // Predicated region
      $region49: #{multiscale_forward_pallas.18} parent=47 // pred_check
        %p841 = pneg %p133
      $region50: #{multiscale_forward_pallas.18} parent=47 // pred_check_branch
        %843 = sbr.rel (%p841) target = $region52
      $region51: #{multiscale_forward_pallas.18} parent=47 // pred_region
        %s844 = smul.u32 6, %s24
        %p845 = scmp.lt.s32.totalorder %s844, 11
        %s846 = scalar_select %p845, %s844, 11
        %p847 = scmp.lt.s32.totalorder %s23, 0
        %s848 = scalar_select %p847, %s23, 0
        %s849 = sadd.s32 %s848, %s846
        %s850 = smul.addr %s849, 4
        %s851 = scalar_lea.vmem %s3, %s850
      $region52: #{multiscale_forward_pallas.18} parent=47 // pred_fallthru
        _
      // Predicated region
      $region53: #{multiscale_forward_pallas.18} parent=47 // pred_check
        %p852 = pneg %p161
      $region54: #{multiscale_forward_pallas.18} parent=47 // pred_check_branch
        %854 = sbr.rel (%p852) target = $region56
      $region55: #{multiscale_forward_pallas.18} parent=47 // pred_region
        %p855 = scmp.lt.s32.totalorder %s24, 1
        %s856 = scalar_select %p855, %s24, 1
        %p857 = scmp.lt.s32.totalorder %s23, 0
        %s858 = scalar_select %p857, %s23, 0
        %s859 = sadd.s32 %s858, %s856
        %s860 = smul.addr %s859, 8
        %s861 = scalar_lea.vmem %s4, %s860
      $region56: #{multiscale_forward_pallas.18} parent=47 // pred_fallthru
        _
      // Predicated region
      $region57: #{multiscale_forward_pallas.18} parent=47 // pred_check
        %p862 = pneg %p189
      $region58: #{multiscale_forward_pallas.18} parent=47 // pred_check_branch
        %864 = sbr.rel (%p862) target = $region60
      $region59: #{multiscale_forward_pallas.18} parent=47 // pred_region
        %p865 = scmp.lt.s32.totalorder %s24, 1
        %s866 = scalar_select %p865, %s24, 1
        %p867 = scmp.lt.s32.totalorder %s23, 0
        %s868 = scalar_select %p867, %s23, 0
        %s869 = sadd.s32 %s868, %s866
        %s870 = smul.addr %s869, 8
        %s871 = scalar_lea.vmem %s5, %s870
      $region60: #{multiscale_forward_pallas.18} parent=47 // pred_fallthru
        _
    $region48: #{multiscale_forward_pallas.18} parent=5 // pred_fallthru
      _
  $region6: #{multiscale_forward_pallas.18} parent=0 // loop_footer
    %s16 = sadd.s32 1, %s12
  $region7: #{multiscale_forward_pallas.18} parent=0 // loop_footer_branch
    %11 = sbr.rel target = $region3
  $region8: #{multiscale_forward_pallas.18} parent=0 // loop_exit
    _

// kernel: multiscale_forward_pallas.19
$region0: #{multiscale_forward_pallas.19}
  #allocation0 [shape = 'u32[]', space=smem, size = 0x4, offset = 0x4, fixed_abs, tag = 'smem constant byte address 0x4 - core index']
  #allocation1 [shape = 'u32[72,128]{1,0:T(1,128)}', space=vmem, size = 0x9000, scoped, tag = 'internal scratch']
  %s0 = inlined_call_operand.vmem [shape: bf16[128,1024], index: 0, kind: input, shape index: {}]
  %s1 = inlined_call_operand.vmem [shape: bf16[1024,128], index: 1, kind: input, shape index: {}]
  %s2 = inlined_call_operand.vmem [shape: f32[1,128], index: 2, kind: input, shape index: {}]
  %s3 = inlined_call_operand.vmem [shape: bf16[128,128], index: 3, kind: output, shape index: {}]
  %s4 = sld [smem:[#allocation0]]
  $region45: #{multiscale_forward_pallas.19} parent=0
    _
  %s6 = ssub.s32 1, %s4
  %s7 = scalar_select 0, %s6, %s4
  loop: start=0, step=1, limit=4
  $region2: #{multiscale_forward_pallas.19} parent=0 // loop_pre_header
    _
  $region3: #{multiscale_forward_pallas.19} parent=0 // loop_header
    %s9 = sphi 0, %s13
    %p10 = scmp.ge.s32.totalorder %s9, 4
    %s16 = sphi 0, %s28
    %s17 = sphi 0, %s24
    %s18 = sphi 0, %s16
    %s19 = sphi 0, %s17
    %s20 = sphi 0, %s18
    %s21 = sphi 0, %s19
    %s31 = sphi 0, %s33
    %s34 = sphi 0, %s31
    %s35 = sphi 0, %s34
    %s51 = sphi 0, %s35
    %s57 = sphi 0, %s59
    %s60 = sphi 0, %s57
    %s61 = sphi 0, %s60
    %s77 = sphi 0, %s61
    %s83 = sphi 0, %s85
    %s86 = sphi 0, %s83
    %s87 = sphi 0, %s86
    %s103 = sphi 0, %s87
    %s111 = sphi 0, %s113
    %s114 = sphi 0, %s111
    %s115 = sphi 0, %s114
    %s131 = sphi 0, %s115
  $region4: #{multiscale_forward_pallas.19} parent=0 // loop_header_branch
    %12 = sbr.rel (%p10) target = $region8
  $region5: #{multiscale_forward_pallas.19} parent=0 // loop_body
    %s14 = ssub.s32 %s9, 1
    %s15 = ssub.s32 %s9, 2
    %s22 = sadd.s32 1, %s17
    %p23 = scmp.ge.s32.totalorder %s22, 2
    %s24 = scalar_select %p23, 0, %s22
    %s25 = sadd.s32 1, %s16
    %s26 = scalar_select %p23, %s25, %s16
    %p27 = scmp.ge.s32.totalorder %s26, 1
    %s28 = scalar_select %p27, 0, %s26
    %s29 = ssub.s32 %s17, %s24
    %p30 = scmp.eq.s32.totalorder %s29, 0
    %s32 = sadd.s32 %s31, 1
    %s33 = scalar_select %p30, %s31, %s32
    %p36 = pneg %p30
    %p37 = scmp.eq.s32.totalorder %s9, 1
    %p38 = por %p36, %p37
    %p39 = scmp.ne.s32.totalorder %s31, %s34
    %p40 = scmp.eq.s32.totalorder %s9, 0
    %p41 = por %p39, %p40
    %p42 = scmp.ne.s32.totalorder %s31, %s34
    %p43 = scmp.eq.s32.totalorder %s14, 1
    %p44 = por %p42, %p43
    %p45 = scmp.ne.s32.totalorder %s34, %s35
    %p46 = scmp.eq.s32.totalorder %s14, 0
    %p47 = por %p45, %p46
    %p48 = scmp.ne.s32.totalorder %s34, %s35
    %p49 = scmp.eq.s32.totalorder %s15, 1
    %p50 = por %p48, %p49
    %p52 = scmp.ne.s32.totalorder %s35, %s51
    %p53 = scmp.eq.s32.totalorder %s15, 0
    %p54 = por %p52, %p53
    %s55 = ssub.s32 %s16, %s28
    %p56 = scmp.eq.s32.totalorder %s55, 0
    %s58 = sadd.s32 %s57, 1
    %s59 = scalar_select %p56, %s57, %s58
    %p62 = pneg %p56
    %p63 = scmp.eq.s32.totalorder %s9, 1
    %p64 = por %p62, %p63
    %p65 = scmp.ne.s32.totalorder %s57, %s60
    %p66 = scmp.eq.s32.totalorder %s9, 0
    %p67 = por %p65, %p66
    %p68 = scmp.ne.s32.totalorder %s57, %s60
    %p69 = scmp.eq.s32.totalorder %s14, 1
    %p70 = por %p68, %p69
    %p71 = scmp.ne.s32.totalorder %s60, %s61
    %p72 = scmp.eq.s32.totalorder %s14, 0
    %p73 = por %p71, %p72
    %p74 = scmp.ne.s32.totalorder %s60, %s61
    %p75 = scmp.eq.s32.totalorder %s15, 1
    %p76 = por %p74, %p75
    %p78 = scmp.ne.s32.totalorder %s61, %s77
    %p79 = scmp.eq.s32.totalorder %s15, 0
    %p80 = por %p78, %p79
    %s81 = ssub.s32 %s16, %s28
    %p82 = scmp.eq.s32.totalorder %s81, 0
    %s84 = sadd.s32 %s83, 1
    %s85 = scalar_select %p82, %s83, %s84
    %p88 = pneg %p82
    %p89 = scmp.eq.s32.totalorder %s9, 1
    %p90 = por %p88, %p89
    %p91 = scmp.ne.s32.totalorder %s83, %s86
    %p92 = scmp.eq.s32.totalorder %s9, 0
    %p93 = por %p91, %p92
    %p94 = scmp.ne.s32.totalorder %s83, %s86
    %p95 = scmp.eq.s32.totalorder %s14, 1
    %p96 = por %p94, %p95
    %p97 = scmp.ne.s32.totalorder %s86, %s87
    %p98 = scmp.eq.s32.totalorder %s14, 0
    %p99 = por %p97, %p98
    %p100 = scmp.ne.s32.totalorder %s86, %s87
    %p101 = scmp.eq.s32.totalorder %s15, 1
    %p102 = por %p100, %p101
    %p104 = scmp.ne.s32.totalorder %s87, %s103
    %p105 = scmp.eq.s32.totalorder %s15, 0
    %p106 = por %p104, %p105
    %s107 = ssub.s32 %s17, %s24
    %s108 = ssub.s32 %s16, %s28
    %s109 = sor.u32 %s107, %s108
    %p110 = scmp.eq.s32.totalorder %s109, 0
    %s112 = sadd.s32 %s111, 1
    %s113 = scalar_select %p110, %s111, %s112
    %p116 = pneg %p110
    %p117 = scmp.eq.s32.totalorder %s9, 1
    %p118 = por %p116, %p117
    %p119 = scmp.ne.s32.totalorder %s111, %s114
    %p120 = scmp.eq.s32.totalorder %s9, 0
    %p121 = por %p119, %p120
    %p122 = scmp.ne.s32.totalorder %s111, %s114
    %p123 = scmp.eq.s32.totalorder %s14, 1
    %p124 = por %p122, %p123
    %p125 = scmp.ne.s32.totalorder %s114, %s115
    %p126 = scmp.eq.s32.totalorder %s14, 0
    %p127 = por %p125, %p126
    %p128 = scmp.ne.s32.totalorder %s114, %s115
    %p129 = scmp.eq.s32.totalorder %s15, 1
    %p130 = por %p128, %p129
    %p132 = scmp.ne.s32.totalorder %s115, %s131
    %p133 = scmp.eq.s32.totalorder %s15, 0
    %p134 = por %p132, %p133
    %p135 = scmp.le.s32.totalorder 1, %s9
    %p136 = scmp.lt.s32.totalorder %s9, 3
    %p137 = pnand %p135, %p136
    %p138 = pneg %p137
    // Predicated region
    $region9: #{multiscale_forward_pallas.19} parent=5 // pred_check
      _
    $region10: #{multiscale_forward_pallas.19} parent=5 // pred_check_branch
      %140 = sbr.rel (%p137) target = $region12
    $region11: #{multiscale_forward_pallas.19} parent=5 // pred_region
      %s141 = ssub.s32 %s9, 1
      // Predicated region
      $region13: #{multiscale_forward_pallas.19} parent=11 // pred_check
        %p142 = pneg %p73
      $region14: #{multiscale_forward_pallas.19} parent=11 // pred_check_branch
        %144 = sbr.rel (%p142) target = $region16
      $region15: #{multiscale_forward_pallas.19} parent=11 // pred_region
        %p145 = scmp.lt.s32.totalorder %s18, 0
        %s146 = scalar_select %p145, %s18, 0
        %s147 = smul.addr %s146, 4
        %s148 = scalar_lea.vmem %s1, %s147
      $region16: #{multiscale_forward_pallas.19} parent=11 // pred_fallthru
        _
      // Predicated region
      $region17: #{multiscale_forward_pallas.19} parent=11 // pred_check
        %p149 = pneg %p99
      $region18: #{multiscale_forward_pallas.19} parent=11 // pred_check_branch
        %151 = sbr.rel (%p149) target = $region20
      $region19: #{multiscale_forward_pallas.19} parent=11 // pred_region
        %p152 = scmp.lt.s32.totalorder %s18, 0
        %s153 = scalar_select %p152, %s18, 0
        %s154 = scalar_lea.vmem %s2, %s153
      $region20: #{multiscale_forward_pallas.19} parent=11 // pred_fallthru
        _
    $region12: #{multiscale_forward_pallas.19} parent=5 // pred_fallthru
      _
    %p155 = scmp.lt.s32.totalorder %s9, 2
    // Predicated region
    $region21: #{multiscale_forward_pallas.19} parent=5 // pred_check
      %p156 = pneg %p155
    $region22: #{multiscale_forward_pallas.19} parent=5 // pred_check_branch
      %158 = sbr.rel (%p156) target = $region24
    $region23: #{multiscale_forward_pallas.19} parent=5 // pred_region
      // Predicated region
      $region25: #{multiscale_forward_pallas.19} parent=23 // pred_check
        %p159 = pneg %p41
      $region26: #{multiscale_forward_pallas.19} parent=23 // pred_check_branch
        %161 = sbr.rel (%p159) target = $region28
      $region27: #{multiscale_forward_pallas.19} parent=23 // pred_region
        %s162 = smul.u32 8, %s17
        %p163 = scmp.lt.s32.totalorder %s162, 15
        %s164 = scalar_select %p163, %s162, 15
        %s165 = smul.addr %s164, 8
        %s166 = smul.addr %s165, 4
        %s167 = scalar_lea.vmem %s0, %s166
        %s168 = smul.u32 8, %s17
      $region28: #{multiscale_forward_pallas.19} parent=23 // pred_fallthru
        _
    $region24: #{multiscale_forward_pallas.19} parent=5 // pred_fallthru
      _
    %p169 = scmp.le.s32.totalorder 1, %s9
    %p170 = scmp.lt.s32.totalorder %s9, 3
    %p171 = pnand %p169, %p170
    %p172 = pneg %p171
    // Predicated region
    $region29: #{multiscale_forward_pallas.19} parent=5 // pred_check
      _
    $region30: #{multiscale_forward_pallas.19} parent=5 // pred_check_branch
      %174 = sbr.rel (%p171) target = $region32
    $region31: #{multiscale_forward_pallas.19} parent=5 // pred_region
      %s175 = ssub.s32 %s9, 1
      %s176 = smul.u32 8, %s19
      %p177 = scmp.lt.s32.totalorder %s176, 15
      %s178 = scalar_select %p177, %s176, 15
      %s179 = smul.addr %s178, 8
      %s180 = smul.addr %s179, 4
      %s181 = scalar_lea.vmem %s0, %s180
      %p182 = pneg %p47
      %p183 = pneg %p44
      %p184 = scmp.lt.s32.totalorder %s18, 0
      %s185 = scalar_select %p184, %s18, 0
      %s186 = smul.addr %s185, 4
      %s187 = scalar_lea.vmem %s1, %s186
      %p188 = pneg %p73
      %p189 = pneg %p70
      %p190 = scmp.lt.s32.totalorder %s18, 0
      %s191 = scalar_select %p190, %s18, 0
      %s192 = scalar_lea.vmem %s2, %s191
      %p193 = pneg %p99
      %p194 = pneg %p96
      %p195 = pneg %p127
      %p196 = pneg %p124
      %s197 = smul.u32 8, %s19
      %p198 = scmp.lt.s32.totalorder %s197, 15
      %s199 = scalar_select %p198, %s197, 15
      %p200 = scmp.lt.s32.totalorder %s18, 0
      %s201 = scalar_select %p200, %s18, 0
      %s202 = sadd.s32 %s201, %s199
      %s203 = smul.addr %s202, 4
      %s204 = scalar_lea.vmem %s3, %s203
      %s205 = smul.u32 8, %s19
      %p206 = scmp.lt.s32.totalorder %s205, 15
      %s207 = scalar_select %p206, %s205, 15
      %s208 = smul.addr %s207, 8
      %s209 = smul.addr %s208, 4
      %s210 = scalar_lea.vmem %s0, %s209
      %s211 = smul.u32 8, %s19
      %p212 = scmp.lt.s32.totalorder %s18, 0
      %s213 = scalar_select %p212, %s18, 0
      %s214 = smul.addr %s213, 4
      %s215 = scalar_lea.vmem %s1, %s214
      %p216 = scmp.lt.s32.totalorder %s18, 0
      %s217 = scalar_select %p216, %s18, 0
      %s218 = scalar_lea.vmem %s2, %s217
      %s219 = smul.u32 8, %s19
      %p220 = scmp.lt.s32.totalorder %s219, 15
      %s221 = scalar_select %p220, %s219, 15
      %p222 = scmp.lt.s32.totalorder %s18, 0
      %s223 = scalar_select %p222, %s18, 0
      %s224 = sadd.s32 %s223, %s221
      %s225 = smul.addr %s224, 4
      %s226 = scalar_lea.vmem %s3, %s225
      %s227 = smul.u32 8, %s19
      %v228 = vld [vmem:[%s210] sm:$0xff]
      %v229 = vld [vmem:[%s210 + $0x8] sm:$0xff]
      %v230 = vld [vmem:[%s210 + $0x10] sm:$0xff]
      %v231 = vld [vmem:[%s210 + $0x18] sm:$0xff]
      %v232 = vld [vmem:[%s210 + $0x20] sm:$0xff]
      %v233 = vld [vmem:[%s210 + $0x28] sm:$0xff]
      %v234 = vld [vmem:[%s210 + $0x30] sm:$0xff]
      %v235 = vld [vmem:[%s210 + $0x38] sm:$0xff]
      %v236 = vld [vmem:[%s210 + $0x40] sm:$0xff]
      %v237 = vld [vmem:[%s210 + $0x48] sm:$0xff]
      %v238 = vld [vmem:[%s210 + $0x50] sm:$0xff]
      %v239 = vld [vmem:[%s210 + $0x58] sm:$0xff]
      %v240 = vld [vmem:[%s210 + $0x60] sm:$0xff]
      %v241 = vld [vmem:[%s210 + $0x68] sm:$0xff]
      %v242 = vld [vmem:[%s210 + $0x70] sm:$0xff]
      %v243 = vld [vmem:[%s210 + $0x78] sm:$0xff]
      %v244 = vld [vmem:[%s210 + $0x80] sm:$0xff]
      %v245 = vld [vmem:[%s210 + $0x88] sm:$0xff]
      %v246 = vld [vmem:[%s210 + $0x90] sm:$0xff]
      %v247 = vld [vmem:[%s210 + $0x98] sm:$0xff]
      %v248 = vld [vmem:[%s210 + $0xa0] sm:$0xff]
      %v249 = vld [vmem:[%s210 + $0xa8] sm:$0xff]
      %v250 = vld [vmem:[%s210 + $0xb0] sm:$0xff]
      %v251 = vld [vmem:[%s210 + $0xb8] sm:$0xff]
      %v252 = vld [vmem:[%s210 + $0xc0] sm:$0xff]
      %v253 = vld [vmem:[%s210 + $0xc8] sm:$0xff]
      %v254 = vld [vmem:[%s210 + $0xd0] sm:$0xff]
      %v255 = vld [vmem:[%s210 + $0xd8] sm:$0xff]
      %v256 = vld [vmem:[%s210 + $0xe0] sm:$0xff]
      %v257 = vld [vmem:[%s210 + $0xe8] sm:$0xff]
      %v258 = vld [vmem:[%s210 + $0xf0] sm:$0xff]
      %v259 = vld [vmem:[%s210 + $0xf8] sm:$0xff]
      %v260 = vld [vmem:[%s215] sm:$0xf]
      %v261 = vld [vmem:[%s215 + $0x4] sm:$0xf]
      %v262 = vld [vmem:[%s215 + $0x8] sm:$0xf]
      %v263 = vld [vmem:[%s215 + $0xc] sm:$0xf]
      %v264 = vld [vmem:[%s215 + $0x10] sm:$0xf]
      %v265 = vld [vmem:[%s215 + $0x14] sm:$0xf]
      %v266 = vld [vmem:[%s215 + $0x18] sm:$0xf]
      %v267 = vld [vmem:[%s215 + $0x1c] sm:$0xf]
      %v268 = vld [vmem:[%s215 + $0x20] sm:$0xf]
      %v269 = vld [vmem:[%s215 + $0x24] sm:$0xf]
      %v270 = vld [vmem:[%s215 + $0x28] sm:$0xf]
      %v271 = vld [vmem:[%s215 + $0x2c] sm:$0xf]
      %v272 = vld [vmem:[%s215 + $0x30] sm:$0xf]
      %v273 = vld [vmem:[%s215 + $0x34] sm:$0xf]
      %v274 = vld [vmem:[%s215 + $0x38] sm:$0xf]
      %v275 = vld [vmem:[%s215 + $0x3c] sm:$0xf]
      %v276 = vld [vmem:[%s215 + $0x40] sm:$0xf]
      %v277 = vld [vmem:[%s215 + $0x44] sm:$0xf]
      %v278 = vld [vmem:[%s215 + $0x48] sm:$0xf]
      %v279 = vld [vmem:[%s215 + $0x4c] sm:$0xf]
      %v280 = vld [vmem:[%s215 + $0x50] sm:$0xf]
      %v281 = vld [vmem:[%s215 + $0x54] sm:$0xf]
      %v282 = vld [vmem:[%s215 + $0x58] sm:$0xf]
      %v283 = vld [vmem:[%s215 + $0x5c] sm:$0xf]
      %v284 = vld [vmem:[%s215 + $0x60] sm:$0xf]
      %v285 = vld [vmem:[%s215 + $0x64] sm:$0xf]
      %v286 = vld [vmem:[%s215 + $0x68] sm:$0xf]
      %v287 = vld [vmem:[%s215 + $0x6c] sm:$0xf]
      %v288 = vld [vmem:[%s215 + $0x70] sm:$0xf]
      %v289 = vld [vmem:[%s215 + $0x74] sm:$0xf]
      %v290 = vld [vmem:[%s215 + $0x78] sm:$0xf]
      %v291 = vld [vmem:[%s215 + $0x7c] sm:$0xf]
      %v292 = vld [vmem:[%s215 + $0x80] sm:$0xf]
      %v293 = vld [vmem:[%s215 + $0x84] sm:$0xf]
      %v294 = vld [vmem:[%s215 + $0x88] sm:$0xf]
      %v295 = vld [vmem:[%s215 + $0x8c] sm:$0xf]
      %v296 = vld [vmem:[%s215 + $0x90] sm:$0xf]
      %v297 = vld [vmem:[%s215 + $0x94] sm:$0xf]
      %v298 = vld [vmem:[%s215 + $0x98] sm:$0xf]
      %v299 = vld [vmem:[%s215 + $0x9c] sm:$0xf]
      %v300 = vld [vmem:[%s215 + $0xa0] sm:$0xf]
      %v301 = vld [vmem:[%s215 + $0xa4] sm:$0xf]
      %v302 = vld [vmem:[%s215 + $0xa8] sm:$0xf]
      %v303 = vld [vmem:[%s215 + $0xac] sm:$0xf]
      %v304 = vld [vmem:[%s215 + $0xb0] sm:$0xf]
      %v305 = vld [vmem:[%s215 + $0xb4] sm:$0xf]
      %v306 = vld [vmem:[%s215 + $0xb8] sm:$0xf]
      %v307 = vld [vmem:[%s215 + $0xbc] sm:$0xf]
      %v308 = vld [vmem:[%s215 + $0xc0] sm:$0xf]
      %v309 = vld [vmem:[%s215 + $0xc4] sm:$0xf]
      %v310 = vld [vmem:[%s215 + $0xc8] sm:$0xf]
      %v311 = vld [vmem:[%s215 + $0xcc] sm:$0xf]
      %v312 = vld [vmem:[%s215 + $0xd0] sm:$0xf]
      %v313 = vld [vmem:[%s215 + $0xd4] sm:$0xf]
      %v314 = vld [vmem:[%s215 + $0xd8] sm:$0xf]
      %v315 = vld [vmem:[%s215 + $0xdc] sm:$0xf]
      %v316 = vld [vmem:[%s215 + $0xe0] sm:$0xf]
      %v317 = vld [vmem:[%s215 + $0xe4] sm:$0xf]
      %v318 = vld [vmem:[%s215 + $0xe8] sm:$0xf]
      %v319 = vld [vmem:[%s215 + $0xec] sm:$0xf]
      %v320 = vld [vmem:[%s215 + $0xf0] sm:$0xf]
      %v321 = vld [vmem:[%s215 + $0xf4] sm:$0xf]
      %v322 = vld [vmem:[%s215 + $0xf8] sm:$0xf]
      %v323 = vld [vmem:[%s215 + $0xfc] sm:$0xf]
      %v324 = vld [vmem:[%s215 + $0x100] sm:$0xf]
      %v325 = vld [vmem:[%s215 + $0x104] sm:$0xf]
      %v326 = vld [vmem:[%s215 + $0x108] sm:$0xf]
      %v327 = vld [vmem:[%s215 + $0x10c] sm:$0xf]
      %v328 = vld [vmem:[%s215 + $0x110] sm:$0xf]
      %v329 = vld [vmem:[%s215 + $0x114] sm:$0xf]
      %v330 = vld [vmem:[%s215 + $0x118] sm:$0xf]
      %v331 = vld [vmem:[%s215 + $0x11c] sm:$0xf]
      %v332 = vld [vmem:[%s215 + $0x120] sm:$0xf]
      %v333 = vld [vmem:[%s215 + $0x124] sm:$0xf]
      %v334 = vld [vmem:[%s215 + $0x128] sm:$0xf]
      %v335 = vld [vmem:[%s215 + $0x12c] sm:$0xf]
      %v336 = vld [vmem:[%s215 + $0x130] sm:$0xf]
      %v337 = vld [vmem:[%s215 + $0x134] sm:$0xf]
      %v338 = vld [vmem:[%s215 + $0x138] sm:$0xf]
      %v339 = vld [vmem:[%s215 + $0x13c] sm:$0xf]
      %v340 = vld [vmem:[%s215 + $0x140] sm:$0xf]
      %v341 = vld [vmem:[%s215 + $0x144] sm:$0xf]
      %v342 = vld [vmem:[%s215 + $0x148] sm:$0xf]
      %v343 = vld [vmem:[%s215 + $0x14c] sm:$0xf]
      %v344 = vld [vmem:[%s215 + $0x150] sm:$0xf]
      %v345 = vld [vmem:[%s215 + $0x154] sm:$0xf]
      %v346 = vld [vmem:[%s215 + $0x158] sm:$0xf]
      %v347 = vld [vmem:[%s215 + $0x15c] sm:$0xf]
      %v348 = vld [vmem:[%s215 + $0x160] sm:$0xf]
      %v349 = vld [vmem:[%s215 + $0x164] sm:$0xf]
      %v350 = vld [vmem:[%s215 + $0x168] sm:$0xf]
      %v351 = vld [vmem:[%s215 + $0x16c] sm:$0xf]
      %v352 = vld [vmem:[%s215 + $0x170] sm:$0xf]
      %v353 = vld [vmem:[%s215 + $0x174] sm:$0xf]
      %v354 = vld [vmem:[%s215 + $0x178] sm:$0xf]
      %v355 = vld [vmem:[%s215 + $0x17c] sm:$0xf]
      %v356 = vld [vmem:[%s215 + $0x180] sm:$0xf]
      %v357 = vld [vmem:[%s215 + $0x184] sm:$0xf]
      %v358 = vld [vmem:[%s215 + $0x188] sm:$0xf]
      %v359 = vld [vmem:[%s215 + $0x18c] sm:$0xf]
      %v360 = vld [vmem:[%s215 + $0x190] sm:$0xf]
      %v361 = vld [vmem:[%s215 + $0x194] sm:$0xf]
      %v362 = vld [vmem:[%s215 + $0x198] sm:$0xf]
      %v363 = vld [vmem:[%s215 + $0x19c] sm:$0xf]
      %v364 = vld [vmem:[%s215 + $0x1a0] sm:$0xf]
      %v365 = vld [vmem:[%s215 + $0x1a4] sm:$0xf]
      %v366 = vld [vmem:[%s215 + $0x1a8] sm:$0xf]
      %v367 = vld [vmem:[%s215 + $0x1ac] sm:$0xf]
      %v368 = vld [vmem:[%s215 + $0x1b0] sm:$0xf]
      %v369 = vld [vmem:[%s215 + $0x1b4] sm:$0xf]
      %v370 = vld [vmem:[%s215 + $0x1b8] sm:$0xf]
      %v371 = vld [vmem:[%s215 + $0x1bc] sm:$0xf]
      %v372 = vld [vmem:[%s215 + $0x1c0] sm:$0xf]
      %v373 = vld [vmem:[%s215 + $0x1c4] sm:$0xf]
      %v374 = vld [vmem:[%s215 + $0x1c8] sm:$0xf]
      %v375 = vld [vmem:[%s215 + $0x1cc] sm:$0xf]
      %v376 = vld [vmem:[%s215 + $0x1d0] sm:$0xf]
      %v377 = vld [vmem:[%s215 + $0x1d4] sm:$0xf]
      %v378 = vld [vmem:[%s215 + $0x1d8] sm:$0xf]
      %v379 = vld [vmem:[%s215 + $0x1dc] sm:$0xf]
      %v380 = vld [vmem:[%s215 + $0x1e0] sm:$0xf]
      %v381 = vld [vmem:[%s215 + $0x1e4] sm:$0xf]
      %v382 = vld [vmem:[%s215 + $0x1e8] sm:$0xf]
      %v383 = vld [vmem:[%s215 + $0x1ec] sm:$0xf]
      %v384 = vld [vmem:[%s215 + $0x1f0] sm:$0xf]
      %v385 = vld [vmem:[%s215 + $0x1f4] sm:$0xf]
      %v386 = vld [vmem:[%s215 + $0x1f8] sm:$0xf]
      %v387 = vld [vmem:[%s215 + $0x1fc] sm:$0xf]
      %v388 = vld [vmem:[%s218] sm:$0x1]
      %v390 = vperm.slane %v388, 0
      %v424 = vunpack.c.l.b16 %v228
      %v425 = vunpack.c.h.b16 %v228
      %v426 = vunpack.c.l.b16 %v229
      %v427 = vunpack.c.h.b16 %v229
      %v428 = vunpack.c.l.b16 %v230
      %v429 = vunpack.c.h.b16 %v230
      %v430 = vunpack.c.l.b16 %v231
      %v431 = vunpack.c.h.b16 %v231
      %v432 = vunpack.c.l.b16 %v232
      %v433 = vunpack.c.h.b16 %v232
      %v434 = vunpack.c.l.b16 %v233
      %v435 = vunpack.c.h.b16 %v233
      %v436 = vunpack.c.l.b16 %v234
      %v437 = vunpack.c.h.b16 %v234
      %v438 = vunpack.c.l.b16 %v235
      %v439 = vunpack.c.h.b16 %v235
      %v440 = vunpack.c.l.b16 %v236
      %v441 = vunpack.c.h.b16 %v236
      %v442 = vunpack.c.l.b16 %v237
      %v443 = vunpack.c.h.b16 %v237
      %v444 = vunpack.c.l.b16 %v238
      %v445 = vunpack.c.h.b16 %v238
      %v446 = vunpack.c.l.b16 %v239
      %v447 = vunpack.c.h.b16 %v239
      %v448 = vunpack.c.l.b16 %v240
      %v449 = vunpack.c.h.b16 %v240
      %v450 = vunpack.c.l.b16 %v241
      %v451 = vunpack.c.h.b16 %v241
      %v452 = vunpack.c.l.b16 %v242
      %v453 = vunpack.c.h.b16 %v242
      %v454 = vunpack.c.l.b16 %v243
      %v455 = vunpack.c.h.b16 %v243
      %v456 = vunpack.c.l.b16 %v244
      %v457 = vunpack.c.h.b16 %v244
      %v458 = vunpack.c.l.b16 %v245
      %v459 = vunpack.c.h.b16 %v245
      %v460 = vunpack.c.l.b16 %v246
      %v461 = vunpack.c.h.b16 %v246
      %v462 = vunpack.c.l.b16 %v247
      %v463 = vunpack.c.h.b16 %v247
      %v464 = vunpack.c.l.b16 %v248
      %v465 = vunpack.c.h.b16 %v248
      %v466 = vunpack.c.l.b16 %v249
      %v467 = vunpack.c.h.b16 %v249
      %v468 = vunpack.c.l.b16 %v250
      %v469 = vunpack.c.h.b16 %v250
      %v470 = vunpack.c.l.b16 %v251
      %v471 = vunpack.c.h.b16 %v251
      %v472 = vunpack.c.l.b16 %v252
      %v473 = vunpack.c.h.b16 %v252
      %v474 = vunpack.c.l.b16 %v253
      %v475 = vunpack.c.h.b16 %v253
      %v476 = vunpack.c.l.b16 %v254
      %v477 = vunpack.c.h.b16 %v254
      %v478 = vunpack.c.l.b16 %v255
      %v479 = vunpack.c.h.b16 %v255
      %v480 = vunpack.c.l.b16 %v256
      %v481 = vunpack.c.h.b16 %v256
      %v482 = vunpack.c.l.b16 %v257
      %v483 = vunpack.c.h.b16 %v257
      %v484 = vunpack.c.l.b16 %v258
      %v485 = vunpack.c.h.b16 %v258
      %v486 = vunpack.c.l.b16 %v259
      %v487 = vunpack.c.h.b16 %v259
      %v488 = vpack.c.b16 %v432, %v424
      %v489 = vpack.c.b16 %v433, %v425
      %v490 = vpack.c.b16 %v434, %v426
      %v491 = vpack.c.b16 %v435, %v427
      %v492 = vpack.c.b16 %v436, %v428
      %v493 = vpack.c.b16 %v437, %v429
      %v494 = vpack.c.b16 %v438, %v430
      %v495 = vpack.c.b16 %v439, %v431
      %v496 = vpack.c.b16 %v448, %v440
      %v497 = vpack.c.b16 %v449, %v441
      %v498 = vpack.c.b16 %v450, %v442
      %v499 = vpack.c.b16 %v451, %v443
      %v500 = vpack.c.b16 %v452, %v444
      %v501 = vpack.c.b16 %v453, %v445
      %v502 = vpack.c.b16 %v454, %v446
      %v503 = vpack.c.b16 %v455, %v447
      %v504 = vpack.c.b16 %v464, %v456
      %v505 = vpack.c.b16 %v465, %v457
      %v506 = vpack.c.b16 %v466, %v458
      %v507 = vpack.c.b16 %v467, %v459
      %v508 = vpack.c.b16 %v468, %v460
      %v509 = vpack.c.b16 %v469, %v461
      %v510 = vpack.c.b16 %v470, %v462
      %v511 = vpack.c.b16 %v471, %v463
      %v512 = vpack.c.b16 %v480, %v472
      %v513 = vpack.c.b16 %v481, %v473
      %v514 = vpack.c.b16 %v482, %v474
      %v515 = vpack.c.b16 %v483, %v475
      %v516 = vpack.c.b16 %v484, %v476
      %v517 = vpack.c.b16 %v485, %v477
      %v518 = vpack.c.b16 %v486, %v478
      %v519 = vpack.c.b16 %v487, %v479
      %v680 = vunpack.c.l.b16 %v260
      %v681 = vunpack.c.l.b16 %v261
      %v682 = vunpack.c.l.b16 %v262
      %v683 = vunpack.c.l.b16 %v263
      %v684 = vunpack.c.l.b16 %v264
      %v685 = vunpack.c.l.b16 %v265
      %v686 = vunpack.c.l.b16 %v266
      %v687 = vunpack.c.l.b16 %v267
      %v688 = vunpack.c.l.b16 %v268
      %v689 = vunpack.c.l.b16 %v269
      %v690 = vunpack.c.l.b16 %v270
      %v691 = vunpack.c.l.b16 %v271
      %v692 = vunpack.c.l.b16 %v272
      %v693 = vunpack.c.l.b16 %v273
      %v694 = vunpack.c.l.b16 %v274
      %v695 = vunpack.c.l.b16 %v275
      %v696 = vunpack.c.l.b16 %v276
      %v697 = vunpack.c.l.b16 %v277
      %v698 = vunpack.c.l.b16 %v278
      %v699 = vunpack.c.l.b16 %v279
      %v700 = vunpack.c.l.b16 %v280
      %v701 = vunpack.c.l.b16 %v281
      %v702 = vunpack.c.l.b16 %v282
      %v703 = vunpack.c.l.b16 %v283
      %v704 = vunpack.c.l.b16 %v284
      %v705 = vunpack.c.l.b16 %v285
      %v706 = vunpack.c.l.b16 %v286
      %v707 = vunpack.c.l.b16 %v287
      %v708 = vunpack.c.l.b16 %v288
      %v709 = vunpack.c.l.b16 %v289
      %v710 = vunpack.c.l.b16 %v290
      %v711 = vunpack.c.l.b16 %v291
      %v712 = vunpack.c.l.b16 %v292
      %v713 = vunpack.c.l.b16 %v293
      %v714 = vunpack.c.l.b16 %v294
      %v715 = vunpack.c.l.b16 %v295
      %v716 = vunpack.c.l.b16 %v296
      %v717 = vunpack.c.l.b16 %v297
      %v718 = vunpack.c.l.b16 %v298
      %v719 = vunpack.c.l.b16 %v299
      %v720 = vunpack.c.l.b16 %v300
      %v721 = vunpack.c.l.b16 %v301
      %v722 = vunpack.c.l.b16 %v302
      %v723 = vunpack.c.l.b16 %v303
      %v724 = vunpack.c.l.b16 %v304
      %v725 = vunpack.c.l.b16 %v305
      %v726 = vunpack.c.l.b16 %v306
      %v727 = vunpack.c.l.b16 %v307
      %v728 = vunpack.c.l.b16 %v308
      %v729 = vunpack.c.l.b16 %v309
      %v730 = vunpack.c.l.b16 %v310
      %v731 = vunpack.c.l.b16 %v311
      %v732 = vunpack.c.l.b16 %v312
      %v733 = vunpack.c.l.b16 %v313
      %v734 = vunpack.c.l.b16 %v314
      %v735 = vunpack.c.l.b16 %v315
      %v736 = vunpack.c.l.b16 %v316
      %v737 = vunpack.c.l.b16 %v317
      %v738 = vunpack.c.l.b16 %v318
      %v739 = vunpack.c.l.b16 %v319
      %v740 = vunpack.c.l.b16 %v320
      %v741 = vunpack.c.l.b16 %v321
      %v742 = vunpack.c.l.b16 %v322
      %v743 = vunpack.c.l.b16 %v323
      %v744 = vunpack.c.l.b16 %v324
      %v745 = vunpack.c.l.b16 %v325
      %v746 = vunpack.c.l.b16 %v326
      %v747 = vunpack.c.l.b16 %v327
      %v748 = vunpack.c.l.b16 %v328
      %v749 = vunpack.c.l.b16 %v329
      %v750 = vunpack.c.l.b16 %v330
      %v751 = vunpack.c.l.b16 %v331
      %v752 = vunpack.c.l.b16 %v332
      %v753 = vunpack.c.l.b16 %v333
      %v754 = vunpack.c.l.b16 %v334
      %v755 = vunpack.c.l.b16 %v335
      %v756 = vunpack.c.l.b16 %v336
      %v757 = vunpack.c.l.b16 %v337
      %v758 = vunpack.c.l.b16 %v338
      %v759 = vunpack.c.l.b16 %v339
      %v760 = vunpack.c.l.b16 %v340
      %v761 = vunpack.c.l.b16 %v341
      %v762 = vunpack.c.l.b16 %v342
      %v763 = vunpack.c.l.b16 %v343
      %v764 = vunpack.c.l.b16 %v344
      %v765 = vunpack.c.l.b16 %v345
      %v766 = vunpack.c.l.b16 %v346
      %v767 = vunpack.c.l.b16 %v347
      %v768 = vunpack.c.l.b16 %v348
      %v769 = vunpack.c.l.b16 %v349
      %v770 = vunpack.c.l.b16 %v350
      %v771 = vunpack.c.l.b16 %v351
      %v772 = vunpack.c.l.b16 %v352
      %v773 = vunpack.c.l.b16 %v353
      %v774 = vunpack.c.l.b16 %v354
      %v775 = vunpack.c.l.b16 %v355
      %v776 = vunpack.c.l.b16 %v356
      %v777 = vunpack.c.l.b16 %v357
      %v778 = vunpack.c.l.b16 %v358
      %v779 = vunpack.c.l.b16 %v359
      %v780 = vunpack.c.l.b16 %v360
      %v781 = vunpack.c.l.b16 %v361
      %v782 = vunpack.c.l.b16 %v362
      %v783 = vunpack.c.l.b16 %v363
      %v784 = vunpack.c.l.b16 %v364
      %v785 = vunpack.c.l.b16 %v365
      %v786 = vunpack.c.l.b16 %v366
      %v787 = vunpack.c.l.b16 %v367
      %v788 = vunpack.c.l.b16 %v368
      %v789 = vunpack.c.l.b16 %v369
      %v790 = vunpack.c.l.b16 %v370
      %v791 = vunpack.c.l.b16 %v371
      %v792 = vunpack.c.l.b16 %v372
      %v793 = vunpack.c.l.b16 %v373
      %v794 = vunpack.c.l.b16 %v374
      %v795 = vunpack.c.l.b16 %v375
      %v796 = vunpack.c.l.b16 %v376
      %v797 = vunpack.c.l.b16 %v377
      %v798 = vunpack.c.l.b16 %v378
      %v799 = vunpack.c.l.b16 %v379
      %v800 = vunpack.c.l.b16 %v380
      %v801 = vunpack.c.l.b16 %v381
      %v802 = vunpack.c.l.b16 %v382
      %v803 = vunpack.c.l.b16 %v383
      %v804 = vunpack.c.l.b16 %v384
      %v805 = vunpack.c.l.b16 %v385
      %v806 = vunpack.c.l.b16 %v386
      %v807 = vunpack.c.l.b16 %v387
      %v808 = vpack.c.b16 %v681, %v680
      %v809 = vpack.c.b16 %v683, %v682
      %v810 = vpack.c.b16 %v685, %v684
      %v811 = vpack.c.b16 %v687, %v686
      %v812 = vpack.c.b16 %v689, %v688
      %v813 = vpack.c.b16 %v691, %v690
      %v814 = vpack.c.b16 %v693, %v692
      %v815 = vpack.c.b16 %v695, %v694
      %v816 = vpack.c.b16 %v697, %v696
      %v817 = vpack.c.b16 %v699, %v698
      %v818 = vpack.c.b16 %v701, %v700
      %v819 = vpack.c.b16 %v703, %v702
      %v820 = vpack.c.b16 %v705, %v704
      %v821 = vpack.c.b16 %v707, %v706
      %v822 = vpack.c.b16 %v709, %v708
      %v823 = vpack.c.b16 %v711, %v710
      %v824 = vpack.c.b16 %v713, %v712
      %v825 = vpack.c.b16 %v715, %v714
      %v826 = vpack.c.b16 %v717, %v716
      %v827 = vpack.c.b16 %v719, %v718
      %v828 = vpack.c.b16 %v721, %v720
      %v829 = vpack.c.b16 %v723, %v722
      %v830 = vpack.c.b16 %v725, %v724
      %v831 = vpack.c.b16 %v727, %v726
      %v832 = vpack.c.b16 %v729, %v728
      %v833 = vpack.c.b16 %v731, %v730
      %v834 = vpack.c.b16 %v733, %v732
      %v835 = vpack.c.b16 %v735, %v734
      %v836 = vpack.c.b16 %v737, %v736
      %v837 = vpack.c.b16 %v739, %v738
      %v838 = vpack.c.b16 %v741, %v740
      %v839 = vpack.c.b16 %v743, %v742
      %v840 = vpack.c.b16 %v745, %v744
      %v841 = vpack.c.b16 %v747, %v746
      %v842 = vpack.c.b16 %v749, %v748
      %v843 = vpack.c.b16 %v751, %v750
      %v844 = vpack.c.b16 %v753, %v752
      %v845 = vpack.c.b16 %v755, %v754
      %v846 = vpack.c.b16 %v757, %v756
      %v847 = vpack.c.b16 %v759, %v758
      %v848 = vpack.c.b16 %v761, %v760
      %v849 = vpack.c.b16 %v763, %v762
      %v850 = vpack.c.b16 %v765, %v764
      %v851 = vpack.c.b16 %v767, %v766
      %v852 = vpack.c.b16 %v769, %v768
      %v853 = vpack.c.b16 %v771, %v770
      %v854 = vpack.c.b16 %v773, %v772
      %v855 = vpack.c.b16 %v775, %v774
      %v856 = vpack.c.b16 %v777, %v776
      %v857 = vpack.c.b16 %v779, %v778
      %v858 = vpack.c.b16 %v781, %v780
      %v859 = vpack.c.b16 %v783, %v782
      %v860 = vpack.c.b16 %v785, %v784
      %v861 = vpack.c.b16 %v787, %v786
      %v862 = vpack.c.b16 %v789, %v788
      %v863 = vpack.c.b16 %v791, %v790
      %v864 = vpack.c.b16 %v793, %v792
      %v865 = vpack.c.b16 %v795, %v794
      %v866 = vpack.c.b16 %v797, %v796
      %v867 = vpack.c.b16 %v799, %v798
      %v868 = vpack.c.b16 %v801, %v800
      %v869 = vpack.c.b16 %v803, %v802
      %v870 = vpack.c.b16 %v805, %v804
      %v871 = vpack.c.b16 %v807, %v806
      %936 = vmatpush.bf16.msra.mxu0 %v815
      %937 = vmatpush.bf16.msra.mxu0 %v814
      %938 = vmatpush.bf16.msra.mxu0 %v813
      %939 = vmatpush.bf16.msra.mxu0 %v812
      %940 = vmatpush.bf16.msra.mxu0 %v811
      %941 = vmatpush.bf16.msra.mxu0 %v810
      %942 = vmatpush.bf16.msra.mxu0 %v809
      %943 = vmatpush.bf16.msra.mxu0 %v808
      %944 = vmatmul.bf16.gmra.mxu0 %v488
      %v945 = vpop.f32.mrf.mxu0
      %v946 = vadd.f32 %v390, %v945
      %v947 = vpop.f32.mrf.mxu0
      %v948 = vadd.f32 %v390, %v947
      %949 = vmatmul.bf16.gmra.mxu0 %v496
      %v950 = vpop.f32.mrf.mxu0
      %v951 = vadd.f32 %v390, %v950
      %v952 = vpop.f32.mrf.mxu0
      %v953 = vadd.f32 %v390, %v952
      %954 = vmatmul.bf16.gmra.mxu0 %v504
      %v955 = vpop.f32.mrf.mxu0
      %v956 = vadd.f32 %v390, %v955
      %v957 = vpop.f32.mrf.mxu0
      %v958 = vadd.f32 %v390, %v957
      %959 = vmatmul.bf16.gmra.mxu0 %v512
      %v960 = vpop.f32.mrf.mxu0
      %v961 = vadd.f32 %v390, %v960
      %v962 = vpop.f32.mrf.mxu0
      %v963 = vadd.f32 %v390, %v962
      %964 = vdwg.mxu0
      %965 = vmatpush.bf16.msra.mxu0 %v823
      %966 = vmatpush.bf16.msra.mxu0 %v822
      %967 = vmatpush.bf16.msra.mxu0 %v821
      %968 = vmatpush.bf16.msra.mxu0 %v820
      %969 = vmatpush.bf16.msra.mxu0 %v819
      %970 = vmatpush.bf16.msra.mxu0 %v818
      %971 = vmatpush.bf16.msra.mxu0 %v817
      %972 = vmatpush.bf16.msra.mxu0 %v816
      %973 = vmatmul.bf16.gmra.mxu0 %v489
      %v974 = vpop.f32.mrf.mxu0
      %v975 = vadd.f32 %v946, %v974
      %v976 = vpop.f32.mrf.mxu0
      %v977 = vadd.f32 %v948, %v976
      %978 = vmatmul.bf16.gmra.mxu0 %v497
      %v979 = vpop.f32.mrf.mxu0
      %v980 = vadd.f32 %v951, %v979
      %v981 = vpop.f32.mrf.mxu0
      %v982 = vadd.f32 %v953, %v981
      %983 = vmatmul.bf16.gmra.mxu0 %v505
      %v984 = vpop.f32.mrf.mxu0
      %v985 = vadd.f32 %v956, %v984
      %v986 = vpop.f32.mrf.mxu0
      %v987 = vadd.f32 %v958, %v986
      %988 = vmatmul.bf16.gmra.mxu0 %v513
      %v989 = vpop.f32.mrf.mxu0
      %v990 = vadd.f32 %v961, %v989
      %v991 = vpop.f32.mrf.mxu0
      %v992 = vadd.f32 %v963, %v991
      %993 = vdwg.mxu0
      %994 = vmatpush.bf16.msra.mxu0 %v831
      %995 = vmatpush.bf16.msra.mxu0 %v830
      %996 = vmatpush.bf16.msra.mxu0 %v829
      %997 = vmatpush.bf16.msra.mxu0 %v828
      %998 = vmatpush.bf16.msra.mxu0 %v827
      %999 = vmatpush.bf16.msra.mxu0 %v826
      %1000 = vmatpush.bf16.msra.mxu0 %v825
      %1001 = vmatpush.bf16.msra.mxu0 %v824
      %1002 = vmatmul.bf16.gmra.mxu0 %v490
      %v1003 = vpop.f32.mrf.mxu0
      %v1004 = vadd.f32 %v975, %v1003
      %v1005 = vpop.f32.mrf.mxu0
      %v1006 = vadd.f32 %v977, %v1005
      %1007 = vmatmul.bf16.gmra.mxu0 %v498
      %v1008 = vpop.f32.mrf.mxu0
      %v1009 = vadd.f32 %v980, %v1008
      %v1010 = vpop.f32.mrf.mxu0
      %v1011 = vadd.f32 %v982, %v1010
      %1012 = vmatmul.bf16.gmra.mxu0 %v506
      %v1013 = vpop.f32.mrf.mxu0
      %v1014 = vadd.f32 %v985, %v1013
      %v1015 = vpop.f32.mrf.mxu0
      %v1016 = vadd.f32 %v987, %v1015
      %1017 = vmatmul.bf16.gmra.mxu0 %v514
      %v1018 = vpop.f32.mrf.mxu0
      %v1019 = vadd.f32 %v990, %v1018
      %v1020 = vpop.f32.mrf.mxu0
      %v1021 = vadd.f32 %v992, %v1020
      %1022 = vdwg.mxu0
      %1023 = vmatpush.bf16.msra.mxu0 %v839
      %1024 = vmatpush.bf16.msra.mxu0 %v838
      %1025 = vmatpush.bf16.msra.mxu0 %v837
      %1026 = vmatpush.bf16.msra.mxu0 %v836
      %1027 = vmatpush.bf16.msra.mxu0 %v835
      %1028 = vmatpush.bf16.msra.mxu0 %v834
      %1029 = vmatpush.bf16.msra.mxu0 %v833
      %1030 = vmatpush.bf16.msra.mxu0 %v832
      %1031 = vmatmul.bf16.gmra.mxu0 %v491
      %v1032 = vpop.f32.mrf.mxu0
      %v1033 = vadd.f32 %v1004, %v1032
      %v1034 = vpop.f32.mrf.mxu0
      %v1035 = vadd.f32 %v1006, %v1034
      %1036 = vmatmul.bf16.gmra.mxu0 %v499
      %v1037 = vpop.f32.mrf.mxu0
      %v1038 = vadd.f32 %v1009, %v1037
      %v1039 = vpop.f32.mrf.mxu0
      %v1040 = vadd.f32 %v1011, %v1039
      %1041 = vmatmul.bf16.gmra.mxu0 %v507
      %v1042 = vpop.f32.mrf.mxu0
      %v1043 = vadd.f32 %v1014, %v1042
      %v1044 = vpop.f32.mrf.mxu0
      %v1045 = vadd.f32 %v1016, %v1044
      %1046 = vmatmul.bf16.gmra.mxu0 %v515
      %v1047 = vpop.f32.mrf.mxu0
      %v1048 = vadd.f32 %v1019, %v1047
      %v1049 = vpop.f32.mrf.mxu0
      %v1050 = vadd.f32 %v1021, %v1049
      %1051 = vdwg.mxu0
      %1052 = vmatpush.bf16.msra.mxu0 %v847
      %1053 = vmatpush.bf16.msra.mxu0 %v846
      %1054 = vmatpush.bf16.msra.mxu0 %v845
      %1055 = vmatpush.bf16.msra.mxu0 %v844
      %1056 = vmatpush.bf16.msra.mxu0 %v843
      %1057 = vmatpush.bf16.msra.mxu0 %v842
      %1058 = vmatpush.bf16.msra.mxu0 %v841
      %1059 = vmatpush.bf16.msra.mxu0 %v840
      %1060 = vmatmul.bf16.gmra.mxu0 %v492
      %v1061 = vpop.f32.mrf.mxu0
      %v1062 = vadd.f32 %v1033, %v1061
      %v1063 = vpop.f32.mrf.mxu0
      %v1064 = vadd.f32 %v1035, %v1063
      %1065 = vmatmul.bf16.gmra.mxu0 %v500
      %v1066 = vpop.f32.mrf.mxu0
      %v1067 = vadd.f32 %v1038, %v1066
      %v1068 = vpop.f32.mrf.mxu0
      %v1069 = vadd.f32 %v1040, %v1068
      %1070 = vmatmul.bf16.gmra.mxu0 %v508
      %v1071 = vpop.f32.mrf.mxu0
      %v1072 = vadd.f32 %v1043, %v1071
      %v1073 = vpop.f32.mrf.mxu0
      %v1074 = vadd.f32 %v1045, %v1073
      %1075 = vmatmul.bf16.gmra.mxu0 %v516
      %v1076 = vpop.f32.mrf.mxu0
      %v1077 = vadd.f32 %v1048, %v1076
      %v1078 = vpop.f32.mrf.mxu0
      %v1079 = vadd.f32 %v1050, %v1078
      %1080 = vdwg.mxu0
      %1081 = vmatpush.bf16.msra.mxu0 %v855
      %1082 = vmatpush.bf16.msra.mxu0 %v854
      %1083 = vmatpush.bf16.msra.mxu0 %v853
      %1084 = vmatpush.bf16.msra.mxu0 %v852
      %1085 = vmatpush.bf16.msra.mxu0 %v851
      %1086 = vmatpush.bf16.msra.mxu0 %v850
      %1087 = vmatpush.bf16.msra.mxu0 %v849
      %1088 = vmatpush.bf16.msra.mxu0 %v848
      %1089 = vmatmul.bf16.gmra.mxu0 %v493
      %v1090 = vpop.f32.mrf.mxu0
      %v1091 = vadd.f32 %v1062, %v1090
      %v1092 = vpop.f32.mrf.mxu0
      %v1093 = vadd.f32 %v1064, %v1092
      %1094 = vmatmul.bf16.gmra.mxu0 %v501
      %v1095 = vpop.f32.mrf.mxu0
      %v1096 = vadd.f32 %v1067, %v1095
      %v1097 = vpop.f32.mrf.mxu0
      %v1098 = vadd.f32 %v1069, %v1097
      %1099 = vmatmul.bf16.gmra.mxu0 %v509
      %v1100 = vpop.f32.mrf.mxu0
      %v1101 = vadd.f32 %v1072, %v1100
      %v1102 = vpop.f32.mrf.mxu0
      %v1103 = vadd.f32 %v1074, %v1102
      %1104 = vmatmul.bf16.gmra.mxu0 %v517
      %v1105 = vpop.f32.mrf.mxu0
      %v1106 = vadd.f32 %v1077, %v1105
      %v1107 = vpop.f32.mrf.mxu0
      %v1108 = vadd.f32 %v1079, %v1107
      %1109 = vdwg.mxu0
      %1110 = vmatpush.bf16.msra.mxu0 %v863
      %1111 = vmatpush.bf16.msra.mxu0 %v862
      %1112 = vmatpush.bf16.msra.mxu0 %v861
      %1113 = vmatpush.bf16.msra.mxu0 %v860
      %1114 = vmatpush.bf16.msra.mxu0 %v859
      %1115 = vmatpush.bf16.msra.mxu0 %v858
      %1116 = vmatpush.bf16.msra.mxu0 %v857
      %1117 = vmatpush.bf16.msra.mxu0 %v856
      %1118 = vmatmul.bf16.gmra.mxu0 %v494
      %v1119 = vpop.f32.mrf.mxu0
      %v1120 = vadd.f32 %v1091, %v1119
      %v1121 = vpop.f32.mrf.mxu0
      %v1122 = vadd.f32 %v1093, %v1121
      %1123 = vmatmul.bf16.gmra.mxu0 %v502
      %v1124 = vpop.f32.mrf.mxu0
      %v1125 = vadd.f32 %v1096, %v1124
      %v1126 = vpop.f32.mrf.mxu0
      %v1127 = vadd.f32 %v1098, %v1126
      %1128 = vmatmul.bf16.gmra.mxu0 %v510
      %v1129 = vpop.f32.mrf.mxu0
      %v1130 = vadd.f32 %v1101, %v1129
      %v1131 = vpop.f32.mrf.mxu0
      %v1132 = vadd.f32 %v1103, %v1131
      %1133 = vmatmul.bf16.gmra.mxu0 %v518
      %v1134 = vpop.f32.mrf.mxu0
      %v1135 = vadd.f32 %v1106, %v1134
      %v1136 = vpop.f32.mrf.mxu0
      %v1137 = vadd.f32 %v1108, %v1136
      %1138 = vdwg.mxu0
      %1139 = vmatpush.bf16.msra.mxu0 %v871
      %1140 = vmatpush.bf16.msra.mxu0 %v870
      %1141 = vmatpush.bf16.msra.mxu0 %v869
      %1142 = vmatpush.bf16.msra.mxu0 %v868
      %1143 = vmatpush.bf16.msra.mxu0 %v867
      %1144 = vmatpush.bf16.msra.mxu0 %v866
      %1145 = vmatpush.bf16.msra.mxu0 %v865
      %1146 = vmatpush.bf16.msra.mxu0 %v864
      %1147 = vmatmul.bf16.gmra.mxu0 %v495
      %v1148 = vpop.f32.mrf.mxu0
      %v1149 = vadd.f32 %v1120, %v1148
      %v1150 = vpop.f32.mrf.mxu0
      %v1151 = vadd.f32 %v1122, %v1150
      %1152 = vmatmul.bf16.gmra.mxu0 %v503
      %v1153 = vpop.f32.mrf.mxu0
      %v1154 = vadd.f32 %v1125, %v1153
      %v1155 = vpop.f32.mrf.mxu0
      %v1156 = vadd.f32 %v1127, %v1155
      %1157 = vmatmul.bf16.gmra.mxu0 %v511
      %v1158 = vpop.f32.mrf.mxu0
      %v1159 = vadd.f32 %v1130, %v1158
      %v1160 = vpop.f32.mrf.mxu0
      %v1161 = vadd.f32 %v1132, %v1160
      %1162 = vmatmul.bf16.gmra.mxu0 %v519
      %v1163 = vpop.f32.mrf.mxu0
      %v1164 = vadd.f32 %v1135, %v1163
      %v1165 = vpop.f32.mrf.mxu0
      %v1166 = vadd.f32 %v1137, %v1165
      %1167 = vdwg.mxu0
      %v1168 = vpack.c.bf16 %v1149, %v1149
      %v1169 = vpack.c.bf16 %v1151, %v1151
      %v1170 = vpack.c.bf16 %v1154, %v1154
      %v1171 = vpack.c.bf16 %v1156, %v1156
      %v1172 = vpack.c.bf16 %v1159, %v1159
      %v1173 = vpack.c.bf16 %v1161, %v1161
      %v1174 = vpack.c.bf16 %v1164, %v1164
      %v1175 = vpack.c.bf16 %v1166, %v1166
      %1176 = vst [vmem:[%s226] sm:$0xf] %v1168
      %1177 = vst [vmem:[%s226 + $0x4] sm:$0xf] %v1169
      %1178 = vst [vmem:[%s226 + $0x8] sm:$0xf] %v1170
      %1179 = vst [vmem:[%s226 + $0xc] sm:$0xf] %v1171
      %1180 = vst [vmem:[%s226 + $0x10] sm:$0xf] %v1172
      %1181 = vst [vmem:[%s226 + $0x14] sm:$0xf] %v1173
      %1182 = vst [vmem:[%s226 + $0x18] sm:$0xf] %v1174
      %1183 = vst [vmem:[%s226 + $0x1c] sm:$0xf] %v1175
      %s1184 = smul.u32 8, %s19
      %p1185 = scmp.lt.s32.totalorder %s1184, 15
      %s1186 = scalar_select %p1185, %s1184, 15
      %p1187 = scmp.lt.s32.totalorder %s18, 0
      %s1188 = scalar_select %p1187, %s18, 0
      %s1189 = sadd.s32 %s1188, %s1186
      %s1190 = smul.addr %s1189, 4
      %s1191 = scalar_lea.vmem %s3, %s1190
      // Predicated region
      $region33: #{multiscale_forward_pallas.19} parent=31 // pred_check
        %p1192 = pneg %p124
      $region34: #{multiscale_forward_pallas.19} parent=31 // pred_check_branch
        %1194 = sbr.rel (%p1192) target = $region36
      $region35: #{multiscale_forward_pallas.19} parent=31 // pred_region
        %s1195 = smul.u32 8, %s19
      $region36: #{multiscale_forward_pallas.19} parent=31 // pred_fallthru
        _
    $region32: #{multiscale_forward_pallas.19} parent=5 // pred_fallthru
      _
    %p1196 = scmp.le.s32.totalorder 2, %s9
    // Predicated region
    $region37: #{multiscale_forward_pallas.19} parent=5 // pred_check
      %p1197 = pneg %p1196
    $region38: #{multiscale_forward_pallas.19} parent=5 // pred_check_branch
      %1199 = sbr.rel (%p1197) target = $region40
    $region39: #{multiscale_forward_pallas.19} parent=5 // pred_region
      %s1200 = ssub.s32 %s9, 2
      // Predicated region
      $region41: #{multiscale_forward_pallas.19} parent=39 // pred_check
        %p1201 = pneg %p130
      $region42: #{multiscale_forward_pallas.19} parent=39 // pred_check_branch
        %1203 = sbr.rel (%p1201) target = $region44
      $region43: #{multiscale_forward_pallas.19} parent=39 // pred_region
        %s1204 = smul.u32 8, %s21
        %p1205 = scmp.lt.s32.totalorder %s1204, 15
        %s1206 = scalar_select %p1205, %s1204, 15
        %p1207 = scmp.lt.s32.totalorder %s20, 0
        %s1208 = scalar_select %p1207, %s20, 0
        %s1209 = sadd.s32 %s1208, %s1206
        %s1210 = smul.addr %s1209, 4
        %s1211 = scalar_lea.vmem %s3, %s1210
      $region44: #{multiscale_forward_pallas.19} parent=39 // pred_fallthru
        _
    $region40: #{multiscale_forward_pallas.19} parent=5 // pred_fallthru
      _
  $region6: #{multiscale_forward_pallas.19} parent=0 // loop_footer
    %s13 = sadd.s32 1, %s9
  $region7: #{multiscale_forward_pallas.19} parent=0 // loop_footer_branch
    %8 = sbr.rel target = $region3
  $region8: #{multiscale_forward_pallas.19} parent=0 // loop_exit
    _

</llo_original>
